<compile_context>
chip_gen: v6e
topology: v6e:2x2x1
jax: 0.10.0
libtpu: 0.0.40
codegen_flags: <defaults>
</compile_context>

<pallas_src>
import jax
import jax.numpy as jnp
from jax.experimental import pallas as pl
from jax.experimental.pallas import tpu as pltpu

_LANE = 128
_PADW = 8  # zero column-margin width; halo-buffer interior starts at column _PADW


def _round_up(x, m):
    return ((x + m - 1) // m) * m


def _vmem_limit_bytes():
    # Per-generation VMEM budget: leave headroom on v7x's 64 MiB physical VMEM,
    # use more of v5e/v6e's 128 MiB for larger strips / deeper pipelining.
    try:
        cap = int(pltpu.get_tpu_info().vmem_capacity_bytes)
    except Exception:
        cap = 64 * 1024 * 1024
    return int(min(cap * 3 // 4, 96 * 1024 * 1024))


def _pick_strip_height(H, target=32):
    if H <= target:
        return H
    for hs in range(target, 1, -1):
        if H % hs == 0 and hs % 2 == 0:
            return hs
    return H


def _fused_kernel(xb_ref, xt_ref, xbo_ref, w1_ref, w2_ref, b_ref, o_ref,
                  xpad_ref, apad_ref):
    """Fused [Conv3x3 (BN folded) + bias + ReLU] x 2 for one row strip.

    xb_ref  : (1, Hs, W, Cin_p)        bf16  strip body rows
    xt_ref  : (1, 2, W, Cin_p)         bf16  two rows just above the strip (clamped)
    xbo_ref : (1, 2, W, Cin_p)         bf16  two rows just below the strip (clamped)
    w1_ref  : (9, Cin_p, Cout_p)       bf16  layer-1 weights, tap-major, BN scale folded
    w2_ref  : (9, Cout_p, Cout_p)      bf16  layer-2 weights, BN scale folded
    b_ref   : (2, Cout_p)              f32   [bias1, bias2]
    o_ref   : (1, Hs, W, Cout_p)       bf16  output strip
    xpad_ref: (Hs+4, W+2*_PADW, Cin_p)  bf16 scratch: input strip + 2-row halo
    apad_ref: (Hs+2, W+2*_PADW, Cout_p) bf16 scratch: layer-1 act + 1-row halo
    """
    s = pl.program_id(1)
    last = pl.num_programs(1) - 1
    Hs = o_ref.shape[1]
    W = o_ref.shape[2]
    cin_p = xpad_ref.shape[-1]
    cout_p = o_ref.shape[-1]

    # ---- stage input strip + halo rows into the zero-margined halo buffer ----
    # Border-only zeroing: column margins always; top/bottom halo rows only when
    # they fall outside the image (otherwise the neighbor rows are copied in).
    zcol_x = jnp.zeros((Hs + 4, _PADW, cin_p), xpad_ref.dtype)
    xpad_ref[:, 0:_PADW, :] = zcol_x
    xpad_ref[:, _PADW + W:, :] = zcol_x
    xpad_ref[2:2 + Hs, _PADW:_PADW + W, :] = xb_ref[0]          # bf16, no cast

    zrow_x = jnp.zeros((2, W, cin_p), xpad_ref.dtype)

    @pl.when(s == 0)
    def _():
        xpad_ref[0:2, _PADW:_PADW + W, :] = zrow_x

    @pl.when(s > 0)
    def _():
        xpad_ref[0:2, _PADW:_PADW + W, :] = xt_ref[0]

    @pl.when(s == last)
    def _():
        xpad_ref[Hs + 2:Hs + 4, _PADW:_PADW + W, :] = zrow_x

    @pl.when(s < last)
    def _():
        xpad_ref[Hs + 2:Hs + 4, _PADW:_PADW + W, :] = xbo_ref[0]

    def conv3x3_bias_relu(xp_ref, rows, w_ref, bias_row):
        """3x3 same-conv over `rows` output rows.

        Per-tap MXU dots (K = channels) accumulated in f32 -- no im2col slab.
        """
        c = xp_ref.shape[-1]
        n_out = w_ref.shape[-1]
        acc = jnp.zeros((rows * W, n_out), jnp.float32)
        for t in range(9):   # statically unrolled: 9 dots, K = c
            kh, kw = divmod(t, 3)
            win = xp_ref[kh:kh + rows, _PADW - 1 + kw:_PADW - 1 + kw + W, :]
            acc = acc + jnp.dot(win.reshape(rows * W, c), w_ref[t],
                                preferred_element_type=jnp.float32)
        y = jnp.maximum(acc + bias_row, 0.0)   # folded-BN bias + ReLU (f32 epilogue)
        return y.reshape(rows, W, n_out)

    # ---- layer 1: strip rows plus one halo row each side (layer-2's field) ----
    a1 = conv3x3_bias_relu(xpad_ref, Hs + 2, w1_ref, b_ref[0:1, :])

    zcol_a = jnp.zeros((Hs + 2, _PADW, cout_p), apad_ref.dtype)
    apad_ref[:, 0:_PADW, :] = zcol_a
    apad_ref[:, _PADW + W:, :] = zcol_a
    apad_ref[:, _PADW:_PADW + W, :] = a1.astype(apad_ref.dtype)  # one f32->bf16 cast

    # Layer-2's conv padding: layer-1 "halo" rows that fall outside the image
    # must be zero, not conv1-of-zero-input (which would be ReLU(bias) != 0).
    zrow_a = jnp.zeros((1, W, cout_p), apad_ref.dtype)

    @pl.when(s == 0)
    def _():
        apad_ref[0:1, _PADW:_PADW + W, :] = zrow_a

    @pl.when(s == last)
    def _():
        apad_ref[Hs + 1:Hs + 2, _PADW:_PADW + W, :] = zrow_a

    # ---- layer 2: the intermediate activation never leaves VMEM ----
    a2 = conv3x3_bias_relu(apad_ref, Hs, w2_ref, b_ref[1:2, :])
    o_ref[0] = a2.astype(o_ref.dtype)


def _fused_conv_bn_relu_x2(x, w1, w2, b, strip_h):
    """x: (N, H, W, Cin_p) bf16 -> (N, H, W, Cout_p) bf16."""
    N, H, W, cin_p = x.shape
    cout_p = w1.shape[-1]
    n_strips = H // strip_h
    half = strip_h // 2
    bot_max = max(H // 2 - 1, 0)

    flops = 2 * N * H * W * 9 * (cin_p * cout_p + cout_p * cout_p)
    bytes_accessed = (x.size * 2 + w1.size * 2 + w2.size * 2 + b.size * 4
                      + N * H * W * cout_p * 2)

    return pl.pallas_call(
        _fused_kernel,
        out_shape=jax.ShapeDtypeStruct((N, H, W, cout_p), jnp.bfloat16),
        grid_spec=pltpu.PrefetchScalarGridSpec(
            num_scalar_prefetch=0,
            grid=(N, n_strips),
            in_specs=[
                # strip body (auto-pipelined HBM->VMEM prefetch)
                pl.BlockSpec((1, strip_h, W, cin_p), lambda n, s: (n, s, 0, 0)),
                # 2-row halos above / below; block indices clamped at the image
                # edge (the out-of-image fetch is ignored and replaced by zeros
                # inside the kernel).
                pl.BlockSpec((1, 2, W, cin_p),
                             lambda n, s: (n, jnp.maximum(s * half - 1, 0), 0, 0)),
                pl.BlockSpec((1, 2, W, cin_p),
                             lambda n, s: (n, jnp.minimum((s + 1) * half, bot_max),
                                           0, 0)),
                pl.BlockSpec((9, cin_p, cout_p), lambda n, s: (0, 0, 0)),
                pl.BlockSpec((9, cout_p, cout_p), lambda n, s: (0, 0, 0)),
                pl.BlockSpec((2, cout_p), lambda n, s: (0, 0)),
            ],
            out_specs=pl.BlockSpec((1, strip_h, W, cout_p),
                                   lambda n, s: (n, s, 0, 0)),
            scratch_shapes=[
                pltpu.VMEM((strip_h + 4, W + 2 * _PADW, cin_p), jnp.bfloat16),
                pltpu.VMEM((strip_h + 2, W + 2 * _PADW, cout_p), jnp.bfloat16),
            ],
        ),
        compiler_params=pltpu.CompilerParams(
            dimension_semantics=("parallel", "parallel"),
            vmem_limit_bytes=_vmem_limit_bytes(),
        ),
        cost_estimate=pl.CostEstimate(
            flops=int(flops),
            transcendentals=0,
            bytes_accessed=int(bytes_accessed),
        ),
    )(x, x, x, w1, w2, b)


def make_params(key, in_size, out_size, n=2, eps=1e-5):
    """Deterministic parameters matching unet2dConv2d(in, out, True, n=2).

    Returns (kernel_params, ref_layers): kernel_params holds lane-padded,
    tap-major bf16 weights with the folded BN *scale* baked in plus the folded
    bias; ref_layers holds raw (OIHW weight, scale, bias) for the reference.
    """
    assert n == 2, "fused kernel implements the module default n=2"
    cin_p = _round_up(in_size, _LANE)
    cout_p = _round_up(out_size, _LANE)

    ws, bs, ref_layers = [], [], []
    cin, cinp = in_size, cin_p
    for _ in range(n):
        key, k_w, k_b, k_g, k_be, k_m, k_v = jax.random.split(key, 7)
        fan_in = cin * 9
        std = (2.0 / fan_in) ** 0.5                    # kaiming normal
        w_oihw = std * jax.random.normal(k_w, (out_size, cin, 3, 3), jnp.float32)
        b = 0.01 * jax.random.normal(k_b, (out_size,), jnp.float32)
        gamma = 1.0 + 0.05 * jax.random.normal(k_g, (out_size,), jnp.float32)
        beta = 0.05 * jax.random.normal(k_be, (out_size,), jnp.float32)
        run_mean = 0.05 * jax.random.normal(k_m, (out_size,), jnp.float32)
        run_var = 1.0 + 0.1 * jnp.abs(jax.random.normal(k_v, (out_size,), jnp.float32))

        scale = gamma / jnp.sqrt(run_var + eps)        # folded BN
        bias = (b - run_mean) * scale + beta
        ref_layers.append((w_oihw, scale, bias))

        # (O,I,kh,kw) -> (kh,kw,I,O); fold the BN scale into the output channels,
        # lane-pad channels, pack tap-major as (9, Cin_p, Cout_p) for per-tap dots.
        w = jnp.transpose(w_oihw, (2, 3, 1, 0)) * scale[None, None, None, :]
        w = jnp.pad(w, ((0, 0), (0, 0), (0, cinp - cin), (0, cout_p - out_size)))
        ws.append(w.reshape(9, cinp, cout_p).astype(jnp.bfloat16))
        bs.append(jnp.pad(bias, (0, cout_p - out_size)))

        cin, cinp = out_size, cout_p

    params = dict(
        w1=ws[0], w2=ws[1],
        bias=jnp.stack(bs, axis=0).astype(jnp.float32),    # (2, Cout_p)
        cin=in_size, cin_p=cin_p, cout=out_size, cout_p=cout_p,
    )
    return params, ref_layers


def unet2d_conv2d_forward(x_nchw, params, strip_h=None):
    """Forward pass of unet2dConv2d. Public interface is NCHW (PyTorch layout)."""
    N, Cin, H, W = x_nchw.shape
    cin_p, cout = params["cin_p"], params["cout"]
    if strip_h is None:
        strip_h = _pick_strip_height(H)
    assert H % strip_h == 0, "H must be divisible by the strip height"
    if H // strip_h > 1:
        assert strip_h >= 2 and strip_h % 2 == 0
    assert W % 8 == 0, "W must be a multiple of 8 (sublane width)"

    # Entry: NCHW -> NHWC, lane-pad channels, cast bf16 (single fused chain).
    # TODO(synk): in a full UNet keep activations NHWC + channel-padded across
    #             blocks so these entry/exit HBM passes happen once per network.
    x = jnp.transpose(x_nchw, (0, 2, 3, 1))
    x = jnp.pad(x, ((0, 0), (0, 0), (0, 0), (0, cin_p - Cin))).astype(jnp.bfloat16)
    y = _fused_conv_bn_relu_x2(x, params["w1"], params["w2"], params["bias"], strip_h)
    y = y[..., :cout]
    return jnp.transpose(y, (0, 3, 1, 2))               # NHWC -> NCHW, bf16


def _reference_forward(x_nchw, ref_layers):
    """Pure-JAX reference (lax conv, bf16 matmul inputs / f32 accumulate)."""
    x = x_nchw
    for (w_oihw, scale, bias) in ref_layers:
        y = jax.lax.conv_general_dilated(
            x.astype(jnp.bfloat16), w_oihw.astype(jnp.bfloat16),
            window_strides=(1, 1), padding=((1, 1), (1, 1)),
            dimension_numbers=("NCHW", "OIHW", "NCHW"),
            preferred_element_type=jnp.float32)
        y = y * scale[None, :, None, None] + bias[None, :, None, None]
        x = jnp.maximum(y, 0.0)
    return x


if __name__ == "__main__":
    key = jax.random.PRNGKey(0)
    k_x, k_p = jax.random.split(key)

    N, Cin, H, W = 2, 4, 16, 16
    Cout = 8
    x = jax.random.normal(k_x, (N, Cin, H, W), jnp.float32)

    params, ref_layers = make_params(k_p, in_size=Cin, out_size=Cout, n=2)

    # strip_h=8 -> 2 row strips per image: exercises the halo/boundary paths.
    out = unet2d_conv2d_forward(x, params, strip_h=8)
    out = jax.block_until_ready(out)

    ref = _reference_forward(x, ref_layers)
    assert out.shape == (N, Cout, H, W)
    assert jnp.allclose(out.astype(jnp.float32), ref, atol=4e-2, rtol=4e-2), \
        "mismatch vs reference"

    print("KERNEL_OK")
</pallas_src>

<mosaic_0001>
module attributes {stable_mosaic.version = 11 : i64} {
  func.func @_fused_kernel(%arg0: i32, %arg1: i32, %arg2: memref<1x8x16x128xbf16, #tpu.memory_space<vmem>>, %arg3: memref<1x2x16x128xbf16, #tpu.memory_space<vmem>>, %arg4: memref<1x2x16x128xbf16, #tpu.memory_space<vmem>>, %arg5: memref<9x128x128xbf16, #tpu.memory_space<vmem>>, %arg6: memref<9x128x128xbf16, #tpu.memory_space<vmem>>, %arg7: memref<2x128xf32, #tpu.memory_space<vmem>>, %arg8: memref<1x8x16x128xbf16, #tpu.memory_space<vmem>>, %arg9: memref<12x32x128xbf16, #tpu.memory_space<vmem>>, %arg10: memref<10x32x128xbf16, #tpu.memory_space<vmem>>) attributes {dimension_semantics = [#tpu.dimension_semantics<parallel>, #tpu.dimension_semantics<parallel>], iteration_bounds = array<i64: 2, 2>, scalar_prefetch = 0 : i64, scratch_operands = 2 : i64, tpu.core_type = #tpu.core_type<tc>, window_params = [{transform_indices = @transform_0, window_bounds = array<i64: 1, 8, 16, 128>}, {transform_indices = @transform_1, window_bounds = array<i64: 1, 2, 16, 128>}, {transform_indices = @transform_2, window_bounds = array<i64: 1, 2, 16, 128>}, {pipeline_mode = #tpu.pipeline_mode<synchronous>, transform_indices = @transform_3, window_bounds = array<i64: 9, 128, 128>}, {pipeline_mode = #tpu.pipeline_mode<synchronous>, transform_indices = @transform_4, window_bounds = array<i64: 9, 128, 128>}, {pipeline_mode = #tpu.pipeline_mode<synchronous>, transform_indices = @transform_5, window_bounds = array<i64: 2, 128>}, {transform_indices = @transform_6, window_bounds = array<i64: 1, 8, 16, 128>}]} {
    %cst = arith.constant 0.000000e+00 : bf16
    %0 = vector.broadcast %cst : bf16 to vector<12x8x128xbf16>
    %c0 = arith.constant 0 : index
    %c0_0 = arith.constant 0 : index
    %c0_1 = arith.constant 0 : index
    %1 = vector.load %arg9[%c0, %c0_0, %c0_1] : memref<12x32x128xbf16, #tpu.memory_space<vmem>>, vector<12x8x128xbf16>
    tpu.vector_store %arg9[%c0, %c0_0, %c0_1], %0 {strides = array<i32>} : memref<12x32x128xbf16, #tpu.memory_space<vmem>>, vector<12x8x128xbf16>,
    %c0_2 = arith.constant 0 : index
    %c24 = arith.constant 24 : index
    %c0_3 = arith.constant 0 : index
    %2 = vector.load %arg9[%c0_2, %c24, %c0_3] : memref<12x32x128xbf16, #tpu.memory_space<vmem>>, vector<12x8x128xbf16>
    tpu.vector_store %arg9[%c0_2, %c24, %c0_3], %0 {strides = array<i32>} : memref<12x32x128xbf16, #tpu.memory_space<vmem>>, vector<12x8x128xbf16>,
    %c0_4 = arith.constant 0 : index
    %c0_5 = arith.constant 0 : index
    %c0_6 = arith.constant 0 : index
    %c0_7 = arith.constant 0 : index
    %3 = vector.load %arg2[%c0_4, %c0_5, %c0_6, %c0_7] : memref<1x8x16x128xbf16, #tpu.memory_space<vmem>>, vector<1x8x16x128xbf16>
    %4 = vector.shape_cast %3 : vector<1x8x16x128xbf16> to vector<8x16x128xbf16>
    %c2 = arith.constant 2 : index
    %c8 = arith.constant 8 : index
    %c0_8 = arith.constant 0 : index
    %5 = vector.load %arg9[%c2, %c8, %c0_8] : memref<12x32x128xbf16, #tpu.memory_space<vmem>>, vector<8x16x128xbf16>
    tpu.vector_store %arg9[%c2, %c8, %c0_8], %4 {strides = array<i32>} : memref<12x32x128xbf16, #tpu.memory_space<vmem>>, vector<8x16x128xbf16>,
    %cst_9 = arith.constant 0.000000e+00 : bf16
    %6 = vector.broadcast %cst_9 : bf16 to vector<2x16x128xbf16>
    %c0_i32 = arith.constant 0 : i32
    %7 = arith.cmpi eq, %arg1, %c0_i32 : i32
    %8 = arith.extui %7 : i1 to i32
    %c0_i32_10 = arith.constant 0 : i32
    %9 = arith.cmpi ne, %8, %c0_i32_10 : i32
    scf.if %9 {
      %c0_162 = arith.constant 0 : index
      %c8_163 = arith.constant 8 : index
      %c0_164 = arith.constant 0 : index
      %157 = vector.load %arg9[%c0_162, %c8_163, %c0_164] : memref<12x32x128xbf16, #tpu.memory_space<vmem>>, vector<2x16x128xbf16>
      tpu.vector_store %arg9[%c0_162, %c8_163, %c0_164], %6 {strides = array<i32>} : memref<12x32x128xbf16, #tpu.memory_space<vmem>>, vector<2x16x128xbf16>,
    } else {
    }
    %c0_i32_11 = arith.constant 0 : i32
    %10 = arith.cmpi sgt, %arg1, %c0_i32_11 : i32
    %11 = arith.extui %10 : i1 to i32
    %c0_i32_12 = arith.constant 0 : i32
    %12 = arith.cmpi ne, %11, %c0_i32_12 : i32
    scf.if %12 {
      %c0_162 = arith.constant 0 : index
      %c0_163 = arith.constant 0 : index
      %c0_164 = arith.constant 0 : index
      %c0_165 = arith.constant 0 : index
      %157 = vector.load %arg3[%c0_162, %c0_163, %c0_164, %c0_165] : memref<1x2x16x128xbf16, #tpu.memory_space<vmem>>, vector<1x2x16x128xbf16>
      %158 = vector.shape_cast %157 : vector<1x2x16x128xbf16> to vector<2x16x128xbf16>
      %c0_166 = arith.constant 0 : index
      %c8_167 = arith.constant 8 : index
      %c0_168 = arith.constant 0 : index
      %159 = vector.load %arg9[%c0_166, %c8_167, %c0_168] : memref<12x32x128xbf16, #tpu.memory_space<vmem>>, vector<2x16x128xbf16>
      tpu.vector_store %arg9[%c0_166, %c8_167, %c0_168], %158 {strides = array<i32>} : memref<12x32x128xbf16, #tpu.memory_space<vmem>>, vector<2x16x128xbf16>,
    } else {
    }
    %c1_i32 = arith.constant 1 : i32
    %13 = arith.cmpi eq, %arg1, %c1_i32 : i32
    %14 = arith.extui %13 : i1 to i32
    %c0_i32_13 = arith.constant 0 : i32
    %15 = arith.cmpi ne, %14, %c0_i32_13 : i32
    scf.if %15 {
      %c10 = arith.constant 10 : index
      %c8_162 = arith.constant 8 : index
      %c0_163 = arith.constant 0 : index
      %157 = vector.load %arg9[%c10, %c8_162, %c0_163] : memref<12x32x128xbf16, #tpu.memory_space<vmem>>, vector<2x16x128xbf16>
      tpu.vector_store %arg9[%c10, %c8_162, %c0_163], %6 {strides = array<i32>} : memref<12x32x128xbf16, #tpu.memory_space<vmem>>, vector<2x16x128xbf16>,
    } else {
    }
    %c1_i32_14 = arith.constant 1 : i32
    %16 = arith.cmpi slt, %arg1, %c1_i32_14 : i32
    %17 = arith.extui %16 : i1 to i32
    %c0_i32_15 = arith.constant 0 : i32
    %18 = arith.cmpi ne, %17, %c0_i32_15 : i32
    scf.if %18 {
      %c0_162 = arith.constant 0 : index
      %c0_163 = arith.constant 0 : index
      %c0_164 = arith.constant 0 : index
      %c0_165 = arith.constant 0 : index
      %157 = vector.load %arg4[%c0_162, %c0_163, %c0_164, %c0_165] : memref<1x2x16x128xbf16, #tpu.memory_space<vmem>>, vector<1x2x16x128xbf16>
      %158 = vector.shape_cast %157 : vector<1x2x16x128xbf16> to vector<2x16x128xbf16>
      %c10 = arith.constant 10 : index
      %c8_166 = arith.constant 8 : index
      %c0_167 = arith.constant 0 : index
      %159 = vector.load %arg9[%c10, %c8_166, %c0_167] : memref<12x32x128xbf16, #tpu.memory_space<vmem>>, vector<2x16x128xbf16>
      tpu.vector_store %arg9[%c10, %c8_166, %c0_167], %158 {strides = array<i32>} : memref<12x32x128xbf16, #tpu.memory_space<vmem>>, vector<2x16x128xbf16>,
    } else {
    }
    %c0_16 = arith.constant 0 : index
    %c0_17 = arith.constant 0 : index
    %19 = vector.load %arg7[%c0_16, %c0_17] : memref<2x128xf32, #tpu.memory_space<vmem>>, vector<1x128xf32>
    %cst_18 = arith.constant 0.000000e+00 : f32
    %20 = vector.broadcast %cst_18 : f32 to vector<160x128xf32>
    %c0_19 = arith.constant 0 : index
    %c7 = arith.constant 7 : index
    %c0_20 = arith.constant 0 : index
    %21 = vector.load %arg9[%c0_19, %c7, %c0_20] : memref<12x32x128xbf16, #tpu.memory_space<vmem>>, vector<10x16x128xbf16>
    %22 = vector.shape_cast %21 : vector<10x16x128xbf16> to vector<160x128xbf16>
    %c0_21 = arith.constant 0 : index
    %c0_22 = arith.constant 0 : index
    %c0_23 = arith.constant 0 : index
    %23 = vector.load %arg5[%c0_21, %c0_22, %c0_23] : memref<9x128x128xbf16, #tpu.memory_space<vmem>>, vector<1x128x128xbf16>
    %24 = vector.shape_cast %23 : vector<1x128x128xbf16> to vector<128x128xbf16>
    %cst_24 = arith.constant dense<0.000000e+00> : vector<160x128xf32>
    %25 = tpu.matmul %22, %24, %cst_24 {dimension_numbers = #tpu.dot_dimension_numbers<[1], [0], [0], [1], [0, 0, 1, 1], [], []>} : vector<160x128xbf16>, vector<128x128xbf16>, vector<160x128xf32> -> vector<160x128xf32>
    %26 = arith.addf %20, %25 : vector<160x128xf32>
    %c0_25 = arith.constant 0 : index
    %c8_26 = arith.constant 8 : index
    %c0_27 = arith.constant 0 : index
    %27 = vector.load %arg9[%c0_25, %c8_26, %c0_27] : memref<12x32x128xbf16, #tpu.memory_space<vmem>>, vector<10x16x128xbf16>
    %28 = vector.shape_cast %27 : vector<10x16x128xbf16> to vector<160x128xbf16>
    %c1 = arith.constant 1 : index
    %c0_28 = arith.constant 0 : index
    %c0_29 = arith.constant 0 : index
    %29 = vector.load %arg5[%c1, %c0_28, %c0_29] : memref<9x128x128xbf16, #tpu.memory_space<vmem>>, vector<1x128x128xbf16>
    %30 = vector.shape_cast %29 : vector<1x128x128xbf16> to vector<128x128xbf16>
    %cst_30 = arith.constant dense<0.000000e+00> : vector<160x128xf32>
    %31 = tpu.matmul %28, %30, %cst_30 {dimension_numbers = #tpu.dot_dimension_numbers<[1], [0], [0], [1], [0, 0, 1, 1], [], []>} : vector<160x128xbf16>, vector<128x128xbf16>, vector<160x128xf32> -> vector<160x128xf32>
    %32 = arith.addf %26, %31 : vector<160x128xf32>
    %c0_31 = arith.constant 0 : index
    %c9 = arith.constant 9 : index
    %c0_32 = arith.constant 0 : index
    %33 = vector.load %arg9[%c0_31, %c9, %c0_32] : memref<12x32x128xbf16, #tpu.memory_space<vmem>>, vector<10x16x128xbf16>
    %34 = vector.shape_cast %33 : vector<10x16x128xbf16> to vector<160x128xbf16>
    %c2_33 = arith.constant 2 : index
    %c0_34 = arith.constant 0 : index
    %c0_35 = arith.constant 0 : index
    %35 = vector.load %arg5[%c2_33, %c0_34, %c0_35] : memref<9x128x128xbf16, #tpu.memory_space<vmem>>, vector<1x128x128xbf16>
    %36 = vector.shape_cast %35 : vector<1x128x128xbf16> to vector<128x128xbf16>
    %cst_36 = arith.constant dense<0.000000e+00> : vector<160x128xf32>
    %37 = tpu.matmul %34, %36, %cst_36 {dimension_numbers = #tpu.dot_dimension_numbers<[1], [0], [0], [1], [0, 0, 1, 1], [], []>} : vector<160x128xbf16>, vector<128x128xbf16>, vector<160x128xf32> -> vector<160x128xf32>
    %38 = arith.addf %32, %37 : vector<160x128xf32>
    %c1_37 = arith.constant 1 : index
    %c7_38 = arith.constant 7 : index
    %c0_39 = arith.constant 0 : index
    %39 = vector.load %arg9[%c1_37, %c7_38, %c0_39] : memref<12x32x128xbf16, #tpu.memory_space<vmem>>, vector<10x16x128xbf16>
    %40 = vector.shape_cast %39 : vector<10x16x128xbf16> to vector<160x128xbf16>
    %c3 = arith.constant 3 : index
    %c0_40 = arith.constant 0 : index
    %c0_41 = arith.constant 0 : index
    %41 = vector.load %arg5[%c3, %c0_40, %c0_41] : memref<9x128x128xbf16, #tpu.memory_space<vmem>>, vector<1x128x128xbf16>
    %42 = vector.shape_cast %41 : vector<1x128x128xbf16> to vector<128x128xbf16>
    %cst_42 = arith.constant dense<0.000000e+00> : vector<160x128xf32>
    %43 = tpu.matmul %40, %42, %cst_42 {dimension_numbers = #tpu.dot_dimension_numbers<[1], [0], [0], [1], [0, 0, 1, 1], [], []>} : vector<160x128xbf16>, vector<128x128xbf16>, vector<160x128xf32> -> vector<160x128xf32>
    %44 = arith.addf %38, %43 : vector<160x128xf32>
    %c1_43 = arith.constant 1 : index
    %c8_44 = arith.constant 8 : index
    %c0_45 = arith.constant 0 : index
    %45 = vector.load %arg9[%c1_43, %c8_44, %c0_45] : memref<12x32x128xbf16, #tpu.memory_space<vmem>>, vector<10x16x128xbf16>
    %46 = vector.shape_cast %45 : vector<10x16x128xbf16> to vector<160x128xbf16>
    %c4 = arith.constant 4 : index
    %c0_46 = arith.constant 0 : index
    %c0_47 = arith.constant 0 : index
    %47 = vector.load %arg5[%c4, %c0_46, %c0_47] : memref<9x128x128xbf16, #tpu.memory_space<vmem>>, vector<1x128x128xbf16>
    %48 = vector.shape_cast %47 : vector<1x128x128xbf16> to vector<128x128xbf16>
    %cst_48 = arith.constant dense<0.000000e+00> : vector<160x128xf32>
    %49 = tpu.matmul %46, %48, %cst_48 {dimension_numbers = #tpu.dot_dimension_numbers<[1], [0], [0], [1], [0, 0, 1, 1], [], []>} : vector<160x128xbf16>, vector<128x128xbf16>, vector<160x128xf32> -> vector<160x128xf32>
    %50 = arith.addf %44, %49 : vector<160x128xf32>
    %c1_49 = arith.constant 1 : index
    %c9_50 = arith.constant 9 : index
    %c0_51 = arith.constant 0 : index
    %51 = vector.load %arg9[%c1_49, %c9_50, %c0_51] : memref<12x32x128xbf16, #tpu.memory_space<vmem>>, vector<10x16x128xbf16>
    %52 = vector.shape_cast %51 : vector<10x16x128xbf16> to vector<160x128xbf16>
    %c5 = arith.constant 5 : index
    %c0_52 = arith.constant 0 : index
    %c0_53 = arith.constant 0 : index
    %53 = vector.load %arg5[%c5, %c0_52, %c0_53] : memref<9x128x128xbf16, #tpu.memory_space<vmem>>, vector<1x128x128xbf16>
    %54 = vector.shape_cast %53 : vector<1x128x128xbf16> to vector<128x128xbf16>
    %cst_54 = arith.constant dense<0.000000e+00> : vector<160x128xf32>
    %55 = tpu.matmul %52, %54, %cst_54 {dimension_numbers = #tpu.dot_dimension_numbers<[1], [0], [0], [1], [0, 0, 1, 1], [], []>} : vector<160x128xbf16>, vector<128x128xbf16>, vector<160x128xf32> -> vector<160x128xf32>
    %56 = arith.addf %50, %55 : vector<160x128xf32>
    %c2_55 = arith.constant 2 : index
    %c7_56 = arith.constant 7 : index
    %c0_57 = arith.constant 0 : index
    %57 = vector.load %arg9[%c2_55, %c7_56, %c0_57] : memref<12x32x128xbf16, #tpu.memory_space<vmem>>, vector<10x16x128xbf16>
    %58 = vector.shape_cast %57 : vector<10x16x128xbf16> to vector<160x128xbf16>
    %c6 = arith.constant 6 : index
    %c0_58 = arith.constant 0 : index
    %c0_59 = arith.constant 0 : index
    %59 = vector.load %arg5[%c6, %c0_58, %c0_59] : memref<9x128x128xbf16, #tpu.memory_space<vmem>>, vector<1x128x128xbf16>
    %60 = vector.shape_cast %59 : vector<1x128x128xbf16> to vector<128x128xbf16>
    %cst_60 = arith.constant dense<0.000000e+00> : vector<160x128xf32>
    %61 = tpu.matmul %58, %60, %cst_60 {dimension_numbers = #tpu.dot_dimension_numbers<[1], [0], [0], [1], [0, 0, 1, 1], [], []>} : vector<160x128xbf16>, vector<128x128xbf16>, vector<160x128xf32> -> vector<160x128xf32>
    %62 = arith.addf %56, %61 : vector<160x128xf32>
    %c2_61 = arith.constant 2 : index
    %c8_62 = arith.constant 8 : index
    %c0_63 = arith.constant 0 : index
    %63 = vector.load %arg9[%c2_61, %c8_62, %c0_63] : memref<12x32x128xbf16, #tpu.memory_space<vmem>>, vector<10x16x128xbf16>
    %64 = vector.shape_cast %63 : vector<10x16x128xbf16> to vector<160x128xbf16>
    %c7_64 = arith.constant 7 : index
    %c0_65 = arith.constant 0 : index
    %c0_66 = arith.constant 0 : index
    %65 = vector.load %arg5[%c7_64, %c0_65, %c0_66] : memref<9x128x128xbf16, #tpu.memory_space<vmem>>, vector<1x128x128xbf16>
    %66 = vector.shape_cast %65 : vector<1x128x128xbf16> to vector<128x128xbf16>
    %cst_67 = arith.constant dense<0.000000e+00> : vector<160x128xf32>
    %67 = tpu.matmul %64, %66, %cst_67 {dimension_numbers = #tpu.dot_dimension_numbers<[1], [0], [0], [1], [0, 0, 1, 1], [], []>} : vector<160x128xbf16>, vector<128x128xbf16>, vector<160x128xf32> -> vector<160x128xf32>
    %68 = arith.addf %62, %67 : vector<160x128xf32>
    %c2_68 = arith.constant 2 : index
    %c9_69 = arith.constant 9 : index
    %c0_70 = arith.constant 0 : index
    %69 = vector.load %arg9[%c2_68, %c9_69, %c0_70] : memref<12x32x128xbf16, #tpu.memory_space<vmem>>, vector<10x16x128xbf16>
    %70 = vector.shape_cast %69 : vector<10x16x128xbf16> to vector<160x128xbf16>
    %c8_71 = arith.constant 8 : index
    %c0_72 = arith.constant 0 : index
    %c0_73 = arith.constant 0 : index
    %71 = vector.load %arg5[%c8_71, %c0_72, %c0_73] : memref<9x128x128xbf16, #tpu.memory_space<vmem>>, vector<1x128x128xbf16>
    %72 = vector.shape_cast %71 : vector<1x128x128xbf16> to vector<128x128xbf16>
    %cst_74 = arith.constant dense<0.000000e+00> : vector<160x128xf32>
    %73 = tpu.matmul %70, %72, %cst_74 {dimension_numbers = #tpu.dot_dimension_numbers<[1], [0], [0], [1], [0, 0, 1, 1], [], []>} : vector<160x128xbf16>, vector<128x128xbf16>, vector<160x128xf32> -> vector<160x128xf32>
    %74 = arith.addf %68, %73 : vector<160x128xf32>
    %75 = vector.broadcast %19 : vector<1x128xf32> to vector<160x128xf32>
    %76 = arith.addf %74, %75 : vector<160x128xf32>
    %cst_75 = arith.constant 0.000000e+00 : f32
    %77 = vector.broadcast %cst_75 : f32 to vector<160x128xf32>
    %78 = arith.maximumf %76, %77 : vector<160x128xf32>
    %79 = vector.shape_cast %78 : vector<160x128xf32> to vector<10x16x128xf32>
    %cst_76 = arith.constant 0.000000e+00 : bf16
    %80 = vector.broadcast %cst_76 : bf16 to vector<10x8x128xbf16>
    %c0_77 = arith.constant 0 : index
    %c0_78 = arith.constant 0 : index
    %c0_79 = arith.constant 0 : index
    %81 = vector.load %arg10[%c0_77, %c0_78, %c0_79] : memref<10x32x128xbf16, #tpu.memory_space<vmem>>, vector<10x8x128xbf16>
    tpu.vector_store %arg10[%c0_77, %c0_78, %c0_79], %80 {strides = array<i32>} : memref<10x32x128xbf16, #tpu.memory_space<vmem>>, vector<10x8x128xbf16>,
    %c0_80 = arith.constant 0 : index
    %c24_81 = arith.constant 24 : index
    %c0_82 = arith.constant 0 : index
    %82 = vector.load %arg10[%c0_80, %c24_81, %c0_82] : memref<10x32x128xbf16, #tpu.memory_space<vmem>>, vector<10x8x128xbf16>
    tpu.vector_store %arg10[%c0_80, %c24_81, %c0_82], %80 {strides = array<i32>} : memref<10x32x128xbf16, #tpu.memory_space<vmem>>, vector<10x8x128xbf16>,
    %83 = arith.truncf %79 : vector<10x16x128xf32> to vector<10x16x128xbf16>
    %c0_83 = arith.constant 0 : index
    %c8_84 = arith.constant 8 : index
    %c0_85 = arith.constant 0 : index
    %84 = vector.load %arg10[%c0_83, %c8_84, %c0_85] : memref<10x32x128xbf16, #tpu.memory_space<vmem>>, vector<10x16x128xbf16>
    tpu.vector_store %arg10[%c0_83, %c8_84, %c0_85], %83 {strides = array<i32>} : memref<10x32x128xbf16, #tpu.memory_space<vmem>>, vector<10x16x128xbf16>,
    %cst_86 = arith.constant 0.000000e+00 : bf16
    %85 = vector.broadcast %cst_86 : bf16 to vector<1x16x128xbf16>
    %c0_i32_87 = arith.constant 0 : i32
    %86 = arith.cmpi eq, %arg1, %c0_i32_87 : i32
    %87 = arith.extui %86 : i1 to i32
    %c0_i32_88 = arith.constant 0 : i32
    %88 = arith.cmpi ne, %87, %c0_i32_88 : i32
    scf.if %88 {
      %c0_162 = arith.constant 0 : index
      %c8_163 = arith.constant 8 : index
      %c0_164 = arith.constant 0 : index
      %157 = vector.load %arg10[%c0_162, %c8_163, %c0_164] : memref<10x32x128xbf16, #tpu.memory_space<vmem>>, vector<1x16x128xbf16>
      tpu.vector_store %arg10[%c0_162, %c8_163, %c0_164], %85 {strides = array<i32>} : memref<10x32x128xbf16, #tpu.memory_space<vmem>>, vector<1x16x128xbf16>,
    } else {
    }
    %c1_i32_89 = arith.constant 1 : i32
    %89 = arith.cmpi eq, %arg1, %c1_i32_89 : i32
    %90 = arith.extui %89 : i1 to i32
    %c0_i32_90 = arith.constant 0 : i32
    %91 = arith.cmpi ne, %90, %c0_i32_90 : i32
    scf.if %91 {
      %c9_162 = arith.constant 9 : index
      %c8_163 = arith.constant 8 : index
      %c0_164 = arith.constant 0 : index
      %157 = vector.load %arg10[%c9_162, %c8_163, %c0_164] : memref<10x32x128xbf16, #tpu.memory_space<vmem>>, vector<1x16x128xbf16>
      tpu.vector_store %arg10[%c9_162, %c8_163, %c0_164], %85 {strides = array<i32>} : memref<10x32x128xbf16, #tpu.memory_space<vmem>>, vector<1x16x128xbf16>,
    } else {
    }
    %c1_91 = arith.constant 1 : index
    %c0_92 = arith.constant 0 : index
    %92 = vector.load %arg7[%c1_91, %c0_92] : memref<2x128xf32, #tpu.memory_space<vmem>>, vector<1x128xf32>
    %cst_93 = arith.constant 0.000000e+00 : f32
    %93 = vector.broadcast %cst_93 : f32 to vector<128x128xf32>
    %c0_94 = arith.constant 0 : index
    %c7_95 = arith.constant 7 : index
    %c0_96 = arith.constant 0 : index
    %94 = vector.load %arg10[%c0_94, %c7_95, %c0_96] : memref<10x32x128xbf16, #tpu.memory_space<vmem>>, vector<8x16x128xbf16>
    %95 = vector.shape_cast %94 : vector<8x16x128xbf16> to vector<128x128xbf16>
    %c0_97 = arith.constant 0 : index
    %c0_98 = arith.constant 0 : index
    %c0_99 = arith.constant 0 : index
    %96 = vector.load %arg6[%c0_97, %c0_98, %c0_99] : memref<9x128x128xbf16, #tpu.memory_space<vmem>>, vector<1x128x128xbf16>
    %97 = vector.shape_cast %96 : vector<1x128x128xbf16> to vector<128x128xbf16>
    %cst_100 = arith.constant dense<0.000000e+00> : vector<128x128xf32>
    %98 = tpu.matmul %95, %97, %cst_100 {dimension_numbers = #tpu.dot_dimension_numbers<[1], [0], [0], [1], [0, 0, 1, 1], [], []>} : vector<128x128xbf16>, vector<128x128xbf16>, vector<128x128xf32> -> vector<128x128xf32>
    %99 = arith.addf %93, %98 : vector<128x128xf32>
    %c0_101 = arith.constant 0 : index
    %c8_102 = arith.constant 8 : index
    %c0_103 = arith.constant 0 : index
    %100 = vector.load %arg10[%c0_101, %c8_102, %c0_103] : memref<10x32x128xbf16, #tpu.memory_space<vmem>>, vector<8x16x128xbf16>
    %101 = vector.shape_cast %100 : vector<8x16x128xbf16> to vector<128x128xbf16>
    %c1_104 = arith.constant 1 : index
    %c0_105 = arith.constant 0 : index
    %c0_106 = arith.constant 0 : index
    %102 = vector.load %arg6[%c1_104, %c0_105, %c0_106] : memref<9x128x128xbf16, #tpu.memory_space<vmem>>, vector<1x128x128xbf16>
    %103 = vector.shape_cast %102 : vector<1x128x128xbf16> to vector<128x128xbf16>
    %cst_107 = arith.constant dense<0.000000e+00> : vector<128x128xf32>
    %104 = tpu.matmul %101, %103, %cst_107 {dimension_numbers = #tpu.dot_dimension_numbers<[1], [0], [0], [1], [0, 0, 1, 1], [], []>} : vector<128x128xbf16>, vector<128x128xbf16>, vector<128x128xf32> -> vector<128x128xf32>
    %105 = arith.addf %99, %104 : vector<128x128xf32>
    %c0_108 = arith.constant 0 : index
    %c9_109 = arith.constant 9 : index
    %c0_110 = arith.constant 0 : index
    %106 = vector.load %arg10[%c0_108, %c9_109, %c0_110] : memref<10x32x128xbf16, #tpu.memory_space<vmem>>, vector<8x16x128xbf16>
    %107 = vector.shape_cast %106 : vector<8x16x128xbf16> to vector<128x128xbf16>
    %c2_111 = arith.constant 2 : index
    %c0_112 = arith.constant 0 : index
    %c0_113 = arith.constant 0 : index
    %108 = vector.load %arg6[%c2_111, %c0_112, %c0_113] : memref<9x128x128xbf16, #tpu.memory_space<vmem>>, vector<1x128x128xbf16>
    %109 = vector.shape_cast %108 : vector<1x128x128xbf16> to vector<128x128xbf16>
    %cst_114 = arith.constant dense<0.000000e+00> : vector<128x128xf32>
    %110 = tpu.matmul %107, %109, %cst_114 {dimension_numbers = #tpu.dot_dimension_numbers<[1], [0], [0], [1], [0, 0, 1, 1], [], []>} : vector<128x128xbf16>, vector<128x128xbf16>, vector<128x128xf32> -> vector<128x128xf32>
    %111 = arith.addf %105, %110 : vector<128x128xf32>
    %c1_115 = arith.constant 1 : index
    %c7_116 = arith.constant 7 : index
    %c0_117 = arith.constant 0 : index
    %112 = vector.load %arg10[%c1_115, %c7_116, %c0_117] : memref<10x32x128xbf16, #tpu.memory_space<vmem>>, vector<8x16x128xbf16>
    %113 = vector.shape_cast %112 : vector<8x16x128xbf16> to vector<128x128xbf16>
    %c3_118 = arith.constant 3 : index
    %c0_119 = arith.constant 0 : index
    %c0_120 = arith.constant 0 : index
    %114 = vector.load %arg6[%c3_118, %c0_119, %c0_120] : memref<9x128x128xbf16, #tpu.memory_space<vmem>>, vector<1x128x128xbf16>
    %115 = vector.shape_cast %114 : vector<1x128x128xbf16> to vector<128x128xbf16>
    %cst_121 = arith.constant dense<0.000000e+00> : vector<128x128xf32>
    %116 = tpu.matmul %113, %115, %cst_121 {dimension_numbers = #tpu.dot_dimension_numbers<[1], [0], [0], [1], [0, 0, 1, 1], [], []>} : vector<128x128xbf16>, vector<128x128xbf16>, vector<128x128xf32> -> vector<128x128xf32>
    %117 = arith.addf %111, %116 : vector<128x128xf32>
    %c1_122 = arith.constant 1 : index
    %c8_123 = arith.constant 8 : index
    %c0_124 = arith.constant 0 : index
    %118 = vector.load %arg10[%c1_122, %c8_123, %c0_124] : memref<10x32x128xbf16, #tpu.memory_space<vmem>>, vector<8x16x128xbf16>
    %119 = vector.shape_cast %118 : vector<8x16x128xbf16> to vector<128x128xbf16>
    %c4_125 = arith.constant 4 : index
    %c0_126 = arith.constant 0 : index
    %c0_127 = arith.constant 0 : index
    %120 = vector.load %arg6[%c4_125, %c0_126, %c0_127] : memref<9x128x128xbf16, #tpu.memory_space<vmem>>, vector<1x128x128xbf16>
    %121 = vector.shape_cast %120 : vector<1x128x128xbf16> to vector<128x128xbf16>
    %cst_128 = arith.constant dense<0.000000e+00> : vector<128x128xf32>
    %122 = tpu.matmul %119, %121, %cst_128 {dimension_numbers = #tpu.dot_dimension_numbers<[1], [0], [0], [1], [0, 0, 1, 1], [], []>} : vector<128x128xbf16>, vector<128x128xbf16>, vector<128x128xf32> -> vector<128x128xf32>
    %123 = arith.addf %117, %122 : vector<128x128xf32>
    %c1_129 = arith.constant 1 : index
    %c9_130 = arith.constant 9 : index
    %c0_131 = arith.constant 0 : index
    %124 = vector.load %arg10[%c1_129, %c9_130, %c0_131] : memref<10x32x128xbf16, #tpu.memory_space<vmem>>, vector<8x16x128xbf16>
    %125 = vector.shape_cast %124 : vector<8x16x128xbf16> to vector<128x128xbf16>
    %c5_132 = arith.constant 5 : index
    %c0_133 = arith.constant 0 : index
    %c0_134 = arith.constant 0 : index
    %126 = vector.load %arg6[%c5_132, %c0_133, %c0_134] : memref<9x128x128xbf16, #tpu.memory_space<vmem>>, vector<1x128x128xbf16>
    %127 = vector.shape_cast %126 : vector<1x128x128xbf16> to vector<128x128xbf16>
    %cst_135 = arith.constant dense<0.000000e+00> : vector<128x128xf32>
    %128 = tpu.matmul %125, %127, %cst_135 {dimension_numbers = #tpu.dot_dimension_numbers<[1], [0], [0], [1], [0, 0, 1, 1], [], []>} : vector<128x128xbf16>, vector<128x128xbf16>, vector<128x128xf32> -> vector<128x128xf32>
    %129 = arith.addf %123, %128 : vector<128x128xf32>
    %c2_136 = arith.constant 2 : index
    %c7_137 = arith.constant 7 : index
    %c0_138 = arith.constant 0 : index
    %130 = vector.load %arg10[%c2_136, %c7_137, %c0_138] : memref<10x32x128xbf16, #tpu.memory_space<vmem>>, vector<8x16x128xbf16>
    %131 = vector.shape_cast %130 : vector<8x16x128xbf16> to vector<128x128xbf16>
    %c6_139 = arith.constant 6 : index
    %c0_140 = arith.constant 0 : index
    %c0_141 = arith.constant 0 : index
    %132 = vector.load %arg6[%c6_139, %c0_140, %c0_141] : memref<9x128x128xbf16, #tpu.memory_space<vmem>>, vector<1x128x128xbf16>
    %133 = vector.shape_cast %132 : vector<1x128x128xbf16> to vector<128x128xbf16>
    %cst_142 = arith.constant dense<0.000000e+00> : vector<128x128xf32>
    %134 = tpu.matmul %131, %133, %cst_142 {dimension_numbers = #tpu.dot_dimension_numbers<[1], [0], [0], [1], [0, 0, 1, 1], [], []>} : vector<128x128xbf16>, vector<128x128xbf16>, vector<128x128xf32> -> vector<128x128xf32>
    %135 = arith.addf %129, %134 : vector<128x128xf32>
    %c2_143 = arith.constant 2 : index
    %c8_144 = arith.constant 8 : index
    %c0_145 = arith.constant 0 : index
    %136 = vector.load %arg10[%c2_143, %c8_144, %c0_145] : memref<10x32x128xbf16, #tpu.memory_space<vmem>>, vector<8x16x128xbf16>
    %137 = vector.shape_cast %136 : vector<8x16x128xbf16> to vector<128x128xbf16>
    %c7_146 = arith.constant 7 : index
    %c0_147 = arith.constant 0 : index
    %c0_148 = arith.constant 0 : index
    %138 = vector.load %arg6[%c7_146, %c0_147, %c0_148] : memref<9x128x128xbf16, #tpu.memory_space<vmem>>, vector<1x128x128xbf16>
    %139 = vector.shape_cast %138 : vector<1x128x128xbf16> to vector<128x128xbf16>
    %cst_149 = arith.constant dense<0.000000e+00> : vector<128x128xf32>
    %140 = tpu.matmul %137, %139, %cst_149 {dimension_numbers = #tpu.dot_dimension_numbers<[1], [0], [0], [1], [0, 0, 1, 1], [], []>} : vector<128x128xbf16>, vector<128x128xbf16>, vector<128x128xf32> -> vector<128x128xf32>
    %141 = arith.addf %135, %140 : vector<128x128xf32>
    %c2_150 = arith.constant 2 : index
    %c9_151 = arith.constant 9 : index
    %c0_152 = arith.constant 0 : index
    %142 = vector.load %arg10[%c2_150, %c9_151, %c0_152] : memref<10x32x128xbf16, #tpu.memory_space<vmem>>, vector<8x16x128xbf16>
    %143 = vector.shape_cast %142 : vector<8x16x128xbf16> to vector<128x128xbf16>
    %c8_153 = arith.constant 8 : index
    %c0_154 = arith.constant 0 : index
    %c0_155 = arith.constant 0 : index
    %144 = vector.load %arg6[%c8_153, %c0_154, %c0_155] : memref<9x128x128xbf16, #tpu.memory_space<vmem>>, vector<1x128x128xbf16>
    %145 = vector.shape_cast %144 : vector<1x128x128xbf16> to vector<128x128xbf16>
    %cst_156 = arith.constant dense<0.000000e+00> : vector<128x128xf32>
    %146 = tpu.matmul %143, %145, %cst_156 {dimension_numbers = #tpu.dot_dimension_numbers<[1], [0], [0], [1], [0, 0, 1, 1], [], []>} : vector<128x128xbf16>, vector<128x128xbf16>, vector<128x128xf32> -> vector<128x128xf32>
    %147 = arith.addf %141, %146 : vector<128x128xf32>
    %148 = vector.broadcast %92 : vector<1x128xf32> to vector<128x128xf32>
    %149 = arith.addf %147, %148 : vector<128x128xf32>
    %cst_157 = arith.constant 0.000000e+00 : f32
    %150 = vector.broadcast %cst_157 : f32 to vector<128x128xf32>
    %151 = arith.maximumf %149, %150 : vector<128x128xf32>
    %152 = vector.shape_cast %151 : vector<128x128xf32> to vector<8x16x128xf32>
    %153 = arith.truncf %152 : vector<8x16x128xf32> to vector<8x16x128xbf16>
    %c0_158 = arith.constant 0 : index
    %c0_159 = arith.constant 0 : index
    %c0_160 = arith.constant 0 : index
    %c0_161 = arith.constant 0 : index
    %154 = vector.load %arg8[%c0_158, %c0_159, %c0_160, %c0_161] : memref<1x8x16x128xbf16, #tpu.memory_space<vmem>>, vector<1x8x16x128xbf16>
    %155 = vector.shape_cast %154 : vector<1x8x16x128xbf16> to vector<8x16x128xbf16>
    %156 = vector.shape_cast %153 : vector<8x16x128xbf16> to vector<1x8x16x128xbf16>
    tpu.vector_store %arg8[%c0_158, %c0_159, %c0_160, %c0_161], %156 {strides = array<i32>} : memref<1x8x16x128xbf16, #tpu.memory_space<vmem>>, vector<1x8x16x128xbf16>,
    return
  }
  func.func @transform_0(%arg0: i32, %arg1: i32) -> (i32, i32, i32, i32) {
    %c0_i32 = arith.constant 0 : i32
    %c0_i32_0 = arith.constant 0 : i32
    %c0_i32_1 = arith.constant 0 : i32
    return %arg0, %arg1, %c0_i32, %c0_i32_0 : i32, i32, i32, i32
  }
  func.func @transform_1(%arg0: i32, %arg1: i32) -> (i32, i32, i32, i32) {
    %c4_i32 = arith.constant 4 : i32
    %0 = arith.muli %arg1, %c4_i32 : i32
    %c1_i32 = arith.constant 1 : i32
    %1 = arith.subi %0, %c1_i32 : i32
    %c0_i32 = arith.constant 0 : i32
    %2 = arith.maxsi %1, %c0_i32 : i32
    %c0_i32_0 = arith.constant 0 : i32
    %c0_i32_1 = arith.constant 0 : i32
    %c0_i32_2 = arith.constant 0 : i32
    return %arg0, %2, %c0_i32_0, %c0_i32_1 : i32, i32, i32, i32
  }
  func.func @transform_2(%arg0: i32, %arg1: i32) -> (i32, i32, i32, i32) {
    %c1_i32 = arith.constant 1 : i32
    %0 = arith.addi %arg1, %c1_i32 : i32
    %c4_i32 = arith.constant 4 : i32
    %1 = arith.muli %0, %c4_i32 : i32
    %c7_i32 = arith.constant 7 : i32
    %2 = arith.minsi %1, %c7_i32 : i32
    %c0_i32 = arith.constant 0 : i32
    %c0_i32_0 = arith.constant 0 : i32
    %c0_i32_1 = arith.constant 0 : i32
    return %arg0, %2, %c0_i32, %c0_i32_0 : i32, i32, i32, i32
  }
  func.func @transform_3(%arg0: i32, %arg1: i32) -> (i32, i32, i32) {
    %c0_i32 = arith.constant 0 : i32
    %c0_i32_0 = arith.constant 0 : i32
    %c0_i32_1 = arith.constant 0 : i32
    %c0_i32_2 = arith.constant 0 : i32
    return %c0_i32, %c0_i32_0, %c0_i32_1 : i32, i32, i32
  }
  func.func @transform_4(%arg0: i32, %arg1: i32) -> (i32, i32, i32) {
    %c0_i32 = arith.constant 0 : i32
    %c0_i32_0 = arith.constant 0 : i32
    %c0_i32_1 = arith.constant 0 : i32
    %c0_i32_2 = arith.constant 0 : i32
    return %c0_i32, %c0_i32_0, %c0_i32_1 : i32, i32, i32
  }
  func.func @transform_5(%arg0: i32, %arg1: i32) -> (i32, i32) {
    %c0_i32 = arith.constant 0 : i32
    %c0_i32_0 = arith.constant 0 : i32
    %c0_i32_1 = arith.constant 0 : i32
    return %c0_i32, %c0_i32_0 : i32, i32
  }
  func.func @transform_6(%arg0: i32, %arg1: i32) -> (i32, i32, i32, i32) {
    %c0_i32 = arith.constant 0 : i32
    %c0_i32_0 = arith.constant 0 : i32
    %c0_i32_1 = arith.constant 0 : i32
    return %arg0, %arg1, %c0_i32, %c0_i32_0 : i32, i32, i32, i32
  }
}

</mosaic_0001>

<llo_original>
// kernel: tpu_custom_call.1
$region0: #{tpu_custom_call.1}
  #allocation0 [shape = 'u32[]', space=smem, size = 0x4, offset = 0x4, fixed_abs, tag = 'smem constant byte address 0x4 - core index']
  #allocation1 [shape = 'u32[144,128]{1,0:T(1,128)}', space=vmem, size = 0x12000, scoped, tag = 'internal scratch']
  #allocation2 [shape = 'bf16[12,32,128]{2,1,0:T(8,128)(2,1)}', space=vmem, size = 0x18000, scoped, tag = 'scratch operand']
  #allocation3 [shape = 'bf16[10,32,128]{2,1,0:T(8,128)(2,1)}', space=vmem, size = 0x14000, scoped, tag = 'scratch operand']
  %s0 = inlined_call_operand.hbm [shape: bf16[2,16,16,128], index: 0, kind: input, shape index: {}]
  %s1 = inlined_call_operand.hbm [shape: bf16[2,16,16,128], index: 1, kind: input, shape index: {}]
  %s2 = inlined_call_operand.hbm [shape: bf16[2,16,16,128], index: 2, kind: input, shape index: {}]
  %s3 = inlined_call_operand.hbm [shape: bf16[9,128,128], index: 3, kind: input, shape index: {}]
  %s4 = inlined_call_operand.hbm [shape: bf16[9,128,128], index: 4, kind: input, shape index: {}]
  %s5 = inlined_call_operand.vmem [shape: f32[2,128], index: 5, kind: input, shape index: {}]
  %s6 = inlined_call_operand.hbm [shape: bf16[2,16,16,128], index: 6, kind: output, shape index: {}]
  %s7 = sld [smem:[#allocation0]]
  $region101: #{tpu_custom_call.1} parent=0
    _
  %s9 = ssub.s32 1, %s7
  %s10 = scalar_select 0, %s9, %s7
  $region1: #{tpu_custom_call.1} parent=0
    #allocation4 [shape = 'u8[65536]{0}', space=vmem, size = 0x10000, scoped, tag = 'input window, operand 0']
    #allocation5 [shape = 's32[2]{0}', space=sflag, size = 0x8, scoped, tag = 'scoped memory for tpu_custom_call.1']
    #allocation6 [shape = 's32[2]{0}', space=sflag, size = 0x8, scoped, tag = 'scoped memory for tpu_custom_call.1']
    #allocation7 [shape = 'u8[16384]{0}', space=vmem, size = 0x4000, scoped, tag = 'input window, operand 1']
    #allocation8 [shape = 's32[2]{0}', space=sflag, size = 0x8, scoped, tag = 'scoped memory for tpu_custom_call.1']
    #allocation9 [shape = 'u8[16384]{0}', space=vmem, size = 0x4000, scoped, tag = 'input window, operand 2']
    #allocation10 [shape = 'u8[294912]{0}', space=vmem, size = 0x48000, scoped, tag = 'input window, operand 3, single buffered']
    #allocation11 [shape = 's32[1]{0}', space=sflag, size = 0x4, scoped, tag = 'scoped memory for tpu_custom_call.1']
    #allocation12 [shape = 'u8[294912]{0}', space=vmem, size = 0x48000, scoped, tag = 'input window, operand 4, single buffered']
    #allocation13 [shape = 'u8[65536]{0}', space=vmem, size = 0x10000, scoped, tag = 'output window, operand 0']
    %11 = vsyncpa [#allocation5], 0
    %s12 = scalar_lea.sflag [#allocation5], 1
    %13 = vsyncpa %s12, 0
    %14 = vsyncpa [#allocation8], 0
    %s15 = scalar_lea.sflag [#allocation8], 1
    %16 = vsyncpa %s15, 0
    %17 = vsyncpa [#allocation11], 0
    %18 = vsyncpa [#allocation6], 0
    %s19 = scalar_lea.sflag [#allocation6], 1
    %20 = vsyncpa %s19, 0
    loop: start=0, step=1, limit=6
    $region2: #{tpu_custom_call.1} parent=1 // loop_pre_header
      _
    $region3: #{tpu_custom_call.1} parent=1 // loop_header
      %s22 = sphi 0, %s26
      %p23 = scmp.ge.s32.totalorder %s22, 6
      %s29 = sphi 0, %s41
      %s30 = sphi 0, %s37
      %s31 = sphi 0, %s29
      %s32 = sphi 0, %s30
      %s33 = sphi 0, %s31
      %s34 = sphi 0, %s32
      %s46 = sphi 0, %s48
      %s49 = sphi 0, %s46
      %s50 = sphi 0, %s49
      %s66 = sphi 0, %s50
      %s82 = sphi 0, %s84
      %s85 = sphi 0, %s82
      %s86 = sphi 0, %s85
      %s102 = sphi 0, %s86
      %s118 = sphi 0, %s120
      %s121 = sphi 0, %s118
      %s122 = sphi 0, %s121
      %s138 = sphi 0, %s122
      %s142 = sphi 0, %s142
      %s144 = sphi 0, %s142
      %s145 = sphi 0, %s144
      %s159 = sphi 0, %s145
      %s163 = sphi 0, %s163
      %s165 = sphi 0, %s163
      %s166 = sphi 0, %s165
      %s180 = sphi 0, %s166
      %s184 = sphi 0, %s184
      %s186 = sphi 0, %s184
      %s187 = sphi 0, %s186
      %s201 = sphi 0, %s187
      %s209 = sphi 0, %s211
      %s212 = sphi 0, %s209
      %s213 = sphi 0, %s212
      %s229 = sphi 0, %s213
    $region4: #{tpu_custom_call.1} parent=1 // loop_header_branch
      %25 = sbr.rel (%p23) target = $region8
    $region5: #{tpu_custom_call.1} parent=1 // loop_body
      %s27 = ssub.s32 %s22, 1
      %s28 = ssub.s32 %s22, 2
      %s35 = sadd.s32 1, %s30
      %p36 = scmp.ge.s32.totalorder %s35, 2
      %s37 = scalar_select %p36, 0, %s35
      %s38 = sadd.s32 1, %s29
      %s39 = scalar_select %p36, %s38, %s29
      %p40 = scmp.ge.s32.totalorder %s39, 2
      %s41 = scalar_select %p40, 0, %s39
      %s42 = ssub.s32 %s29, %s41
      %s43 = ssub.s32 %s30, %s37
      %s44 = sor.u32 %s42, %s43
      %p45 = scmp.eq.s32.totalorder %s44, 0
      %s47 = sadd.s32 %s46, 1
      %s48 = scalar_select %p45, %s46, %s47
      %p51 = pneg %p45
      %p52 = scmp.eq.s32.totalorder %s22, 3
      %p53 = por %p51, %p52
      %p54 = scmp.ne.s32.totalorder %s46, %s49
      %p55 = scmp.eq.s32.totalorder %s22, 0
      %p56 = por %p54, %p55
      %p57 = scmp.ne.s32.totalorder %s46, %s49
      %p58 = scmp.eq.s32.totalorder %s27, 3
      %p59 = por %p57, %p58
      %p60 = scmp.ne.s32.totalorder %s49, %s50
      %p61 = scmp.eq.s32.totalorder %s27, 0
      %p62 = por %p60, %p61
      %p63 = scmp.ne.s32.totalorder %s49, %s50
      %p64 = scmp.eq.s32.totalorder %s28, 3
      %p65 = por %p63, %p64
      %p67 = scmp.ne.s32.totalorder %s50, %s66
      %p68 = scmp.eq.s32.totalorder %s28, 0
      %p69 = por %p67, %p68
      %s70 = smul.u32 %s30, 4
      %s71 = ssub.s32 %s70, 1
      %p72 = scmp.gt.s32.totalorder %s71, 0
      %s73 = scalar_select %p72, %s71, 0
      %s74 = smul.u32 %s37, 4
      %s75 = ssub.s32 %s74, 1
      %p76 = scmp.gt.s32.totalorder %s75, 0
      %s77 = scalar_select %p76, %s75, 0
      %s78 = ssub.s32 %s29, %s41
      %s79 = ssub.s32 %s73, %s77
      %s80 = sor.u32 %s78, %s79
      %p81 = scmp.eq.s32.totalorder %s80, 0
      %s83 = sadd.s32 %s82, 1
      %s84 = scalar_select %p81, %s82, %s83
      %p87 = pneg %p81
      %p88 = scmp.eq.s32.totalorder %s22, 3
      %p89 = por %p87, %p88
      %p90 = scmp.ne.s32.totalorder %s82, %s85
      %p91 = scmp.eq.s32.totalorder %s22, 0
      %p92 = por %p90, %p91
      %p93 = scmp.ne.s32.totalorder %s82, %s85
      %p94 = scmp.eq.s32.totalorder %s27, 3
      %p95 = por %p93, %p94
      %p96 = scmp.ne.s32.totalorder %s85, %s86
      %p97 = scmp.eq.s32.totalorder %s27, 0
      %p98 = por %p96, %p97
      %p99 = scmp.ne.s32.totalorder %s85, %s86
      %p100 = scmp.eq.s32.totalorder %s28, 3
      %p101 = por %p99, %p100
      %p103 = scmp.ne.s32.totalorder %s86, %s102
      %p104 = scmp.eq.s32.totalorder %s28, 0
      %p105 = por %p103, %p104
      %s106 = sadd.s32 %s30, 1
      %s107 = smul.u32 %s106, 4
      %p108 = scmp.lt.s32.totalorder %s107, 7
      %s109 = scalar_select %p108, %s107, 7
      %s110 = sadd.s32 %s37, 1
      %s111 = smul.u32 %s110, 4
      %p112 = scmp.lt.s32.totalorder %s111, 7
      %s113 = scalar_select %p112, %s111, 7
      %s114 = ssub.s32 %s29, %s41
      %s115 = ssub.s32 %s109, %s113
      %s116 = sor.u32 %s114, %s115
      %p117 = scmp.eq.s32.totalorder %s116, 0
      %s119 = sadd.s32 %s118, 1
      %s120 = scalar_select %p117, %s118, %s119
      %p123 = pneg %p117
      %p124 = scmp.eq.s32.totalorder %s22, 3
      %p125 = por %p123, %p124
      %p126 = scmp.ne.s32.totalorder %s118, %s121
      %p127 = scmp.eq.s32.totalorder %s22, 0
      %p128 = por %p126, %p127
      %p129 = scmp.ne.s32.totalorder %s118, %s121
      %p130 = scmp.eq.s32.totalorder %s27, 3
      %p131 = por %p129, %p130
      %p132 = scmp.ne.s32.totalorder %s121, %s122
      %p133 = scmp.eq.s32.totalorder %s27, 0
      %p134 = por %p132, %p133
      %p135 = scmp.ne.s32.totalorder %s121, %s122
      %p136 = scmp.eq.s32.totalorder %s28, 3
      %p137 = por %p135, %p136
      %p139 = scmp.ne.s32.totalorder %s122, %s138
      %p140 = scmp.eq.s32.totalorder %s28, 0
      %p141 = por %p139, %p140
      %s143 = sadd.s32 %s142, 1
      %p146 = scmp.eq.s32.totalorder %s22, 3
      %p147 = scmp.ne.s32.totalorder %s142, %s144
      %p148 = scmp.eq.s32.totalorder %s22, 0
      %p149 = por %p147, %p148
      %p150 = scmp.ne.s32.totalorder %s142, %s144
      %p151 = scmp.eq.s32.totalorder %s27, 3
      %p152 = por %p150, %p151
      %p153 = scmp.ne.s32.totalorder %s144, %s145
      %p154 = scmp.eq.s32.totalorder %s27, 0
      %p155 = por %p153, %p154
      %p156 = scmp.ne.s32.totalorder %s144, %s145
      %p157 = scmp.eq.s32.totalorder %s28, 3
      %p158 = por %p156, %p157
      %p160 = scmp.ne.s32.totalorder %s145, %s159
      %p161 = scmp.eq.s32.totalorder %s28, 0
      %p162 = por %p160, %p161
      %s164 = sadd.s32 %s163, 1
      %p167 = scmp.eq.s32.totalorder %s22, 3
      %p168 = scmp.ne.s32.totalorder %s163, %s165
      %p169 = scmp.eq.s32.totalorder %s22, 0
      %p170 = por %p168, %p169
      %p171 = scmp.ne.s32.totalorder %s163, %s165
      %p172 = scmp.eq.s32.totalorder %s27, 3
      %p173 = por %p171, %p172
      %p174 = scmp.ne.s32.totalorder %s165, %s166
      %p175 = scmp.eq.s32.totalorder %s27, 0
      %p176 = por %p174, %p175
      %p177 = scmp.ne.s32.totalorder %s165, %s166
      %p178 = scmp.eq.s32.totalorder %s28, 3
      %p179 = por %p177, %p178
      %p181 = scmp.ne.s32.totalorder %s166, %s180
      %p182 = scmp.eq.s32.totalorder %s28, 0
      %p183 = por %p181, %p182
      %s185 = sadd.s32 %s184, 1
      %p188 = scmp.eq.s32.totalorder %s22, 3
      %p189 = scmp.ne.s32.totalorder %s184, %s186
      %p190 = scmp.eq.s32.totalorder %s22, 0
      %p191 = por %p189, %p190
      %p192 = scmp.ne.s32.totalorder %s184, %s186
      %p193 = scmp.eq.s32.totalorder %s27, 3
      %p194 = por %p192, %p193
      %p195 = scmp.ne.s32.totalorder %s186, %s187
      %p196 = scmp.eq.s32.totalorder %s27, 0
      %p197 = por %p195, %p196
      %p198 = scmp.ne.s32.totalorder %s186, %s187
      %p199 = scmp.eq.s32.totalorder %s28, 3
      %p200 = por %p198, %p199
      %p202 = scmp.ne.s32.totalorder %s187, %s201
      %p203 = scmp.eq.s32.totalorder %s28, 0
      %p204 = por %p202, %p203
      %s205 = ssub.s32 %s29, %s41
      %s206 = ssub.s32 %s30, %s37
      %s207 = sor.u32 %s205, %s206
      %p208 = scmp.eq.s32.totalorder %s207, 0
      %s210 = sadd.s32 %s209, 1
      %s211 = scalar_select %p208, %s209, %s210
      %p214 = pneg %p208
      %p215 = scmp.eq.s32.totalorder %s22, 3
      %p216 = por %p214, %p215
      %p217 = scmp.ne.s32.totalorder %s209, %s212
      %p218 = scmp.eq.s32.totalorder %s22, 0
      %p219 = por %p217, %p218
      %p220 = scmp.ne.s32.totalorder %s209, %s212
      %p221 = scmp.eq.s32.totalorder %s27, 3
      %p222 = por %p220, %p221
      %p223 = scmp.ne.s32.totalorder %s212, %s213
      %p224 = scmp.eq.s32.totalorder %s27, 0
      %p225 = por %p223, %p224
      %p226 = scmp.ne.s32.totalorder %s212, %s213
      %p227 = scmp.eq.s32.totalorder %s28, 3
      %p228 = por %p226, %p227
      %p230 = scmp.ne.s32.totalorder %s213, %s229
      %p231 = scmp.eq.s32.totalorder %s28, 0
      %p232 = por %p230, %p231
      %p233 = scmp.le.s32.totalorder 1, %s22
      %p234 = scmp.lt.s32.totalorder %s22, 5
      %p235 = pnand %p233, %p234
      %p236 = pneg %p235
      // Predicated region
      $region9: #{tpu_custom_call.1} parent=5 // pred_check
        _
      $region10: #{tpu_custom_call.1} parent=5 // pred_check_branch
        %238 = sbr.rel (%p235) target = $region12
      $region11: #{tpu_custom_call.1} parent=5 // pred_region
        %s239 = ssub.s32 %s22, 1
        // Predicated region
        $region13: #{tpu_custom_call.1} parent=11 // pred_check
          %p240 = pneg %p155
        $region14: #{tpu_custom_call.1} parent=11 // pred_check_branch
          %242 = sbr.rel (%p240) target = $region16
        $region15: #{tpu_custom_call.1} parent=11 // pred_region
          %s244 = ssub.s32 9216, 9216
          %245 = vsyncadd [#allocation11], %s244
          %s246 = sshll.u32 [#allocation10], 4
          %s247 = int_to_ptr.vmem [resolvable:$true] %s246
          %252 = dma.hbm_to_vmem [thread:$0]  %s3, 9216, %s247, [#allocation11], 64, 64, 4
        $region16: #{tpu_custom_call.1} parent=11 // pred_fallthru
          _
        // Predicated region
        $region17: #{tpu_custom_call.1} parent=11 // pred_check
          %p253 = pneg %p176
        $region18: #{tpu_custom_call.1} parent=11 // pred_check_branch
          %255 = sbr.rel (%p253) target = $region20
        $region19: #{tpu_custom_call.1} parent=11 // pred_region
          %s257 = ssub.s32 9216, 9216
          %258 = vsyncadd [#allocation11], %s257
          %s259 = sshll.u32 [#allocation12], 4
          %s260 = int_to_ptr.vmem [resolvable:$true] %s259
          %265 = dma.hbm_to_vmem [thread:$0]  %s4, 9216, %s260, [#allocation11], 64, 64, 4
        $region20: #{tpu_custom_call.1} parent=11 // pred_fallthru
          _
        // Predicated region
        $region21: #{tpu_custom_call.1} parent=11 // pred_check
          %p266 = pneg %p197
        $region22: #{tpu_custom_call.1} parent=11 // pred_check_branch
          %268 = sbr.rel (%p266) target = $region24
        $region23: #{tpu_custom_call.1} parent=11 // pred_region
          _
        $region24: #{tpu_custom_call.1} parent=11 // pred_fallthru
          _
      $region12: #{tpu_custom_call.1} parent=5 // pred_fallthru
        _
      %p269 = scmp.lt.s32.totalorder %s22, 4
      // Predicated region
      $region25: #{tpu_custom_call.1} parent=5 // pred_check
        %p270 = pneg %p269
      $region26: #{tpu_custom_call.1} parent=5 // pred_check_branch
        %272 = sbr.rel (%p270) target = $region28
      $region27: #{tpu_custom_call.1} parent=5 // pred_region
        // Predicated region
        $region29: #{tpu_custom_call.1} parent=27 // pred_check
          %p273 = pneg %p56
        $region30: #{tpu_custom_call.1} parent=27 // pred_check_branch
          %275 = sbr.rel (%p273) target = $region32
        $region31: #{tpu_custom_call.1} parent=27 // pred_region
          %s276 = sand.u32 %s46, 1
          %s277 = scalar_lea.sflag [#allocation5], %s276
          %s278 = sand.u32 %s46, 1
          %s279 = smul.addr %s278, 64
          %s280 = scalar_lea.vmem [#allocation4], %s279
          %s281 = smul.u32 8, %s30
          %s283 = ssub.s32 1024, 1024
          %284 = vsyncadd %s277, %s283
          %s285 = smul.addr %s281, 2
          %s286 = smul.addr %s29, 32
          %s287 = sadd.s32 %s285, %s286
          %s288 = smul.addr %s287, 64
          %s289 = scalar_lea.hbm %s0, %s288
          %s290 = sshll.u32 %s280, 4
          %s291 = int_to_ptr.vmem [resolvable:$true] %s290
          %296 = dma.hbm_to_vmem [thread:$0]  %s289, 1024, %s291, %s277, 64, 64, 4
        $region32: #{tpu_custom_call.1} parent=27 // pred_fallthru
          _
        // Predicated region
        $region33: #{tpu_custom_call.1} parent=27 // pred_check
          %p297 = pneg %p92
        $region34: #{tpu_custom_call.1} parent=27 // pred_check_branch
          %299 = sbr.rel (%p297) target = $region36
        $region35: #{tpu_custom_call.1} parent=27 // pred_region
          %s300 = sand.u32 %s22, 1
          %s301 = scalar_lea.sflag [#allocation8], %s300
          %s302 = sand.u32 %s82, 1
          %s303 = smul.addr %s302, 16
          %s304 = scalar_lea.vmem [#allocation7], %s303
          %s305 = smul.u32 %s30, 4
          %s306 = ssub.s32 %s305, 1
          %p307 = scmp.gt.s32.totalorder %s306, 0
          %s308 = scalar_select %p307, %s306, 0
          %s309 = smul.u32 2, %s308
          %s311 = ssub.s32 256, 256
          %312 = vsyncadd %s301, %s311
          %s313 = smul.addr %s309, 2
          %s314 = smul.addr %s29, 32
          %s315 = sadd.s32 %s313, %s314
          %s316 = smul.addr %s315, 64
          %s317 = scalar_lea.hbm %s1, %s316
          %s318 = sshll.u32 %s304, 4
          %s319 = int_to_ptr.vmem [resolvable:$true] %s318
          %324 = dma.hbm_to_vmem [thread:$0]  %s317, 256, %s319, %s301, 64, 64, 4
        $region36: #{tpu_custom_call.1} parent=27 // pred_fallthru
          _
        // Predicated region
        $region37: #{tpu_custom_call.1} parent=27 // pred_check
          %p325 = pneg %p128
        $region38: #{tpu_custom_call.1} parent=27 // pred_check_branch
          %327 = sbr.rel (%p325) target = $region40
        $region39: #{tpu_custom_call.1} parent=27 // pred_region
          %s328 = sand.u32 %s22, 1
          %s329 = scalar_lea.sflag [#allocation8], %s328
          %s330 = sand.u32 %s118, 1
          %s331 = smul.addr %s330, 16
          %s332 = scalar_lea.vmem [#allocation9], %s331
          %s333 = sadd.s32 %s30, 1
          %s334 = smul.u32 %s333, 4
          %p335 = scmp.lt.s32.totalorder %s334, 7
          %s336 = scalar_select %p335, %s334, 7
          %s337 = smul.u32 2, %s336
          %s339 = ssub.s32 256, 256
          %340 = vsyncadd %s329, %s339
          %s341 = smul.addr %s337, 2
          %s342 = smul.addr %s29, 32
          %s343 = sadd.s32 %s341, %s342
          %s344 = smul.addr %s343, 64
          %s345 = scalar_lea.hbm %s2, %s344
          %s346 = sshll.u32 %s332, 4
          %s347 = int_to_ptr.vmem [resolvable:$true] %s346
          %352 = dma.hbm_to_vmem [thread:$0]  %s345, 256, %s347, %s329, 64, 64, 4
        $region40: #{tpu_custom_call.1} parent=27 // pred_fallthru
          _
      $region28: #{tpu_custom_call.1} parent=5 // pred_fallthru
        _
      %p353 = scmp.le.s32.totalorder 1, %s22
      %p354 = scmp.lt.s32.totalorder %s22, 5
      %p355 = pnand %p353, %p354
      %p356 = pneg %p355
      // Predicated region
      $region41: #{tpu_custom_call.1} parent=5 // pred_check
        _
      $region42: #{tpu_custom_call.1} parent=5 // pred_check_branch
        %358 = sbr.rel (%p355) target = $region44
      $region43: #{tpu_custom_call.1} parent=5 // pred_region
        %s359 = ssub.s32 %s22, 1
        %s360 = sand.u32 %s49, 1
        %s361 = scalar_lea.sflag [#allocation5], %s360
        %s362 = sand.u32 %s49, 1
        %s363 = smul.addr %s362, 64
        %s364 = scalar_lea.vmem [#allocation4], %s363
        // Predicated region
        $region45: #{tpu_custom_call.1} parent=43 // pred_check
          %p365 = pneg %p62
        $region46: #{tpu_custom_call.1} parent=43 // pred_check_branch
          %367 = sbr.rel (%p365) target = $region48
        $region47: #{tpu_custom_call.1} parent=43 // pred_region
          %368 = dma.done %s361, 1024
        $region48: #{tpu_custom_call.1} parent=43 // pred_fallthru
          _
        %s369 = sand.u32 %s27, 1
        %s370 = scalar_lea.sflag [#allocation8], %s369
        %s371 = sand.u32 %s85, 1
        %s372 = smul.addr %s371, 16
        %s373 = scalar_lea.vmem [#allocation7], %s372
        // Predicated region
        $region49: #{tpu_custom_call.1} parent=43 // pred_check
          %p374 = pneg %p98
        $region50: #{tpu_custom_call.1} parent=43 // pred_check_branch
          %376 = sbr.rel (%p374) target = $region52
        $region51: #{tpu_custom_call.1} parent=43 // pred_region
          %377 = dma.done %s370, 256
        $region52: #{tpu_custom_call.1} parent=43 // pred_fallthru
          _
        %s378 = sand.u32 %s27, 1
        %s379 = scalar_lea.sflag [#allocation8], %s378
        %s380 = sand.u32 %s121, 1
        %s381 = smul.addr %s380, 16
        %s382 = scalar_lea.vmem [#allocation9], %s381
        // Predicated region
        $region53: #{tpu_custom_call.1} parent=43 // pred_check
          %p383 = pneg %p134
        $region54: #{tpu_custom_call.1} parent=43 // pred_check_branch
          %385 = sbr.rel (%p383) target = $region56
        $region55: #{tpu_custom_call.1} parent=43 // pred_region
          %386 = dma.done %s379, 256
        $region56: #{tpu_custom_call.1} parent=43 // pred_fallthru
          _
        // Predicated region
        $region57: #{tpu_custom_call.1} parent=43 // pred_check
          %p387 = pneg %p155
        $region58: #{tpu_custom_call.1} parent=43 // pred_check_branch
          %389 = sbr.rel (%p387) target = $region60
        $region59: #{tpu_custom_call.1} parent=43 // pred_region
          %390 = dma.done [#allocation11], 9216
        $region60: #{tpu_custom_call.1} parent=43 // pred_fallthru
          _
        // Predicated region
        $region61: #{tpu_custom_call.1} parent=43 // pred_check
          %p391 = pneg %p176
        $region62: #{tpu_custom_call.1} parent=43 // pred_check_branch
          %393 = sbr.rel (%p391) target = $region64
        $region63: #{tpu_custom_call.1} parent=43 // pred_region
          %394 = dma.done [#allocation11], 9216
        $region64: #{tpu_custom_call.1} parent=43 // pred_fallthru
          _
        %s395 = sand.u32 %s49, 1
        %s396 = scalar_lea.sflag [#allocation5], %s395
        %s397 = sand.u32 %s49, 1
        %s398 = smul.addr %s397, 64
        %s399 = scalar_lea.vmem [#allocation4], %s398
        %p400 = pneg %p62
        %p401 = pneg %p59
        %s402 = sand.u32 %s27, 1
        %s403 = scalar_lea.sflag [#allocation8], %s402
        %s404 = sand.u32 %s85, 1
        %s405 = smul.addr %s404, 16
        %s406 = scalar_lea.vmem [#allocation7], %s405
        %p407 = pneg %p98
        %p408 = pneg %p95
        %s409 = sand.u32 %s27, 1
        %s410 = scalar_lea.sflag [#allocation8], %s409
        %s411 = sand.u32 %s121, 1
        %s412 = smul.addr %s411, 16
        %s413 = scalar_lea.vmem [#allocation9], %s412
        %p414 = pneg %p134
        %p415 = pneg %p131
        %p416 = pneg %p155
        %p417 = pneg %p152
        %p418 = pneg %p176
        %p419 = pneg %p173
        %p420 = pneg %p197
        %p421 = pneg %p194
        %p422 = pneg %p225
        %p423 = pneg %p222
        %s424 = sand.u32 %s212, 1
        %s425 = scalar_lea.sflag [#allocation6], %s424
        %s426 = sand.u32 %s212, 1
        %s427 = smul.addr %s426, 64
        %s428 = scalar_lea.vmem [#allocation13], %s427
        %s429 = smul.u32 8, %s32
        %s430 = smul.u32 %s32, 4
        %s431 = ssub.s32 %s430, 1
        %p432 = scmp.gt.s32.totalorder %s431, 0
        %s433 = scalar_select %p432, %s431, 0
        %s434 = smul.u32 2, %s433
        %s435 = sadd.s32 %s32, 1
        %s436 = smul.u32 %s435, 4
        %p437 = scmp.lt.s32.totalorder %s436, 7
        %s438 = scalar_select %p437, %s436, 7
        %s439 = smul.u32 2, %s438
        %s440 = smul.u32 8, %s32
        %442 = vst [vmem:[#allocation2] sm:$0xf] 0
        %443 = vst [vmem:[#allocation2 + $0x10] sm:$0xf] 0
        %444 = vst [vmem:[#allocation2 + $0x20] sm:$0xf] 0
        %445 = vst [vmem:[#allocation2 + $0x30] sm:$0xf] 0
        %446 = vst [vmem:[#allocation2 + $0x40] sm:$0xf] 0
        %447 = vst [vmem:[#allocation2 + $0x50] sm:$0xf] 0
        %448 = vst [vmem:[#allocation2 + $0x60] sm:$0xf] 0
        %449 = vst [vmem:[#allocation2 + $0x70] sm:$0xf] 0
        %450 = vst [vmem:[#allocation2 + $0x80] sm:$0xf] 0
        %451 = vst [vmem:[#allocation2 + $0x90] sm:$0xf] 0
        %452 = vst [vmem:[#allocation2 + $0xa0] sm:$0xf] 0
        %453 = vst [vmem:[#allocation2 + $0xb0] sm:$0xf] 0
        %454 = vst [vmem:[#allocation2 + $0xc] sm:$0xf] 0
        %455 = vst [vmem:[#allocation2 + $0x1c] sm:$0xf] 0
        %456 = vst [vmem:[#allocation2 + $0x2c] sm:$0xf] 0
        %457 = vst [vmem:[#allocation2 + $0x3c] sm:$0xf] 0
        %458 = vst [vmem:[#allocation2 + $0x4c] sm:$0xf] 0
        %459 = vst [vmem:[#allocation2 + $0x5c] sm:$0xf] 0
        %460 = vst [vmem:[#allocation2 + $0x6c] sm:$0xf] 0
        %461 = vst [vmem:[#allocation2 + $0x7c] sm:$0xf] 0
        %462 = vst [vmem:[#allocation2 + $0x8c] sm:$0xf] 0
        %463 = vst [vmem:[#allocation2 + $0x9c] sm:$0xf] 0
        %464 = vst [vmem:[#allocation2 + $0xac] sm:$0xf] 0
        %465 = vst [vmem:[#allocation2 + $0xbc] sm:$0xf] 0
        %v466 = vld [vmem:[%s364] sm:$0xf]
        %v467 = vld [vmem:[%s364 + $0x4] sm:$0xf]
        %v468 = vld [vmem:[%s364 + $0x8] sm:$0xf]
        %v469 = vld [vmem:[%s364 + $0xc] sm:$0xf]
        %v470 = vld [vmem:[%s364 + $0x10] sm:$0xf]
        %v471 = vld [vmem:[%s364 + $0x14] sm:$0xf]
        %v472 = vld [vmem:[%s364 + $0x18] sm:$0xf]
        %v473 = vld [vmem:[%s364 + $0x1c] sm:$0xf]
        %v474 = vld [vmem:[%s364 + $0x20] sm:$0xf]
        %v475 = vld [vmem:[%s364 + $0x24] sm:$0xf]
        %v476 = vld [vmem:[%s364 + $0x28] sm:$0xf]
        %v477 = vld [vmem:[%s364 + $0x2c] sm:$0xf]
        %v478 = vld [vmem:[%s364 + $0x30] sm:$0xf]
        %v479 = vld [vmem:[%s364 + $0x34] sm:$0xf]
        %v480 = vld [vmem:[%s364 + $0x38] sm:$0xf]
        %v481 = vld [vmem:[%s364 + $0x3c] sm:$0xf]
        %s482 = scalar_lea.vmem [#allocation2], 32
        %483 = vst [vmem:[%s482 + $0x4] sm:$0xf] %v466
        %484 = vst [vmem:[%s482 + $0x8] sm:$0xf] %v467
        %485 = vst [vmem:[%s482 + $0x14] sm:$0xf] %v468
        %486 = vst [vmem:[%s482 + $0x18] sm:$0xf] %v469
        %487 = vst [vmem:[%s482 + $0x24] sm:$0xf] %v470
        %488 = vst [vmem:[%s482 + $0x28] sm:$0xf] %v471
        %489 = vst [vmem:[%s482 + $0x34] sm:$0xf] %v472
        %490 = vst [vmem:[%s482 + $0x38] sm:$0xf] %v473
        %491 = vst [vmem:[%s482 + $0x44] sm:$0xf] %v474
        %492 = vst [vmem:[%s482 + $0x48] sm:$0xf] %v475
        %493 = vst [vmem:[%s482 + $0x54] sm:$0xf] %v476
        %494 = vst [vmem:[%s482 + $0x58] sm:$0xf] %v477
        %495 = vst [vmem:[%s482 + $0x64] sm:$0xf] %v478
        %496 = vst [vmem:[%s482 + $0x68] sm:$0xf] %v479
        %497 = vst [vmem:[%s482 + $0x74] sm:$0xf] %v480
        %498 = vst [vmem:[%s482 + $0x78] sm:$0xf] %v481
        %p499 = scmp.eq.s32.totalorder %s32, 0
        // Predicated region
        $region65: #{tpu_custom_call.1} parent=43 // pred_check
          %p500 = pneg %p499
        $region66: #{tpu_custom_call.1} parent=43 // pred_check_branch
          %502 = sbr.rel (%p500) target = $region68
        $region67: #{tpu_custom_call.1} parent=43 // pred_region
          %503 = vst [vmem:[#allocation2 + $0x4] sm:$0xf] 0
          %504 = vst [vmem:[#allocation2 + $0x8] sm:$0xf] 0
          %505 = vst [vmem:[#allocation2 + $0x14] sm:$0xf] 0
          %506 = vst [vmem:[#allocation2 + $0x18] sm:$0xf] 0
        $region68: #{tpu_custom_call.1} parent=43 // pred_fallthru
          _
        %p507 = scmp.gt.s32.totalorder %s32, 0
        // Predicated region
        $region69: #{tpu_custom_call.1} parent=43 // pred_check
          %p508 = pneg %p507
        $region70: #{tpu_custom_call.1} parent=43 // pred_check_branch
          %510 = sbr.rel (%p508) target = $region72
        $region71: #{tpu_custom_call.1} parent=43 // pred_region
          %v511 = vld [vmem:[%s373] sm:$0xf]
          %v512 = vld [vmem:[%s373 + $0x4] sm:$0xf]
          %v513 = vld [vmem:[%s373 + $0x8] sm:$0xf]
          %v514 = vld [vmem:[%s373 + $0xc] sm:$0xf]
          %515 = vst [vmem:[#allocation2 + $0x4] sm:$0xf] %v511
          %516 = vst [vmem:[#allocation2 + $0x8] sm:$0xf] %v512
          %517 = vst [vmem:[#allocation2 + $0x14] sm:$0xf] %v513
          %518 = vst [vmem:[#allocation2 + $0x18] sm:$0xf] %v514
        $region72: #{tpu_custom_call.1} parent=43 // pred_fallthru
          _
        %p519 = scmp.eq.s32.totalorder %s32, 1
        // Predicated region
        $region73: #{tpu_custom_call.1} parent=43 // pred_check
          %p520 = pneg %p519
        $region74: #{tpu_custom_call.1} parent=43 // pred_check_branch
          %522 = sbr.rel (%p520) target = $region76
        $region75: #{tpu_custom_call.1} parent=43 // pred_region
          %s523 = scalar_lea.vmem [#allocation2], 160
          %524 = vst [vmem:[%s523 + $0x4] sm:$0xf] 0
          %525 = vst [vmem:[%s523 + $0x8] sm:$0xf] 0
          %526 = vst [vmem:[%s523 + $0x14] sm:$0xf] 0
          %527 = vst [vmem:[%s523 + $0x18] sm:$0xf] 0
        $region76: #{tpu_custom_call.1} parent=43 // pred_fallthru
          _
        %p528 = scmp.lt.s32.totalorder %s32, 1
        // Predicated region
        $region77: #{tpu_custom_call.1} parent=43 // pred_check
          %p529 = pneg %p528
        $region78: #{tpu_custom_call.1} parent=43 // pred_check_branch
          %531 = sbr.rel (%p529) target = $region80
        $region79: #{tpu_custom_call.1} parent=43 // pred_region
          %v532 = vld [vmem:[%s382] sm:$0xf]
          %v533 = vld [vmem:[%s382 + $0x4] sm:$0xf]
          %v534 = vld [vmem:[%s382 + $0x8] sm:$0xf]
          %v535 = vld [vmem:[%s382 + $0xc] sm:$0xf]
          %s536 = scalar_lea.vmem [#allocation2], 160
          %537 = vst [vmem:[%s536 + $0x4] sm:$0xf] %v532
          %538 = vst [vmem:[%s536 + $0x8] sm:$0xf] %v533
          %539 = vst [vmem:[%s536 + $0x14] sm:$0xf] %v534
          %540 = vst [vmem:[%s536 + $0x18] sm:$0xf] %v535
        $region80: #{tpu_custom_call.1} parent=43 // pred_fallthru
          _
        %v541 = vld [vmem:[%s5] sm:$0x1]
        %v542 = vld [vmem:[#allocation2] sm:$0x8]
        %v543 = vld [vmem:[#allocation2 + $0x4] sm:$0xf]
        %v544 = vld [vmem:[#allocation2 + $0x8] sm:$0xf]
        %v545 = vld [vmem:[#allocation2 + $0x10] sm:$0x8]
        %v546 = vld [vmem:[#allocation2 + $0x14] sm:$0xf]
        %v547 = vld [vmem:[#allocation2 + $0x18] sm:$0xf]
        %v548 = vld [vmem:[#allocation2 + $0x20] sm:$0x8]
        %v549 = vld [vmem:[#allocation2 + $0x24] sm:$0xf]
        %v550 = vld [vmem:[#allocation2 + $0x28] sm:$0xf]
        %v551 = vld [vmem:[#allocation2 + $0x30] sm:$0x8]
        %v552 = vld [vmem:[#allocation2 + $0x34] sm:$0xf]
        %v553 = vld [vmem:[#allocation2 + $0x38] sm:$0xf]
        %v554 = vld [vmem:[#allocation2 + $0x40] sm:$0x8]
        %v555 = vld [vmem:[#allocation2 + $0x44] sm:$0xf]
        %v556 = vld [vmem:[#allocation2 + $0x48] sm:$0xf]
        %v557 = vld [vmem:[#allocation2 + $0x50] sm:$0x8]
        %v558 = vld [vmem:[#allocation2 + $0x54] sm:$0xf]
        %v559 = vld [vmem:[#allocation2 + $0x58] sm:$0xf]
        %v560 = vld [vmem:[#allocation2 + $0x60] sm:$0x8]
        %v561 = vld [vmem:[#allocation2 + $0x64] sm:$0xf]
        %v562 = vld [vmem:[#allocation2 + $0x68] sm:$0xf]
        %v563 = vld [vmem:[#allocation2 + $0x70] sm:$0x8]
        %v564 = vld [vmem:[#allocation2 + $0x74] sm:$0xf]
        %v565 = vld [vmem:[#allocation2 + $0x78] sm:$0xf]
        %v566 = vld [vmem:[#allocation2 + $0x80] sm:$0x8]
        %v567 = vld [vmem:[#allocation2 + $0x84] sm:$0xf]
        %v568 = vld [vmem:[#allocation2 + $0x88] sm:$0xf]
        %v569 = vld [vmem:[#allocation2 + $0x90] sm:$0x8]
        %v570 = vld [vmem:[#allocation2 + $0x94] sm:$0xf]
        %v571 = vld [vmem:[#allocation2 + $0x98] sm:$0xf]
        %vm572 = vsmask.f32 256
        %vm573 = vsmask.f32 4368
        %vm574 = vmor %vm572, %vm573
        %v576 = vshrl.u32 %v542, 16
        %v578 = vrot.slane %v576, 7
        %v579 = vrot.slane %v578, 4
        %v581 = vshrl.u32 %v543, 16
        %v583 = vrot.slane %v581, 7
        %v584 = vshll.u32 %v543, 16
        %v586 = vor.u32 %v583, %v584
        %v587 = vsel %vm574, %v579, %v586
        %v588 = vrot.slane %v583, 4
        %v590 = vshrl.u32 %v544, 16
        %v592 = vrot.slane %v590, 7
        %v593 = vshll.u32 %v544, 16
        %v595 = vor.u32 %v592, %v593
        %v596 = vsel %vm574, %v588, %v595
        %v598 = vshrl.u32 %v545, 16
        %v600 = vrot.slane %v598, 7
        %v601 = vrot.slane %v600, 4
        %v603 = vshrl.u32 %v546, 16
        %v605 = vrot.slane %v603, 7
        %v606 = vshll.u32 %v546, 16
        %v608 = vor.u32 %v605, %v606
        %v609 = vsel %vm574, %v601, %v608
        %v610 = vrot.slane %v605, 4
        %v612 = vshrl.u32 %v547, 16
        %v614 = vrot.slane %v612, 7
        %v615 = vshll.u32 %v547, 16
        %v617 = vor.u32 %v614, %v615
        %v618 = vsel %vm574, %v610, %v617
        %v620 = vshrl.u32 %v548, 16
        %v622 = vrot.slane %v620, 7
        %v623 = vrot.slane %v622, 4
        %v625 = vshrl.u32 %v549, 16
        %v627 = vrot.slane %v625, 7
        %v628 = vshll.u32 %v549, 16
        %v630 = vor.u32 %v627, %v628
        %v631 = vsel %vm574, %v623, %v630
        %v632 = vrot.slane %v627, 4
        %v634 = vshrl.u32 %v550, 16
        %v636 = vrot.slane %v634, 7
        %v637 = vshll.u32 %v550, 16
        %v639 = vor.u32 %v636, %v637
        %v640 = vsel %vm574, %v632, %v639
        %v642 = vshrl.u32 %v551, 16
        %v644 = vrot.slane %v642, 7
        %v645 = vrot.slane %v644, 4
        %v647 = vshrl.u32 %v552, 16
        %v649 = vrot.slane %v647, 7
        %v650 = vshll.u32 %v552, 16
        %v652 = vor.u32 %v649, %v650
        %v653 = vsel %vm574, %v645, %v652
        %v654 = vrot.slane %v649, 4
        %v656 = vshrl.u32 %v553, 16
        %v658 = vrot.slane %v656, 7
        %v659 = vshll.u32 %v553, 16
        %v661 = vor.u32 %v658, %v659
        %v662 = vsel %vm574, %v654, %v661
        %v664 = vshrl.u32 %v554, 16
        %v666 = vrot.slane %v664, 7
        %v667 = vrot.slane %v666, 4
        %v669 = vshrl.u32 %v555, 16
        %v671 = vrot.slane %v669, 7
        %v672 = vshll.u32 %v555, 16
        %v674 = vor.u32 %v671, %v672
        %v675 = vsel %vm574, %v667, %v674
        %v676 = vrot.slane %v671, 4
        %v678 = vshrl.u32 %v556, 16
        %v680 = vrot.slane %v678, 7
        %v681 = vshll.u32 %v556, 16
        %v683 = vor.u32 %v680, %v681
        %v684 = vsel %vm574, %v676, %v683
        %v686 = vshrl.u32 %v557, 16
        %v688 = vrot.slane %v686, 7
        %v689 = vrot.slane %v688, 4
        %v691 = vshrl.u32 %v558, 16
        %v693 = vrot.slane %v691, 7
        %v694 = vshll.u32 %v558, 16
        %v696 = vor.u32 %v693, %v694
        %v697 = vsel %vm574, %v689, %v696
        %v698 = vrot.slane %v693, 4
        %v700 = vshrl.u32 %v559, 16
        %v702 = vrot.slane %v700, 7
        %v703 = vshll.u32 %v559, 16
        %v705 = vor.u32 %v702, %v703
        %v706 = vsel %vm574, %v698, %v705
        %v708 = vshrl.u32 %v560, 16
        %v710 = vrot.slane %v708, 7
        %v711 = vrot.slane %v710, 4
        %v713 = vshrl.u32 %v561, 16
        %v715 = vrot.slane %v713, 7
        %v716 = vshll.u32 %v561, 16
        %v718 = vor.u32 %v715, %v716
        %v719 = vsel %vm574, %v711, %v718
        %v720 = vrot.slane %v715, 4
        %v722 = vshrl.u32 %v562, 16
        %v724 = vrot.slane %v722, 7
        %v725 = vshll.u32 %v562, 16
        %v727 = vor.u32 %v724, %v725
        %v728 = vsel %vm574, %v720, %v727
        %v730 = vshrl.u32 %v563, 16
        %v732 = vrot.slane %v730, 7
        %v733 = vrot.slane %v732, 4
        %v735 = vshrl.u32 %v564, 16
        %v737 = vrot.slane %v735, 7
        %v738 = vshll.u32 %v564, 16
        %v740 = vor.u32 %v737, %v738
        %v741 = vsel %vm574, %v733, %v740
        %v742 = vrot.slane %v737, 4
        %v744 = vshrl.u32 %v565, 16
        %v746 = vrot.slane %v744, 7
        %v747 = vshll.u32 %v565, 16
        %v749 = vor.u32 %v746, %v747
        %v750 = vsel %vm574, %v742, %v749
        %v752 = vshrl.u32 %v566, 16
        %v754 = vrot.slane %v752, 7
        %v755 = vrot.slane %v754, 4
        %v757 = vshrl.u32 %v567, 16
        %v759 = vrot.slane %v757, 7
        %v760 = vshll.u32 %v567, 16
        %v762 = vor.u32 %v759, %v760
        %v763 = vsel %vm574, %v755, %v762
        %v764 = vrot.slane %v759, 4
        %v766 = vshrl.u32 %v568, 16
        %v768 = vrot.slane %v766, 7
        %v769 = vshll.u32 %v568, 16
        %v771 = vor.u32 %v768, %v769
        %v772 = vsel %vm574, %v764, %v771
        %v774 = vshrl.u32 %v569, 16
        %v776 = vrot.slane %v774, 7
        %v777 = vrot.slane %v776, 4
        %v779 = vshrl.u32 %v570, 16
        %v781 = vrot.slane %v779, 7
        %v782 = vshll.u32 %v570, 16
        %v784 = vor.u32 %v781, %v782
        %v785 = vsel %vm574, %v777, %v784
        %v786 = vrot.slane %v781, 4
        %v788 = vshrl.u32 %v571, 16
        %v790 = vrot.slane %v788, 7
        %v791 = vshll.u32 %v571, 16
        %v793 = vor.u32 %v790, %v791
        %v794 = vsel %vm574, %v786, %v793
        %v795 = vld [vmem:[#allocation10] sm:$0xf]
        %v796 = vld [vmem:[#allocation10 + $0x4] sm:$0xf]
        %v797 = vld [vmem:[#allocation10 + $0x8] sm:$0xf]
        %v798 = vld [vmem:[#allocation10 + $0xc] sm:$0xf]
        %v799 = vld [vmem:[#allocation10 + $0x10] sm:$0xf]
        %v800 = vld [vmem:[#allocation10 + $0x14] sm:$0xf]
        %v801 = vld [vmem:[#allocation10 + $0x18] sm:$0xf]
        %v802 = vld [vmem:[#allocation10 + $0x1c] sm:$0xf]
        %v803 = vld [vmem:[#allocation10 + $0x20] sm:$0xf]
        %v804 = vld [vmem:[#allocation10 + $0x24] sm:$0xf]
        %v805 = vld [vmem:[#allocation10 + $0x28] sm:$0xf]
        %v806 = vld [vmem:[#allocation10 + $0x2c] sm:$0xf]
        %v807 = vld [vmem:[#allocation10 + $0x30] sm:$0xf]
        %v808 = vld [vmem:[#allocation10 + $0x34] sm:$0xf]
        %v809 = vld [vmem:[#allocation10 + $0x38] sm:$0xf]
        %v810 = vld [vmem:[#allocation10 + $0x3c] sm:$0xf]
        %s811 = scalar_lea.vmem [#allocation10], 64
        %v812 = vld [vmem:[%s811] sm:$0xf]
        %v813 = vld [vmem:[%s811 + $0x4] sm:$0xf]
        %v814 = vld [vmem:[%s811 + $0x8] sm:$0xf]
        %v815 = vld [vmem:[%s811 + $0xc] sm:$0xf]
        %v816 = vld [vmem:[%s811 + $0x10] sm:$0xf]
        %v817 = vld [vmem:[%s811 + $0x14] sm:$0xf]
        %v818 = vld [vmem:[%s811 + $0x18] sm:$0xf]
        %v819 = vld [vmem:[%s811 + $0x1c] sm:$0xf]
        %v820 = vld [vmem:[%s811 + $0x20] sm:$0xf]
        %v821 = vld [vmem:[%s811 + $0x24] sm:$0xf]
        %v822 = vld [vmem:[%s811 + $0x28] sm:$0xf]
        %v823 = vld [vmem:[%s811 + $0x2c] sm:$0xf]
        %v824 = vld [vmem:[%s811 + $0x30] sm:$0xf]
        %v825 = vld [vmem:[%s811 + $0x34] sm:$0xf]
        %v826 = vld [vmem:[%s811 + $0x38] sm:$0xf]
        %v827 = vld [vmem:[%s811 + $0x3c] sm:$0xf]
        %v848 = vunpack.c.l.b16 %v543
        %v849 = vunpack.c.l.b16 %v544
        %v850 = vunpack.c.l.b16 %v546
        %v851 = vunpack.c.l.b16 %v547
        %v852 = vunpack.c.l.b16 %v549
        %v853 = vunpack.c.l.b16 %v550
        %v854 = vunpack.c.l.b16 %v552
        %v855 = vunpack.c.l.b16 %v553
        %v856 = vunpack.c.l.b16 %v555
        %v857 = vunpack.c.l.b16 %v556
        %v858 = vunpack.c.l.b16 %v558
        %v859 = vunpack.c.l.b16 %v559
        %v860 = vunpack.c.l.b16 %v561
        %v861 = vunpack.c.l.b16 %v562
        %v862 = vunpack.c.l.b16 %v564
        %v863 = vunpack.c.l.b16 %v565
        %v864 = vunpack.c.l.b16 %v567
        %v865 = vunpack.c.l.b16 %v568
        %v866 = vunpack.c.l.b16 %v570
        %v867 = vunpack.c.l.b16 %v571
        %v868 = vpack.c.b16 %v849, %v848
        %v869 = vpack.c.b16 %v851, %v850
        %v870 = vpack.c.b16 %v853, %v852
        %v871 = vpack.c.b16 %v855, %v854
        %v872 = vpack.c.b16 %v857, %v856
        %v873 = vpack.c.b16 %v859, %v858
        %v874 = vpack.c.b16 %v861, %v860
        %v875 = vpack.c.b16 %v863, %v862
        %v876 = vpack.c.b16 %v865, %v864
        %v877 = vpack.c.b16 %v867, %v866
        %v904 = vunpack.c.l.b16 %v812
        %v905 = vunpack.c.l.b16 %v813
        %v906 = vunpack.c.l.b16 %v814
        %v907 = vunpack.c.l.b16 %v815
        %v908 = vunpack.c.l.b16 %v816
        %v909 = vunpack.c.l.b16 %v817
        %v910 = vunpack.c.l.b16 %v818
        %v911 = vunpack.c.l.b16 %v819
        %v912 = vunpack.c.l.b16 %v820
        %v913 = vunpack.c.l.b16 %v821
        %v914 = vunpack.c.l.b16 %v822
        %v915 = vunpack.c.l.b16 %v823
        %v916 = vunpack.c.l.b16 %v824
        %v917 = vunpack.c.l.b16 %v825
        %v918 = vunpack.c.l.b16 %v826
        %v919 = vunpack.c.l.b16 %v827
        %v920 = vpack.c.b16 %v905, %v904
        %v921 = vpack.c.b16 %v907, %v906
        %v922 = vpack.c.b16 %v909, %v908
        %v923 = vpack.c.b16 %v911, %v910
        %v924 = vpack.c.b16 %v913, %v912
        %v925 = vpack.c.b16 %v915, %v914
        %v926 = vpack.c.b16 %v917, %v916
        %v927 = vpack.c.b16 %v919, %v918
        %936 = vmatprep.subr.bf16.mxu0 0
        %937 = vmatpush1.bf16.msra.mxu0 %v927
        %938 = vmatprep.subr.bf16.mxu0 0
        %939 = vmatpush1.bf16.msra.mxu0 %v926
        %940 = vmatprep.subr.bf16.mxu0 0
        %941 = vmatpush1.bf16.msra.mxu0 %v925
        %942 = vmatprep.subr.bf16.mxu0 0
        %943 = vmatpush1.bf16.msra.mxu0 %v924
        %944 = vmatprep.subr.bf16.mxu0 0
        %945 = vmatpush1.bf16.msra.mxu0 %v923
        %946 = vmatprep.subr.bf16.mxu0 0
        %947 = vmatpush1.bf16.msra.mxu0 %v922
        %948 = vmatprep.subr.bf16.mxu0 0
        %949 = vmatpush1.bf16.msra.mxu0 %v921
        %950 = vmatprep.subr.bf16.mxu0 0
        %951 = vmatpush1.bf16.msra.mxu0 %v920
        %952 = vmatprep.subr.bf16.mxu0 0
        %953 = vmatpush2.bf16.msra.mxu0 0
        %954 = vmatprep.subr.bf16.mxu0 0
        %955 = vmatpush2.bf16.msra.mxu0 0
        %956 = vmatprep.subr.bf16.mxu0 0
        %957 = vmatpush2.bf16.msra.mxu0 0
        %958 = vmatprep.subr.bf16.mxu0 0
        %959 = vmatpush2.bf16.msra.mxu0 0
        %960 = vmatprep.subr.bf16.mxu0 0
        %961 = vmatpush2.bf16.msra.mxu0 0
        %962 = vmatprep.subr.bf16.mxu0 0
        %963 = vmatpush2.bf16.msra.mxu0 0
        %964 = vmatprep.subr.bf16.mxu0 0
        %965 = vmatpush2.bf16.msra.mxu0 0
        %966 = vmatprep.subr.bf16.mxu0 0
        %967 = vmatpush2.bf16.msra.mxu0 0
        %968 = vmatprep.mubr.bf16.mxu0 0
        %969 = vmatmul.mubr.bf16.gmra.mxu0 %v868
        %v970 = vpop.f32.mrf.mxu0
        %v971 = vadd.f32 0.0, %v970
        %v972 = vpop.f32.mrf.mxu0
        %v973 = vpop.f32.mrf.mxu0
        %v974 = vadd.f32 0.0, %v973
        %v975 = vpop.f32.mrf.mxu0
        %976 = vmatprep.mubr.bf16.mxu0 0
        %977 = vmatmul.mubr.bf16.gmra.mxu0 %v869
        %v978 = vpop.f32.mrf.mxu0
        %v979 = vadd.f32 0.0, %v978
        %v980 = vpop.f32.mrf.mxu0
        %v981 = vpop.f32.mrf.mxu0
        %v982 = vadd.f32 0.0, %v981
        %v983 = vpop.f32.mrf.mxu0
        %984 = vmatprep.mubr.bf16.mxu0 0
        %985 = vmatmul.mubr.bf16.gmra.mxu0 %v870
        %v986 = vpop.f32.mrf.mxu0
        %v987 = vadd.f32 0.0, %v986
        %v988 = vpop.f32.mrf.mxu0
        %v989 = vpop.f32.mrf.mxu0
        %v990 = vadd.f32 0.0, %v989
        %v991 = vpop.f32.mrf.mxu0
        %992 = vmatprep.mubr.bf16.mxu0 0
        %993 = vmatmul.mubr.bf16.gmra.mxu0 %v871
        %v994 = vpop.f32.mrf.mxu0
        %v995 = vadd.f32 0.0, %v994
        %v996 = vpop.f32.mrf.mxu0
        %v997 = vpop.f32.mrf.mxu0
        %v998 = vadd.f32 0.0, %v997
        %v999 = vpop.f32.mrf.mxu0
        %1000 = vmatprep.mubr.bf16.mxu0 0
        %1001 = vmatmul.mubr.bf16.gmra.mxu0 %v872
        %v1002 = vpop.f32.mrf.mxu0
        %v1003 = vadd.f32 0.0, %v1002
        %v1004 = vpop.f32.mrf.mxu0
        %v1005 = vpop.f32.mrf.mxu0
        %v1006 = vadd.f32 0.0, %v1005
        %v1007 = vpop.f32.mrf.mxu0
        %1008 = vmatprep.mubr.bf16.mxu0 0
        %1009 = vmatmul.mubr.bf16.gmra.mxu0 %v873
        %v1010 = vpop.f32.mrf.mxu0
        %v1011 = vadd.f32 0.0, %v1010
        %v1012 = vpop.f32.mrf.mxu0
        %v1013 = vpop.f32.mrf.mxu0
        %v1014 = vadd.f32 0.0, %v1013
        %v1015 = vpop.f32.mrf.mxu0
        %1016 = vmatprep.mubr.bf16.mxu0 0
        %1017 = vmatmul.mubr.bf16.gmra.mxu0 %v874
        %v1018 = vpop.f32.mrf.mxu0
        %v1019 = vadd.f32 0.0, %v1018
        %v1020 = vpop.f32.mrf.mxu0
        %v1021 = vpop.f32.mrf.mxu0
        %v1022 = vadd.f32 0.0, %v1021
        %v1023 = vpop.f32.mrf.mxu0
        %1024 = vmatprep.mubr.bf16.mxu0 0
        %1025 = vmatmul.mubr.bf16.gmra.mxu0 %v875
        %v1026 = vpop.f32.mrf.mxu0
        %v1027 = vadd.f32 0.0, %v1026
        %v1028 = vpop.f32.mrf.mxu0
        %v1029 = vpop.f32.mrf.mxu0
        %v1030 = vadd.f32 0.0, %v1029
        %v1031 = vpop.f32.mrf.mxu0
        %1032 = vmatprep.mubr.bf16.mxu0 0
        %1033 = vmatmul.mubr.bf16.gmra.mxu0 %v876
        %v1034 = vpop.f32.mrf.mxu0
        %v1035 = vadd.f32 0.0, %v1034
        %v1036 = vpop.f32.mrf.mxu0
        %v1037 = vpop.f32.mrf.mxu0
        %v1038 = vadd.f32 0.0, %v1037
        %v1039 = vpop.f32.mrf.mxu0
        %1040 = vmatprep.mubr.bf16.mxu0 0
        %1041 = vmatmul.mubr.bf16.gmra.mxu0 %v877
        %v1042 = vpop.f32.mrf.mxu0
        %v1043 = vadd.f32 0.0, %v1042
        %v1044 = vpop.f32.mrf.mxu0
        %v1045 = vpop.f32.mrf.mxu0
        %v1046 = vadd.f32 0.0, %v1045
        %v1047 = vpop.f32.mrf.mxu0
        %1048 = vdwg.mxu0
        %v1049 = vunpack.c.l.b16 %v587
        %v1050 = vunpack.c.l.b16 %v596
        %v1051 = vunpack.c.l.b16 %v609
        %v1052 = vunpack.c.l.b16 %v618
        %v1053 = vunpack.c.l.b16 %v631
        %v1054 = vunpack.c.l.b16 %v640
        %v1055 = vunpack.c.l.b16 %v653
        %v1056 = vunpack.c.l.b16 %v662
        %v1057 = vunpack.c.l.b16 %v675
        %v1058 = vunpack.c.l.b16 %v684
        %v1059 = vunpack.c.l.b16 %v697
        %v1060 = vunpack.c.l.b16 %v706
        %v1061 = vunpack.c.l.b16 %v719
        %v1062 = vunpack.c.l.b16 %v728
        %v1063 = vunpack.c.l.b16 %v741
        %v1064 = vunpack.c.l.b16 %v750
        %v1065 = vunpack.c.l.b16 %v763
        %v1066 = vunpack.c.l.b16 %v772
        %v1067 = vunpack.c.l.b16 %v785
        %v1068 = vunpack.c.l.b16 %v794
        %v1069 = vpack.c.b16 %v1050, %v1049
        %v1070 = vpack.c.b16 %v1052, %v1051
        %v1071 = vpack.c.b16 %v1054, %v1053
        %v1072 = vpack.c.b16 %v1056, %v1055
        %v1073 = vpack.c.b16 %v1058, %v1057
        %v1074 = vpack.c.b16 %v1060, %v1059
        %v1075 = vpack.c.b16 %v1062, %v1061
        %v1076 = vpack.c.b16 %v1064, %v1063
        %v1077 = vpack.c.b16 %v1066, %v1065
        %v1078 = vpack.c.b16 %v1068, %v1067
        %v1105 = vunpack.c.l.b16 %v795
        %v1106 = vunpack.c.l.b16 %v796
        %v1107 = vunpack.c.l.b16 %v797
        %v1108 = vunpack.c.l.b16 %v798
        %v1109 = vunpack.c.l.b16 %v799
        %v1110 = vunpack.c.l.b16 %v800
        %v1111 = vunpack.c.l.b16 %v801
        %v1112 = vunpack.c.l.b16 %v802
        %v1113 = vunpack.c.l.b16 %v803
        %v1114 = vunpack.c.l.b16 %v804
        %v1115 = vunpack.c.l.b16 %v805
        %v1116 = vunpack.c.l.b16 %v806
        %v1117 = vunpack.c.l.b16 %v807
        %v1118 = vunpack.c.l.b16 %v808
        %v1119 = vunpack.c.l.b16 %v809
        %v1120 = vunpack.c.l.b16 %v810
        %v1121 = vpack.c.b16 %v1106, %v1105
        %v1122 = vpack.c.b16 %v1108, %v1107
        %v1123 = vpack.c.b16 %v1110, %v1109
        %v1124 = vpack.c.b16 %v1112, %v1111
        %v1125 = vpack.c.b16 %v1114, %v1113
        %v1126 = vpack.c.b16 %v1116, %v1115
        %v1127 = vpack.c.b16 %v1118, %v1117
        %v1128 = vpack.c.b16 %v1120, %v1119
        %1137 = vmatprep.subr.bf16.mxu0 0
        %1138 = vmatpush1.bf16.msra.mxu0 %v1128
        %1139 = vmatprep.subr.bf16.mxu0 0
        %1140 = vmatpush1.bf16.msra.mxu0 %v1127
        %1141 = vmatprep.subr.bf16.mxu0 0
        %1142 = vmatpush1.bf16.msra.mxu0 %v1126
        %1143 = vmatprep.subr.bf16.mxu0 0
        %1144 = vmatpush1.bf16.msra.mxu0 %v1125
        %1145 = vmatprep.subr.bf16.mxu0 0
        %1146 = vmatpush1.bf16.msra.mxu0 %v1124
        %1147 = vmatprep.subr.bf16.mxu0 0
        %1148 = vmatpush1.bf16.msra.mxu0 %v1123
        %1149 = vmatprep.subr.bf16.mxu0 0
        %1150 = vmatpush1.bf16.msra.mxu0 %v1122
        %1151 = vmatprep.subr.bf16.mxu0 0
        %1152 = vmatpush1.bf16.msra.mxu0 %v1121
        %1153 = vmatprep.subr.bf16.mxu0 0
        %1154 = vmatpush2.bf16.msra.mxu0 0
        %1155 = vmatprep.subr.bf16.mxu0 0
        %1156 = vmatpush2.bf16.msra.mxu0 0
        %1157 = vmatprep.subr.bf16.mxu0 0
        %1158 = vmatpush2.bf16.msra.mxu0 0
        %1159 = vmatprep.subr.bf16.mxu0 0
        %1160 = vmatpush2.bf16.msra.mxu0 0
        %1161 = vmatprep.subr.bf16.mxu0 0
        %1162 = vmatpush2.bf16.msra.mxu0 0
        %1163 = vmatprep.subr.bf16.mxu0 0
        %1164 = vmatpush2.bf16.msra.mxu0 0
        %1165 = vmatprep.subr.bf16.mxu0 0
        %1166 = vmatpush2.bf16.msra.mxu0 0
        %1167 = vmatprep.subr.bf16.mxu0 0
        %1168 = vmatpush2.bf16.msra.mxu0 0
        %1169 = vmatprep.mubr.bf16.mxu0 0
        %1170 = vmatmul.mubr.bf16.gmra.mxu0 %v1069
        %v1171 = vpop.f32.mrf.mxu0
        %v1172 = vadd.f32 %v971, %v1171
        %v1173 = vpop.f32.mrf.mxu0
        %v1174 = vpop.f32.mrf.mxu0
        %v1175 = vadd.f32 %v974, %v1174
        %v1176 = vpop.f32.mrf.mxu0
        %1177 = vmatprep.mubr.bf16.mxu0 0
        %1178 = vmatmul.mubr.bf16.gmra.mxu0 %v1070
        %v1179 = vpop.f32.mrf.mxu0
        %v1180 = vadd.f32 %v979, %v1179
        %v1181 = vpop.f32.mrf.mxu0
        %v1182 = vpop.f32.mrf.mxu0
        %v1183 = vadd.f32 %v982, %v1182
        %v1184 = vpop.f32.mrf.mxu0
        %1185 = vmatprep.mubr.bf16.mxu0 0
        %1186 = vmatmul.mubr.bf16.gmra.mxu0 %v1071
        %v1187 = vpop.f32.mrf.mxu0
        %v1188 = vadd.f32 %v987, %v1187
        %v1189 = vpop.f32.mrf.mxu0
        %v1190 = vpop.f32.mrf.mxu0
        %v1191 = vadd.f32 %v990, %v1190
        %v1192 = vpop.f32.mrf.mxu0
        %1193 = vmatprep.mubr.bf16.mxu0 0
        %1194 = vmatmul.mubr.bf16.gmra.mxu0 %v1072
        %v1195 = vpop.f32.mrf.mxu0
        %v1196 = vadd.f32 %v995, %v1195
        %v1197 = vpop.f32.mrf.mxu0
        %v1198 = vpop.f32.mrf.mxu0
        %v1199 = vadd.f32 %v998, %v1198
        %v1200 = vpop.f32.mrf.mxu0
        %1201 = vmatprep.mubr.bf16.mxu0 0
        %1202 = vmatmul.mubr.bf16.gmra.mxu0 %v1073
        %v1203 = vpop.f32.mrf.mxu0
        %v1204 = vadd.f32 %v1003, %v1203
        %v1205 = vpop.f32.mrf.mxu0
        %v1206 = vpop.f32.mrf.mxu0
        %v1207 = vadd.f32 %v1006, %v1206
        %v1208 = vpop.f32.mrf.mxu0
        %1209 = vmatprep.mubr.bf16.mxu0 0
        %1210 = vmatmul.mubr.bf16.gmra.mxu0 %v1074
        %v1211 = vpop.f32.mrf.mxu0
        %v1212 = vadd.f32 %v1011, %v1211
        %v1213 = vpop.f32.mrf.mxu0
        %v1214 = vpop.f32.mrf.mxu0
        %v1215 = vadd.f32 %v1014, %v1214
        %v1216 = vpop.f32.mrf.mxu0
        %1217 = vmatprep.mubr.bf16.mxu0 0
        %1218 = vmatmul.mubr.bf16.gmra.mxu0 %v1075
        %v1219 = vpop.f32.mrf.mxu0
        %v1220 = vadd.f32 %v1019, %v1219
        %v1221 = vpop.f32.mrf.mxu0
        %v1222 = vpop.f32.mrf.mxu0
        %v1223 = vadd.f32 %v1022, %v1222
        %v1224 = vpop.f32.mrf.mxu0
        %1225 = vmatprep.mubr.bf16.mxu0 0
        %1226 = vmatmul.mubr.bf16.gmra.mxu0 %v1076
        %v1227 = vpop.f32.mrf.mxu0
        %v1228 = vadd.f32 %v1027, %v1227
        %v1229 = vpop.f32.mrf.mxu0
        %v1230 = vpop.f32.mrf.mxu0
        %v1231 = vadd.f32 %v1030, %v1230
        %v1232 = vpop.f32.mrf.mxu0
        %1233 = vmatprep.mubr.bf16.mxu0 0
        %1234 = vmatmul.mubr.bf16.gmra.mxu0 %v1077
        %v1235 = vpop.f32.mrf.mxu0
        %v1236 = vadd.f32 %v1035, %v1235
        %v1237 = vpop.f32.mrf.mxu0
        %v1238 = vpop.f32.mrf.mxu0
        %v1239 = vadd.f32 %v1038, %v1238
        %v1240 = vpop.f32.mrf.mxu0
        %1241 = vmatprep.mubr.bf16.mxu0 0
        %1242 = vmatmul.mubr.bf16.gmra.mxu0 %v1078
        %v1243 = vpop.f32.mrf.mxu0
        %v1244 = vadd.f32 %v1043, %v1243
        %v1245 = vpop.f32.mrf.mxu0
        %v1246 = vpop.f32.mrf.mxu0
        %v1247 = vadd.f32 %v1046, %v1246
        %v1248 = vpop.f32.mrf.mxu0
        %1249 = vdwg.mxu0
        %v1250 = vld [vmem:[#allocation2 + $0x4] sm:$0xf]
        %v1251 = vld [vmem:[#allocation2 + $0x8] sm:$0xf]
        %v1252 = vld [vmem:[#allocation2 + $0xc] sm:$0x1]
        %v1253 = vld [vmem:[#allocation2 + $0x14] sm:$0xf]
        %v1254 = vld [vmem:[#allocation2 + $0x18] sm:$0xf]
        %v1255 = vld [vmem:[#allocation2 + $0x1c] sm:$0x1]
        %v1256 = vld [vmem:[#allocation2 + $0x24] sm:$0xf]
        %v1257 = vld [vmem:[#allocation2 + $0x28] sm:$0xf]
        %v1258 = vld [vmem:[#allocation2 + $0x2c] sm:$0x1]
        %v1259 = vld [vmem:[#allocation2 + $0x34] sm:$0xf]
        %v1260 = vld [vmem:[#allocation2 + $0x38] sm:$0xf]
        %v1261 = vld [vmem:[#allocation2 + $0x3c] sm:$0x1]
        %v1262 = vld [vmem:[#allocation2 + $0x44] sm:$0xf]
        %v1263 = vld [vmem:[#allocation2 + $0x48] sm:$0xf]
        %v1264 = vld [vmem:[#allocation2 + $0x4c] sm:$0x1]
        %v1265 = vld [vmem:[#allocation2 + $0x54] sm:$0xf]
        %v1266 = vld [vmem:[#allocation2 + $0x58] sm:$0xf]
        %v1267 = vld [vmem:[#allocation2 + $0x5c] sm:$0x1]
        %v1268 = vld [vmem:[#allocation2 + $0x64] sm:$0xf]
        %v1269 = vld [vmem:[#allocation2 + $0x68] sm:$0xf]
        %v1270 = vld [vmem:[#allocation2 + $0x6c] sm:$0x1]
        %v1271 = vld [vmem:[#allocation2 + $0x74] sm:$0xf]
        %v1272 = vld [vmem:[#allocation2 + $0x78] sm:$0xf]
        %v1273 = vld [vmem:[#allocation2 + $0x7c] sm:$0x1]
        %v1274 = vld [vmem:[#allocation2 + $0x84] sm:$0xf]
        %v1275 = vld [vmem:[#allocation2 + $0x88] sm:$0xf]
        %v1276 = vld [vmem:[#allocation2 + $0x8c] sm:$0x1]
        %v1277 = vld [vmem:[#allocation2 + $0x94] sm:$0xf]
        %v1278 = vld [vmem:[#allocation2 + $0x98] sm:$0xf]
        %v1279 = vld [vmem:[#allocation2 + $0x9c] sm:$0x1]
        %vm1280 = vsmask.f32 3328
        %vm1281 = vsmask.f32 7440
        %vm1282 = vmor %vm1280, %vm1281
        %v1284 = vshrl.u32 %v1250, 16
        %v1286 = vrot.slane %v1284, 4
        %v1287 = vshll.u32 %v1250, 16
        %v1289 = vrot.slane %v1287, 5
        %v1290 = vor.u32 %v1286, %v1289
        %v1291 = vrot.slane %v1290, 4
        %v1293 = vshll.u32 %v1251, 16
        %v1295 = vrot.slane %v1293, 5
        %v1296 = vsel %vm1282, %v1291, %v1295
        %v1297 = vshrl.u32 %v1251, 16
        %v1299 = vrot.slane %v1297, 4
        %v1300 = vor.u32 %v1299, %v1295
        %v1301 = vrot.slane %v1300, 4
        %v1303 = vshll.u32 %v1252, 16
        %v1305 = vrot.slane %v1303, 5
        %v1306 = vsel %vm1282, %v1301, %v1305
        %v1308 = vshrl.u32 %v1253, 16
        %v1310 = vrot.slane %v1308, 4
        %v1311 = vshll.u32 %v1253, 16
        %v1313 = vrot.slane %v1311, 5
        %v1314 = vor.u32 %v1310, %v1313
        %v1315 = vrot.slane %v1314, 4
        %v1317 = vshll.u32 %v1254, 16
        %v1319 = vrot.slane %v1317, 5
        %v1320 = vsel %vm1282, %v1315, %v1319
        %v1321 = vshrl.u32 %v1254, 16
        %v1323 = vrot.slane %v1321, 4
        %v1324 = vor.u32 %v1323, %v1319
        %v1325 = vrot.slane %v1324, 4
        %v1327 = vshll.u32 %v1255, 16
        %v1329 = vrot.slane %v1327, 5
        %v1330 = vsel %vm1282, %v1325, %v1329
        %v1332 = vshrl.u32 %v1256, 16
        %v1334 = vrot.slane %v1332, 4
        %v1335 = vshll.u32 %v1256, 16
        %v1337 = vrot.slane %v1335, 5
        %v1338 = vor.u32 %v1334, %v1337
        %v1339 = vrot.slane %v1338, 4
        %v1341 = vshll.u32 %v1257, 16
        %v1343 = vrot.slane %v1341, 5
        %v1344 = vsel %vm1282, %v1339, %v1343
        %v1345 = vshrl.u32 %v1257, 16
        %v1347 = vrot.slane %v1345, 4
        %v1348 = vor.u32 %v1347, %v1343
        %v1349 = vrot.slane %v1348, 4
        %v1351 = vshll.u32 %v1258, 16
        %v1353 = vrot.slane %v1351, 5
        %v1354 = vsel %vm1282, %v1349, %v1353
        %v1356 = vshrl.u32 %v1259, 16
        %v1358 = vrot.slane %v1356, 4
        %v1359 = vshll.u32 %v1259, 16
        %v1361 = vrot.slane %v1359, 5
        %v1362 = vor.u32 %v1358, %v1361
        %v1363 = vrot.slane %v1362, 4
        %v1365 = vshll.u32 %v1260, 16
        %v1367 = vrot.slane %v1365, 5
        %v1368 = vsel %vm1282, %v1363, %v1367
        %v1369 = vshrl.u32 %v1260, 16
        %v1371 = vrot.slane %v1369, 4
        %v1372 = vor.u32 %v1371, %v1367
        %v1373 = vrot.slane %v1372, 4
        %v1375 = vshll.u32 %v1261, 16
        %v1377 = vrot.slane %v1375, 5
        %v1378 = vsel %vm1282, %v1373, %v1377
        %v1380 = vshrl.u32 %v1262, 16
        %v1382 = vrot.slane %v1380, 4
        %v1383 = vshll.u32 %v1262, 16
        %v1385 = vrot.slane %v1383, 5
        %v1386 = vor.u32 %v1382, %v1385
        %v1387 = vrot.slane %v1386, 4
        %v1389 = vshll.u32 %v1263, 16
        %v1391 = vrot.slane %v1389, 5
        %v1392 = vsel %vm1282, %v1387, %v1391
        %v1393 = vshrl.u32 %v1263, 16
        %v1395 = vrot.slane %v1393, 4
        %v1396 = vor.u32 %v1395, %v1391
        %v1397 = vrot.slane %v1396, 4
        %v1399 = vshll.u32 %v1264, 16
        %v1401 = vrot.slane %v1399, 5
        %v1402 = vsel %vm1282, %v1397, %v1401
        %v1404 = vshrl.u32 %v1265, 16
        %v1406 = vrot.slane %v1404, 4
        %v1407 = vshll.u32 %v1265, 16
        %v1409 = vrot.slane %v1407, 5
        %v1410 = vor.u32 %v1406, %v1409
        %v1411 = vrot.slane %v1410, 4
        %v1413 = vshll.u32 %v1266, 16
        %v1415 = vrot.slane %v1413, 5
        %v1416 = vsel %vm1282, %v1411, %v1415
        %v1417 = vshrl.u32 %v1266, 16
        %v1419 = vrot.slane %v1417, 4
        %v1420 = vor.u32 %v1419, %v1415
        %v1421 = vrot.slane %v1420, 4
        %v1423 = vshll.u32 %v1267, 16
        %v1425 = vrot.slane %v1423, 5
        %v1426 = vsel %vm1282, %v1421, %v1425
        %v1428 = vshrl.u32 %v1268, 16
        %v1430 = vrot.slane %v1428, 4
        %v1431 = vshll.u32 %v1268, 16
        %v1433 = vrot.slane %v1431, 5
        %v1434 = vor.u32 %v1430, %v1433
        %v1435 = vrot.slane %v1434, 4
        %v1437 = vshll.u32 %v1269, 16
        %v1439 = vrot.slane %v1437, 5
        %v1440 = vsel %vm1282, %v1435, %v1439
        %v1441 = vshrl.u32 %v1269, 16
        %v1443 = vrot.slane %v1441, 4
        %v1444 = vor.u32 %v1443, %v1439
        %v1445 = vrot.slane %v1444, 4
        %v1447 = vshll.u32 %v1270, 16
        %v1449 = vrot.slane %v1447, 5
        %v1450 = vsel %vm1282, %v1445, %v1449
        %v1452 = vshrl.u32 %v1271, 16
        %v1454 = vrot.slane %v1452, 4
        %v1455 = vshll.u32 %v1271, 16
        %v1457 = vrot.slane %v1455, 5
        %v1458 = vor.u32 %v1454, %v1457
        %v1459 = vrot.slane %v1458, 4
        %v1461 = vshll.u32 %v1272, 16
        %v1463 = vrot.slane %v1461, 5
        %v1464 = vsel %vm1282, %v1459, %v1463
        %v1465 = vshrl.u32 %v1272, 16
        %v1467 = vrot.slane %v1465, 4
        %v1468 = vor.u32 %v1467, %v1463
        %v1469 = vrot.slane %v1468, 4
        %v1471 = vshll.u32 %v1273, 16
        %v1473 = vrot.slane %v1471, 5
        %v1474 = vsel %vm1282, %v1469, %v1473
        %v1476 = vshrl.u32 %v1274, 16
        %v1478 = vrot.slane %v1476, 4
        %v1479 = vshll.u32 %v1274, 16
        %v1481 = vrot.slane %v1479, 5
        %v1482 = vor.u32 %v1478, %v1481
        %v1483 = vrot.slane %v1482, 4
        %v1485 = vshll.u32 %v1275, 16
        %v1487 = vrot.slane %v1485, 5
        %v1488 = vsel %vm1282, %v1483, %v1487
        %v1489 = vshrl.u32 %v1275, 16
        %v1491 = vrot.slane %v1489, 4
        %v1492 = vor.u32 %v1491, %v1487
        %v1493 = vrot.slane %v1492, 4
        %v1495 = vshll.u32 %v1276, 16
        %v1497 = vrot.slane %v1495, 5
        %v1498 = vsel %vm1282, %v1493, %v1497
        %v1500 = vshrl.u32 %v1277, 16
        %v1502 = vrot.slane %v1500, 4
        %v1503 = vshll.u32 %v1277, 16
        %v1505 = vrot.slane %v1503, 5
        %v1506 = vor.u32 %v1502, %v1505
        %v1507 = vrot.slane %v1506, 4
        %v1509 = vshll.u32 %v1278, 16
        %v1511 = vrot.slane %v1509, 5
        %v1512 = vsel %vm1282, %v1507, %v1511
        %v1513 = vshrl.u32 %v1278, 16
        %v1515 = vrot.slane %v1513, 4
        %v1516 = vor.u32 %v1515, %v1511
        %v1517 = vrot.slane %v1516, 4
        %v1519 = vshll.u32 %v1279, 16
        %v1521 = vrot.slane %v1519, 5
        %v1522 = vsel %vm1282, %v1517, %v1521
        %s1523 = scalar_lea.vmem [#allocation10], 128
        %v1524 = vld [vmem:[%s1523] sm:$0xf]
        %v1525 = vld [vmem:[%s1523 + $0x4] sm:$0xf]
        %v1526 = vld [vmem:[%s1523 + $0x8] sm:$0xf]
        %v1527 = vld [vmem:[%s1523 + $0xc] sm:$0xf]
        %v1528 = vld [vmem:[%s1523 + $0x10] sm:$0xf]
        %v1529 = vld [vmem:[%s1523 + $0x14] sm:$0xf]
        %v1530 = vld [vmem:[%s1523 + $0x18] sm:$0xf]
        %v1531 = vld [vmem:[%s1523 + $0x1c] sm:$0xf]
        %v1532 = vld [vmem:[%s1523 + $0x20] sm:$0xf]
        %v1533 = vld [vmem:[%s1523 + $0x24] sm:$0xf]
        %v1534 = vld [vmem:[%s1523 + $0x28] sm:$0xf]
        %v1535 = vld [vmem:[%s1523 + $0x2c] sm:$0xf]
        %v1536 = vld [vmem:[%s1523 + $0x30] sm:$0xf]
        %v1537 = vld [vmem:[%s1523 + $0x34] sm:$0xf]
        %v1538 = vld [vmem:[%s1523 + $0x38] sm:$0xf]
        %v1539 = vld [vmem:[%s1523 + $0x3c] sm:$0xf]
        %v1540 = vunpack.c.l.b16 %v1296
        %v1541 = vunpack.c.l.b16 %v1306
        %v1542 = vunpack.c.l.b16 %v1320
        %v1543 = vunpack.c.l.b16 %v1330
        %v1544 = vunpack.c.l.b16 %v1344
        %v1545 = vunpack.c.l.b16 %v1354
        %v1546 = vunpack.c.l.b16 %v1368
        %v1547 = vunpack.c.l.b16 %v1378
        %v1548 = vunpack.c.l.b16 %v1392
        %v1549 = vunpack.c.l.b16 %v1402
        %v1550 = vunpack.c.l.b16 %v1416
        %v1551 = vunpack.c.l.b16 %v1426
        %v1552 = vunpack.c.l.b16 %v1440
        %v1553 = vunpack.c.l.b16 %v1450
        %v1554 = vunpack.c.l.b16 %v1464
        %v1555 = vunpack.c.l.b16 %v1474
        %v1556 = vunpack.c.l.b16 %v1488
        %v1557 = vunpack.c.l.b16 %v1498
        %v1558 = vunpack.c.l.b16 %v1512
        %v1559 = vunpack.c.l.b16 %v1522
        %v1560 = vpack.c.b16 %v1541, %v1540
        %v1561 = vpack.c.b16 %v1543, %v1542
        %v1562 = vpack.c.b16 %v1545, %v1544
        %v1563 = vpack.c.b16 %v1547, %v1546
        %v1564 = vpack.c.b16 %v1549, %v1548
        %v1565 = vpack.c.b16 %v1551, %v1550
        %v1566 = vpack.c.b16 %v1553, %v1552
        %v1567 = vpack.c.b16 %v1555, %v1554
        %v1568 = vpack.c.b16 %v1557, %v1556
        %v1569 = vpack.c.b16 %v1559, %v1558
        %v1596 = vunpack.c.l.b16 %v1524
        %v1597 = vunpack.c.l.b16 %v1525
        %v1598 = vunpack.c.l.b16 %v1526
        %v1599 = vunpack.c.l.b16 %v1527
        %v1600 = vunpack.c.l.b16 %v1528
        %v1601 = vunpack.c.l.b16 %v1529
        %v1602 = vunpack.c.l.b16 %v1530
        %v1603 = vunpack.c.l.b16 %v1531
        %v1604 = vunpack.c.l.b16 %v1532
        %v1605 = vunpack.c.l.b16 %v1533
        %v1606 = vunpack.c.l.b16 %v1534
        %v1607 = vunpack.c.l.b16 %v1535
        %v1608 = vunpack.c.l.b16 %v1536
        %v1609 = vunpack.c.l.b16 %v1537
        %v1610 = vunpack.c.l.b16 %v1538
        %v1611 = vunpack.c.l.b16 %v1539
        %v1612 = vpack.c.b16 %v1597, %v1596
        %v1613 = vpack.c.b16 %v1599, %v1598
        %v1614 = vpack.c.b16 %v1601, %v1600
        %v1615 = vpack.c.b16 %v1603, %v1602
        %v1616 = vpack.c.b16 %v1605, %v1604
        %v1617 = vpack.c.b16 %v1607, %v1606
        %v1618 = vpack.c.b16 %v1609, %v1608
        %v1619 = vpack.c.b16 %v1611, %v1610
        %1628 = vmatprep.subr.bf16.mxu0 0
        %1629 = vmatpush1.bf16.msra.mxu0 %v1619
        %1630 = vmatprep.subr.bf16.mxu0 0
        %1631 = vmatpush1.bf16.msra.mxu0 %v1618
        %1632 = vmatprep.subr.bf16.mxu0 0
        %1633 = vmatpush1.bf16.msra.mxu0 %v1617
        %1634 = vmatprep.subr.bf16.mxu0 0
        %1635 = vmatpush1.bf16.msra.mxu0 %v1616
        %1636 = vmatprep.subr.bf16.mxu0 0
        %1637 = vmatpush1.bf16.msra.mxu0 %v1615
        %1638 = vmatprep.subr.bf16.mxu0 0
        %1639 = vmatpush1.bf16.msra.mxu0 %v1614
        %1640 = vmatprep.subr.bf16.mxu0 0
        %1641 = vmatpush1.bf16.msra.mxu0 %v1613
        %1642 = vmatprep.subr.bf16.mxu0 0
        %1643 = vmatpush1.bf16.msra.mxu0 %v1612
        %1644 = vmatprep.subr.bf16.mxu0 0
        %1645 = vmatpush2.bf16.msra.mxu0 0
        %1646 = vmatprep.subr.bf16.mxu0 0
        %1647 = vmatpush2.bf16.msra.mxu0 0
        %1648 = vmatprep.subr.bf16.mxu0 0
        %1649 = vmatpush2.bf16.msra.mxu0 0
        %1650 = vmatprep.subr.bf16.mxu0 0
        %1651 = vmatpush2.bf16.msra.mxu0 0
        %1652 = vmatprep.subr.bf16.mxu0 0
        %1653 = vmatpush2.bf16.msra.mxu0 0
        %1654 = vmatprep.subr.bf16.mxu0 0
        %1655 = vmatpush2.bf16.msra.mxu0 0
        %1656 = vmatprep.subr.bf16.mxu0 0
        %1657 = vmatpush2.bf16.msra.mxu0 0
        %1658 = vmatprep.subr.bf16.mxu0 0
        %1659 = vmatpush2.bf16.msra.mxu0 0
        %1660 = vmatprep.mubr.bf16.mxu0 0
        %1661 = vmatmul.mubr.bf16.gmra.mxu0 %v1560
        %v1662 = vpop.f32.mrf.mxu0
        %v1663 = vadd.f32 0.0, %v1662
        %v1664 = vpop.f32.mrf.mxu0
        %v1665 = vpop.f32.mrf.mxu0
        %v1666 = vadd.f32 0.0, %v1665
        %v1667 = vpop.f32.mrf.mxu0
        %1668 = vmatprep.mubr.bf16.mxu0 0
        %1669 = vmatmul.mubr.bf16.gmra.mxu0 %v1561
        %v1670 = vpop.f32.mrf.mxu0
        %v1671 = vadd.f32 0.0, %v1670
        %v1672 = vpop.f32.mrf.mxu0
        %v1673 = vpop.f32.mrf.mxu0
        %v1674 = vadd.f32 0.0, %v1673
        %v1675 = vpop.f32.mrf.mxu0
        %1676 = vmatprep.mubr.bf16.mxu0 0
        %1677 = vmatmul.mubr.bf16.gmra.mxu0 %v1562
        %v1678 = vpop.f32.mrf.mxu0
        %v1679 = vadd.f32 0.0, %v1678
        %v1680 = vpop.f32.mrf.mxu0
        %v1681 = vpop.f32.mrf.mxu0
        %v1682 = vadd.f32 0.0, %v1681
        %v1683 = vpop.f32.mrf.mxu0
        %1684 = vmatprep.mubr.bf16.mxu0 0
        %1685 = vmatmul.mubr.bf16.gmra.mxu0 %v1563
        %v1686 = vpop.f32.mrf.mxu0
        %v1687 = vadd.f32 0.0, %v1686
        %v1688 = vpop.f32.mrf.mxu0
        %v1689 = vpop.f32.mrf.mxu0
        %v1690 = vadd.f32 0.0, %v1689
        %v1691 = vpop.f32.mrf.mxu0
        %1692 = vmatprep.mubr.bf16.mxu0 0
        %1693 = vmatmul.mubr.bf16.gmra.mxu0 %v1564
        %v1694 = vpop.f32.mrf.mxu0
        %v1695 = vadd.f32 0.0, %v1694
        %v1696 = vpop.f32.mrf.mxu0
        %v1697 = vpop.f32.mrf.mxu0
        %v1698 = vadd.f32 0.0, %v1697
        %v1699 = vpop.f32.mrf.mxu0
        %1700 = vmatprep.mubr.bf16.mxu0 0
        %1701 = vmatmul.mubr.bf16.gmra.mxu0 %v1565
        %v1702 = vpop.f32.mrf.mxu0
        %v1703 = vadd.f32 0.0, %v1702
        %v1704 = vpop.f32.mrf.mxu0
        %v1705 = vpop.f32.mrf.mxu0
        %v1706 = vadd.f32 0.0, %v1705
        %v1707 = vpop.f32.mrf.mxu0
        %1708 = vmatprep.mubr.bf16.mxu0 0
        %1709 = vmatmul.mubr.bf16.gmra.mxu0 %v1566
        %v1710 = vpop.f32.mrf.mxu0
        %v1711 = vadd.f32 0.0, %v1710
        %v1712 = vpop.f32.mrf.mxu0
        %v1713 = vpop.f32.mrf.mxu0
        %v1714 = vadd.f32 0.0, %v1713
        %v1715 = vpop.f32.mrf.mxu0
        %1716 = vmatprep.mubr.bf16.mxu0 0
        %1717 = vmatmul.mubr.bf16.gmra.mxu0 %v1567
        %v1718 = vpop.f32.mrf.mxu0
        %v1719 = vadd.f32 0.0, %v1718
        %v1720 = vpop.f32.mrf.mxu0
        %v1721 = vpop.f32.mrf.mxu0
        %v1722 = vadd.f32 0.0, %v1721
        %v1723 = vpop.f32.mrf.mxu0
        %1724 = vmatprep.mubr.bf16.mxu0 0
        %1725 = vmatmul.mubr.bf16.gmra.mxu0 %v1568
        %v1726 = vpop.f32.mrf.mxu0
        %v1727 = vadd.f32 0.0, %v1726
        %v1728 = vpop.f32.mrf.mxu0
        %v1729 = vpop.f32.mrf.mxu0
        %v1730 = vadd.f32 0.0, %v1729
        %v1731 = vpop.f32.mrf.mxu0
        %1732 = vmatprep.mubr.bf16.mxu0 0
        %1733 = vmatmul.mubr.bf16.gmra.mxu0 %v1569
        %v1734 = vpop.f32.mrf.mxu0
        %v1735 = vadd.f32 0.0, %v1734
        %v1736 = vpop.f32.mrf.mxu0
        %v1737 = vpop.f32.mrf.mxu0
        %v1738 = vadd.f32 0.0, %v1737
        %v1739 = vpop.f32.mrf.mxu0
        %1740 = vdwg.mxu0
        %v1741 = vadd.f32 %v1172, %v1663
        %v1742 = vadd.f32 %v1175, %v1666
        %v1743 = vadd.f32 %v1180, %v1671
        %v1744 = vadd.f32 %v1183, %v1674
        %v1745 = vadd.f32 %v1188, %v1679
        %v1746 = vadd.f32 %v1191, %v1682
        %v1747 = vadd.f32 %v1196, %v1687
        %v1748 = vadd.f32 %v1199, %v1690
        %v1749 = vadd.f32 %v1204, %v1695
        %v1750 = vadd.f32 %v1207, %v1698
        %v1751 = vadd.f32 %v1212, %v1703
        %v1752 = vadd.f32 %v1215, %v1706
        %v1753 = vadd.f32 %v1220, %v1711
        %v1754 = vadd.f32 %v1223, %v1714
        %v1755 = vadd.f32 %v1228, %v1719
        %v1756 = vadd.f32 %v1231, %v1722
        %v1757 = vadd.f32 %v1236, %v1727
        %v1758 = vadd.f32 %v1239, %v1730
        %v1759 = vadd.f32 %v1244, %v1735
        %v1760 = vadd.f32 %v1247, %v1738
        %s1761 = scalar_lea.vmem [#allocation2], 16
        %v1762 = vld [vmem:[%s1761] sm:$0x8]
        %v1763 = vld [vmem:[%s1761 + $0x4] sm:$0xf]
        %v1764 = vld [vmem:[%s1761 + $0x8] sm:$0xf]
        %v1765 = vld [vmem:[%s1761 + $0x10] sm:$0x8]
        %v1766 = vld [vmem:[%s1761 + $0x14] sm:$0xf]
        %v1767 = vld [vmem:[%s1761 + $0x18] sm:$0xf]
        %v1768 = vld [vmem:[%s1761 + $0x20] sm:$0x8]
        %v1769 = vld [vmem:[%s1761 + $0x24] sm:$0xf]
        %v1770 = vld [vmem:[%s1761 + $0x28] sm:$0xf]
        %v1771 = vld [vmem:[%s1761 + $0x30] sm:$0x8]
        %v1772 = vld [vmem:[%s1761 + $0x34] sm:$0xf]
        %v1773 = vld [vmem:[%s1761 + $0x38] sm:$0xf]
        %v1774 = vld [vmem:[%s1761 + $0x40] sm:$0x8]
        %v1775 = vld [vmem:[%s1761 + $0x44] sm:$0xf]
        %v1776 = vld [vmem:[%s1761 + $0x48] sm:$0xf]
        %v1777 = vld [vmem:[%s1761 + $0x50] sm:$0x8]
        %v1778 = vld [vmem:[%s1761 + $0x54] sm:$0xf]
        %v1779 = vld [vmem:[%s1761 + $0x58] sm:$0xf]
        %v1780 = vld [vmem:[%s1761 + $0x60] sm:$0x8]
        %v1781 = vld [vmem:[%s1761 + $0x64] sm:$0xf]
        %v1782 = vld [vmem:[%s1761 + $0x68] sm:$0xf]
        %v1783 = vld [vmem:[%s1761 + $0x70] sm:$0x8]
        %v1784 = vld [vmem:[%s1761 + $0x74] sm:$0xf]
        %v1785 = vld [vmem:[%s1761 + $0x78] sm:$0xf]
        %v1786 = vld [vmem:[%s1761 + $0x80] sm:$0x8]
        %v1787 = vld [vmem:[%s1761 + $0x84] sm:$0xf]
        %v1788 = vld [vmem:[%s1761 + $0x88] sm:$0xf]
        %v1789 = vld [vmem:[%s1761 + $0x90] sm:$0x8]
        %v1790 = vld [vmem:[%s1761 + $0x94] sm:$0xf]
        %v1791 = vld [vmem:[%s1761 + $0x98] sm:$0xf]
        %v1793 = vshrl.u32 %v1762, 16
        %v1795 = vrot.slane %v1793, 7
        %v1796 = vrot.slane %v1795, 4
        %v1798 = vshrl.u32 %v1763, 16
        %v1800 = vrot.slane %v1798, 7
        %v1801 = vshll.u32 %v1763, 16
        %v1803 = vor.u32 %v1800, %v1801
        %v1804 = vsel %vm574, %v1796, %v1803
        %v1805 = vrot.slane %v1800, 4
        %v1807 = vshrl.u32 %v1764, 16
        %v1809 = vrot.slane %v1807, 7
        %v1810 = vshll.u32 %v1764, 16
        %v1812 = vor.u32 %v1809, %v1810
        %v1813 = vsel %vm574, %v1805, %v1812
        %v1815 = vshrl.u32 %v1765, 16
        %v1817 = vrot.slane %v1815, 7
        %v1818 = vrot.slane %v1817, 4
        %v1820 = vshrl.u32 %v1766, 16
        %v1822 = vrot.slane %v1820, 7
        %v1823 = vshll.u32 %v1766, 16
        %v1825 = vor.u32 %v1822, %v1823
        %v1826 = vsel %vm574, %v1818, %v1825
        %v1827 = vrot.slane %v1822, 4
        %v1829 = vshrl.u32 %v1767, 16
        %v1831 = vrot.slane %v1829, 7
        %v1832 = vshll.u32 %v1767, 16
        %v1834 = vor.u32 %v1831, %v1832
        %v1835 = vsel %vm574, %v1827, %v1834
        %v1837 = vshrl.u32 %v1768, 16
        %v1839 = vrot.slane %v1837, 7
        %v1840 = vrot.slane %v1839, 4
        %v1842 = vshrl.u32 %v1769, 16
        %v1844 = vrot.slane %v1842, 7
        %v1845 = vshll.u32 %v1769, 16
        %v1847 = vor.u32 %v1844, %v1845
        %v1848 = vsel %vm574, %v1840, %v1847
        %v1849 = vrot.slane %v1844, 4
        %v1851 = vshrl.u32 %v1770, 16
        %v1853 = vrot.slane %v1851, 7
        %v1854 = vshll.u32 %v1770, 16
        %v1856 = vor.u32 %v1853, %v1854
        %v1857 = vsel %vm574, %v1849, %v1856
        %v1859 = vshrl.u32 %v1771, 16
        %v1861 = vrot.slane %v1859, 7
        %v1862 = vrot.slane %v1861, 4
        %v1864 = vshrl.u32 %v1772, 16
        %v1866 = vrot.slane %v1864, 7
        %v1867 = vshll.u32 %v1772, 16
        %v1869 = vor.u32 %v1866, %v1867
        %v1870 = vsel %vm574, %v1862, %v1869
        %v1871 = vrot.slane %v1866, 4
        %v1873 = vshrl.u32 %v1773, 16
        %v1875 = vrot.slane %v1873, 7
        %v1876 = vshll.u32 %v1773, 16
        %v1878 = vor.u32 %v1875, %v1876
        %v1879 = vsel %vm574, %v1871, %v1878
        %v1881 = vshrl.u32 %v1774, 16
        %v1883 = vrot.slane %v1881, 7
        %v1884 = vrot.slane %v1883, 4
        %v1886 = vshrl.u32 %v1775, 16
        %v1888 = vrot.slane %v1886, 7
        %v1889 = vshll.u32 %v1775, 16
        %v1891 = vor.u32 %v1888, %v1889
        %v1892 = vsel %vm574, %v1884, %v1891
        %v1893 = vrot.slane %v1888, 4
        %v1895 = vshrl.u32 %v1776, 16
        %v1897 = vrot.slane %v1895, 7
        %v1898 = vshll.u32 %v1776, 16
        %v1900 = vor.u32 %v1897, %v1898
        %v1901 = vsel %vm574, %v1893, %v1900
        %v1903 = vshrl.u32 %v1777, 16
        %v1905 = vrot.slane %v1903, 7
        %v1906 = vrot.slane %v1905, 4
        %v1908 = vshrl.u32 %v1778, 16
        %v1910 = vrot.slane %v1908, 7
        %v1911 = vshll.u32 %v1778, 16
        %v1913 = vor.u32 %v1910, %v1911
        %v1914 = vsel %vm574, %v1906, %v1913
        %v1915 = vrot.slane %v1910, 4
        %v1917 = vshrl.u32 %v1779, 16
        %v1919 = vrot.slane %v1917, 7
        %v1920 = vshll.u32 %v1779, 16
        %v1922 = vor.u32 %v1919, %v1920
        %v1923 = vsel %vm574, %v1915, %v1922
        %v1925 = vshrl.u32 %v1780, 16
        %v1927 = vrot.slane %v1925, 7
        %v1928 = vrot.slane %v1927, 4
        %v1930 = vshrl.u32 %v1781, 16
        %v1932 = vrot.slane %v1930, 7
        %v1933 = vshll.u32 %v1781, 16
        %v1935 = vor.u32 %v1932, %v1933
        %v1936 = vsel %vm574, %v1928, %v1935
        %v1937 = vrot.slane %v1932, 4
        %v1939 = vshrl.u32 %v1782, 16
        %v1941 = vrot.slane %v1939, 7
        %v1942 = vshll.u32 %v1782, 16
        %v1944 = vor.u32 %v1941, %v1942
        %v1945 = vsel %vm574, %v1937, %v1944
        %v1947 = vshrl.u32 %v1783, 16
        %v1949 = vrot.slane %v1947, 7
        %v1950 = vrot.slane %v1949, 4
        %v1952 = vshrl.u32 %v1784, 16
        %v1954 = vrot.slane %v1952, 7
        %v1955 = vshll.u32 %v1784, 16
        %v1957 = vor.u32 %v1954, %v1955
        %v1958 = vsel %vm574, %v1950, %v1957
        %v1959 = vrot.slane %v1954, 4
        %v1961 = vshrl.u32 %v1785, 16
        %v1963 = vrot.slane %v1961, 7
        %v1964 = vshll.u32 %v1785, 16
        %v1966 = vor.u32 %v1963, %v1964
        %v1967 = vsel %vm574, %v1959, %v1966
        %v1969 = vshrl.u32 %v1786, 16
        %v1971 = vrot.slane %v1969, 7
        %v1972 = vrot.slane %v1971, 4
        %v1974 = vshrl.u32 %v1787, 16
        %v1976 = vrot.slane %v1974, 7
        %v1977 = vshll.u32 %v1787, 16
        %v1979 = vor.u32 %v1976, %v1977
        %v1980 = vsel %vm574, %v1972, %v1979
        %v1981 = vrot.slane %v1976, 4
        %v1983 = vshrl.u32 %v1788, 16
        %v1985 = vrot.slane %v1983, 7
        %v1986 = vshll.u32 %v1788, 16
        %v1988 = vor.u32 %v1985, %v1986
        %v1989 = vsel %vm574, %v1981, %v1988
        %v1991 = vshrl.u32 %v1789, 16
        %v1993 = vrot.slane %v1991, 7
        %v1994 = vrot.slane %v1993, 4
        %v1996 = vshrl.u32 %v1790, 16
        %v1998 = vrot.slane %v1996, 7
        %v1999 = vshll.u32 %v1790, 16
        %v2001 = vor.u32 %v1998, %v1999
        %v2002 = vsel %vm574, %v1994, %v2001
        %v2003 = vrot.slane %v1998, 4
        %v2005 = vshrl.u32 %v1791, 16
        %v2007 = vrot.slane %v2005, 7
        %v2008 = vshll.u32 %v1791, 16
        %v2010 = vor.u32 %v2007, %v2008
        %v2011 = vsel %vm574, %v2003, %v2010
        %s2012 = scalar_lea.vmem [#allocation10], 192
        %v2013 = vld [vmem:[%s2012] sm:$0xf]
        %v2014 = vld [vmem:[%s2012 + $0x4] sm:$0xf]
        %v2015 = vld [vmem:[%s2012 + $0x8] sm:$0xf]
        %v2016 = vld [vmem:[%s2012 + $0xc] sm:$0xf]
        %v2017 = vld [vmem:[%s2012 + $0x10] sm:$0xf]
        %v2018 = vld [vmem:[%s2012 + $0x14] sm:$0xf]
        %v2019 = vld [vmem:[%s2012 + $0x18] sm:$0xf]
        %v2020 = vld [vmem:[%s2012 + $0x1c] sm:$0xf]
        %v2021 = vld [vmem:[%s2012 + $0x20] sm:$0xf]
        %v2022 = vld [vmem:[%s2012 + $0x24] sm:$0xf]
        %v2023 = vld [vmem:[%s2012 + $0x28] sm:$0xf]
        %v2024 = vld [vmem:[%s2012 + $0x2c] sm:$0xf]
        %v2025 = vld [vmem:[%s2012 + $0x30] sm:$0xf]
        %v2026 = vld [vmem:[%s2012 + $0x34] sm:$0xf]
        %v2027 = vld [vmem:[%s2012 + $0x38] sm:$0xf]
        %v2028 = vld [vmem:[%s2012 + $0x3c] sm:$0xf]
        %v2029 = vunpack.c.l.b16 %v1804
        %v2030 = vunpack.c.l.b16 %v1813
        %v2031 = vunpack.c.l.b16 %v1826
        %v2032 = vunpack.c.l.b16 %v1835
        %v2033 = vunpack.c.l.b16 %v1848
        %v2034 = vunpack.c.l.b16 %v1857
        %v2035 = vunpack.c.l.b16 %v1870
        %v2036 = vunpack.c.l.b16 %v1879
        %v2037 = vunpack.c.l.b16 %v1892
        %v2038 = vunpack.c.l.b16 %v1901
        %v2039 = vunpack.c.l.b16 %v1914
        %v2040 = vunpack.c.l.b16 %v1923
        %v2041 = vunpack.c.l.b16 %v1936
        %v2042 = vunpack.c.l.b16 %v1945
        %v2043 = vunpack.c.l.b16 %v1958
        %v2044 = vunpack.c.l.b16 %v1967
        %v2045 = vunpack.c.l.b16 %v1980
        %v2046 = vunpack.c.l.b16 %v1989
        %v2047 = vunpack.c.l.b16 %v2002
        %v2048 = vunpack.c.l.b16 %v2011
        %v2049 = vpack.c.b16 %v2030, %v2029
        %v2050 = vpack.c.b16 %v2032, %v2031
        %v2051 = vpack.c.b16 %v2034, %v2033
        %v2052 = vpack.c.b16 %v2036, %v2035
        %v2053 = vpack.c.b16 %v2038, %v2037
        %v2054 = vpack.c.b16 %v2040, %v2039
        %v2055 = vpack.c.b16 %v2042, %v2041
        %v2056 = vpack.c.b16 %v2044, %v2043
        %v2057 = vpack.c.b16 %v2046, %v2045
        %v2058 = vpack.c.b16 %v2048, %v2047
        %v2085 = vunpack.c.l.b16 %v2013
        %v2086 = vunpack.c.l.b16 %v2014
        %v2087 = vunpack.c.l.b16 %v2015
        %v2088 = vunpack.c.l.b16 %v2016
        %v2089 = vunpack.c.l.b16 %v2017
        %v2090 = vunpack.c.l.b16 %v2018
        %v2091 = vunpack.c.l.b16 %v2019
        %v2092 = vunpack.c.l.b16 %v2020
        %v2093 = vunpack.c.l.b16 %v2021
        %v2094 = vunpack.c.l.b16 %v2022
        %v2095 = vunpack.c.l.b16 %v2023
        %v2096 = vunpack.c.l.b16 %v2024
        %v2097 = vunpack.c.l.b16 %v2025
        %v2098 = vunpack.c.l.b16 %v2026
        %v2099 = vunpack.c.l.b16 %v2027
        %v2100 = vunpack.c.l.b16 %v2028
        %v2101 = vpack.c.b16 %v2086, %v2085
        %v2102 = vpack.c.b16 %v2088, %v2087
        %v2103 = vpack.c.b16 %v2090, %v2089
        %v2104 = vpack.c.b16 %v2092, %v2091
        %v2105 = vpack.c.b16 %v2094, %v2093
        %v2106 = vpack.c.b16 %v2096, %v2095
        %v2107 = vpack.c.b16 %v2098, %v2097
        %v2108 = vpack.c.b16 %v2100, %v2099
        %2117 = vmatprep.subr.bf16.mxu0 0
        %2118 = vmatpush1.bf16.msra.mxu0 %v2108
        %2119 = vmatprep.subr.bf16.mxu0 0
        %2120 = vmatpush1.bf16.msra.mxu0 %v2107
        %2121 = vmatprep.subr.bf16.mxu0 0
        %2122 = vmatpush1.bf16.msra.mxu0 %v2106
        %2123 = vmatprep.subr.bf16.mxu0 0
        %2124 = vmatpush1.bf16.msra.mxu0 %v2105
        %2125 = vmatprep.subr.bf16.mxu0 0
        %2126 = vmatpush1.bf16.msra.mxu0 %v2104
        %2127 = vmatprep.subr.bf16.mxu0 0
        %2128 = vmatpush1.bf16.msra.mxu0 %v2103
        %2129 = vmatprep.subr.bf16.mxu0 0
        %2130 = vmatpush1.bf16.msra.mxu0 %v2102
        %2131 = vmatprep.subr.bf16.mxu0 0
        %2132 = vmatpush1.bf16.msra.mxu0 %v2101
        %2133 = vmatprep.subr.bf16.mxu0 0
        %2134 = vmatpush2.bf16.msra.mxu0 0
        %2135 = vmatprep.subr.bf16.mxu0 0
        %2136 = vmatpush2.bf16.msra.mxu0 0
        %2137 = vmatprep.subr.bf16.mxu0 0
        %2138 = vmatpush2.bf16.msra.mxu0 0
        %2139 = vmatprep.subr.bf16.mxu0 0
        %2140 = vmatpush2.bf16.msra.mxu0 0
        %2141 = vmatprep.subr.bf16.mxu0 0
        %2142 = vmatpush2.bf16.msra.mxu0 0
        %2143 = vmatprep.subr.bf16.mxu0 0
        %2144 = vmatpush2.bf16.msra.mxu0 0
        %2145 = vmatprep.subr.bf16.mxu0 0
        %2146 = vmatpush2.bf16.msra.mxu0 0
        %2147 = vmatprep.subr.bf16.mxu0 0
        %2148 = vmatpush2.bf16.msra.mxu0 0
        %2149 = vmatprep.mubr.bf16.mxu0 0
        %2150 = vmatmul.mubr.bf16.gmra.mxu0 %v2049
        %v2151 = vpop.f32.mrf.mxu0
        %v2152 = vadd.f32 0.0, %v2151
        %v2153 = vpop.f32.mrf.mxu0
        %v2154 = vpop.f32.mrf.mxu0
        %v2155 = vadd.f32 0.0, %v2154
        %v2156 = vpop.f32.mrf.mxu0
        %2157 = vmatprep.mubr.bf16.mxu0 0
        %2158 = vmatmul.mubr.bf16.gmra.mxu0 %v2050
        %v2159 = vpop.f32.mrf.mxu0
        %v2160 = vadd.f32 0.0, %v2159
        %v2161 = vpop.f32.mrf.mxu0
        %v2162 = vpop.f32.mrf.mxu0
        %v2163 = vadd.f32 0.0, %v2162
        %v2164 = vpop.f32.mrf.mxu0
        %2165 = vmatprep.mubr.bf16.mxu0 0
        %2166 = vmatmul.mubr.bf16.gmra.mxu0 %v2051
        %v2167 = vpop.f32.mrf.mxu0
        %v2168 = vadd.f32 0.0, %v2167
        %v2169 = vpop.f32.mrf.mxu0
        %v2170 = vpop.f32.mrf.mxu0
        %v2171 = vadd.f32 0.0, %v2170
        %v2172 = vpop.f32.mrf.mxu0
        %2173 = vmatprep.mubr.bf16.mxu0 0
        %2174 = vmatmul.mubr.bf16.gmra.mxu0 %v2052
        %v2175 = vpop.f32.mrf.mxu0
        %v2176 = vadd.f32 0.0, %v2175
        %v2177 = vpop.f32.mrf.mxu0
        %v2178 = vpop.f32.mrf.mxu0
        %v2179 = vadd.f32 0.0, %v2178
        %v2180 = vpop.f32.mrf.mxu0
        %2181 = vmatprep.mubr.bf16.mxu0 0
        %2182 = vmatmul.mubr.bf16.gmra.mxu0 %v2053
        %v2183 = vpop.f32.mrf.mxu0
        %v2184 = vadd.f32 0.0, %v2183
        %v2185 = vpop.f32.mrf.mxu0
        %v2186 = vpop.f32.mrf.mxu0
        %v2187 = vadd.f32 0.0, %v2186
        %v2188 = vpop.f32.mrf.mxu0
        %2189 = vmatprep.mubr.bf16.mxu0 0
        %2190 = vmatmul.mubr.bf16.gmra.mxu0 %v2054
        %v2191 = vpop.f32.mrf.mxu0
        %v2192 = vadd.f32 0.0, %v2191
        %v2193 = vpop.f32.mrf.mxu0
        %v2194 = vpop.f32.mrf.mxu0
        %v2195 = vadd.f32 0.0, %v2194
        %v2196 = vpop.f32.mrf.mxu0
        %2197 = vmatprep.mubr.bf16.mxu0 0
        %2198 = vmatmul.mubr.bf16.gmra.mxu0 %v2055
        %v2199 = vpop.f32.mrf.mxu0
        %v2200 = vadd.f32 0.0, %v2199
        %v2201 = vpop.f32.mrf.mxu0
        %v2202 = vpop.f32.mrf.mxu0
        %v2203 = vadd.f32 0.0, %v2202
        %v2204 = vpop.f32.mrf.mxu0
        %2205 = vmatprep.mubr.bf16.mxu0 0
        %2206 = vmatmul.mubr.bf16.gmra.mxu0 %v2056
        %v2207 = vpop.f32.mrf.mxu0
        %v2208 = vadd.f32 0.0, %v2207
        %v2209 = vpop.f32.mrf.mxu0
        %v2210 = vpop.f32.mrf.mxu0
        %v2211 = vadd.f32 0.0, %v2210
        %v2212 = vpop.f32.mrf.mxu0
        %2213 = vmatprep.mubr.bf16.mxu0 0
        %2214 = vmatmul.mubr.bf16.gmra.mxu0 %v2057
        %v2215 = vpop.f32.mrf.mxu0
        %v2216 = vadd.f32 0.0, %v2215
        %v2217 = vpop.f32.mrf.mxu0
        %v2218 = vpop.f32.mrf.mxu0
        %v2219 = vadd.f32 0.0, %v2218
        %v2220 = vpop.f32.mrf.mxu0
        %2221 = vmatprep.mubr.bf16.mxu0 0
        %2222 = vmatmul.mubr.bf16.gmra.mxu0 %v2058
        %v2223 = vpop.f32.mrf.mxu0
        %v2224 = vadd.f32 0.0, %v2223
        %v2225 = vpop.f32.mrf.mxu0
        %v2226 = vpop.f32.mrf.mxu0
        %v2227 = vadd.f32 0.0, %v2226
        %v2228 = vpop.f32.mrf.mxu0
        %2229 = vdwg.mxu0
        %v2230 = vadd.f32 %v1741, %v2152
        %v2231 = vadd.f32 %v1742, %v2155
        %v2232 = vadd.f32 %v1743, %v2160
        %v2233 = vadd.f32 %v1744, %v2163
        %v2234 = vadd.f32 %v1745, %v2168
        %v2235 = vadd.f32 %v1746, %v2171
        %v2236 = vadd.f32 %v1747, %v2176
        %v2237 = vadd.f32 %v1748, %v2179
        %v2238 = vadd.f32 %v1749, %v2184
        %v2239 = vadd.f32 %v1750, %v2187
        %v2240 = vadd.f32 %v1751, %v2192
        %v2241 = vadd.f32 %v1752, %v2195
        %v2242 = vadd.f32 %v1753, %v2200
        %v2243 = vadd.f32 %v1754, %v2203
        %v2244 = vadd.f32 %v1755, %v2208
        %v2245 = vadd.f32 %v1756, %v2211
        %v2246 = vadd.f32 %v1757, %v2216
        %v2247 = vadd.f32 %v1758, %v2219
        %v2248 = vadd.f32 %v1759, %v2224
        %v2249 = vadd.f32 %v1760, %v2227
        %s2250 = scalar_lea.vmem [#allocation10], 256
        %v2251 = vld [vmem:[%s2250] sm:$0xf]
        %v2252 = vld [vmem:[%s2250 + $0x4] sm:$0xf]
        %v2253 = vld [vmem:[%s2250 + $0x8] sm:$0xf]
        %v2254 = vld [vmem:[%s2250 + $0xc] sm:$0xf]
        %v2255 = vld [vmem:[%s2250 + $0x10] sm:$0xf]
        %v2256 = vld [vmem:[%s2250 + $0x14] sm:$0xf]
        %v2257 = vld [vmem:[%s2250 + $0x18] sm:$0xf]
        %v2258 = vld [vmem:[%s2250 + $0x1c] sm:$0xf]
        %v2259 = vld [vmem:[%s2250 + $0x20] sm:$0xf]
        %v2260 = vld [vmem:[%s2250 + $0x24] sm:$0xf]
        %v2261 = vld [vmem:[%s2250 + $0x28] sm:$0xf]
        %v2262 = vld [vmem:[%s2250 + $0x2c] sm:$0xf]
        %v2263 = vld [vmem:[%s2250 + $0x30] sm:$0xf]
        %v2264 = vld [vmem:[%s2250 + $0x34] sm:$0xf]
        %v2265 = vld [vmem:[%s2250 + $0x38] sm:$0xf]
        %v2266 = vld [vmem:[%s2250 + $0x3c] sm:$0xf]
        %v2287 = vunpack.c.l.b16 %v1763
        %v2288 = vunpack.c.l.b16 %v1764
        %v2289 = vunpack.c.l.b16 %v1766
        %v2290 = vunpack.c.l.b16 %v1767
        %v2291 = vunpack.c.l.b16 %v1769
        %v2292 = vunpack.c.l.b16 %v1770
        %v2293 = vunpack.c.l.b16 %v1772
        %v2294 = vunpack.c.l.b16 %v1773
        %v2295 = vunpack.c.l.b16 %v1775
        %v2296 = vunpack.c.l.b16 %v1776
        %v2297 = vunpack.c.l.b16 %v1778
        %v2298 = vunpack.c.l.b16 %v1779
        %v2299 = vunpack.c.l.b16 %v1781
        %v2300 = vunpack.c.l.b16 %v1782
        %v2301 = vunpack.c.l.b16 %v1784
        %v2302 = vunpack.c.l.b16 %v1785
        %v2303 = vunpack.c.l.b16 %v1787
        %v2304 = vunpack.c.l.b16 %v1788
        %v2305 = vunpack.c.l.b16 %v1790
        %v2306 = vunpack.c.l.b16 %v1791
        %v2307 = vpack.c.b16 %v2288, %v2287
        %v2308 = vpack.c.b16 %v2290, %v2289
        %v2309 = vpack.c.b16 %v2292, %v2291
        %v2310 = vpack.c.b16 %v2294, %v2293
        %v2311 = vpack.c.b16 %v2296, %v2295
        %v2312 = vpack.c.b16 %v2298, %v2297
        %v2313 = vpack.c.b16 %v2300, %v2299
        %v2314 = vpack.c.b16 %v2302, %v2301
        %v2315 = vpack.c.b16 %v2304, %v2303
        %v2316 = vpack.c.b16 %v2306, %v2305
        %v2343 = vunpack.c.l.b16 %v2251
        %v2344 = vunpack.c.l.b16 %v2252
        %v2345 = vunpack.c.l.b16 %v2253
        %v2346 = vunpack.c.l.b16 %v2254
        %v2347 = vunpack.c.l.b16 %v2255
        %v2348 = vunpack.c.l.b16 %v2256
        %v2349 = vunpack.c.l.b16 %v2257
        %v2350 = vunpack.c.l.b16 %v2258
        %v2351 = vunpack.c.l.b16 %v2259
        %v2352 = vunpack.c.l.b16 %v2260
        %v2353 = vunpack.c.l.b16 %v2261
        %v2354 = vunpack.c.l.b16 %v2262
        %v2355 = vunpack.c.l.b16 %v2263
        %v2356 = vunpack.c.l.b16 %v2264
        %v2357 = vunpack.c.l.b16 %v2265
        %v2358 = vunpack.c.l.b16 %v2266
        %v2359 = vpack.c.b16 %v2344, %v2343
        %v2360 = vpack.c.b16 %v2346, %v2345
        %v2361 = vpack.c.b16 %v2348, %v2347
        %v2362 = vpack.c.b16 %v2350, %v2349
        %v2363 = vpack.c.b16 %v2352, %v2351
        %v2364 = vpack.c.b16 %v2354, %v2353
        %v2365 = vpack.c.b16 %v2356, %v2355
        %v2366 = vpack.c.b16 %v2358, %v2357
        %2375 = vmatprep.subr.bf16.mxu0 0
        %2376 = vmatpush1.bf16.msra.mxu0 %v2366
        %2377 = vmatprep.subr.bf16.mxu0 0
        %2378 = vmatpush1.bf16.msra.mxu0 %v2365
        %2379 = vmatprep.subr.bf16.mxu0 0
        %2380 = vmatpush1.bf16.msra.mxu0 %v2364
        %2381 = vmatprep.subr.bf16.mxu0 0
        %2382 = vmatpush1.bf16.msra.mxu0 %v2363
        %2383 = vmatprep.subr.bf16.mxu0 0
        %2384 = vmatpush1.bf16.msra.mxu0 %v2362
        %2385 = vmatprep.subr.bf16.mxu0 0
        %2386 = vmatpush1.bf16.msra.mxu0 %v2361
        %2387 = vmatprep.subr.bf16.mxu0 0
        %2388 = vmatpush1.bf16.msra.mxu0 %v2360
        %2389 = vmatprep.subr.bf16.mxu0 0
        %2390 = vmatpush1.bf16.msra.mxu0 %v2359
        %2391 = vmatprep.subr.bf16.mxu0 0
        %2392 = vmatpush2.bf16.msra.mxu0 0
        %2393 = vmatprep.subr.bf16.mxu0 0
        %2394 = vmatpush2.bf16.msra.mxu0 0
        %2395 = vmatprep.subr.bf16.mxu0 0
        %2396 = vmatpush2.bf16.msra.mxu0 0
        %2397 = vmatprep.subr.bf16.mxu0 0
        %2398 = vmatpush2.bf16.msra.mxu0 0
        %2399 = vmatprep.subr.bf16.mxu0 0
        %2400 = vmatpush2.bf16.msra.mxu0 0
        %2401 = vmatprep.subr.bf16.mxu0 0
        %2402 = vmatpush2.bf16.msra.mxu0 0
        %2403 = vmatprep.subr.bf16.mxu0 0
        %2404 = vmatpush2.bf16.msra.mxu0 0
        %2405 = vmatprep.subr.bf16.mxu0 0
        %2406 = vmatpush2.bf16.msra.mxu0 0
        %2407 = vmatprep.mubr.bf16.mxu0 0
        %2408 = vmatmul.mubr.bf16.gmra.mxu0 %v2307
        %v2409 = vpop.f32.mrf.mxu0
        %v2410 = vadd.f32 0.0, %v2409
        %v2411 = vpop.f32.mrf.mxu0
        %v2412 = vpop.f32.mrf.mxu0
        %v2413 = vadd.f32 0.0, %v2412
        %v2414 = vpop.f32.mrf.mxu0
        %2415 = vmatprep.mubr.bf16.mxu0 0
        %2416 = vmatmul.mubr.bf16.gmra.mxu0 %v2308
        %v2417 = vpop.f32.mrf.mxu0
        %v2418 = vadd.f32 0.0, %v2417
        %v2419 = vpop.f32.mrf.mxu0
        %v2420 = vpop.f32.mrf.mxu0
        %v2421 = vadd.f32 0.0, %v2420
        %v2422 = vpop.f32.mrf.mxu0
        %2423 = vmatprep.mubr.bf16.mxu0 0
        %2424 = vmatmul.mubr.bf16.gmra.mxu0 %v2309
        %v2425 = vpop.f32.mrf.mxu0
        %v2426 = vadd.f32 0.0, %v2425
        %v2427 = vpop.f32.mrf.mxu0
        %v2428 = vpop.f32.mrf.mxu0
        %v2429 = vadd.f32 0.0, %v2428
        %v2430 = vpop.f32.mrf.mxu0
        %2431 = vmatprep.mubr.bf16.mxu0 0
        %2432 = vmatmul.mubr.bf16.gmra.mxu0 %v2310
        %v2433 = vpop.f32.mrf.mxu0
        %v2434 = vadd.f32 0.0, %v2433
        %v2435 = vpop.f32.mrf.mxu0
        %v2436 = vpop.f32.mrf.mxu0
        %v2437 = vadd.f32 0.0, %v2436
        %v2438 = vpop.f32.mrf.mxu0
        %2439 = vmatprep.mubr.bf16.mxu0 0
        %2440 = vmatmul.mubr.bf16.gmra.mxu0 %v2311
        %v2441 = vpop.f32.mrf.mxu0
        %v2442 = vadd.f32 0.0, %v2441
        %v2443 = vpop.f32.mrf.mxu0
        %v2444 = vpop.f32.mrf.mxu0
        %v2445 = vadd.f32 0.0, %v2444
        %v2446 = vpop.f32.mrf.mxu0
        %2447 = vmatprep.mubr.bf16.mxu0 0
        %2448 = vmatmul.mubr.bf16.gmra.mxu0 %v2312
        %v2449 = vpop.f32.mrf.mxu0
        %v2450 = vadd.f32 0.0, %v2449
        %v2451 = vpop.f32.mrf.mxu0
        %v2452 = vpop.f32.mrf.mxu0
        %v2453 = vadd.f32 0.0, %v2452
        %v2454 = vpop.f32.mrf.mxu0
        %2455 = vmatprep.mubr.bf16.mxu0 0
        %2456 = vmatmul.mubr.bf16.gmra.mxu0 %v2313
        %v2457 = vpop.f32.mrf.mxu0
        %v2458 = vadd.f32 0.0, %v2457
        %v2459 = vpop.f32.mrf.mxu0
        %v2460 = vpop.f32.mrf.mxu0
        %v2461 = vadd.f32 0.0, %v2460
        %v2462 = vpop.f32.mrf.mxu0
        %2463 = vmatprep.mubr.bf16.mxu0 0
        %2464 = vmatmul.mubr.bf16.gmra.mxu0 %v2314
        %v2465 = vpop.f32.mrf.mxu0
        %v2466 = vadd.f32 0.0, %v2465
        %v2467 = vpop.f32.mrf.mxu0
        %v2468 = vpop.f32.mrf.mxu0
        %v2469 = vadd.f32 0.0, %v2468
        %v2470 = vpop.f32.mrf.mxu0
        %2471 = vmatprep.mubr.bf16.mxu0 0
        %2472 = vmatmul.mubr.bf16.gmra.mxu0 %v2315
        %v2473 = vpop.f32.mrf.mxu0
        %v2474 = vadd.f32 0.0, %v2473
        %v2475 = vpop.f32.mrf.mxu0
        %v2476 = vpop.f32.mrf.mxu0
        %v2477 = vadd.f32 0.0, %v2476
        %v2478 = vpop.f32.mrf.mxu0
        %2479 = vmatprep.mubr.bf16.mxu0 0
        %2480 = vmatmul.mubr.bf16.gmra.mxu0 %v2316
        %v2481 = vpop.f32.mrf.mxu0
        %v2482 = vadd.f32 0.0, %v2481
        %v2483 = vpop.f32.mrf.mxu0
        %v2484 = vpop.f32.mrf.mxu0
        %v2485 = vadd.f32 0.0, %v2484
        %v2486 = vpop.f32.mrf.mxu0
        %2487 = vdwg.mxu0
        %v2488 = vadd.f32 %v2230, %v2410
        %v2489 = vadd.f32 %v2231, %v2413
        %v2490 = vadd.f32 %v2232, %v2418
        %v2491 = vadd.f32 %v2233, %v2421
        %v2492 = vadd.f32 %v2234, %v2426
        %v2493 = vadd.f32 %v2235, %v2429
        %v2494 = vadd.f32 %v2236, %v2434
        %v2495 = vadd.f32 %v2237, %v2437
        %v2496 = vadd.f32 %v2238, %v2442
        %v2497 = vadd.f32 %v2239, %v2445
        %v2498 = vadd.f32 %v2240, %v2450
        %v2499 = vadd.f32 %v2241, %v2453
        %v2500 = vadd.f32 %v2242, %v2458
        %v2501 = vadd.f32 %v2243, %v2461
        %v2502 = vadd.f32 %v2244, %v2466
        %v2503 = vadd.f32 %v2245, %v2469
        %v2504 = vadd.f32 %v2246, %v2474
        %v2505 = vadd.f32 %v2247, %v2477
        %v2506 = vadd.f32 %v2248, %v2482
        %v2507 = vadd.f32 %v2249, %v2485
        %v2508 = vld [vmem:[%s1761 + $0x4] sm:$0xf]
        %v2509 = vld [vmem:[%s1761 + $0x8] sm:$0xf]
        %v2510 = vld [vmem:[%s1761 + $0xc] sm:$0x1]
        %v2511 = vld [vmem:[%s1761 + $0x14] sm:$0xf]
        %v2512 = vld [vmem:[%s1761 + $0x18] sm:$0xf]
        %v2513 = vld [vmem:[%s1761 + $0x1c] sm:$0x1]
        %v2514 = vld [vmem:[%s1761 + $0x24] sm:$0xf]
        %v2515 = vld [vmem:[%s1761 + $0x28] sm:$0xf]
        %v2516 = vld [vmem:[%s1761 + $0x2c] sm:$0x1]
        %v2517 = vld [vmem:[%s1761 + $0x34] sm:$0xf]
        %v2518 = vld [vmem:[%s1761 + $0x38] sm:$0xf]
        %v2519 = vld [vmem:[%s1761 + $0x3c] sm:$0x1]
        %v2520 = vld [vmem:[%s1761 + $0x44] sm:$0xf]
        %v2521 = vld [vmem:[%s1761 + $0x48] sm:$0xf]
        %v2522 = vld [vmem:[%s1761 + $0x4c] sm:$0x1]
        %v2523 = vld [vmem:[%s1761 + $0x54] sm:$0xf]
        %v2524 = vld [vmem:[%s1761 + $0x58] sm:$0xf]
        %v2525 = vld [vmem:[%s1761 + $0x5c] sm:$0x1]
        %v2526 = vld [vmem:[%s1761 + $0x64] sm:$0xf]
        %v2527 = vld [vmem:[%s1761 + $0x68] sm:$0xf]
        %v2528 = vld [vmem:[%s1761 + $0x6c] sm:$0x1]
        %v2529 = vld [vmem:[%s1761 + $0x74] sm:$0xf]
        %v2530 = vld [vmem:[%s1761 + $0x78] sm:$0xf]
        %v2531 = vld [vmem:[%s1761 + $0x7c] sm:$0x1]
        %v2532 = vld [vmem:[%s1761 + $0x84] sm:$0xf]
        %v2533 = vld [vmem:[%s1761 + $0x88] sm:$0xf]
        %v2534 = vld [vmem:[%s1761 + $0x8c] sm:$0x1]
        %v2535 = vld [vmem:[%s1761 + $0x94] sm:$0xf]
        %v2536 = vld [vmem:[%s1761 + $0x98] sm:$0xf]
        %v2537 = vld [vmem:[%s1761 + $0x9c] sm:$0x1]
        %v2539 = vshrl.u32 %v2508, 16
        %v2541 = vrot.slane %v2539, 4
        %v2542 = vshll.u32 %v2508, 16
        %v2544 = vrot.slane %v2542, 5
        %v2545 = vor.u32 %v2541, %v2544
        %v2546 = vrot.slane %v2545, 4
        %v2548 = vshll.u32 %v2509, 16
        %v2550 = vrot.slane %v2548, 5
        %v2551 = vsel %vm1282, %v2546, %v2550
        %v2552 = vshrl.u32 %v2509, 16
        %v2554 = vrot.slane %v2552, 4
        %v2555 = vor.u32 %v2554, %v2550
        %v2556 = vrot.slane %v2555, 4
        %v2558 = vshll.u32 %v2510, 16
        %v2560 = vrot.slane %v2558, 5
        %v2561 = vsel %vm1282, %v2556, %v2560
        %v2563 = vshrl.u32 %v2511, 16
        %v2565 = vrot.slane %v2563, 4
        %v2566 = vshll.u32 %v2511, 16
        %v2568 = vrot.slane %v2566, 5
        %v2569 = vor.u32 %v2565, %v2568
        %v2570 = vrot.slane %v2569, 4
        %v2572 = vshll.u32 %v2512, 16
        %v2574 = vrot.slane %v2572, 5
        %v2575 = vsel %vm1282, %v2570, %v2574
        %v2576 = vshrl.u32 %v2512, 16
        %v2578 = vrot.slane %v2576, 4
        %v2579 = vor.u32 %v2578, %v2574
        %v2580 = vrot.slane %v2579, 4
        %v2582 = vshll.u32 %v2513, 16
        %v2584 = vrot.slane %v2582, 5
        %v2585 = vsel %vm1282, %v2580, %v2584
        %v2587 = vshrl.u32 %v2514, 16
        %v2589 = vrot.slane %v2587, 4
        %v2590 = vshll.u32 %v2514, 16
        %v2592 = vrot.slane %v2590, 5
        %v2593 = vor.u32 %v2589, %v2592
        %v2594 = vrot.slane %v2593, 4
        %v2596 = vshll.u32 %v2515, 16
        %v2598 = vrot.slane %v2596, 5
        %v2599 = vsel %vm1282, %v2594, %v2598
        %v2600 = vshrl.u32 %v2515, 16
        %v2602 = vrot.slane %v2600, 4
        %v2603 = vor.u32 %v2602, %v2598
        %v2604 = vrot.slane %v2603, 4
        %v2606 = vshll.u32 %v2516, 16
        %v2608 = vrot.slane %v2606, 5
        %v2609 = vsel %vm1282, %v2604, %v2608
        %v2611 = vshrl.u32 %v2517, 16
        %v2613 = vrot.slane %v2611, 4
        %v2614 = vshll.u32 %v2517, 16
        %v2616 = vrot.slane %v2614, 5
        %v2617 = vor.u32 %v2613, %v2616
        %v2618 = vrot.slane %v2617, 4
        %v2620 = vshll.u32 %v2518, 16
        %v2622 = vrot.slane %v2620, 5
        %v2623 = vsel %vm1282, %v2618, %v2622
        %v2624 = vshrl.u32 %v2518, 16
        %v2626 = vrot.slane %v2624, 4
        %v2627 = vor.u32 %v2626, %v2622
        %v2628 = vrot.slane %v2627, 4
        %v2630 = vshll.u32 %v2519, 16
        %v2632 = vrot.slane %v2630, 5
        %v2633 = vsel %vm1282, %v2628, %v2632
        %v2635 = vshrl.u32 %v2520, 16
        %v2637 = vrot.slane %v2635, 4
        %v2638 = vshll.u32 %v2520, 16
        %v2640 = vrot.slane %v2638, 5
        %v2641 = vor.u32 %v2637, %v2640
        %v2642 = vrot.slane %v2641, 4
        %v2644 = vshll.u32 %v2521, 16
        %v2646 = vrot.slane %v2644, 5
        %v2647 = vsel %vm1282, %v2642, %v2646
        %v2648 = vshrl.u32 %v2521, 16
        %v2650 = vrot.slane %v2648, 4
        %v2651 = vor.u32 %v2650, %v2646
        %v2652 = vrot.slane %v2651, 4
        %v2654 = vshll.u32 %v2522, 16
        %v2656 = vrot.slane %v2654, 5
        %v2657 = vsel %vm1282, %v2652, %v2656
        %v2659 = vshrl.u32 %v2523, 16
        %v2661 = vrot.slane %v2659, 4
        %v2662 = vshll.u32 %v2523, 16
        %v2664 = vrot.slane %v2662, 5
        %v2665 = vor.u32 %v2661, %v2664
        %v2666 = vrot.slane %v2665, 4
        %v2668 = vshll.u32 %v2524, 16
        %v2670 = vrot.slane %v2668, 5
        %v2671 = vsel %vm1282, %v2666, %v2670
        %v2672 = vshrl.u32 %v2524, 16
        %v2674 = vrot.slane %v2672, 4
        %v2675 = vor.u32 %v2674, %v2670
        %v2676 = vrot.slane %v2675, 4
        %v2678 = vshll.u32 %v2525, 16
        %v2680 = vrot.slane %v2678, 5
        %v2681 = vsel %vm1282, %v2676, %v2680
        %v2683 = vshrl.u32 %v2526, 16
        %v2685 = vrot.slane %v2683, 4
        %v2686 = vshll.u32 %v2526, 16
        %v2688 = vrot.slane %v2686, 5
        %v2689 = vor.u32 %v2685, %v2688
        %v2690 = vrot.slane %v2689, 4
        %v2692 = vshll.u32 %v2527, 16
        %v2694 = vrot.slane %v2692, 5
        %v2695 = vsel %vm1282, %v2690, %v2694
        %v2696 = vshrl.u32 %v2527, 16
        %v2698 = vrot.slane %v2696, 4
        %v2699 = vor.u32 %v2698, %v2694
        %v2700 = vrot.slane %v2699, 4
        %v2702 = vshll.u32 %v2528, 16
        %v2704 = vrot.slane %v2702, 5
        %v2705 = vsel %vm1282, %v2700, %v2704
        %v2707 = vshrl.u32 %v2529, 16
        %v2709 = vrot.slane %v2707, 4
        %v2710 = vshll.u32 %v2529, 16
        %v2712 = vrot.slane %v2710, 5
        %v2713 = vor.u32 %v2709, %v2712
        %v2714 = vrot.slane %v2713, 4
        %v2716 = vshll.u32 %v2530, 16
        %v2718 = vrot.slane %v2716, 5
        %v2719 = vsel %vm1282, %v2714, %v2718
        %v2720 = vshrl.u32 %v2530, 16
        %v2722 = vrot.slane %v2720, 4
        %v2723 = vor.u32 %v2722, %v2718
        %v2724 = vrot.slane %v2723, 4
        %v2726 = vshll.u32 %v2531, 16
        %v2728 = vrot.slane %v2726, 5
        %v2729 = vsel %vm1282, %v2724, %v2728
        %v2731 = vshrl.u32 %v2532, 16
        %v2733 = vrot.slane %v2731, 4
        %v2734 = vshll.u32 %v2532, 16
        %v2736 = vrot.slane %v2734, 5
        %v2737 = vor.u32 %v2733, %v2736
        %v2738 = vrot.slane %v2737, 4
        %v2740 = vshll.u32 %v2533, 16
        %v2742 = vrot.slane %v2740, 5
        %v2743 = vsel %vm1282, %v2738, %v2742
        %v2744 = vshrl.u32 %v2533, 16
        %v2746 = vrot.slane %v2744, 4
        %v2747 = vor.u32 %v2746, %v2742
        %v2748 = vrot.slane %v2747, 4
        %v2750 = vshll.u32 %v2534, 16
        %v2752 = vrot.slane %v2750, 5
        %v2753 = vsel %vm1282, %v2748, %v2752
        %v2755 = vshrl.u32 %v2535, 16
        %v2757 = vrot.slane %v2755, 4
        %v2758 = vshll.u32 %v2535, 16
        %v2760 = vrot.slane %v2758, 5
        %v2761 = vor.u32 %v2757, %v2760
        %v2762 = vrot.slane %v2761, 4
        %v2764 = vshll.u32 %v2536, 16
        %v2766 = vrot.slane %v2764, 5
        %v2767 = vsel %vm1282, %v2762, %v2766
        %v2768 = vshrl.u32 %v2536, 16
        %v2770 = vrot.slane %v2768, 4
        %v2771 = vor.u32 %v2770, %v2766
        %v2772 = vrot.slane %v2771, 4
        %v2774 = vshll.u32 %v2537, 16
        %v2776 = vrot.slane %v2774, 5
        %v2777 = vsel %vm1282, %v2772, %v2776
        %s2778 = scalar_lea.vmem [#allocation10], 320
        %v2779 = vld [vmem:[%s2778] sm:$0xf]
        %v2780 = vld [vmem:[%s2778 + $0x4] sm:$0xf]
        %v2781 = vld [vmem:[%s2778 + $0x8] sm:$0xf]
        %v2782 = vld [vmem:[%s2778 + $0xc] sm:$0xf]
        %v2783 = vld [vmem:[%s2778 + $0x10] sm:$0xf]
        %v2784 = vld [vmem:[%s2778 + $0x14] sm:$0xf]
        %v2785 = vld [vmem:[%s2778 + $0x18] sm:$0xf]
        %v2786 = vld [vmem:[%s2778 + $0x1c] sm:$0xf]
        %v2787 = vld [vmem:[%s2778 + $0x20] sm:$0xf]
        %v2788 = vld [vmem:[%s2778 + $0x24] sm:$0xf]
        %v2789 = vld [vmem:[%s2778 + $0x28] sm:$0xf]
        %v2790 = vld [vmem:[%s2778 + $0x2c] sm:$0xf]
        %v2791 = vld [vmem:[%s2778 + $0x30] sm:$0xf]
        %v2792 = vld [vmem:[%s2778 + $0x34] sm:$0xf]
        %v2793 = vld [vmem:[%s2778 + $0x38] sm:$0xf]
        %v2794 = vld [vmem:[%s2778 + $0x3c] sm:$0xf]
        %v2795 = vunpack.c.l.b16 %v2551
        %v2796 = vunpack.c.l.b16 %v2561
        %v2797 = vunpack.c.l.b16 %v2575
        %v2798 = vunpack.c.l.b16 %v2585
        %v2799 = vunpack.c.l.b16 %v2599
        %v2800 = vunpack.c.l.b16 %v2609
        %v2801 = vunpack.c.l.b16 %v2623
        %v2802 = vunpack.c.l.b16 %v2633
        %v2803 = vunpack.c.l.b16 %v2647
        %v2804 = vunpack.c.l.b16 %v2657
        %v2805 = vunpack.c.l.b16 %v2671
        %v2806 = vunpack.c.l.b16 %v2681
        %v2807 = vunpack.c.l.b16 %v2695
        %v2808 = vunpack.c.l.b16 %v2705
        %v2809 = vunpack.c.l.b16 %v2719
        %v2810 = vunpack.c.l.b16 %v2729
        %v2811 = vunpack.c.l.b16 %v2743
        %v2812 = vunpack.c.l.b16 %v2753
        %v2813 = vunpack.c.l.b16 %v2767
        %v2814 = vunpack.c.l.b16 %v2777
        %v2815 = vpack.c.b16 %v2796, %v2795
        %v2816 = vpack.c.b16 %v2798, %v2797
        %v2817 = vpack.c.b16 %v2800, %v2799
        %v2818 = vpack.c.b16 %v2802, %v2801
        %v2819 = vpack.c.b16 %v2804, %v2803
        %v2820 = vpack.c.b16 %v2806, %v2805
        %v2821 = vpack.c.b16 %v2808, %v2807
        %v2822 = vpack.c.b16 %v2810, %v2809
        %v2823 = vpack.c.b16 %v2812, %v2811
        %v2824 = vpack.c.b16 %v2814, %v2813
        %v2851 = vunpack.c.l.b16 %v2779
        %v2852 = vunpack.c.l.b16 %v2780
        %v2853 = vunpack.c.l.b16 %v2781
        %v2854 = vunpack.c.l.b16 %v2782
        %v2855 = vunpack.c.l.b16 %v2783
        %v2856 = vunpack.c.l.b16 %v2784
        %v2857 = vunpack.c.l.b16 %v2785
        %v2858 = vunpack.c.l.b16 %v2786
        %v2859 = vunpack.c.l.b16 %v2787
        %v2860 = vunpack.c.l.b16 %v2788
        %v2861 = vunpack.c.l.b16 %v2789
        %v2862 = vunpack.c.l.b16 %v2790
        %v2863 = vunpack.c.l.b16 %v2791
        %v2864 = vunpack.c.l.b16 %v2792
        %v2865 = vunpack.c.l.b16 %v2793
        %v2866 = vunpack.c.l.b16 %v2794
        %v2867 = vpack.c.b16 %v2852, %v2851
        %v2868 = vpack.c.b16 %v2854, %v2853
        %v2869 = vpack.c.b16 %v2856, %v2855
        %v2870 = vpack.c.b16 %v2858, %v2857
        %v2871 = vpack.c.b16 %v2860, %v2859
        %v2872 = vpack.c.b16 %v2862, %v2861
        %v2873 = vpack.c.b16 %v2864, %v2863
        %v2874 = vpack.c.b16 %v2866, %v2865
        %2883 = vmatprep.subr.bf16.mxu0 0
        %2884 = vmatpush1.bf16.msra.mxu0 %v2874
        %2885 = vmatprep.subr.bf16.mxu0 0
        %2886 = vmatpush1.bf16.msra.mxu0 %v2873
        %2887 = vmatprep.subr.bf16.mxu0 0
        %2888 = vmatpush1.bf16.msra.mxu0 %v2872
        %2889 = vmatprep.subr.bf16.mxu0 0
        %2890 = vmatpush1.bf16.msra.mxu0 %v2871
        %2891 = vmatprep.subr.bf16.mxu0 0
        %2892 = vmatpush1.bf16.msra.mxu0 %v2870
        %2893 = vmatprep.subr.bf16.mxu0 0
        %2894 = vmatpush1.bf16.msra.mxu0 %v2869
        %2895 = vmatprep.subr.bf16.mxu0 0
        %2896 = vmatpush1.bf16.msra.mxu0 %v2868
        %2897 = vmatprep.subr.bf16.mxu0 0
        %2898 = vmatpush1.bf16.msra.mxu0 %v2867
        %2899 = vmatprep.subr.bf16.mxu0 0
        %2900 = vmatpush2.bf16.msra.mxu0 0
        %2901 = vmatprep.subr.bf16.mxu0 0
        %2902 = vmatpush2.bf16.msra.mxu0 0
        %2903 = vmatprep.subr.bf16.mxu0 0
        %2904 = vmatpush2.bf16.msra.mxu0 0
        %2905 = vmatprep.subr.bf16.mxu0 0
        %2906 = vmatpush2.bf16.msra.mxu0 0
        %2907 = vmatprep.subr.bf16.mxu0 0
        %2908 = vmatpush2.bf16.msra.mxu0 0
        %2909 = vmatprep.subr.bf16.mxu0 0
        %2910 = vmatpush2.bf16.msra.mxu0 0
        %2911 = vmatprep.subr.bf16.mxu0 0
        %2912 = vmatpush2.bf16.msra.mxu0 0
        %2913 = vmatprep.subr.bf16.mxu0 0
        %2914 = vmatpush2.bf16.msra.mxu0 0
        %2915 = vmatprep.mubr.bf16.mxu0 0
        %2916 = vmatmul.mubr.bf16.gmra.mxu0 %v2815
        %v2917 = vpop.f32.mrf.mxu0
        %v2918 = vadd.f32 0.0, %v2917
        %v2919 = vpop.f32.mrf.mxu0
        %v2920 = vpop.f32.mrf.mxu0
        %v2921 = vadd.f32 0.0, %v2920
        %v2922 = vpop.f32.mrf.mxu0
        %2923 = vmatprep.mubr.bf16.mxu0 0
        %2924 = vmatmul.mubr.bf16.gmra.mxu0 %v2816
        %v2925 = vpop.f32.mrf.mxu0
        %v2926 = vadd.f32 0.0, %v2925
        %v2927 = vpop.f32.mrf.mxu0
        %v2928 = vpop.f32.mrf.mxu0
        %v2929 = vadd.f32 0.0, %v2928
        %v2930 = vpop.f32.mrf.mxu0
        %2931 = vmatprep.mubr.bf16.mxu0 0
        %2932 = vmatmul.mubr.bf16.gmra.mxu0 %v2817
        %v2933 = vpop.f32.mrf.mxu0
        %v2934 = vadd.f32 0.0, %v2933
        %v2935 = vpop.f32.mrf.mxu0
        %v2936 = vpop.f32.mrf.mxu0
        %v2937 = vadd.f32 0.0, %v2936
        %v2938 = vpop.f32.mrf.mxu0
        %2939 = vmatprep.mubr.bf16.mxu0 0
        %2940 = vmatmul.mubr.bf16.gmra.mxu0 %v2818
        %v2941 = vpop.f32.mrf.mxu0
        %v2942 = vadd.f32 0.0, %v2941
        %v2943 = vpop.f32.mrf.mxu0
        %v2944 = vpop.f32.mrf.mxu0
        %v2945 = vadd.f32 0.0, %v2944
        %v2946 = vpop.f32.mrf.mxu0
        %2947 = vmatprep.mubr.bf16.mxu0 0
        %2948 = vmatmul.mubr.bf16.gmra.mxu0 %v2819
        %v2949 = vpop.f32.mrf.mxu0
        %v2950 = vadd.f32 0.0, %v2949
        %v2951 = vpop.f32.mrf.mxu0
        %v2952 = vpop.f32.mrf.mxu0
        %v2953 = vadd.f32 0.0, %v2952
        %v2954 = vpop.f32.mrf.mxu0
        %2955 = vmatprep.mubr.bf16.mxu0 0
        %2956 = vmatmul.mubr.bf16.gmra.mxu0 %v2820
        %v2957 = vpop.f32.mrf.mxu0
        %v2958 = vadd.f32 0.0, %v2957
        %v2959 = vpop.f32.mrf.mxu0
        %v2960 = vpop.f32.mrf.mxu0
        %v2961 = vadd.f32 0.0, %v2960
        %v2962 = vpop.f32.mrf.mxu0
        %2963 = vmatprep.mubr.bf16.mxu0 0
        %2964 = vmatmul.mubr.bf16.gmra.mxu0 %v2821
        %v2965 = vpop.f32.mrf.mxu0
        %v2966 = vadd.f32 0.0, %v2965
        %v2967 = vpop.f32.mrf.mxu0
        %v2968 = vpop.f32.mrf.mxu0
        %v2969 = vadd.f32 0.0, %v2968
        %v2970 = vpop.f32.mrf.mxu0
        %2971 = vmatprep.mubr.bf16.mxu0 0
        %2972 = vmatmul.mubr.bf16.gmra.mxu0 %v2822
        %v2973 = vpop.f32.mrf.mxu0
        %v2974 = vadd.f32 0.0, %v2973
        %v2975 = vpop.f32.mrf.mxu0
        %v2976 = vpop.f32.mrf.mxu0
        %v2977 = vadd.f32 0.0, %v2976
        %v2978 = vpop.f32.mrf.mxu0
        %2979 = vmatprep.mubr.bf16.mxu0 0
        %2980 = vmatmul.mubr.bf16.gmra.mxu0 %v2823
        %v2981 = vpop.f32.mrf.mxu0
        %v2982 = vadd.f32 0.0, %v2981
        %v2983 = vpop.f32.mrf.mxu0
        %v2984 = vpop.f32.mrf.mxu0
        %v2985 = vadd.f32 0.0, %v2984
        %v2986 = vpop.f32.mrf.mxu0
        %2987 = vmatprep.mubr.bf16.mxu0 0
        %2988 = vmatmul.mubr.bf16.gmra.mxu0 %v2824
        %v2989 = vpop.f32.mrf.mxu0
        %v2990 = vadd.f32 0.0, %v2989
        %v2991 = vpop.f32.mrf.mxu0
        %v2992 = vpop.f32.mrf.mxu0
        %v2993 = vadd.f32 0.0, %v2992
        %v2994 = vpop.f32.mrf.mxu0
        %2995 = vdwg.mxu0
        %v2996 = vadd.f32 %v2488, %v2918
        %v2997 = vadd.f32 %v2489, %v2921
        %v2998 = vadd.f32 %v2490, %v2926
        %v2999 = vadd.f32 %v2491, %v2929
        %v3000 = vadd.f32 %v2492, %v2934
        %v3001 = vadd.f32 %v2493, %v2937
        %v3002 = vadd.f32 %v2494, %v2942
        %v3003 = vadd.f32 %v2495, %v2945
        %v3004 = vadd.f32 %v2496, %v2950
        %v3005 = vadd.f32 %v2497, %v2953
        %v3006 = vadd.f32 %v2498, %v2958
        %v3007 = vadd.f32 %v2499, %v2961
        %v3008 = vadd.f32 %v2500, %v2966
        %v3009 = vadd.f32 %v2501, %v2969
        %v3010 = vadd.f32 %v2502, %v2974
        %v3011 = vadd.f32 %v2503, %v2977
        %v3012 = vadd.f32 %v2504, %v2982
        %v3013 = vadd.f32 %v2505, %v2985
        %v3014 = vadd.f32 %v2506, %v2990
        %v3015 = vadd.f32 %v2507, %v2993
        %v3016 = vld [vmem:[%s482] sm:$0x8]
        %v3017 = vld [vmem:[%s482 + $0x4] sm:$0xf]
        %v3018 = vld [vmem:[%s482 + $0x8] sm:$0xf]
        %v3019 = vld [vmem:[%s482 + $0x10] sm:$0x8]
        %v3020 = vld [vmem:[%s482 + $0x14] sm:$0xf]
        %v3021 = vld [vmem:[%s482 + $0x18] sm:$0xf]
        %v3022 = vld [vmem:[%s482 + $0x20] sm:$0x8]
        %v3023 = vld [vmem:[%s482 + $0x24] sm:$0xf]
        %v3024 = vld [vmem:[%s482 + $0x28] sm:$0xf]
        %v3025 = vld [vmem:[%s482 + $0x30] sm:$0x8]
        %v3026 = vld [vmem:[%s482 + $0x34] sm:$0xf]
        %v3027 = vld [vmem:[%s482 + $0x38] sm:$0xf]
        %v3028 = vld [vmem:[%s482 + $0x40] sm:$0x8]
        %v3029 = vld [vmem:[%s482 + $0x44] sm:$0xf]
        %v3030 = vld [vmem:[%s482 + $0x48] sm:$0xf]
        %v3031 = vld [vmem:[%s482 + $0x50] sm:$0x8]
        %v3032 = vld [vmem:[%s482 + $0x54] sm:$0xf]
        %v3033 = vld [vmem:[%s482 + $0x58] sm:$0xf]
        %v3034 = vld [vmem:[%s482 + $0x60] sm:$0x8]
        %v3035 = vld [vmem:[%s482 + $0x64] sm:$0xf]
        %v3036 = vld [vmem:[%s482 + $0x68] sm:$0xf]
        %v3037 = vld [vmem:[%s482 + $0x70] sm:$0x8]
        %v3038 = vld [vmem:[%s482 + $0x74] sm:$0xf]
        %v3039 = vld [vmem:[%s482 + $0x78] sm:$0xf]
        %v3040 = vld [vmem:[%s482 + $0x80] sm:$0x8]
        %v3041 = vld [vmem:[%s482 + $0x84] sm:$0xf]
        %v3042 = vld [vmem:[%s482 + $0x88] sm:$0xf]
        %v3043 = vld [vmem:[%s482 + $0x90] sm:$0x8]
        %v3044 = vld [vmem:[%s482 + $0x94] sm:$0xf]
        %v3045 = vld [vmem:[%s482 + $0x98] sm:$0xf]
        %v3047 = vshrl.u32 %v3016, 16
        %v3049 = vrot.slane %v3047, 7
        %v3050 = vrot.slane %v3049, 4
        %v3052 = vshrl.u32 %v3017, 16
        %v3054 = vrot.slane %v3052, 7
        %v3055 = vshll.u32 %v3017, 16
        %v3057 = vor.u32 %v3054, %v3055
        %v3058 = vsel %vm574, %v3050, %v3057
        %v3059 = vrot.slane %v3054, 4
        %v3061 = vshrl.u32 %v3018, 16
        %v3063 = vrot.slane %v3061, 7
        %v3064 = vshll.u32 %v3018, 16
        %v3066 = vor.u32 %v3063, %v3064
        %v3067 = vsel %vm574, %v3059, %v3066
        %v3069 = vshrl.u32 %v3019, 16
        %v3071 = vrot.slane %v3069, 7
        %v3072 = vrot.slane %v3071, 4
        %v3074 = vshrl.u32 %v3020, 16
        %v3076 = vrot.slane %v3074, 7
        %v3077 = vshll.u32 %v3020, 16
        %v3079 = vor.u32 %v3076, %v3077
        %v3080 = vsel %vm574, %v3072, %v3079
        %v3081 = vrot.slane %v3076, 4
        %v3083 = vshrl.u32 %v3021, 16
        %v3085 = vrot.slane %v3083, 7
        %v3086 = vshll.u32 %v3021, 16
        %v3088 = vor.u32 %v3085, %v3086
        %v3089 = vsel %vm574, %v3081, %v3088
        %v3091 = vshrl.u32 %v3022, 16
        %v3093 = vrot.slane %v3091, 7
        %v3094 = vrot.slane %v3093, 4
        %v3096 = vshrl.u32 %v3023, 16
        %v3098 = vrot.slane %v3096, 7
        %v3099 = vshll.u32 %v3023, 16
        %v3101 = vor.u32 %v3098, %v3099
        %v3102 = vsel %vm574, %v3094, %v3101
        %v3103 = vrot.slane %v3098, 4
        %v3105 = vshrl.u32 %v3024, 16
        %v3107 = vrot.slane %v3105, 7
        %v3108 = vshll.u32 %v3024, 16
        %v3110 = vor.u32 %v3107, %v3108
        %v3111 = vsel %vm574, %v3103, %v3110
        %v3113 = vshrl.u32 %v3025, 16
        %v3115 = vrot.slane %v3113, 7
        %v3116 = vrot.slane %v3115, 4
        %v3118 = vshrl.u32 %v3026, 16
        %v3120 = vrot.slane %v3118, 7
        %v3121 = vshll.u32 %v3026, 16
        %v3123 = vor.u32 %v3120, %v3121
        %v3124 = vsel %vm574, %v3116, %v3123
        %v3125 = vrot.slane %v3120, 4
        %v3127 = vshrl.u32 %v3027, 16
        %v3129 = vrot.slane %v3127, 7
        %v3130 = vshll.u32 %v3027, 16
        %v3132 = vor.u32 %v3129, %v3130
        %v3133 = vsel %vm574, %v3125, %v3132
        %v3135 = vshrl.u32 %v3028, 16
        %v3137 = vrot.slane %v3135, 7
        %v3138 = vrot.slane %v3137, 4
        %v3140 = vshrl.u32 %v3029, 16
        %v3142 = vrot.slane %v3140, 7
        %v3143 = vshll.u32 %v3029, 16
        %v3145 = vor.u32 %v3142, %v3143
        %v3146 = vsel %vm574, %v3138, %v3145
        %v3147 = vrot.slane %v3142, 4
        %v3149 = vshrl.u32 %v3030, 16
        %v3151 = vrot.slane %v3149, 7
        %v3152 = vshll.u32 %v3030, 16
        %v3154 = vor.u32 %v3151, %v3152
        %v3155 = vsel %vm574, %v3147, %v3154
        %v3157 = vshrl.u32 %v3031, 16
        %v3159 = vrot.slane %v3157, 7
        %v3160 = vrot.slane %v3159, 4
        %v3162 = vshrl.u32 %v3032, 16
        %v3164 = vrot.slane %v3162, 7
        %v3165 = vshll.u32 %v3032, 16
        %v3167 = vor.u32 %v3164, %v3165
        %v3168 = vsel %vm574, %v3160, %v3167
        %v3169 = vrot.slane %v3164, 4
        %v3171 = vshrl.u32 %v3033, 16
        %v3173 = vrot.slane %v3171, 7
        %v3174 = vshll.u32 %v3033, 16
        %v3176 = vor.u32 %v3173, %v3174
        %v3177 = vsel %vm574, %v3169, %v3176
        %v3179 = vshrl.u32 %v3034, 16
        %v3181 = vrot.slane %v3179, 7
        %v3182 = vrot.slane %v3181, 4
        %v3184 = vshrl.u32 %v3035, 16
        %v3186 = vrot.slane %v3184, 7
        %v3187 = vshll.u32 %v3035, 16
        %v3189 = vor.u32 %v3186, %v3187
        %v3190 = vsel %vm574, %v3182, %v3189
        %v3191 = vrot.slane %v3186, 4
        %v3193 = vshrl.u32 %v3036, 16
        %v3195 = vrot.slane %v3193, 7
        %v3196 = vshll.u32 %v3036, 16
        %v3198 = vor.u32 %v3195, %v3196
        %v3199 = vsel %vm574, %v3191, %v3198
        %v3201 = vshrl.u32 %v3037, 16
        %v3203 = vrot.slane %v3201, 7
        %v3204 = vrot.slane %v3203, 4
        %v3206 = vshrl.u32 %v3038, 16
        %v3208 = vrot.slane %v3206, 7
        %v3209 = vshll.u32 %v3038, 16
        %v3211 = vor.u32 %v3208, %v3209
        %v3212 = vsel %vm574, %v3204, %v3211
        %v3213 = vrot.slane %v3208, 4
        %v3215 = vshrl.u32 %v3039, 16
        %v3217 = vrot.slane %v3215, 7
        %v3218 = vshll.u32 %v3039, 16
        %v3220 = vor.u32 %v3217, %v3218
        %v3221 = vsel %vm574, %v3213, %v3220
        %v3223 = vshrl.u32 %v3040, 16
        %v3225 = vrot.slane %v3223, 7
        %v3226 = vrot.slane %v3225, 4
        %v3228 = vshrl.u32 %v3041, 16
        %v3230 = vrot.slane %v3228, 7
        %v3231 = vshll.u32 %v3041, 16
        %v3233 = vor.u32 %v3230, %v3231
        %v3234 = vsel %vm574, %v3226, %v3233
        %v3235 = vrot.slane %v3230, 4
        %v3237 = vshrl.u32 %v3042, 16
        %v3239 = vrot.slane %v3237, 7
        %v3240 = vshll.u32 %v3042, 16
        %v3242 = vor.u32 %v3239, %v3240
        %v3243 = vsel %vm574, %v3235, %v3242
        %v3245 = vshrl.u32 %v3043, 16
        %v3247 = vrot.slane %v3245, 7
        %v3248 = vrot.slane %v3247, 4
        %v3250 = vshrl.u32 %v3044, 16
        %v3252 = vrot.slane %v3250, 7
        %v3253 = vshll.u32 %v3044, 16
        %v3255 = vor.u32 %v3252, %v3253
        %v3256 = vsel %vm574, %v3248, %v3255
        %v3257 = vrot.slane %v3252, 4
        %v3259 = vshrl.u32 %v3045, 16
        %v3261 = vrot.slane %v3259, 7
        %v3262 = vshll.u32 %v3045, 16
        %v3264 = vor.u32 %v3261, %v3262
        %v3265 = vsel %vm574, %v3257, %v3264
        %s3266 = scalar_lea.vmem [#allocation10], 384
        %v3267 = vld [vmem:[%s3266] sm:$0xf]
        %v3268 = vld [vmem:[%s3266 + $0x4] sm:$0xf]
        %v3269 = vld [vmem:[%s3266 + $0x8] sm:$0xf]
        %v3270 = vld [vmem:[%s3266 + $0xc] sm:$0xf]
        %v3271 = vld [vmem:[%s3266 + $0x10] sm:$0xf]
        %v3272 = vld [vmem:[%s3266 + $0x14] sm:$0xf]
        %v3273 = vld [vmem:[%s3266 + $0x18] sm:$0xf]
        %v3274 = vld [vmem:[%s3266 + $0x1c] sm:$0xf]
        %v3275 = vld [vmem:[%s3266 + $0x20] sm:$0xf]
        %v3276 = vld [vmem:[%s3266 + $0x24] sm:$0xf]
        %v3277 = vld [vmem:[%s3266 + $0x28] sm:$0xf]
        %v3278 = vld [vmem:[%s3266 + $0x2c] sm:$0xf]
        %v3279 = vld [vmem:[%s3266 + $0x30] sm:$0xf]
        %v3280 = vld [vmem:[%s3266 + $0x34] sm:$0xf]
        %v3281 = vld [vmem:[%s3266 + $0x38] sm:$0xf]
        %v3282 = vld [vmem:[%s3266 + $0x3c] sm:$0xf]
        %v3283 = vunpack.c.l.b16 %v3058
        %v3284 = vunpack.c.l.b16 %v3067
        %v3285 = vunpack.c.l.b16 %v3080
        %v3286 = vunpack.c.l.b16 %v3089
        %v3287 = vunpack.c.l.b16 %v3102
        %v3288 = vunpack.c.l.b16 %v3111
        %v3289 = vunpack.c.l.b16 %v3124
        %v3290 = vunpack.c.l.b16 %v3133
        %v3291 = vunpack.c.l.b16 %v3146
        %v3292 = vunpack.c.l.b16 %v3155
        %v3293 = vunpack.c.l.b16 %v3168
        %v3294 = vunpack.c.l.b16 %v3177
        %v3295 = vunpack.c.l.b16 %v3190
        %v3296 = vunpack.c.l.b16 %v3199
        %v3297 = vunpack.c.l.b16 %v3212
        %v3298 = vunpack.c.l.b16 %v3221
        %v3299 = vunpack.c.l.b16 %v3234
        %v3300 = vunpack.c.l.b16 %v3243
        %v3301 = vunpack.c.l.b16 %v3256
        %v3302 = vunpack.c.l.b16 %v3265
        %v3303 = vpack.c.b16 %v3284, %v3283
        %v3304 = vpack.c.b16 %v3286, %v3285
        %v3305 = vpack.c.b16 %v3288, %v3287
        %v3306 = vpack.c.b16 %v3290, %v3289
        %v3307 = vpack.c.b16 %v3292, %v3291
        %v3308 = vpack.c.b16 %v3294, %v3293
        %v3309 = vpack.c.b16 %v3296, %v3295
        %v3310 = vpack.c.b16 %v3298, %v3297
        %v3311 = vpack.c.b16 %v3300, %v3299
        %v3312 = vpack.c.b16 %v3302, %v3301
        %v3339 = vunpack.c.l.b16 %v3267
        %v3340 = vunpack.c.l.b16 %v3268
        %v3341 = vunpack.c.l.b16 %v3269
        %v3342 = vunpack.c.l.b16 %v3270
        %v3343 = vunpack.c.l.b16 %v3271
        %v3344 = vunpack.c.l.b16 %v3272
        %v3345 = vunpack.c.l.b16 %v3273
        %v3346 = vunpack.c.l.b16 %v3274
        %v3347 = vunpack.c.l.b16 %v3275
        %v3348 = vunpack.c.l.b16 %v3276
        %v3349 = vunpack.c.l.b16 %v3277
        %v3350 = vunpack.c.l.b16 %v3278
        %v3351 = vunpack.c.l.b16 %v3279
        %v3352 = vunpack.c.l.b16 %v3280
        %v3353 = vunpack.c.l.b16 %v3281
        %v3354 = vunpack.c.l.b16 %v3282
        %v3355 = vpack.c.b16 %v3340, %v3339
        %v3356 = vpack.c.b16 %v3342, %v3341
        %v3357 = vpack.c.b16 %v3344, %v3343
        %v3358 = vpack.c.b16 %v3346, %v3345
        %v3359 = vpack.c.b16 %v3348, %v3347
        %v3360 = vpack.c.b16 %v3350, %v3349
        %v3361 = vpack.c.b16 %v3352, %v3351
        %v3362 = vpack.c.b16 %v3354, %v3353
        %3371 = vmatprep.subr.bf16.mxu0 0
        %3372 = vmatpush1.bf16.msra.mxu0 %v3362
        %3373 = vmatprep.subr.bf16.mxu0 0
        %3374 = vmatpush1.bf16.msra.mxu0 %v3361
        %3375 = vmatprep.subr.bf16.mxu0 0
        %3376 = vmatpush1.bf16.msra.mxu0 %v3360
        %3377 = vmatprep.subr.bf16.mxu0 0
        %3378 = vmatpush1.bf16.msra.mxu0 %v3359
        %3379 = vmatprep.subr.bf16.mxu0 0
        %3380 = vmatpush1.bf16.msra.mxu0 %v3358
        %3381 = vmatprep.subr.bf16.mxu0 0
        %3382 = vmatpush1.bf16.msra.mxu0 %v3357
        %3383 = vmatprep.subr.bf16.mxu0 0
        %3384 = vmatpush1.bf16.msra.mxu0 %v3356
        %3385 = vmatprep.subr.bf16.mxu0 0
        %3386 = vmatpush1.bf16.msra.mxu0 %v3355
        %3387 = vmatprep.subr.bf16.mxu0 0
        %3388 = vmatpush2.bf16.msra.mxu0 0
        %3389 = vmatprep.subr.bf16.mxu0 0
        %3390 = vmatpush2.bf16.msra.mxu0 0
        %3391 = vmatprep.subr.bf16.mxu0 0
        %3392 = vmatpush2.bf16.msra.mxu0 0
        %3393 = vmatprep.subr.bf16.mxu0 0
        %3394 = vmatpush2.bf16.msra.mxu0 0
        %3395 = vmatprep.subr.bf16.mxu0 0
        %3396 = vmatpush2.bf16.msra.mxu0 0
        %3397 = vmatprep.subr.bf16.mxu0 0
        %3398 = vmatpush2.bf16.msra.mxu0 0
        %3399 = vmatprep.subr.bf16.mxu0 0
        %3400 = vmatpush2.bf16.msra.mxu0 0
        %3401 = vmatprep.subr.bf16.mxu0 0
        %3402 = vmatpush2.bf16.msra.mxu0 0
        %3403 = vmatprep.mubr.bf16.mxu0 0
        %3404 = vmatmul.mubr.bf16.gmra.mxu0 %v3303
        %v3405 = vpop.f32.mrf.mxu0
        %v3406 = vadd.f32 0.0, %v3405
        %v3407 = vpop.f32.mrf.mxu0
        %v3408 = vpop.f32.mrf.mxu0
        %v3409 = vadd.f32 0.0, %v3408
        %v3410 = vpop.f32.mrf.mxu0
        %3411 = vmatprep.mubr.bf16.mxu0 0
        %3412 = vmatmul.mubr.bf16.gmra.mxu0 %v3304
        %v3413 = vpop.f32.mrf.mxu0
        %v3414 = vadd.f32 0.0, %v3413
        %v3415 = vpop.f32.mrf.mxu0
        %v3416 = vpop.f32.mrf.mxu0
        %v3417 = vadd.f32 0.0, %v3416
        %v3418 = vpop.f32.mrf.mxu0
        %3419 = vmatprep.mubr.bf16.mxu0 0
        %3420 = vmatmul.mubr.bf16.gmra.mxu0 %v3305
        %v3421 = vpop.f32.mrf.mxu0
        %v3422 = vadd.f32 0.0, %v3421
        %v3423 = vpop.f32.mrf.mxu0
        %v3424 = vpop.f32.mrf.mxu0
        %v3425 = vadd.f32 0.0, %v3424
        %v3426 = vpop.f32.mrf.mxu0
        %3427 = vmatprep.mubr.bf16.mxu0 0
        %3428 = vmatmul.mubr.bf16.gmra.mxu0 %v3306
        %v3429 = vpop.f32.mrf.mxu0
        %v3430 = vadd.f32 0.0, %v3429
        %v3431 = vpop.f32.mrf.mxu0
        %v3432 = vpop.f32.mrf.mxu0
        %v3433 = vadd.f32 0.0, %v3432
        %v3434 = vpop.f32.mrf.mxu0
        %3435 = vmatprep.mubr.bf16.mxu0 0
        %3436 = vmatmul.mubr.bf16.gmra.mxu0 %v3307
        %v3437 = vpop.f32.mrf.mxu0
        %v3438 = vadd.f32 0.0, %v3437
        %v3439 = vpop.f32.mrf.mxu0
        %v3440 = vpop.f32.mrf.mxu0
        %v3441 = vadd.f32 0.0, %v3440
        %v3442 = vpop.f32.mrf.mxu0
        %3443 = vmatprep.mubr.bf16.mxu0 0
        %3444 = vmatmul.mubr.bf16.gmra.mxu0 %v3308
        %v3445 = vpop.f32.mrf.mxu0
        %v3446 = vadd.f32 0.0, %v3445
        %v3447 = vpop.f32.mrf.mxu0
        %v3448 = vpop.f32.mrf.mxu0
        %v3449 = vadd.f32 0.0, %v3448
        %v3450 = vpop.f32.mrf.mxu0
        %3451 = vmatprep.mubr.bf16.mxu0 0
        %3452 = vmatmul.mubr.bf16.gmra.mxu0 %v3309
        %v3453 = vpop.f32.mrf.mxu0
        %v3454 = vadd.f32 0.0, %v3453
        %v3455 = vpop.f32.mrf.mxu0
        %v3456 = vpop.f32.mrf.mxu0
        %v3457 = vadd.f32 0.0, %v3456
        %v3458 = vpop.f32.mrf.mxu0
        %3459 = vmatprep.mubr.bf16.mxu0 0
        %3460 = vmatmul.mubr.bf16.gmra.mxu0 %v3310
        %v3461 = vpop.f32.mrf.mxu0
        %v3462 = vadd.f32 0.0, %v3461
        %v3463 = vpop.f32.mrf.mxu0
        %v3464 = vpop.f32.mrf.mxu0
        %v3465 = vadd.f32 0.0, %v3464
        %v3466 = vpop.f32.mrf.mxu0
        %3467 = vmatprep.mubr.bf16.mxu0 0
        %3468 = vmatmul.mubr.bf16.gmra.mxu0 %v3311
        %v3469 = vpop.f32.mrf.mxu0
        %v3470 = vadd.f32 0.0, %v3469
        %v3471 = vpop.f32.mrf.mxu0
        %v3472 = vpop.f32.mrf.mxu0
        %v3473 = vadd.f32 0.0, %v3472
        %v3474 = vpop.f32.mrf.mxu0
        %3475 = vmatprep.mubr.bf16.mxu0 0
        %3476 = vmatmul.mubr.bf16.gmra.mxu0 %v3312
        %v3477 = vpop.f32.mrf.mxu0
        %v3478 = vadd.f32 0.0, %v3477
        %v3479 = vpop.f32.mrf.mxu0
        %v3480 = vpop.f32.mrf.mxu0
        %v3481 = vadd.f32 0.0, %v3480
        %v3482 = vpop.f32.mrf.mxu0
        %3483 = vdwg.mxu0
        %v3484 = vadd.f32 %v2996, %v3406
        %v3485 = vadd.f32 %v2997, %v3409
        %v3486 = vadd.f32 %v2998, %v3414
        %v3487 = vadd.f32 %v2999, %v3417
        %v3488 = vadd.f32 %v3000, %v3422
        %v3489 = vadd.f32 %v3001, %v3425
        %v3490 = vadd.f32 %v3002, %v3430
        %v3491 = vadd.f32 %v3003, %v3433
        %v3492 = vadd.f32 %v3004, %v3438
        %v3493 = vadd.f32 %v3005, %v3441
        %v3494 = vadd.f32 %v3006, %v3446
        %v3495 = vadd.f32 %v3007, %v3449
        %v3496 = vadd.f32 %v3008, %v3454
        %v3497 = vadd.f32 %v3009, %v3457
        %v3498 = vadd.f32 %v3010, %v3462
        %v3499 = vadd.f32 %v3011, %v3465
        %v3500 = vadd.f32 %v3012, %v3470
        %v3501 = vadd.f32 %v3013, %v3473
        %v3502 = vadd.f32 %v3014, %v3478
        %v3503 = vadd.f32 %v3015, %v3481
        %s3504 = scalar_lea.vmem [#allocation10], 448
        %v3505 = vld [vmem:[%s3504] sm:$0xf]
        %v3506 = vld [vmem:[%s3504 + $0x4] sm:$0xf]
        %v3507 = vld [vmem:[%s3504 + $0x8] sm:$0xf]
        %v3508 = vld [vmem:[%s3504 + $0xc] sm:$0xf]
        %v3509 = vld [vmem:[%s3504 + $0x10] sm:$0xf]
        %v3510 = vld [vmem:[%s3504 + $0x14] sm:$0xf]
        %v3511 = vld [vmem:[%s3504 + $0x18] sm:$0xf]
        %v3512 = vld [vmem:[%s3504 + $0x1c] sm:$0xf]
        %v3513 = vld [vmem:[%s3504 + $0x20] sm:$0xf]
        %v3514 = vld [vmem:[%s3504 + $0x24] sm:$0xf]
        %v3515 = vld [vmem:[%s3504 + $0x28] sm:$0xf]
        %v3516 = vld [vmem:[%s3504 + $0x2c] sm:$0xf]
        %v3517 = vld [vmem:[%s3504 + $0x30] sm:$0xf]
        %v3518 = vld [vmem:[%s3504 + $0x34] sm:$0xf]
        %v3519 = vld [vmem:[%s3504 + $0x38] sm:$0xf]
        %v3520 = vld [vmem:[%s3504 + $0x3c] sm:$0xf]
        %v3541 = vunpack.c.l.b16 %v3017
        %v3542 = vunpack.c.l.b16 %v3018
        %v3543 = vunpack.c.l.b16 %v3020
        %v3544 = vunpack.c.l.b16 %v3021
        %v3545 = vunpack.c.l.b16 %v3023
        %v3546 = vunpack.c.l.b16 %v3024
        %v3547 = vunpack.c.l.b16 %v3026
        %v3548 = vunpack.c.l.b16 %v3027
        %v3549 = vunpack.c.l.b16 %v3029
        %v3550 = vunpack.c.l.b16 %v3030
        %v3551 = vunpack.c.l.b16 %v3032
        %v3552 = vunpack.c.l.b16 %v3033
        %v3553 = vunpack.c.l.b16 %v3035
        %v3554 = vunpack.c.l.b16 %v3036
        %v3555 = vunpack.c.l.b16 %v3038
        %v3556 = vunpack.c.l.b16 %v3039
        %v3557 = vunpack.c.l.b16 %v3041
        %v3558 = vunpack.c.l.b16 %v3042
        %v3559 = vunpack.c.l.b16 %v3044
        %v3560 = vunpack.c.l.b16 %v3045
        %v3561 = vpack.c.b16 %v3542, %v3541
        %v3562 = vpack.c.b16 %v3544, %v3543
        %v3563 = vpack.c.b16 %v3546, %v3545
        %v3564 = vpack.c.b16 %v3548, %v3547
        %v3565 = vpack.c.b16 %v3550, %v3549
        %v3566 = vpack.c.b16 %v3552, %v3551
        %v3567 = vpack.c.b16 %v3554, %v3553
        %v3568 = vpack.c.b16 %v3556, %v3555
        %v3569 = vpack.c.b16 %v3558, %v3557
        %v3570 = vpack.c.b16 %v3560, %v3559
        %v3597 = vunpack.c.l.b16 %v3505
        %v3598 = vunpack.c.l.b16 %v3506
        %v3599 = vunpack.c.l.b16 %v3507
        %v3600 = vunpack.c.l.b16 %v3508
        %v3601 = vunpack.c.l.b16 %v3509
        %v3602 = vunpack.c.l.b16 %v3510
        %v3603 = vunpack.c.l.b16 %v3511
        %v3604 = vunpack.c.l.b16 %v3512
        %v3605 = vunpack.c.l.b16 %v3513
        %v3606 = vunpack.c.l.b16 %v3514
        %v3607 = vunpack.c.l.b16 %v3515
        %v3608 = vunpack.c.l.b16 %v3516
        %v3609 = vunpack.c.l.b16 %v3517
        %v3610 = vunpack.c.l.b16 %v3518
        %v3611 = vunpack.c.l.b16 %v3519
        %v3612 = vunpack.c.l.b16 %v3520
        %v3613 = vpack.c.b16 %v3598, %v3597
        %v3614 = vpack.c.b16 %v3600, %v3599
        %v3615 = vpack.c.b16 %v3602, %v3601
        %v3616 = vpack.c.b16 %v3604, %v3603
        %v3617 = vpack.c.b16 %v3606, %v3605
        %v3618 = vpack.c.b16 %v3608, %v3607
        %v3619 = vpack.c.b16 %v3610, %v3609
        %v3620 = vpack.c.b16 %v3612, %v3611
        %3629 = vmatprep.subr.bf16.mxu0 0
        %3630 = vmatpush1.bf16.msra.mxu0 %v3620
        %3631 = vmatprep.subr.bf16.mxu0 0
        %3632 = vmatpush1.bf16.msra.mxu0 %v3619
        %3633 = vmatprep.subr.bf16.mxu0 0
        %3634 = vmatpush1.bf16.msra.mxu0 %v3618
        %3635 = vmatprep.subr.bf16.mxu0 0
        %3636 = vmatpush1.bf16.msra.mxu0 %v3617
        %3637 = vmatprep.subr.bf16.mxu0 0
        %3638 = vmatpush1.bf16.msra.mxu0 %v3616
        %3639 = vmatprep.subr.bf16.mxu0 0
        %3640 = vmatpush1.bf16.msra.mxu0 %v3615
        %3641 = vmatprep.subr.bf16.mxu0 0
        %3642 = vmatpush1.bf16.msra.mxu0 %v3614
        %3643 = vmatprep.subr.bf16.mxu0 0
        %3644 = vmatpush1.bf16.msra.mxu0 %v3613
        %3645 = vmatprep.subr.bf16.mxu0 0
        %3646 = vmatpush2.bf16.msra.mxu0 0
        %3647 = vmatprep.subr.bf16.mxu0 0
        %3648 = vmatpush2.bf16.msra.mxu0 0
        %3649 = vmatprep.subr.bf16.mxu0 0
        %3650 = vmatpush2.bf16.msra.mxu0 0
        %3651 = vmatprep.subr.bf16.mxu0 0
        %3652 = vmatpush2.bf16.msra.mxu0 0
        %3653 = vmatprep.subr.bf16.mxu0 0
        %3654 = vmatpush2.bf16.msra.mxu0 0
        %3655 = vmatprep.subr.bf16.mxu0 0
        %3656 = vmatpush2.bf16.msra.mxu0 0
        %3657 = vmatprep.subr.bf16.mxu0 0
        %3658 = vmatpush2.bf16.msra.mxu0 0
        %3659 = vmatprep.subr.bf16.mxu0 0
        %3660 = vmatpush2.bf16.msra.mxu0 0
        %3661 = vmatprep.mubr.bf16.mxu0 0
        %3662 = vmatmul.mubr.bf16.gmra.mxu0 %v3561
        %v3663 = vpop.f32.mrf.mxu0
        %v3664 = vadd.f32 0.0, %v3663
        %v3665 = vpop.f32.mrf.mxu0
        %v3666 = vpop.f32.mrf.mxu0
        %v3667 = vadd.f32 0.0, %v3666
        %v3668 = vpop.f32.mrf.mxu0
        %3669 = vmatprep.mubr.bf16.mxu0 0
        %3670 = vmatmul.mubr.bf16.gmra.mxu0 %v3562
        %v3671 = vpop.f32.mrf.mxu0
        %v3672 = vadd.f32 0.0, %v3671
        %v3673 = vpop.f32.mrf.mxu0
        %v3674 = vpop.f32.mrf.mxu0
        %v3675 = vadd.f32 0.0, %v3674
        %v3676 = vpop.f32.mrf.mxu0
        %3677 = vmatprep.mubr.bf16.mxu0 0
        %3678 = vmatmul.mubr.bf16.gmra.mxu0 %v3563
        %v3679 = vpop.f32.mrf.mxu0
        %v3680 = vadd.f32 0.0, %v3679
        %v3681 = vpop.f32.mrf.mxu0
        %v3682 = vpop.f32.mrf.mxu0
        %v3683 = vadd.f32 0.0, %v3682
        %v3684 = vpop.f32.mrf.mxu0
        %3685 = vmatprep.mubr.bf16.mxu0 0
        %3686 = vmatmul.mubr.bf16.gmra.mxu0 %v3564
        %v3687 = vpop.f32.mrf.mxu0
        %v3688 = vadd.f32 0.0, %v3687
        %v3689 = vpop.f32.mrf.mxu0
        %v3690 = vpop.f32.mrf.mxu0
        %v3691 = vadd.f32 0.0, %v3690
        %v3692 = vpop.f32.mrf.mxu0
        %3693 = vmatprep.mubr.bf16.mxu0 0
        %3694 = vmatmul.mubr.bf16.gmra.mxu0 %v3565
        %v3695 = vpop.f32.mrf.mxu0
        %v3696 = vadd.f32 0.0, %v3695
        %v3697 = vpop.f32.mrf.mxu0
        %v3698 = vpop.f32.mrf.mxu0
        %v3699 = vadd.f32 0.0, %v3698
        %v3700 = vpop.f32.mrf.mxu0
        %3701 = vmatprep.mubr.bf16.mxu0 0
        %3702 = vmatmul.mubr.bf16.gmra.mxu0 %v3566
        %v3703 = vpop.f32.mrf.mxu0
        %v3704 = vadd.f32 0.0, %v3703
        %v3705 = vpop.f32.mrf.mxu0
        %v3706 = vpop.f32.mrf.mxu0
        %v3707 = vadd.f32 0.0, %v3706
        %v3708 = vpop.f32.mrf.mxu0
        %3709 = vmatprep.mubr.bf16.mxu0 0
        %3710 = vmatmul.mubr.bf16.gmra.mxu0 %v3567
        %v3711 = vpop.f32.mrf.mxu0
        %v3712 = vadd.f32 0.0, %v3711
        %v3713 = vpop.f32.mrf.mxu0
        %v3714 = vpop.f32.mrf.mxu0
        %v3715 = vadd.f32 0.0, %v3714
        %v3716 = vpop.f32.mrf.mxu0
        %3717 = vmatprep.mubr.bf16.mxu0 0
        %3718 = vmatmul.mubr.bf16.gmra.mxu0 %v3568
        %v3719 = vpop.f32.mrf.mxu0
        %v3720 = vadd.f32 0.0, %v3719
        %v3721 = vpop.f32.mrf.mxu0
        %v3722 = vpop.f32.mrf.mxu0
        %v3723 = vadd.f32 0.0, %v3722
        %v3724 = vpop.f32.mrf.mxu0
        %3725 = vmatprep.mubr.bf16.mxu0 0
        %3726 = vmatmul.mubr.bf16.gmra.mxu0 %v3569
        %v3727 = vpop.f32.mrf.mxu0
        %v3728 = vadd.f32 0.0, %v3727
        %v3729 = vpop.f32.mrf.mxu0
        %v3730 = vpop.f32.mrf.mxu0
        %v3731 = vadd.f32 0.0, %v3730
        %v3732 = vpop.f32.mrf.mxu0
        %3733 = vmatprep.mubr.bf16.mxu0 0
        %3734 = vmatmul.mubr.bf16.gmra.mxu0 %v3570
        %v3735 = vpop.f32.mrf.mxu0
        %v3736 = vadd.f32 0.0, %v3735
        %v3737 = vpop.f32.mrf.mxu0
        %v3738 = vpop.f32.mrf.mxu0
        %v3739 = vadd.f32 0.0, %v3738
        %v3740 = vpop.f32.mrf.mxu0
        %3741 = vdwg.mxu0
        %v3742 = vadd.f32 %v3484, %v3664
        %v3743 = vadd.f32 %v3485, %v3667
        %v3744 = vadd.f32 %v3486, %v3672
        %v3745 = vadd.f32 %v3487, %v3675
        %v3746 = vadd.f32 %v3488, %v3680
        %v3747 = vadd.f32 %v3489, %v3683
        %v3748 = vadd.f32 %v3490, %v3688
        %v3749 = vadd.f32 %v3491, %v3691
        %v3750 = vadd.f32 %v3492, %v3696
        %v3751 = vadd.f32 %v3493, %v3699
        %v3752 = vadd.f32 %v3494, %v3704
        %v3753 = vadd.f32 %v3495, %v3707
        %v3754 = vadd.f32 %v3496, %v3712
        %v3755 = vadd.f32 %v3497, %v3715
        %v3756 = vadd.f32 %v3498, %v3720
        %v3757 = vadd.f32 %v3499, %v3723
        %v3758 = vadd.f32 %v3500, %v3728
        %v3759 = vadd.f32 %v3501, %v3731
        %v3760 = vadd.f32 %v3502, %v3736
        %v3761 = vadd.f32 %v3503, %v3739
        %v3762 = vld [vmem:[%s482 + $0x4] sm:$0xf]
        %v3763 = vld [vmem:[%s482 + $0x8] sm:$0xf]
        %v3764 = vld [vmem:[%s482 + $0xc] sm:$0x1]
        %v3765 = vld [vmem:[%s482 + $0x14] sm:$0xf]
        %v3766 = vld [vmem:[%s482 + $0x18] sm:$0xf]
        %v3767 = vld [vmem:[%s482 + $0x1c] sm:$0x1]
        %v3768 = vld [vmem:[%s482 + $0x24] sm:$0xf]
        %v3769 = vld [vmem:[%s482 + $0x28] sm:$0xf]
        %v3770 = vld [vmem:[%s482 + $0x2c] sm:$0x1]
        %v3771 = vld [vmem:[%s482 + $0x34] sm:$0xf]
        %v3772 = vld [vmem:[%s482 + $0x38] sm:$0xf]
        %v3773 = vld [vmem:[%s482 + $0x3c] sm:$0x1]
        %v3774 = vld [vmem:[%s482 + $0x44] sm:$0xf]
        %v3775 = vld [vmem:[%s482 + $0x48] sm:$0xf]
        %v3776 = vld [vmem:[%s482 + $0x4c] sm:$0x1]
        %v3777 = vld [vmem:[%s482 + $0x54] sm:$0xf]
        %v3778 = vld [vmem:[%s482 + $0x58] sm:$0xf]
        %v3779 = vld [vmem:[%s482 + $0x5c] sm:$0x1]
        %v3780 = vld [vmem:[%s482 + $0x64] sm:$0xf]
        %v3781 = vld [vmem:[%s482 + $0x68] sm:$0xf]
        %v3782 = vld [vmem:[%s482 + $0x6c] sm:$0x1]
        %v3783 = vld [vmem:[%s482 + $0x74] sm:$0xf]
        %v3784 = vld [vmem:[%s482 + $0x78] sm:$0xf]
        %v3785 = vld [vmem:[%s482 + $0x7c] sm:$0x1]
        %v3786 = vld [vmem:[%s482 + $0x84] sm:$0xf]
        %v3787 = vld [vmem:[%s482 + $0x88] sm:$0xf]
        %v3788 = vld [vmem:[%s482 + $0x8c] sm:$0x1]
        %v3789 = vld [vmem:[%s482 + $0x94] sm:$0xf]
        %v3790 = vld [vmem:[%s482 + $0x98] sm:$0xf]
        %v3791 = vld [vmem:[%s482 + $0x9c] sm:$0x1]
        %v3793 = vshrl.u32 %v3762, 16
        %v3795 = vrot.slane %v3793, 4
        %v3796 = vshll.u32 %v3762, 16
        %v3798 = vrot.slane %v3796, 5
        %v3799 = vor.u32 %v3795, %v3798
        %v3800 = vrot.slane %v3799, 4
        %v3802 = vshll.u32 %v3763, 16
        %v3804 = vrot.slane %v3802, 5
        %v3805 = vsel %vm1282, %v3800, %v3804
        %v3806 = vshrl.u32 %v3763, 16
        %v3808 = vrot.slane %v3806, 4
        %v3809 = vor.u32 %v3808, %v3804
        %v3810 = vrot.slane %v3809, 4
        %v3812 = vshll.u32 %v3764, 16
        %v3814 = vrot.slane %v3812, 5
        %v3815 = vsel %vm1282, %v3810, %v3814
        %v3817 = vshrl.u32 %v3765, 16
        %v3819 = vrot.slane %v3817, 4
        %v3820 = vshll.u32 %v3765, 16
        %v3822 = vrot.slane %v3820, 5
        %v3823 = vor.u32 %v3819, %v3822
        %v3824 = vrot.slane %v3823, 4
        %v3826 = vshll.u32 %v3766, 16
        %v3828 = vrot.slane %v3826, 5
        %v3829 = vsel %vm1282, %v3824, %v3828
        %v3830 = vshrl.u32 %v3766, 16
        %v3832 = vrot.slane %v3830, 4
        %v3833 = vor.u32 %v3832, %v3828
        %v3834 = vrot.slane %v3833, 4
        %v3836 = vshll.u32 %v3767, 16
        %v3838 = vrot.slane %v3836, 5
        %v3839 = vsel %vm1282, %v3834, %v3838
        %v3841 = vshrl.u32 %v3768, 16
        %v3843 = vrot.slane %v3841, 4
        %v3844 = vshll.u32 %v3768, 16
        %v3846 = vrot.slane %v3844, 5
        %v3847 = vor.u32 %v3843, %v3846
        %v3848 = vrot.slane %v3847, 4
        %v3850 = vshll.u32 %v3769, 16
        %v3852 = vrot.slane %v3850, 5
        %v3853 = vsel %vm1282, %v3848, %v3852
        %v3854 = vshrl.u32 %v3769, 16
        %v3856 = vrot.slane %v3854, 4
        %v3857 = vor.u32 %v3856, %v3852
        %v3858 = vrot.slane %v3857, 4
        %v3860 = vshll.u32 %v3770, 16
        %v3862 = vrot.slane %v3860, 5
        %v3863 = vsel %vm1282, %v3858, %v3862
        %v3865 = vshrl.u32 %v3771, 16
        %v3867 = vrot.slane %v3865, 4
        %v3868 = vshll.u32 %v3771, 16
        %v3870 = vrot.slane %v3868, 5
        %v3871 = vor.u32 %v3867, %v3870
        %v3872 = vrot.slane %v3871, 4
        %v3874 = vshll.u32 %v3772, 16
        %v3876 = vrot.slane %v3874, 5
        %v3877 = vsel %vm1282, %v3872, %v3876
        %v3878 = vshrl.u32 %v3772, 16
        %v3880 = vrot.slane %v3878, 4
        %v3881 = vor.u32 %v3880, %v3876
        %v3882 = vrot.slane %v3881, 4
        %v3884 = vshll.u32 %v3773, 16
        %v3886 = vrot.slane %v3884, 5
        %v3887 = vsel %vm1282, %v3882, %v3886
        %v3889 = vshrl.u32 %v3774, 16
        %v3891 = vrot.slane %v3889, 4
        %v3892 = vshll.u32 %v3774, 16
        %v3894 = vrot.slane %v3892, 5
        %v3895 = vor.u32 %v3891, %v3894
        %v3896 = vrot.slane %v3895, 4
        %v3898 = vshll.u32 %v3775, 16
        %v3900 = vrot.slane %v3898, 5
        %v3901 = vsel %vm1282, %v3896, %v3900
        %v3902 = vshrl.u32 %v3775, 16
        %v3904 = vrot.slane %v3902, 4
        %v3905 = vor.u32 %v3904, %v3900
        %v3906 = vrot.slane %v3905, 4
        %v3908 = vshll.u32 %v3776, 16
        %v3910 = vrot.slane %v3908, 5
        %v3911 = vsel %vm1282, %v3906, %v3910
        %v3913 = vshrl.u32 %v3777, 16
        %v3915 = vrot.slane %v3913, 4
        %v3916 = vshll.u32 %v3777, 16
        %v3918 = vrot.slane %v3916, 5
        %v3919 = vor.u32 %v3915, %v3918
        %v3920 = vrot.slane %v3919, 4
        %v3922 = vshll.u32 %v3778, 16
        %v3924 = vrot.slane %v3922, 5
        %v3925 = vsel %vm1282, %v3920, %v3924
        %v3926 = vshrl.u32 %v3778, 16
        %v3928 = vrot.slane %v3926, 4
        %v3929 = vor.u32 %v3928, %v3924
        %v3930 = vrot.slane %v3929, 4
        %v3932 = vshll.u32 %v3779, 16
        %v3934 = vrot.slane %v3932, 5
        %v3935 = vsel %vm1282, %v3930, %v3934
        %v3937 = vshrl.u32 %v3780, 16
        %v3939 = vrot.slane %v3937, 4
        %v3940 = vshll.u32 %v3780, 16
        %v3942 = vrot.slane %v3940, 5
        %v3943 = vor.u32 %v3939, %v3942
        %v3944 = vrot.slane %v3943, 4
        %v3946 = vshll.u32 %v3781, 16
        %v3948 = vrot.slane %v3946, 5
        %v3949 = vsel %vm1282, %v3944, %v3948
        %v3950 = vshrl.u32 %v3781, 16
        %v3952 = vrot.slane %v3950, 4
        %v3953 = vor.u32 %v3952, %v3948
        %v3954 = vrot.slane %v3953, 4
        %v3956 = vshll.u32 %v3782, 16
        %v3958 = vrot.slane %v3956, 5
        %v3959 = vsel %vm1282, %v3954, %v3958
        %v3961 = vshrl.u32 %v3783, 16
        %v3963 = vrot.slane %v3961, 4
        %v3964 = vshll.u32 %v3783, 16
        %v3966 = vrot.slane %v3964, 5
        %v3967 = vor.u32 %v3963, %v3966
        %v3968 = vrot.slane %v3967, 4
        %v3970 = vshll.u32 %v3784, 16
        %v3972 = vrot.slane %v3970, 5
        %v3973 = vsel %vm1282, %v3968, %v3972
        %v3974 = vshrl.u32 %v3784, 16
        %v3976 = vrot.slane %v3974, 4
        %v3977 = vor.u32 %v3976, %v3972
        %v3978 = vrot.slane %v3977, 4
        %v3980 = vshll.u32 %v3785, 16
        %v3982 = vrot.slane %v3980, 5
        %v3983 = vsel %vm1282, %v3978, %v3982
        %v3985 = vshrl.u32 %v3786, 16
        %v3987 = vrot.slane %v3985, 4
        %v3988 = vshll.u32 %v3786, 16
        %v3990 = vrot.slane %v3988, 5
        %v3991 = vor.u32 %v3987, %v3990
        %v3992 = vrot.slane %v3991, 4
        %v3994 = vshll.u32 %v3787, 16
        %v3996 = vrot.slane %v3994, 5
        %v3997 = vsel %vm1282, %v3992, %v3996
        %v3998 = vshrl.u32 %v3787, 16
        %v4000 = vrot.slane %v3998, 4
        %v4001 = vor.u32 %v4000, %v3996
        %v4002 = vrot.slane %v4001, 4
        %v4004 = vshll.u32 %v3788, 16
        %v4006 = vrot.slane %v4004, 5
        %v4007 = vsel %vm1282, %v4002, %v4006
        %v4009 = vshrl.u32 %v3789, 16
        %v4011 = vrot.slane %v4009, 4
        %v4012 = vshll.u32 %v3789, 16
        %v4014 = vrot.slane %v4012, 5
        %v4015 = vor.u32 %v4011, %v4014
        %v4016 = vrot.slane %v4015, 4
        %v4018 = vshll.u32 %v3790, 16
        %v4020 = vrot.slane %v4018, 5
        %v4021 = vsel %vm1282, %v4016, %v4020
        %v4022 = vshrl.u32 %v3790, 16
        %v4024 = vrot.slane %v4022, 4
        %v4025 = vor.u32 %v4024, %v4020
        %v4026 = vrot.slane %v4025, 4
        %v4028 = vshll.u32 %v3791, 16
        %v4030 = vrot.slane %v4028, 5
        %v4031 = vsel %vm1282, %v4026, %v4030
        %s4032 = scalar_lea.vmem [#allocation10], 512
        %v4033 = vld [vmem:[%s4032] sm:$0xf]
        %v4034 = vld [vmem:[%s4032 + $0x4] sm:$0xf]
        %v4035 = vld [vmem:[%s4032 + $0x8] sm:$0xf]
        %v4036 = vld [vmem:[%s4032 + $0xc] sm:$0xf]
        %v4037 = vld [vmem:[%s4032 + $0x10] sm:$0xf]
        %v4038 = vld [vmem:[%s4032 + $0x14] sm:$0xf]
        %v4039 = vld [vmem:[%s4032 + $0x18] sm:$0xf]
        %v4040 = vld [vmem:[%s4032 + $0x1c] sm:$0xf]
        %v4041 = vld [vmem:[%s4032 + $0x20] sm:$0xf]
        %v4042 = vld [vmem:[%s4032 + $0x24] sm:$0xf]
        %v4043 = vld [vmem:[%s4032 + $0x28] sm:$0xf]
        %v4044 = vld [vmem:[%s4032 + $0x2c] sm:$0xf]
        %v4045 = vld [vmem:[%s4032 + $0x30] sm:$0xf]
        %v4046 = vld [vmem:[%s4032 + $0x34] sm:$0xf]
        %v4047 = vld [vmem:[%s4032 + $0x38] sm:$0xf]
        %v4048 = vld [vmem:[%s4032 + $0x3c] sm:$0xf]
        %v4049 = vunpack.c.l.b16 %v3805
        %v4050 = vunpack.c.l.b16 %v3815
        %v4051 = vunpack.c.l.b16 %v3829
        %v4052 = vunpack.c.l.b16 %v3839
        %v4053 = vunpack.c.l.b16 %v3853
        %v4054 = vunpack.c.l.b16 %v3863
        %v4055 = vunpack.c.l.b16 %v3877
        %v4056 = vunpack.c.l.b16 %v3887
        %v4057 = vunpack.c.l.b16 %v3901
        %v4058 = vunpack.c.l.b16 %v3911
        %v4059 = vunpack.c.l.b16 %v3925
        %v4060 = vunpack.c.l.b16 %v3935
        %v4061 = vunpack.c.l.b16 %v3949
        %v4062 = vunpack.c.l.b16 %v3959
        %v4063 = vunpack.c.l.b16 %v3973
        %v4064 = vunpack.c.l.b16 %v3983
        %v4065 = vunpack.c.l.b16 %v3997
        %v4066 = vunpack.c.l.b16 %v4007
        %v4067 = vunpack.c.l.b16 %v4021
        %v4068 = vunpack.c.l.b16 %v4031
        %v4069 = vpack.c.b16 %v4050, %v4049
        %v4070 = vpack.c.b16 %v4052, %v4051
        %v4071 = vpack.c.b16 %v4054, %v4053
        %v4072 = vpack.c.b16 %v4056, %v4055
        %v4073 = vpack.c.b16 %v4058, %v4057
        %v4074 = vpack.c.b16 %v4060, %v4059
        %v4075 = vpack.c.b16 %v4062, %v4061
        %v4076 = vpack.c.b16 %v4064, %v4063
        %v4077 = vpack.c.b16 %v4066, %v4065
        %v4078 = vpack.c.b16 %v4068, %v4067
        %v4105 = vunpack.c.l.b16 %v4033
        %v4106 = vunpack.c.l.b16 %v4034
        %v4107 = vunpack.c.l.b16 %v4035
        %v4108 = vunpack.c.l.b16 %v4036
        %v4109 = vunpack.c.l.b16 %v4037
        %v4110 = vunpack.c.l.b16 %v4038
        %v4111 = vunpack.c.l.b16 %v4039
        %v4112 = vunpack.c.l.b16 %v4040
        %v4113 = vunpack.c.l.b16 %v4041
        %v4114 = vunpack.c.l.b16 %v4042
        %v4115 = vunpack.c.l.b16 %v4043
        %v4116 = vunpack.c.l.b16 %v4044
        %v4117 = vunpack.c.l.b16 %v4045
        %v4118 = vunpack.c.l.b16 %v4046
        %v4119 = vunpack.c.l.b16 %v4047
        %v4120 = vunpack.c.l.b16 %v4048
        %v4121 = vpack.c.b16 %v4106, %v4105
        %v4122 = vpack.c.b16 %v4108, %v4107
        %v4123 = vpack.c.b16 %v4110, %v4109
        %v4124 = vpack.c.b16 %v4112, %v4111
        %v4125 = vpack.c.b16 %v4114, %v4113
        %v4126 = vpack.c.b16 %v4116, %v4115
        %v4127 = vpack.c.b16 %v4118, %v4117
        %v4128 = vpack.c.b16 %v4120, %v4119
        %4137 = vmatprep.subr.bf16.mxu0 0
        %4138 = vmatpush1.bf16.msra.mxu0 %v4128
        %4139 = vmatprep.subr.bf16.mxu0 0
        %4140 = vmatpush1.bf16.msra.mxu0 %v4127
        %4141 = vmatprep.subr.bf16.mxu0 0
        %4142 = vmatpush1.bf16.msra.mxu0 %v4126
        %4143 = vmatprep.subr.bf16.mxu0 0
        %4144 = vmatpush1.bf16.msra.mxu0 %v4125
        %4145 = vmatprep.subr.bf16.mxu0 0
        %4146 = vmatpush1.bf16.msra.mxu0 %v4124
        %4147 = vmatprep.subr.bf16.mxu0 0
        %4148 = vmatpush1.bf16.msra.mxu0 %v4123
        %4149 = vmatprep.subr.bf16.mxu0 0
        %4150 = vmatpush1.bf16.msra.mxu0 %v4122
        %4151 = vmatprep.subr.bf16.mxu0 0
        %4152 = vmatpush1.bf16.msra.mxu0 %v4121
        %4153 = vmatprep.subr.bf16.mxu0 0
        %4154 = vmatpush2.bf16.msra.mxu0 0
        %4155 = vmatprep.subr.bf16.mxu0 0
        %4156 = vmatpush2.bf16.msra.mxu0 0
        %4157 = vmatprep.subr.bf16.mxu0 0
        %4158 = vmatpush2.bf16.msra.mxu0 0
        %4159 = vmatprep.subr.bf16.mxu0 0
        %4160 = vmatpush2.bf16.msra.mxu0 0
        %4161 = vmatprep.subr.bf16.mxu0 0
        %4162 = vmatpush2.bf16.msra.mxu0 0
        %4163 = vmatprep.subr.bf16.mxu0 0
        %4164 = vmatpush2.bf16.msra.mxu0 0
        %4165 = vmatprep.subr.bf16.mxu0 0
        %4166 = vmatpush2.bf16.msra.mxu0 0
        %4167 = vmatprep.subr.bf16.mxu0 0
        %4168 = vmatpush2.bf16.msra.mxu0 0
        %4169 = vmatprep.mubr.bf16.mxu0 0
        %4170 = vmatmul.mubr.bf16.gmra.mxu0 %v4069
        %v4171 = vpop.f32.mrf.mxu0
        %v4172 = vadd.f32 0.0, %v4171
        %v4173 = vpop.f32.mrf.mxu0
        %v4174 = vpop.f32.mrf.mxu0
        %v4175 = vadd.f32 0.0, %v4174
        %v4176 = vpop.f32.mrf.mxu0
        %4177 = vmatprep.mubr.bf16.mxu0 0
        %4178 = vmatmul.mubr.bf16.gmra.mxu0 %v4070
        %v4179 = vpop.f32.mrf.mxu0
        %v4180 = vadd.f32 0.0, %v4179
        %v4181 = vpop.f32.mrf.mxu0
        %v4182 = vpop.f32.mrf.mxu0
        %v4183 = vadd.f32 0.0, %v4182
        %v4184 = vpop.f32.mrf.mxu0
        %4185 = vmatprep.mubr.bf16.mxu0 0
        %4186 = vmatmul.mubr.bf16.gmra.mxu0 %v4071
        %v4187 = vpop.f32.mrf.mxu0
        %v4188 = vadd.f32 0.0, %v4187
        %v4189 = vpop.f32.mrf.mxu0
        %v4190 = vpop.f32.mrf.mxu0
        %v4191 = vadd.f32 0.0, %v4190
        %v4192 = vpop.f32.mrf.mxu0
        %4193 = vmatprep.mubr.bf16.mxu0 0
        %4194 = vmatmul.mubr.bf16.gmra.mxu0 %v4072
        %v4195 = vpop.f32.mrf.mxu0
        %v4196 = vadd.f32 0.0, %v4195
        %v4197 = vpop.f32.mrf.mxu0
        %v4198 = vpop.f32.mrf.mxu0
        %v4199 = vadd.f32 0.0, %v4198
        %v4200 = vpop.f32.mrf.mxu0
        %4201 = vmatprep.mubr.bf16.mxu0 0
        %4202 = vmatmul.mubr.bf16.gmra.mxu0 %v4073
        %v4203 = vpop.f32.mrf.mxu0
        %v4204 = vadd.f32 0.0, %v4203
        %v4205 = vpop.f32.mrf.mxu0
        %v4206 = vpop.f32.mrf.mxu0
        %v4207 = vadd.f32 0.0, %v4206
        %v4208 = vpop.f32.mrf.mxu0
        %4209 = vmatprep.mubr.bf16.mxu0 0
        %4210 = vmatmul.mubr.bf16.gmra.mxu0 %v4074
        %v4211 = vpop.f32.mrf.mxu0
        %v4212 = vadd.f32 0.0, %v4211
        %v4213 = vpop.f32.mrf.mxu0
        %v4214 = vpop.f32.mrf.mxu0
        %v4215 = vadd.f32 0.0, %v4214
        %v4216 = vpop.f32.mrf.mxu0
        %4217 = vmatprep.mubr.bf16.mxu0 0
        %4218 = vmatmul.mubr.bf16.gmra.mxu0 %v4075
        %v4219 = vpop.f32.mrf.mxu0
        %v4220 = vadd.f32 0.0, %v4219
        %v4221 = vpop.f32.mrf.mxu0
        %v4222 = vpop.f32.mrf.mxu0
        %v4223 = vadd.f32 0.0, %v4222
        %v4224 = vpop.f32.mrf.mxu0
        %4225 = vmatprep.mubr.bf16.mxu0 0
        %4226 = vmatmul.mubr.bf16.gmra.mxu0 %v4076
        %v4227 = vpop.f32.mrf.mxu0
        %v4228 = vadd.f32 0.0, %v4227
        %v4229 = vpop.f32.mrf.mxu0
        %v4230 = vpop.f32.mrf.mxu0
        %v4231 = vadd.f32 0.0, %v4230
        %v4232 = vpop.f32.mrf.mxu0
        %4233 = vmatprep.mubr.bf16.mxu0 0
        %4234 = vmatmul.mubr.bf16.gmra.mxu0 %v4077
        %v4235 = vpop.f32.mrf.mxu0
        %v4236 = vadd.f32 0.0, %v4235
        %v4237 = vpop.f32.mrf.mxu0
        %v4238 = vpop.f32.mrf.mxu0
        %v4239 = vadd.f32 0.0, %v4238
        %v4240 = vpop.f32.mrf.mxu0
        %4241 = vmatprep.mubr.bf16.mxu0 0
        %4242 = vmatmul.mubr.bf16.gmra.mxu0 %v4078
        %v4243 = vpop.f32.mrf.mxu0
        %v4244 = vadd.f32 0.0, %v4243
        %v4245 = vpop.f32.mrf.mxu0
        %v4246 = vpop.f32.mrf.mxu0
        %v4247 = vadd.f32 0.0, %v4246
        %v4248 = vpop.f32.mrf.mxu0
        %4249 = vdwg.mxu0
        %v4250 = vadd.f32 %v3742, %v4172
        %v4251 = vadd.f32 %v3743, %v4175
        %v4252 = vadd.f32 %v3744, %v4180
        %v4253 = vadd.f32 %v3745, %v4183
        %v4254 = vadd.f32 %v3746, %v4188
        %v4255 = vadd.f32 %v3747, %v4191
        %v4256 = vadd.f32 %v3748, %v4196
        %v4257 = vadd.f32 %v3749, %v4199
        %v4258 = vadd.f32 %v3750, %v4204
        %v4259 = vadd.f32 %v3751, %v4207
        %v4260 = vadd.f32 %v3752, %v4212
        %v4261 = vadd.f32 %v3753, %v4215
        %v4262 = vadd.f32 %v3754, %v4220
        %v4263 = vadd.f32 %v3755, %v4223
        %v4264 = vadd.f32 %v3756, %v4228
        %v4265 = vadd.f32 %v3757, %v4231
        %v4266 = vadd.f32 %v3758, %v4236
        %v4267 = vadd.f32 %v3759, %v4239
        %v4268 = vadd.f32 %v3760, %v4244
        %v4269 = vadd.f32 %v3761, %v4247
        %v4270 = vlaneseq
        %v4271 = vshrl.u32 %v4270, 7
        %v4272 = vsub.s32 0, %v4271
        %v4273 = vrot.slane %v541, %v4272
        %v4274 = vadd.f32 %v4250, %v4273
        %v4275 = vadd.f32 %v4251, %v4273
        %v4276 = vadd.f32 %v4252, %v4273
        %v4277 = vadd.f32 %v4253, %v4273
        %v4278 = vadd.f32 %v4254, %v4273
        %v4279 = vadd.f32 %v4255, %v4273
        %v4280 = vadd.f32 %v4256, %v4273
        %v4281 = vadd.f32 %v4257, %v4273
        %v4282 = vadd.f32 %v4258, %v4273
        %v4283 = vadd.f32 %v4259, %v4273
        %v4284 = vadd.f32 %v4260, %v4273
        %v4285 = vadd.f32 %v4261, %v4273
        %v4286 = vadd.f32 %v4262, %v4273
        %v4287 = vadd.f32 %v4263, %v4273
        %v4288 = vadd.f32 %v4264, %v4273
        %v4289 = vadd.f32 %v4265, %v4273
        %v4290 = vadd.f32 %v4266, %v4273
        %v4291 = vadd.f32 %v4267, %v4273
        %v4292 = vadd.f32 %v4268, %v4273
        %v4293 = vadd.f32 %v4269, %v4273
        %v4294 = vmax.f32 %v4274, 0.0
        %v4295 = vmax.f32 %v4275, 0.0
        %v4296 = vmax.f32 %v4276, 0.0
        %v4297 = vmax.f32 %v4277, 0.0
        %v4298 = vmax.f32 %v4278, 0.0
        %v4299 = vmax.f32 %v4279, 0.0
        %v4300 = vmax.f32 %v4280, 0.0
        %v4301 = vmax.f32 %v4281, 0.0
        %v4302 = vmax.f32 %v4282, 0.0
        %v4303 = vmax.f32 %v4283, 0.0
        %v4304 = vmax.f32 %v4284, 0.0
        %v4305 = vmax.f32 %v4285, 0.0
        %v4306 = vmax.f32 %v4286, 0.0
        %v4307 = vmax.f32 %v4287, 0.0
        %v4308 = vmax.f32 %v4288, 0.0
        %v4309 = vmax.f32 %v4289, 0.0
        %v4310 = vmax.f32 %v4290, 0.0
        %v4311 = vmax.f32 %v4291, 0.0
        %v4312 = vmax.f32 %v4292, 0.0
        %v4313 = vmax.f32 %v4293, 0.0
        %4314 = vst [vmem:[#allocation3] sm:$0xf] 0
        %4315 = vst [vmem:[#allocation3 + $0x10] sm:$0xf] 0
        %4316 = vst [vmem:[#allocation3 + $0x20] sm:$0xf] 0
        %4317 = vst [vmem:[#allocation3 + $0x30] sm:$0xf] 0
        %4318 = vst [vmem:[#allocation3 + $0x40] sm:$0xf] 0
        %4319 = vst [vmem:[#allocation3 + $0x50] sm:$0xf] 0
        %4320 = vst [vmem:[#allocation3 + $0x60] sm:$0xf] 0
        %4321 = vst [vmem:[#allocation3 + $0x70] sm:$0xf] 0
        %4322 = vst [vmem:[#allocation3 + $0x80] sm:$0xf] 0
        %4323 = vst [vmem:[#allocation3 + $0x90] sm:$0xf] 0
        %4324 = vst [vmem:[#allocation3 + $0xc] sm:$0xf] 0
        %4325 = vst [vmem:[#allocation3 + $0x1c] sm:$0xf] 0
        %4326 = vst [vmem:[#allocation3 + $0x2c] sm:$0xf] 0
        %4327 = vst [vmem:[#allocation3 + $0x3c] sm:$0xf] 0
        %4328 = vst [vmem:[#allocation3 + $0x4c] sm:$0xf] 0
        %4329 = vst [vmem:[#allocation3 + $0x5c] sm:$0xf] 0
        %4330 = vst [vmem:[#allocation3 + $0x6c] sm:$0xf] 0
        %4331 = vst [vmem:[#allocation3 + $0x7c] sm:$0xf] 0
        %4332 = vst [vmem:[#allocation3 + $0x8c] sm:$0xf] 0
        %4333 = vst [vmem:[#allocation3 + $0x9c] sm:$0xf] 0
        %v4334 = vpack.c.bf16 %v4295, %v4294
        %v4335 = vpack.c.bf16 %v4297, %v4296
        %v4336 = vpack.c.bf16 %v4299, %v4298
        %v4337 = vpack.c.bf16 %v4301, %v4300
        %v4338 = vpack.c.bf16 %v4303, %v4302
        %v4339 = vpack.c.bf16 %v4305, %v4304
        %v4340 = vpack.c.bf16 %v4307, %v4306
        %v4341 = vpack.c.bf16 %v4309, %v4308
        %v4342 = vpack.c.bf16 %v4311, %v4310
        %v4343 = vpack.c.bf16 %v4313, %v4312
        %v4354 = vunpack.c.l.b16 %v4334
        %v4355 = vunpack.c.h.b16 %v4334
        %v4356 = vunpack.c.l.b16 %v4335
        %v4357 = vunpack.c.h.b16 %v4335
        %v4358 = vunpack.c.l.b16 %v4336
        %v4359 = vunpack.c.h.b16 %v4336
        %v4360 = vunpack.c.l.b16 %v4337
        %v4361 = vunpack.c.h.b16 %v4337
        %v4362 = vunpack.c.l.b16 %v4338
        %v4363 = vunpack.c.h.b16 %v4338
        %v4364 = vunpack.c.l.b16 %v4339
        %v4365 = vunpack.c.h.b16 %v4339
        %v4366 = vunpack.c.l.b16 %v4340
        %v4367 = vunpack.c.h.b16 %v4340
        %v4368 = vunpack.c.l.b16 %v4341
        %v4369 = vunpack.c.h.b16 %v4341
        %v4370 = vunpack.c.l.b16 %v4342
        %v4371 = vunpack.c.h.b16 %v4342
        %v4372 = vunpack.c.l.b16 %v4343
        %v4373 = vunpack.c.h.b16 %v4343
        %v4374 = vpack.c.b16 %v4354, %v4354
        %v4375 = vpack.c.b16 %v4355, %v4355
        %v4376 = vpack.c.b16 %v4356, %v4356
        %v4377 = vpack.c.b16 %v4357, %v4357
        %v4378 = vpack.c.b16 %v4358, %v4358
        %v4379 = vpack.c.b16 %v4359, %v4359
        %v4380 = vpack.c.b16 %v4360, %v4360
        %v4381 = vpack.c.b16 %v4361, %v4361
        %v4382 = vpack.c.b16 %v4362, %v4362
        %v4383 = vpack.c.b16 %v4363, %v4363
        %v4384 = vpack.c.b16 %v4364, %v4364
        %v4385 = vpack.c.b16 %v4365, %v4365
        %v4386 = vpack.c.b16 %v4366, %v4366
        %v4387 = vpack.c.b16 %v4367, %v4367
        %v4388 = vpack.c.b16 %v4368, %v4368
        %v4389 = vpack.c.b16 %v4369, %v4369
        %v4390 = vpack.c.b16 %v4370, %v4370
        %v4391 = vpack.c.b16 %v4371, %v4371
        %v4392 = vpack.c.b16 %v4372, %v4372
        %v4393 = vpack.c.b16 %v4373, %v4373
        %4414 = vst [vmem:[#allocation3 + $0x4] sm:$0xf] %v4374
        %4415 = vst [vmem:[#allocation3 + $0x8] sm:$0xf] %v4375
        %4416 = vst [vmem:[#allocation3 + $0x14] sm:$0xf] %v4376
        %4417 = vst [vmem:[#allocation3 + $0x18] sm:$0xf] %v4377
        %4418 = vst [vmem:[#allocation3 + $0x24] sm:$0xf] %v4378
        %4419 = vst [vmem:[#allocation3 + $0x28] sm:$0xf] %v4379
        %4420 = vst [vmem:[#allocation3 + $0x34] sm:$0xf] %v4380
        %4421 = vst [vmem:[#allocation3 + $0x38] sm:$0xf] %v4381
        %4422 = vst [vmem:[#allocation3 + $0x44] sm:$0xf] %v4382
        %4423 = vst [vmem:[#allocation3 + $0x48] sm:$0xf] %v4383
        %4424 = vst [vmem:[#allocation3 + $0x54] sm:$0xf] %v4384
        %4425 = vst [vmem:[#allocation3 + $0x58] sm:$0xf] %v4385
        %4426 = vst [vmem:[#allocation3 + $0x64] sm:$0xf] %v4386
        %4427 = vst [vmem:[#allocation3 + $0x68] sm:$0xf] %v4387
        %4428 = vst [vmem:[#allocation3 + $0x74] sm:$0xf] %v4388
        %4429 = vst [vmem:[#allocation3 + $0x78] sm:$0xf] %v4389
        %4430 = vst [vmem:[#allocation3 + $0x84] sm:$0xf] %v4390
        %4431 = vst [vmem:[#allocation3 + $0x88] sm:$0xf] %v4391
        %4432 = vst [vmem:[#allocation3 + $0x94] sm:$0xf] %v4392
        %4433 = vst [vmem:[#allocation3 + $0x98] sm:$0xf] %v4393
        // Predicated region
        $region81: #{tpu_custom_call.1} parent=43 // pred_check
          %p4434 = pneg %p499
        $region82: #{tpu_custom_call.1} parent=43 // pred_check_branch
          %4436 = sbr.rel (%p4434) target = $region84
        $region83: #{tpu_custom_call.1} parent=43 // pred_region
          %4437 = vst [vmem:[#allocation3 + $0x4] sm:$0xf] 0
          %4438 = vst [vmem:[#allocation3 + $0x8] sm:$0xf] 0
        $region84: #{tpu_custom_call.1} parent=43 // pred_fallthru
          _
        // Predicated region
        $region85: #{tpu_custom_call.1} parent=43 // pred_check
          %p4439 = pneg %p519
        $region86: #{tpu_custom_call.1} parent=43 // pred_check_branch
          %4441 = sbr.rel (%p4439) target = $region88
        $region87: #{tpu_custom_call.1} parent=43 // pred_region
          %s4442 = scalar_lea.vmem [#allocation3], 144
          %4443 = vst [vmem:[%s4442 + $0x4] sm:$0xf] 0
          %4444 = vst [vmem:[%s4442 + $0x8] sm:$0xf] 0
        $region88: #{tpu_custom_call.1} parent=43 // pred_fallthru
          _
        %v4445 = vld [vmem:[%s5 + $0x1] sm:$0x1]
        %v4446 = vld [vmem:[#allocation3] sm:$0x8]
        %v4447 = vld [vmem:[#allocation3 + $0x4] sm:$0xf]
        %v4448 = vld [vmem:[#allocation3 + $0x8] sm:$0xf]
        %v4449 = vld [vmem:[#allocation3 + $0x10] sm:$0x8]
        %v4450 = vld [vmem:[#allocation3 + $0x14] sm:$0xf]
        %v4451 = vld [vmem:[#allocation3 + $0x18] sm:$0xf]
        %v4452 = vld [vmem:[#allocation3 + $0x20] sm:$0x8]
        %v4453 = vld [vmem:[#allocation3 + $0x24] sm:$0xf]
        %v4454 = vld [vmem:[#allocation3 + $0x28] sm:$0xf]
        %v4455 = vld [vmem:[#allocation3 + $0x30] sm:$0x8]
        %v4456 = vld [vmem:[#allocation3 + $0x34] sm:$0xf]
        %v4457 = vld [vmem:[#allocation3 + $0x38] sm:$0xf]
        %v4458 = vld [vmem:[#allocation3 + $0x40] sm:$0x8]
        %v4459 = vld [vmem:[#allocation3 + $0x44] sm:$0xf]
        %v4460 = vld [vmem:[#allocation3 + $0x48] sm:$0xf]
        %v4461 = vld [vmem:[#allocation3 + $0x50] sm:$0x8]
        %v4462 = vld [vmem:[#allocation3 + $0x54] sm:$0xf]
        %v4463 = vld [vmem:[#allocation3 + $0x58] sm:$0xf]
        %v4464 = vld [vmem:[#allocation3 + $0x60] sm:$0x8]
        %v4465 = vld [vmem:[#allocation3 + $0x64] sm:$0xf]
        %v4466 = vld [vmem:[#allocation3 + $0x68] sm:$0xf]
        %v4467 = vld [vmem:[#allocation3 + $0x70] sm:$0x8]
        %v4468 = vld [vmem:[#allocation3 + $0x74] sm:$0xf]
        %v4469 = vld [vmem:[#allocation3 + $0x78] sm:$0xf]
        %v4471 = vshrl.u32 %v4446, 16
        %v4473 = vrot.slane %v4471, 7
        %v4474 = vrot.slane %v4473, 4
        %v4476 = vshrl.u32 %v4447, 16
        %v4478 = vrot.slane %v4476, 7
        %v4479 = vshll.u32 %v4447, 16
        %v4481 = vor.u32 %v4478, %v4479
        %v4482 = vsel %vm574, %v4474, %v4481
        %v4483 = vrot.slane %v4478, 4
        %v4485 = vshrl.u32 %v4448, 16
        %v4487 = vrot.slane %v4485, 7
        %v4488 = vshll.u32 %v4448, 16
        %v4490 = vor.u32 %v4487, %v4488
        %v4491 = vsel %vm574, %v4483, %v4490
        %v4493 = vshrl.u32 %v4449, 16
        %v4495 = vrot.slane %v4493, 7
        %v4496 = vrot.slane %v4495, 4
        %v4498 = vshrl.u32 %v4450, 16
        %v4500 = vrot.slane %v4498, 7
        %v4501 = vshll.u32 %v4450, 16
        %v4503 = vor.u32 %v4500, %v4501
        %v4504 = vsel %vm574, %v4496, %v4503
        %v4505 = vrot.slane %v4500, 4
        %v4507 = vshrl.u32 %v4451, 16
        %v4509 = vrot.slane %v4507, 7
        %v4510 = vshll.u32 %v4451, 16
        %v4512 = vor.u32 %v4509, %v4510
        %v4513 = vsel %vm574, %v4505, %v4512
        %v4515 = vshrl.u32 %v4452, 16
        %v4517 = vrot.slane %v4515, 7
        %v4518 = vrot.slane %v4517, 4
        %v4520 = vshrl.u32 %v4453, 16
        %v4522 = vrot.slane %v4520, 7
        %v4523 = vshll.u32 %v4453, 16
        %v4525 = vor.u32 %v4522, %v4523
        %v4526 = vsel %vm574, %v4518, %v4525
        %v4527 = vrot.slane %v4522, 4
        %v4529 = vshrl.u32 %v4454, 16
        %v4531 = vrot.slane %v4529, 7
        %v4532 = vshll.u32 %v4454, 16
        %v4534 = vor.u32 %v4531, %v4532
        %v4535 = vsel %vm574, %v4527, %v4534
        %v4537 = vshrl.u32 %v4455, 16
        %v4539 = vrot.slane %v4537, 7
        %v4540 = vrot.slane %v4539, 4
        %v4542 = vshrl.u32 %v4456, 16
        %v4544 = vrot.slane %v4542, 7
        %v4545 = vshll.u32 %v4456, 16
        %v4547 = vor.u32 %v4544, %v4545
        %v4548 = vsel %vm574, %v4540, %v4547
        %v4549 = vrot.slane %v4544, 4
        %v4551 = vshrl.u32 %v4457, 16
        %v4553 = vrot.slane %v4551, 7
        %v4554 = vshll.u32 %v4457, 16
        %v4556 = vor.u32 %v4553, %v4554
        %v4557 = vsel %vm574, %v4549, %v4556
        %v4559 = vshrl.u32 %v4458, 16
        %v4561 = vrot.slane %v4559, 7
        %v4562 = vrot.slane %v4561, 4
        %v4564 = vshrl.u32 %v4459, 16
        %v4566 = vrot.slane %v4564, 7
        %v4567 = vshll.u32 %v4459, 16
        %v4569 = vor.u32 %v4566, %v4567
        %v4570 = vsel %vm574, %v4562, %v4569
        %v4571 = vrot.slane %v4566, 4
        %v4573 = vshrl.u32 %v4460, 16
        %v4575 = vrot.slane %v4573, 7
        %v4576 = vshll.u32 %v4460, 16
        %v4578 = vor.u32 %v4575, %v4576
        %v4579 = vsel %vm574, %v4571, %v4578
        %v4581 = vshrl.u32 %v4461, 16
        %v4583 = vrot.slane %v4581, 7
        %v4584 = vrot.slane %v4583, 4
        %v4586 = vshrl.u32 %v4462, 16
        %v4588 = vrot.slane %v4586, 7
        %v4589 = vshll.u32 %v4462, 16
        %v4591 = vor.u32 %v4588, %v4589
        %v4592 = vsel %vm574, %v4584, %v4591
        %v4593 = vrot.slane %v4588, 4
        %v4595 = vshrl.u32 %v4463, 16
        %v4597 = vrot.slane %v4595, 7
        %v4598 = vshll.u32 %v4463, 16
        %v4600 = vor.u32 %v4597, %v4598
        %v4601 = vsel %vm574, %v4593, %v4600
        %v4603 = vshrl.u32 %v4464, 16
        %v4605 = vrot.slane %v4603, 7
        %v4606 = vrot.slane %v4605, 4
        %v4608 = vshrl.u32 %v4465, 16
        %v4610 = vrot.slane %v4608, 7
        %v4611 = vshll.u32 %v4465, 16
        %v4613 = vor.u32 %v4610, %v4611
        %v4614 = vsel %vm574, %v4606, %v4613
        %v4615 = vrot.slane %v4610, 4
        %v4617 = vshrl.u32 %v4466, 16
        %v4619 = vrot.slane %v4617, 7
        %v4620 = vshll.u32 %v4466, 16
        %v4622 = vor.u32 %v4619, %v4620
        %v4623 = vsel %vm574, %v4615, %v4622
        %v4625 = vshrl.u32 %v4467, 16
        %v4627 = vrot.slane %v4625, 7
        %v4628 = vrot.slane %v4627, 4
        %v4630 = vshrl.u32 %v4468, 16
        %v4632 = vrot.slane %v4630, 7
        %v4633 = vshll.u32 %v4468, 16
        %v4635 = vor.u32 %v4632, %v4633
        %v4636 = vsel %vm574, %v4628, %v4635
        %v4637 = vrot.slane %v4632, 4
        %v4639 = vshrl.u32 %v4469, 16
        %v4641 = vrot.slane %v4639, 7
        %v4642 = vshll.u32 %v4469, 16
        %v4644 = vor.u32 %v4641, %v4642
        %v4645 = vsel %vm574, %v4637, %v4644
        %v4646 = vld [vmem:[#allocation12] sm:$0xf]
        %v4647 = vld [vmem:[#allocation12 + $0x4] sm:$0xf]
        %v4648 = vld [vmem:[#allocation12 + $0x8] sm:$0xf]
        %v4649 = vld [vmem:[#allocation12 + $0xc] sm:$0xf]
        %v4650 = vld [vmem:[#allocation12 + $0x10] sm:$0xf]
        %v4651 = vld [vmem:[#allocation12 + $0x14] sm:$0xf]
        %v4652 = vld [vmem:[#allocation12 + $0x18] sm:$0xf]
        %v4653 = vld [vmem:[#allocation12 + $0x1c] sm:$0xf]
        %v4654 = vld [vmem:[#allocation12 + $0x20] sm:$0xf]
        %v4655 = vld [vmem:[#allocation12 + $0x24] sm:$0xf]
        %v4656 = vld [vmem:[#allocation12 + $0x28] sm:$0xf]
        %v4657 = vld [vmem:[#allocation12 + $0x2c] sm:$0xf]
        %v4658 = vld [vmem:[#allocation12 + $0x30] sm:$0xf]
        %v4659 = vld [vmem:[#allocation12 + $0x34] sm:$0xf]
        %v4660 = vld [vmem:[#allocation12 + $0x38] sm:$0xf]
        %v4661 = vld [vmem:[#allocation12 + $0x3c] sm:$0xf]
        %s4662 = scalar_lea.vmem [#allocation12], 64
        %v4663 = vld [vmem:[%s4662] sm:$0xf]
        %v4664 = vld [vmem:[%s4662 + $0x4] sm:$0xf]
        %v4665 = vld [vmem:[%s4662 + $0x8] sm:$0xf]
        %v4666 = vld [vmem:[%s4662 + $0xc] sm:$0xf]
        %v4667 = vld [vmem:[%s4662 + $0x10] sm:$0xf]
        %v4668 = vld [vmem:[%s4662 + $0x14] sm:$0xf]
        %v4669 = vld [vmem:[%s4662 + $0x18] sm:$0xf]
        %v4670 = vld [vmem:[%s4662 + $0x1c] sm:$0xf]
        %v4671 = vld [vmem:[%s4662 + $0x20] sm:$0xf]
        %v4672 = vld [vmem:[%s4662 + $0x24] sm:$0xf]
        %v4673 = vld [vmem:[%s4662 + $0x28] sm:$0xf]
        %v4674 = vld [vmem:[%s4662 + $0x2c] sm:$0xf]
        %v4675 = vld [vmem:[%s4662 + $0x30] sm:$0xf]
        %v4676 = vld [vmem:[%s4662 + $0x34] sm:$0xf]
        %v4677 = vld [vmem:[%s4662 + $0x38] sm:$0xf]
        %v4678 = vld [vmem:[%s4662 + $0x3c] sm:$0xf]
        %v4695 = vunpack.c.l.b16 %v4447
        %v4696 = vunpack.c.l.b16 %v4448
        %v4697 = vunpack.c.l.b16 %v4450
        %v4698 = vunpack.c.l.b16 %v4451
        %v4699 = vunpack.c.l.b16 %v4453
        %v4700 = vunpack.c.l.b16 %v4454
        %v4701 = vunpack.c.l.b16 %v4456
        %v4702 = vunpack.c.l.b16 %v4457
        %v4703 = vunpack.c.l.b16 %v4459
        %v4704 = vunpack.c.l.b16 %v4460
        %v4705 = vunpack.c.l.b16 %v4462
        %v4706 = vunpack.c.l.b16 %v4463
        %v4707 = vunpack.c.l.b16 %v4465
        %v4708 = vunpack.c.l.b16 %v4466
        %v4709 = vunpack.c.l.b16 %v4468
        %v4710 = vunpack.c.l.b16 %v4469
        %v4711 = vpack.c.b16 %v4696, %v4695
        %v4712 = vpack.c.b16 %v4698, %v4697
        %v4713 = vpack.c.b16 %v4700, %v4699
        %v4714 = vpack.c.b16 %v4702, %v4701
        %v4715 = vpack.c.b16 %v4704, %v4703
        %v4716 = vpack.c.b16 %v4706, %v4705
        %v4717 = vpack.c.b16 %v4708, %v4707
        %v4718 = vpack.c.b16 %v4710, %v4709
        %v4743 = vunpack.c.l.b16 %v4663
        %v4744 = vunpack.c.l.b16 %v4664
        %v4745 = vunpack.c.l.b16 %v4665
        %v4746 = vunpack.c.l.b16 %v4666
        %v4747 = vunpack.c.l.b16 %v4667
        %v4748 = vunpack.c.l.b16 %v4668
        %v4749 = vunpack.c.l.b16 %v4669
        %v4750 = vunpack.c.l.b16 %v4670
        %v4751 = vunpack.c.l.b16 %v4671
        %v4752 = vunpack.c.l.b16 %v4672
        %v4753 = vunpack.c.l.b16 %v4673
        %v4754 = vunpack.c.l.b16 %v4674
        %v4755 = vunpack.c.l.b16 %v4675
        %v4756 = vunpack.c.l.b16 %v4676
        %v4757 = vunpack.c.l.b16 %v4677
        %v4758 = vunpack.c.l.b16 %v4678
        %v4759 = vpack.c.b16 %v4744, %v4743
        %v4760 = vpack.c.b16 %v4746, %v4745
        %v4761 = vpack.c.b16 %v4748, %v4747
        %v4762 = vpack.c.b16 %v4750, %v4749
        %v4763 = vpack.c.b16 %v4752, %v4751
        %v4764 = vpack.c.b16 %v4754, %v4753
        %v4765 = vpack.c.b16 %v4756, %v4755
        %v4766 = vpack.c.b16 %v4758, %v4757
        %4775 = vmatprep.subr.bf16.mxu0 0
        %4776 = vmatpush1.bf16.msra.mxu0 %v4766
        %4777 = vmatprep.subr.bf16.mxu0 0
        %4778 = vmatpush1.bf16.msra.mxu0 %v4765
        %4779 = vmatprep.subr.bf16.mxu0 0
        %4780 = vmatpush1.bf16.msra.mxu0 %v4764
        %4781 = vmatprep.subr.bf16.mxu0 0
        %4782 = vmatpush1.bf16.msra.mxu0 %v4763
        %4783 = vmatprep.subr.bf16.mxu0 0
        %4784 = vmatpush1.bf16.msra.mxu0 %v4762
        %4785 = vmatprep.subr.bf16.mxu0 0
        %4786 = vmatpush1.bf16.msra.mxu0 %v4761
        %4787 = vmatprep.subr.bf16.mxu0 0
        %4788 = vmatpush1.bf16.msra.mxu0 %v4760
        %4789 = vmatprep.subr.bf16.mxu0 0
        %4790 = vmatpush1.bf16.msra.mxu0 %v4759
        %4791 = vmatprep.subr.bf16.mxu0 0
        %4792 = vmatpush2.bf16.msra.mxu0 0
        %4793 = vmatprep.subr.bf16.mxu0 0
        %4794 = vmatpush2.bf16.msra.mxu0 0
        %4795 = vmatprep.subr.bf16.mxu0 0
        %4796 = vmatpush2.bf16.msra.mxu0 0
        %4797 = vmatprep.subr.bf16.mxu0 0
        %4798 = vmatpush2.bf16.msra.mxu0 0
        %4799 = vmatprep.subr.bf16.mxu0 0
        %4800 = vmatpush2.bf16.msra.mxu0 0
        %4801 = vmatprep.subr.bf16.mxu0 0
        %4802 = vmatpush2.bf16.msra.mxu0 0
        %4803 = vmatprep.subr.bf16.mxu0 0
        %4804 = vmatpush2.bf16.msra.mxu0 0
        %4805 = vmatprep.subr.bf16.mxu0 0
        %4806 = vmatpush2.bf16.msra.mxu0 0
        %4807 = vmatprep.mubr.bf16.mxu0 0
        %4808 = vmatmul.mubr.bf16.gmra.mxu0 %v4711
        %v4809 = vpop.f32.mrf.mxu0
        %v4810 = vadd.f32 0.0, %v4809
        %v4811 = vpop.f32.mrf.mxu0
        %v4812 = vpop.f32.mrf.mxu0
        %v4813 = vadd.f32 0.0, %v4812
        %v4814 = vpop.f32.mrf.mxu0
        %4815 = vmatprep.mubr.bf16.mxu0 0
        %4816 = vmatmul.mubr.bf16.gmra.mxu0 %v4712
        %v4817 = vpop.f32.mrf.mxu0
        %v4818 = vadd.f32 0.0, %v4817
        %v4819 = vpop.f32.mrf.mxu0
        %v4820 = vpop.f32.mrf.mxu0
        %v4821 = vadd.f32 0.0, %v4820
        %v4822 = vpop.f32.mrf.mxu0
        %4823 = vmatprep.mubr.bf16.mxu0 0
        %4824 = vmatmul.mubr.bf16.gmra.mxu0 %v4713
        %v4825 = vpop.f32.mrf.mxu0
        %v4826 = vadd.f32 0.0, %v4825
        %v4827 = vpop.f32.mrf.mxu0
        %v4828 = vpop.f32.mrf.mxu0
        %v4829 = vadd.f32 0.0, %v4828
        %v4830 = vpop.f32.mrf.mxu0
        %4831 = vmatprep.mubr.bf16.mxu0 0
        %4832 = vmatmul.mubr.bf16.gmra.mxu0 %v4714
        %v4833 = vpop.f32.mrf.mxu0
        %v4834 = vadd.f32 0.0, %v4833
        %v4835 = vpop.f32.mrf.mxu0
        %v4836 = vpop.f32.mrf.mxu0
        %v4837 = vadd.f32 0.0, %v4836
        %v4838 = vpop.f32.mrf.mxu0
        %4839 = vmatprep.mubr.bf16.mxu0 0
        %4840 = vmatmul.mubr.bf16.gmra.mxu0 %v4715
        %v4841 = vpop.f32.mrf.mxu0
        %v4842 = vadd.f32 0.0, %v4841
        %v4843 = vpop.f32.mrf.mxu0
        %v4844 = vpop.f32.mrf.mxu0
        %v4845 = vadd.f32 0.0, %v4844
        %v4846 = vpop.f32.mrf.mxu0
        %4847 = vmatprep.mubr.bf16.mxu0 0
        %4848 = vmatmul.mubr.bf16.gmra.mxu0 %v4716
        %v4849 = vpop.f32.mrf.mxu0
        %v4850 = vadd.f32 0.0, %v4849
        %v4851 = vpop.f32.mrf.mxu0
        %v4852 = vpop.f32.mrf.mxu0
        %v4853 = vadd.f32 0.0, %v4852
        %v4854 = vpop.f32.mrf.mxu0
        %4855 = vmatprep.mubr.bf16.mxu0 0
        %4856 = vmatmul.mubr.bf16.gmra.mxu0 %v4717
        %v4857 = vpop.f32.mrf.mxu0
        %v4858 = vadd.f32 0.0, %v4857
        %v4859 = vpop.f32.mrf.mxu0
        %v4860 = vpop.f32.mrf.mxu0
        %v4861 = vadd.f32 0.0, %v4860
        %v4862 = vpop.f32.mrf.mxu0
        %4863 = vmatprep.mubr.bf16.mxu0 0
        %4864 = vmatmul.mubr.bf16.gmra.mxu0 %v4718
        %v4865 = vpop.f32.mrf.mxu0
        %v4866 = vadd.f32 0.0, %v4865
        %v4867 = vpop.f32.mrf.mxu0
        %v4868 = vpop.f32.mrf.mxu0
        %v4869 = vadd.f32 0.0, %v4868
        %v4870 = vpop.f32.mrf.mxu0
        %4871 = vdwg.mxu0
        %v4872 = vunpack.c.l.b16 %v4482
        %v4873 = vunpack.c.l.b16 %v4491
        %v4874 = vunpack.c.l.b16 %v4504
        %v4875 = vunpack.c.l.b16 %v4513
        %v4876 = vunpack.c.l.b16 %v4526
        %v4877 = vunpack.c.l.b16 %v4535
        %v4878 = vunpack.c.l.b16 %v4548
        %v4879 = vunpack.c.l.b16 %v4557
        %v4880 = vunpack.c.l.b16 %v4570
        %v4881 = vunpack.c.l.b16 %v4579
        %v4882 = vunpack.c.l.b16 %v4592
        %v4883 = vunpack.c.l.b16 %v4601
        %v4884 = vunpack.c.l.b16 %v4614
        %v4885 = vunpack.c.l.b16 %v4623
        %v4886 = vunpack.c.l.b16 %v4636
        %v4887 = vunpack.c.l.b16 %v4645
        %v4888 = vpack.c.b16 %v4873, %v4872
        %v4889 = vpack.c.b16 %v4875, %v4874
        %v4890 = vpack.c.b16 %v4877, %v4876
        %v4891 = vpack.c.b16 %v4879, %v4878
        %v4892 = vpack.c.b16 %v4881, %v4880
        %v4893 = vpack.c.b16 %v4883, %v4882
        %v4894 = vpack.c.b16 %v4885, %v4884
        %v4895 = vpack.c.b16 %v4887, %v4886
        %v4920 = vunpack.c.l.b16 %v4646
        %v4921 = vunpack.c.l.b16 %v4647
        %v4922 = vunpack.c.l.b16 %v4648
        %v4923 = vunpack.c.l.b16 %v4649
        %v4924 = vunpack.c.l.b16 %v4650
        %v4925 = vunpack.c.l.b16 %v4651
        %v4926 = vunpack.c.l.b16 %v4652
        %v4927 = vunpack.c.l.b16 %v4653
        %v4928 = vunpack.c.l.b16 %v4654
        %v4929 = vunpack.c.l.b16 %v4655
        %v4930 = vunpack.c.l.b16 %v4656
        %v4931 = vunpack.c.l.b16 %v4657
        %v4932 = vunpack.c.l.b16 %v4658
        %v4933 = vunpack.c.l.b16 %v4659
        %v4934 = vunpack.c.l.b16 %v4660
        %v4935 = vunpack.c.l.b16 %v4661
        %v4936 = vpack.c.b16 %v4921, %v4920
        %v4937 = vpack.c.b16 %v4923, %v4922
        %v4938 = vpack.c.b16 %v4925, %v4924
        %v4939 = vpack.c.b16 %v4927, %v4926
        %v4940 = vpack.c.b16 %v4929, %v4928
        %v4941 = vpack.c.b16 %v4931, %v4930
        %v4942 = vpack.c.b16 %v4933, %v4932
        %v4943 = vpack.c.b16 %v4935, %v4934
        %4952 = vmatprep.subr.bf16.mxu0 0
        %4953 = vmatpush1.bf16.msra.mxu0 %v4943
        %4954 = vmatprep.subr.bf16.mxu0 0
        %4955 = vmatpush1.bf16.msra.mxu0 %v4942
        %4956 = vmatprep.subr.bf16.mxu0 0
        %4957 = vmatpush1.bf16.msra.mxu0 %v4941
        %4958 = vmatprep.subr.bf16.mxu0 0
        %4959 = vmatpush1.bf16.msra.mxu0 %v4940
        %4960 = vmatprep.subr.bf16.mxu0 0
        %4961 = vmatpush1.bf16.msra.mxu0 %v4939
        %4962 = vmatprep.subr.bf16.mxu0 0
        %4963 = vmatpush1.bf16.msra.mxu0 %v4938
        %4964 = vmatprep.subr.bf16.mxu0 0
        %4965 = vmatpush1.bf16.msra.mxu0 %v4937
        %4966 = vmatprep.subr.bf16.mxu0 0
        %4967 = vmatpush1.bf16.msra.mxu0 %v4936
        %4968 = vmatprep.subr.bf16.mxu0 0
        %4969 = vmatpush2.bf16.msra.mxu0 0
        %4970 = vmatprep.subr.bf16.mxu0 0
        %4971 = vmatpush2.bf16.msra.mxu0 0
        %4972 = vmatprep.subr.bf16.mxu0 0
        %4973 = vmatpush2.bf16.msra.mxu0 0
        %4974 = vmatprep.subr.bf16.mxu0 0
        %4975 = vmatpush2.bf16.msra.mxu0 0
        %4976 = vmatprep.subr.bf16.mxu0 0
        %4977 = vmatpush2.bf16.msra.mxu0 0
        %4978 = vmatprep.subr.bf16.mxu0 0
        %4979 = vmatpush2.bf16.msra.mxu0 0
        %4980 = vmatprep.subr.bf16.mxu0 0
        %4981 = vmatpush2.bf16.msra.mxu0 0
        %4982 = vmatprep.subr.bf16.mxu0 0
        %4983 = vmatpush2.bf16.msra.mxu0 0
        %4984 = vmatprep.mubr.bf16.mxu0 0
        %4985 = vmatmul.mubr.bf16.gmra.mxu0 %v4888
        %v4986 = vpop.f32.mrf.mxu0
        %v4987 = vadd.f32 %v4810, %v4986
        %v4988 = vpop.f32.mrf.mxu0
        %v4989 = vpop.f32.mrf.mxu0
        %v4990 = vadd.f32 %v4813, %v4989
        %v4991 = vpop.f32.mrf.mxu0
        %4992 = vmatprep.mubr.bf16.mxu0 0
        %4993 = vmatmul.mubr.bf16.gmra.mxu0 %v4889
        %v4994 = vpop.f32.mrf.mxu0
        %v4995 = vadd.f32 %v4818, %v4994
        %v4996 = vpop.f32.mrf.mxu0
        %v4997 = vpop.f32.mrf.mxu0
        %v4998 = vadd.f32 %v4821, %v4997
        %v4999 = vpop.f32.mrf.mxu0
        %5000 = vmatprep.mubr.bf16.mxu0 0
        %5001 = vmatmul.mubr.bf16.gmra.mxu0 %v4890
        %v5002 = vpop.f32.mrf.mxu0
        %v5003 = vadd.f32 %v4826, %v5002
        %v5004 = vpop.f32.mrf.mxu0
        %v5005 = vpop.f32.mrf.mxu0
        %v5006 = vadd.f32 %v4829, %v5005
        %v5007 = vpop.f32.mrf.mxu0
        %5008 = vmatprep.mubr.bf16.mxu0 0
        %5009 = vmatmul.mubr.bf16.gmra.mxu0 %v4891
        %v5010 = vpop.f32.mrf.mxu0
        %v5011 = vadd.f32 %v4834, %v5010
        %v5012 = vpop.f32.mrf.mxu0
        %v5013 = vpop.f32.mrf.mxu0
        %v5014 = vadd.f32 %v4837, %v5013
        %v5015 = vpop.f32.mrf.mxu0
        %5016 = vmatprep.mubr.bf16.mxu0 0
        %5017 = vmatmul.mubr.bf16.gmra.mxu0 %v4892
        %v5018 = vpop.f32.mrf.mxu0
        %v5019 = vadd.f32 %v4842, %v5018
        %v5020 = vpop.f32.mrf.mxu0
        %v5021 = vpop.f32.mrf.mxu0
        %v5022 = vadd.f32 %v4845, %v5021
        %v5023 = vpop.f32.mrf.mxu0
        %5024 = vmatprep.mubr.bf16.mxu0 0
        %5025 = vmatmul.mubr.bf16.gmra.mxu0 %v4893
        %v5026 = vpop.f32.mrf.mxu0
        %v5027 = vadd.f32 %v4850, %v5026
        %v5028 = vpop.f32.mrf.mxu0
        %v5029 = vpop.f32.mrf.mxu0
        %v5030 = vadd.f32 %v4853, %v5029
        %v5031 = vpop.f32.mrf.mxu0
        %5032 = vmatprep.mubr.bf16.mxu0 0
        %5033 = vmatmul.mubr.bf16.gmra.mxu0 %v4894
        %v5034 = vpop.f32.mrf.mxu0
        %v5035 = vadd.f32 %v4858, %v5034
        %v5036 = vpop.f32.mrf.mxu0
        %v5037 = vpop.f32.mrf.mxu0
        %v5038 = vadd.f32 %v4861, %v5037
        %v5039 = vpop.f32.mrf.mxu0
        %5040 = vmatprep.mubr.bf16.mxu0 0
        %5041 = vmatmul.mubr.bf16.gmra.mxu0 %v4895
        %v5042 = vpop.f32.mrf.mxu0
        %v5043 = vadd.f32 %v4866, %v5042
        %v5044 = vpop.f32.mrf.mxu0
        %v5045 = vpop.f32.mrf.mxu0
        %v5046 = vadd.f32 %v4869, %v5045
        %v5047 = vpop.f32.mrf.mxu0
        %5048 = vdwg.mxu0
        %v5049 = vld [vmem:[#allocation3 + $0x4] sm:$0xf]
        %v5050 = vld [vmem:[#allocation3 + $0x8] sm:$0xf]
        %v5051 = vld [vmem:[#allocation3 + $0xc] sm:$0x1]
        %v5052 = vld [vmem:[#allocation3 + $0x14] sm:$0xf]
        %v5053 = vld [vmem:[#allocation3 + $0x18] sm:$0xf]
        %v5054 = vld [vmem:[#allocation3 + $0x1c] sm:$0x1]
        %v5055 = vld [vmem:[#allocation3 + $0x24] sm:$0xf]
        %v5056 = vld [vmem:[#allocation3 + $0x28] sm:$0xf]
        %v5057 = vld [vmem:[#allocation3 + $0x2c] sm:$0x1]
        %v5058 = vld [vmem:[#allocation3 + $0x34] sm:$0xf]
        %v5059 = vld [vmem:[#allocation3 + $0x38] sm:$0xf]
        %v5060 = vld [vmem:[#allocation3 + $0x3c] sm:$0x1]
        %v5061 = vld [vmem:[#allocation3 + $0x44] sm:$0xf]
        %v5062 = vld [vmem:[#allocation3 + $0x48] sm:$0xf]
        %v5063 = vld [vmem:[#allocation3 + $0x4c] sm:$0x1]
        %v5064 = vld [vmem:[#allocation3 + $0x54] sm:$0xf]
        %v5065 = vld [vmem:[#allocation3 + $0x58] sm:$0xf]
        %v5066 = vld [vmem:[#allocation3 + $0x5c] sm:$0x1]
        %v5067 = vld [vmem:[#allocation3 + $0x64] sm:$0xf]
        %v5068 = vld [vmem:[#allocation3 + $0x68] sm:$0xf]
        %v5069 = vld [vmem:[#allocation3 + $0x6c] sm:$0x1]
        %v5070 = vld [vmem:[#allocation3 + $0x74] sm:$0xf]
        %v5071 = vld [vmem:[#allocation3 + $0x78] sm:$0xf]
        %v5072 = vld [vmem:[#allocation3 + $0x7c] sm:$0x1]
        %v5074 = vshrl.u32 %v5049, 16
        %v5076 = vrot.slane %v5074, 4
        %v5077 = vshll.u32 %v5049, 16
        %v5079 = vrot.slane %v5077, 5
        %v5080 = vor.u32 %v5076, %v5079
        %v5081 = vrot.slane %v5080, 4
        %v5083 = vshll.u32 %v5050, 16
        %v5085 = vrot.slane %v5083, 5
        %v5086 = vsel %vm1282, %v5081, %v5085
        %v5087 = vshrl.u32 %v5050, 16
        %v5089 = vrot.slane %v5087, 4
        %v5090 = vor.u32 %v5089, %v5085
        %v5091 = vrot.slane %v5090, 4
        %v5093 = vshll.u32 %v5051, 16
        %v5095 = vrot.slane %v5093, 5
        %v5096 = vsel %vm1282, %v5091, %v5095
        %v5098 = vshrl.u32 %v5052, 16
        %v5100 = vrot.slane %v5098, 4
        %v5101 = vshll.u32 %v5052, 16
        %v5103 = vrot.slane %v5101, 5
        %v5104 = vor.u32 %v5100, %v5103
        %v5105 = vrot.slane %v5104, 4
        %v5107 = vshll.u32 %v5053, 16
        %v5109 = vrot.slane %v5107, 5
        %v5110 = vsel %vm1282, %v5105, %v5109
        %v5111 = vshrl.u32 %v5053, 16
        %v5113 = vrot.slane %v5111, 4
        %v5114 = vor.u32 %v5113, %v5109
        %v5115 = vrot.slane %v5114, 4
        %v5117 = vshll.u32 %v5054, 16
        %v5119 = vrot.slane %v5117, 5
        %v5120 = vsel %vm1282, %v5115, %v5119
        %v5122 = vshrl.u32 %v5055, 16
        %v5124 = vrot.slane %v5122, 4
        %v5125 = vshll.u32 %v5055, 16
        %v5127 = vrot.slane %v5125, 5
        %v5128 = vor.u32 %v5124, %v5127
        %v5129 = vrot.slane %v5128, 4
        %v5131 = vshll.u32 %v5056, 16
        %v5133 = vrot.slane %v5131, 5
        %v5134 = vsel %vm1282, %v5129, %v5133
        %v5135 = vshrl.u32 %v5056, 16
        %v5137 = vrot.slane %v5135, 4
        %v5138 = vor.u32 %v5137, %v5133
        %v5139 = vrot.slane %v5138, 4
        %v5141 = vshll.u32 %v5057, 16
        %v5143 = vrot.slane %v5141, 5
        %v5144 = vsel %vm1282, %v5139, %v5143
        %v5146 = vshrl.u32 %v5058, 16
        %v5148 = vrot.slane %v5146, 4
        %v5149 = vshll.u32 %v5058, 16
        %v5151 = vrot.slane %v5149, 5
        %v5152 = vor.u32 %v5148, %v5151
        %v5153 = vrot.slane %v5152, 4
        %v5155 = vshll.u32 %v5059, 16
        %v5157 = vrot.slane %v5155, 5
        %v5158 = vsel %vm1282, %v5153, %v5157
        %v5159 = vshrl.u32 %v5059, 16
        %v5161 = vrot.slane %v5159, 4
        %v5162 = vor.u32 %v5161, %v5157
        %v5163 = vrot.slane %v5162, 4
        %v5165 = vshll.u32 %v5060, 16
        %v5167 = vrot.slane %v5165, 5
        %v5168 = vsel %vm1282, %v5163, %v5167
        %v5170 = vshrl.u32 %v5061, 16
        %v5172 = vrot.slane %v5170, 4
        %v5173 = vshll.u32 %v5061, 16
        %v5175 = vrot.slane %v5173, 5
        %v5176 = vor.u32 %v5172, %v5175
        %v5177 = vrot.slane %v5176, 4
        %v5179 = vshll.u32 %v5062, 16
        %v5181 = vrot.slane %v5179, 5
        %v5182 = vsel %vm1282, %v5177, %v5181
        %v5183 = vshrl.u32 %v5062, 16
        %v5185 = vrot.slane %v5183, 4
        %v5186 = vor.u32 %v5185, %v5181
        %v5187 = vrot.slane %v5186, 4
        %v5189 = vshll.u32 %v5063, 16
        %v5191 = vrot.slane %v5189, 5
        %v5192 = vsel %vm1282, %v5187, %v5191
        %v5194 = vshrl.u32 %v5064, 16
        %v5196 = vrot.slane %v5194, 4
        %v5197 = vshll.u32 %v5064, 16
        %v5199 = vrot.slane %v5197, 5
        %v5200 = vor.u32 %v5196, %v5199
        %v5201 = vrot.slane %v5200, 4
        %v5203 = vshll.u32 %v5065, 16
        %v5205 = vrot.slane %v5203, 5
        %v5206 = vsel %vm1282, %v5201, %v5205
        %v5207 = vshrl.u32 %v5065, 16
        %v5209 = vrot.slane %v5207, 4
        %v5210 = vor.u32 %v5209, %v5205
        %v5211 = vrot.slane %v5210, 4
        %v5213 = vshll.u32 %v5066, 16
        %v5215 = vrot.slane %v5213, 5
        %v5216 = vsel %vm1282, %v5211, %v5215
        %v5218 = vshrl.u32 %v5067, 16
        %v5220 = vrot.slane %v5218, 4
        %v5221 = vshll.u32 %v5067, 16
        %v5223 = vrot.slane %v5221, 5
        %v5224 = vor.u32 %v5220, %v5223
        %v5225 = vrot.slane %v5224, 4
        %v5227 = vshll.u32 %v5068, 16
        %v5229 = vrot.slane %v5227, 5
        %v5230 = vsel %vm1282, %v5225, %v5229
        %v5231 = vshrl.u32 %v5068, 16
        %v5233 = vrot.slane %v5231, 4
        %v5234 = vor.u32 %v5233, %v5229
        %v5235 = vrot.slane %v5234, 4
        %v5237 = vshll.u32 %v5069, 16
        %v5239 = vrot.slane %v5237, 5
        %v5240 = vsel %vm1282, %v5235, %v5239
        %v5242 = vshrl.u32 %v5070, 16
        %v5244 = vrot.slane %v5242, 4
        %v5245 = vshll.u32 %v5070, 16
        %v5247 = vrot.slane %v5245, 5
        %v5248 = vor.u32 %v5244, %v5247
        %v5249 = vrot.slane %v5248, 4
        %v5251 = vshll.u32 %v5071, 16
        %v5253 = vrot.slane %v5251, 5
        %v5254 = vsel %vm1282, %v5249, %v5253
        %v5255 = vshrl.u32 %v5071, 16
        %v5257 = vrot.slane %v5255, 4
        %v5258 = vor.u32 %v5257, %v5253
        %v5259 = vrot.slane %v5258, 4
        %v5261 = vshll.u32 %v5072, 16
        %v5263 = vrot.slane %v5261, 5
        %v5264 = vsel %vm1282, %v5259, %v5263
        %s5265 = scalar_lea.vmem [#allocation12], 128
        %v5266 = vld [vmem:[%s5265] sm:$0xf]
        %v5267 = vld [vmem:[%s5265 + $0x4] sm:$0xf]
        %v5268 = vld [vmem:[%s5265 + $0x8] sm:$0xf]
        %v5269 = vld [vmem:[%s5265 + $0xc] sm:$0xf]
        %v5270 = vld [vmem:[%s5265 + $0x10] sm:$0xf]
        %v5271 = vld [vmem:[%s5265 + $0x14] sm:$0xf]
        %v5272 = vld [vmem:[%s5265 + $0x18] sm:$0xf]
        %v5273 = vld [vmem:[%s5265 + $0x1c] sm:$0xf]
        %v5274 = vld [vmem:[%s5265 + $0x20] sm:$0xf]
        %v5275 = vld [vmem:[%s5265 + $0x24] sm:$0xf]
        %v5276 = vld [vmem:[%s5265 + $0x28] sm:$0xf]
        %v5277 = vld [vmem:[%s5265 + $0x2c] sm:$0xf]
        %v5278 = vld [vmem:[%s5265 + $0x30] sm:$0xf]
        %v5279 = vld [vmem:[%s5265 + $0x34] sm:$0xf]
        %v5280 = vld [vmem:[%s5265 + $0x38] sm:$0xf]
        %v5281 = vld [vmem:[%s5265 + $0x3c] sm:$0xf]
        %v5282 = vunpack.c.l.b16 %v5086
        %v5283 = vunpack.c.l.b16 %v5096
        %v5284 = vunpack.c.l.b16 %v5110
        %v5285 = vunpack.c.l.b16 %v5120
        %v5286 = vunpack.c.l.b16 %v5134
        %v5287 = vunpack.c.l.b16 %v5144
        %v5288 = vunpack.c.l.b16 %v5158
        %v5289 = vunpack.c.l.b16 %v5168
        %v5290 = vunpack.c.l.b16 %v5182
        %v5291 = vunpack.c.l.b16 %v5192
        %v5292 = vunpack.c.l.b16 %v5206
        %v5293 = vunpack.c.l.b16 %v5216
        %v5294 = vunpack.c.l.b16 %v5230
        %v5295 = vunpack.c.l.b16 %v5240
        %v5296 = vunpack.c.l.b16 %v5254
        %v5297 = vunpack.c.l.b16 %v5264
        %v5298 = vpack.c.b16 %v5283, %v5282
        %v5299 = vpack.c.b16 %v5285, %v5284
        %v5300 = vpack.c.b16 %v5287, %v5286
        %v5301 = vpack.c.b16 %v5289, %v5288
        %v5302 = vpack.c.b16 %v5291, %v5290
        %v5303 = vpack.c.b16 %v5293, %v5292
        %v5304 = vpack.c.b16 %v5295, %v5294
        %v5305 = vpack.c.b16 %v5297, %v5296
        %v5330 = vunpack.c.l.b16 %v5266
        %v5331 = vunpack.c.l.b16 %v5267
        %v5332 = vunpack.c.l.b16 %v5268
        %v5333 = vunpack.c.l.b16 %v5269
        %v5334 = vunpack.c.l.b16 %v5270
        %v5335 = vunpack.c.l.b16 %v5271
        %v5336 = vunpack.c.l.b16 %v5272
        %v5337 = vunpack.c.l.b16 %v5273
        %v5338 = vunpack.c.l.b16 %v5274
        %v5339 = vunpack.c.l.b16 %v5275
        %v5340 = vunpack.c.l.b16 %v5276
        %v5341 = vunpack.c.l.b16 %v5277
        %v5342 = vunpack.c.l.b16 %v5278
        %v5343 = vunpack.c.l.b16 %v5279
        %v5344 = vunpack.c.l.b16 %v5280
        %v5345 = vunpack.c.l.b16 %v5281
        %v5346 = vpack.c.b16 %v5331, %v5330
        %v5347 = vpack.c.b16 %v5333, %v5332
        %v5348 = vpack.c.b16 %v5335, %v5334
        %v5349 = vpack.c.b16 %v5337, %v5336
        %v5350 = vpack.c.b16 %v5339, %v5338
        %v5351 = vpack.c.b16 %v5341, %v5340
        %v5352 = vpack.c.b16 %v5343, %v5342
        %v5353 = vpack.c.b16 %v5345, %v5344
        %5362 = vmatprep.subr.bf16.mxu0 0
        %5363 = vmatpush1.bf16.msra.mxu0 %v5353
        %5364 = vmatprep.subr.bf16.mxu0 0
        %5365 = vmatpush1.bf16.msra.mxu0 %v5352
        %5366 = vmatprep.subr.bf16.mxu0 0
        %5367 = vmatpush1.bf16.msra.mxu0 %v5351
        %5368 = vmatprep.subr.bf16.mxu0 0
        %5369 = vmatpush1.bf16.msra.mxu0 %v5350
        %5370 = vmatprep.subr.bf16.mxu0 0
        %5371 = vmatpush1.bf16.msra.mxu0 %v5349
        %5372 = vmatprep.subr.bf16.mxu0 0
        %5373 = vmatpush1.bf16.msra.mxu0 %v5348
        %5374 = vmatprep.subr.bf16.mxu0 0
        %5375 = vmatpush1.bf16.msra.mxu0 %v5347
        %5376 = vmatprep.subr.bf16.mxu0 0
        %5377 = vmatpush1.bf16.msra.mxu0 %v5346
        %5378 = vmatprep.subr.bf16.mxu0 0
        %5379 = vmatpush2.bf16.msra.mxu0 0
        %5380 = vmatprep.subr.bf16.mxu0 0
        %5381 = vmatpush2.bf16.msra.mxu0 0
        %5382 = vmatprep.subr.bf16.mxu0 0
        %5383 = vmatpush2.bf16.msra.mxu0 0
        %5384 = vmatprep.subr.bf16.mxu0 0
        %5385 = vmatpush2.bf16.msra.mxu0 0
        %5386 = vmatprep.subr.bf16.mxu0 0
        %5387 = vmatpush2.bf16.msra.mxu0 0
        %5388 = vmatprep.subr.bf16.mxu0 0
        %5389 = vmatpush2.bf16.msra.mxu0 0
        %5390 = vmatprep.subr.bf16.mxu0 0
        %5391 = vmatpush2.bf16.msra.mxu0 0
        %5392 = vmatprep.subr.bf16.mxu0 0
        %5393 = vmatpush2.bf16.msra.mxu0 0
        %5394 = vmatprep.mubr.bf16.mxu0 0
        %5395 = vmatmul.mubr.bf16.gmra.mxu0 %v5298
        %v5396 = vpop.f32.mrf.mxu0
        %v5397 = vadd.f32 0.0, %v5396
        %v5398 = vpop.f32.mrf.mxu0
        %v5399 = vpop.f32.mrf.mxu0
        %v5400 = vadd.f32 0.0, %v5399
        %v5401 = vpop.f32.mrf.mxu0
        %5402 = vmatprep.mubr.bf16.mxu0 0
        %5403 = vmatmul.mubr.bf16.gmra.mxu0 %v5299
        %v5404 = vpop.f32.mrf.mxu0
        %v5405 = vadd.f32 0.0, %v5404
        %v5406 = vpop.f32.mrf.mxu0
        %v5407 = vpop.f32.mrf.mxu0
        %v5408 = vadd.f32 0.0, %v5407
        %v5409 = vpop.f32.mrf.mxu0
        %5410 = vmatprep.mubr.bf16.mxu0 0
        %5411 = vmatmul.mubr.bf16.gmra.mxu0 %v5300
        %v5412 = vpop.f32.mrf.mxu0
        %v5413 = vadd.f32 0.0, %v5412
        %v5414 = vpop.f32.mrf.mxu0
        %v5415 = vpop.f32.mrf.mxu0
        %v5416 = vadd.f32 0.0, %v5415
        %v5417 = vpop.f32.mrf.mxu0
        %5418 = vmatprep.mubr.bf16.mxu0 0
        %5419 = vmatmul.mubr.bf16.gmra.mxu0 %v5301
        %v5420 = vpop.f32.mrf.mxu0
        %v5421 = vadd.f32 0.0, %v5420
        %v5422 = vpop.f32.mrf.mxu0
        %v5423 = vpop.f32.mrf.mxu0
        %v5424 = vadd.f32 0.0, %v5423
        %v5425 = vpop.f32.mrf.mxu0
        %5426 = vmatprep.mubr.bf16.mxu0 0
        %5427 = vmatmul.mubr.bf16.gmra.mxu0 %v5302
        %v5428 = vpop.f32.mrf.mxu0
        %v5429 = vadd.f32 0.0, %v5428
        %v5430 = vpop.f32.mrf.mxu0
        %v5431 = vpop.f32.mrf.mxu0
        %v5432 = vadd.f32 0.0, %v5431
        %v5433 = vpop.f32.mrf.mxu0
        %5434 = vmatprep.mubr.bf16.mxu0 0
        %5435 = vmatmul.mubr.bf16.gmra.mxu0 %v5303
        %v5436 = vpop.f32.mrf.mxu0
        %v5437 = vadd.f32 0.0, %v5436
        %v5438 = vpop.f32.mrf.mxu0
        %v5439 = vpop.f32.mrf.mxu0
        %v5440 = vadd.f32 0.0, %v5439
        %v5441 = vpop.f32.mrf.mxu0
        %5442 = vmatprep.mubr.bf16.mxu0 0
        %5443 = vmatmul.mubr.bf16.gmra.mxu0 %v5304
        %v5444 = vpop.f32.mrf.mxu0
        %v5445 = vadd.f32 0.0, %v5444
        %v5446 = vpop.f32.mrf.mxu0
        %v5447 = vpop.f32.mrf.mxu0
        %v5448 = vadd.f32 0.0, %v5447
        %v5449 = vpop.f32.mrf.mxu0
        %5450 = vmatprep.mubr.bf16.mxu0 0
        %5451 = vmatmul.mubr.bf16.gmra.mxu0 %v5305
        %v5452 = vpop.f32.mrf.mxu0
        %v5453 = vadd.f32 0.0, %v5452
        %v5454 = vpop.f32.mrf.mxu0
        %v5455 = vpop.f32.mrf.mxu0
        %v5456 = vadd.f32 0.0, %v5455
        %v5457 = vpop.f32.mrf.mxu0
        %5458 = vdwg.mxu0
        %v5459 = vadd.f32 %v4987, %v5397
        %v5460 = vadd.f32 %v4990, %v5400
        %v5461 = vadd.f32 %v4995, %v5405
        %v5462 = vadd.f32 %v4998, %v5408
        %v5463 = vadd.f32 %v5003, %v5413
        %v5464 = vadd.f32 %v5006, %v5416
        %v5465 = vadd.f32 %v5011, %v5421
        %v5466 = vadd.f32 %v5014, %v5424
        %v5467 = vadd.f32 %v5019, %v5429
        %v5468 = vadd.f32 %v5022, %v5432
        %v5469 = vadd.f32 %v5027, %v5437
        %v5470 = vadd.f32 %v5030, %v5440
        %v5471 = vadd.f32 %v5035, %v5445
        %v5472 = vadd.f32 %v5038, %v5448
        %v5473 = vadd.f32 %v5043, %v5453
        %v5474 = vadd.f32 %v5046, %v5456
        %s5475 = scalar_lea.vmem [#allocation3], 16
        %v5476 = vld [vmem:[%s5475] sm:$0x8]
        %v5477 = vld [vmem:[%s5475 + $0x4] sm:$0xf]
        %v5478 = vld [vmem:[%s5475 + $0x8] sm:$0xf]
        %v5479 = vld [vmem:[%s5475 + $0x10] sm:$0x8]
        %v5480 = vld [vmem:[%s5475 + $0x14] sm:$0xf]
        %v5481 = vld [vmem:[%s5475 + $0x18] sm:$0xf]
        %v5482 = vld [vmem:[%s5475 + $0x20] sm:$0x8]
        %v5483 = vld [vmem:[%s5475 + $0x24] sm:$0xf]
        %v5484 = vld [vmem:[%s5475 + $0x28] sm:$0xf]
        %v5485 = vld [vmem:[%s5475 + $0x30] sm:$0x8]
        %v5486 = vld [vmem:[%s5475 + $0x34] sm:$0xf]
        %v5487 = vld [vmem:[%s5475 + $0x38] sm:$0xf]
        %v5488 = vld [vmem:[%s5475 + $0x40] sm:$0x8]
        %v5489 = vld [vmem:[%s5475 + $0x44] sm:$0xf]
        %v5490 = vld [vmem:[%s5475 + $0x48] sm:$0xf]
        %v5491 = vld [vmem:[%s5475 + $0x50] sm:$0x8]
        %v5492 = vld [vmem:[%s5475 + $0x54] sm:$0xf]
        %v5493 = vld [vmem:[%s5475 + $0x58] sm:$0xf]
        %v5494 = vld [vmem:[%s5475 + $0x60] sm:$0x8]
        %v5495 = vld [vmem:[%s5475 + $0x64] sm:$0xf]
        %v5496 = vld [vmem:[%s5475 + $0x68] sm:$0xf]
        %v5497 = vld [vmem:[%s5475 + $0x70] sm:$0x8]
        %v5498 = vld [vmem:[%s5475 + $0x74] sm:$0xf]
        %v5499 = vld [vmem:[%s5475 + $0x78] sm:$0xf]
        %v5501 = vshrl.u32 %v5476, 16
        %v5503 = vrot.slane %v5501, 7
        %v5504 = vrot.slane %v5503, 4
        %v5506 = vshrl.u32 %v5477, 16
        %v5508 = vrot.slane %v5506, 7
        %v5509 = vshll.u32 %v5477, 16
        %v5511 = vor.u32 %v5508, %v5509
        %v5512 = vsel %vm574, %v5504, %v5511
        %v5513 = vrot.slane %v5508, 4
        %v5515 = vshrl.u32 %v5478, 16
        %v5517 = vrot.slane %v5515, 7
        %v5518 = vshll.u32 %v5478, 16
        %v5520 = vor.u32 %v5517, %v5518
        %v5521 = vsel %vm574, %v5513, %v5520
        %v5523 = vshrl.u32 %v5479, 16
        %v5525 = vrot.slane %v5523, 7
        %v5526 = vrot.slane %v5525, 4
        %v5528 = vshrl.u32 %v5480, 16
        %v5530 = vrot.slane %v5528, 7
        %v5531 = vshll.u32 %v5480, 16
        %v5533 = vor.u32 %v5530, %v5531
        %v5534 = vsel %vm574, %v5526, %v5533
        %v5535 = vrot.slane %v5530, 4
        %v5537 = vshrl.u32 %v5481, 16
        %v5539 = vrot.slane %v5537, 7
        %v5540 = vshll.u32 %v5481, 16
        %v5542 = vor.u32 %v5539, %v5540
        %v5543 = vsel %vm574, %v5535, %v5542
        %v5545 = vshrl.u32 %v5482, 16
        %v5547 = vrot.slane %v5545, 7
        %v5548 = vrot.slane %v5547, 4
        %v5550 = vshrl.u32 %v5483, 16
        %v5552 = vrot.slane %v5550, 7
        %v5553 = vshll.u32 %v5483, 16
        %v5555 = vor.u32 %v5552, %v5553
        %v5556 = vsel %vm574, %v5548, %v5555
        %v5557 = vrot.slane %v5552, 4
        %v5559 = vshrl.u32 %v5484, 16
        %v5561 = vrot.slane %v5559, 7
        %v5562 = vshll.u32 %v5484, 16
        %v5564 = vor.u32 %v5561, %v5562
        %v5565 = vsel %vm574, %v5557, %v5564
        %v5567 = vshrl.u32 %v5485, 16
        %v5569 = vrot.slane %v5567, 7
        %v5570 = vrot.slane %v5569, 4
        %v5572 = vshrl.u32 %v5486, 16
        %v5574 = vrot.slane %v5572, 7
        %v5575 = vshll.u32 %v5486, 16
        %v5577 = vor.u32 %v5574, %v5575
        %v5578 = vsel %vm574, %v5570, %v5577
        %v5579 = vrot.slane %v5574, 4
        %v5581 = vshrl.u32 %v5487, 16
        %v5583 = vrot.slane %v5581, 7
        %v5584 = vshll.u32 %v5487, 16
        %v5586 = vor.u32 %v5583, %v5584
        %v5587 = vsel %vm574, %v5579, %v5586
        %v5589 = vshrl.u32 %v5488, 16
        %v5591 = vrot.slane %v5589, 7
        %v5592 = vrot.slane %v5591, 4
        %v5594 = vshrl.u32 %v5489, 16
        %v5596 = vrot.slane %v5594, 7
        %v5597 = vshll.u32 %v5489, 16
        %v5599 = vor.u32 %v5596, %v5597
        %v5600 = vsel %vm574, %v5592, %v5599
        %v5601 = vrot.slane %v5596, 4
        %v5603 = vshrl.u32 %v5490, 16
        %v5605 = vrot.slane %v5603, 7
        %v5606 = vshll.u32 %v5490, 16
        %v5608 = vor.u32 %v5605, %v5606
        %v5609 = vsel %vm574, %v5601, %v5608
        %v5611 = vshrl.u32 %v5491, 16
        %v5613 = vrot.slane %v5611, 7
        %v5614 = vrot.slane %v5613, 4
        %v5616 = vshrl.u32 %v5492, 16
        %v5618 = vrot.slane %v5616, 7
        %v5619 = vshll.u32 %v5492, 16
        %v5621 = vor.u32 %v5618, %v5619
        %v5622 = vsel %vm574, %v5614, %v5621
        %v5623 = vrot.slane %v5618, 4
        %v5625 = vshrl.u32 %v5493, 16
        %v5627 = vrot.slane %v5625, 7
        %v5628 = vshll.u32 %v5493, 16
        %v5630 = vor.u32 %v5627, %v5628
        %v5631 = vsel %vm574, %v5623, %v5630
        %v5633 = vshrl.u32 %v5494, 16
        %v5635 = vrot.slane %v5633, 7
        %v5636 = vrot.slane %v5635, 4
        %v5638 = vshrl.u32 %v5495, 16
        %v5640 = vrot.slane %v5638, 7
        %v5641 = vshll.u32 %v5495, 16
        %v5643 = vor.u32 %v5640, %v5641
        %v5644 = vsel %vm574, %v5636, %v5643
        %v5645 = vrot.slane %v5640, 4
        %v5647 = vshrl.u32 %v5496, 16
        %v5649 = vrot.slane %v5647, 7
        %v5650 = vshll.u32 %v5496, 16
        %v5652 = vor.u32 %v5649, %v5650
        %v5653 = vsel %vm574, %v5645, %v5652
        %v5655 = vshrl.u32 %v5497, 16
        %v5657 = vrot.slane %v5655, 7
        %v5658 = vrot.slane %v5657, 4
        %v5660 = vshrl.u32 %v5498, 16
        %v5662 = vrot.slane %v5660, 7
        %v5663 = vshll.u32 %v5498, 16
        %v5665 = vor.u32 %v5662, %v5663
        %v5666 = vsel %vm574, %v5658, %v5665
        %v5667 = vrot.slane %v5662, 4
        %v5669 = vshrl.u32 %v5499, 16
        %v5671 = vrot.slane %v5669, 7
        %v5672 = vshll.u32 %v5499, 16
        %v5674 = vor.u32 %v5671, %v5672
        %v5675 = vsel %vm574, %v5667, %v5674
        %s5676 = scalar_lea.vmem [#allocation12], 192
        %v5677 = vld [vmem:[%s5676] sm:$0xf]
        %v5678 = vld [vmem:[%s5676 + $0x4] sm:$0xf]
        %v5679 = vld [vmem:[%s5676 + $0x8] sm:$0xf]
        %v5680 = vld [vmem:[%s5676 + $0xc] sm:$0xf]
        %v5681 = vld [vmem:[%s5676 + $0x10] sm:$0xf]
        %v5682 = vld [vmem:[%s5676 + $0x14] sm:$0xf]
        %v5683 = vld [vmem:[%s5676 + $0x18] sm:$0xf]
        %v5684 = vld [vmem:[%s5676 + $0x1c] sm:$0xf]
        %v5685 = vld [vmem:[%s5676 + $0x20] sm:$0xf]
        %v5686 = vld [vmem:[%s5676 + $0x24] sm:$0xf]
        %v5687 = vld [vmem:[%s5676 + $0x28] sm:$0xf]
        %v5688 = vld [vmem:[%s5676 + $0x2c] sm:$0xf]
        %v5689 = vld [vmem:[%s5676 + $0x30] sm:$0xf]
        %v5690 = vld [vmem:[%s5676 + $0x34] sm:$0xf]
        %v5691 = vld [vmem:[%s5676 + $0x38] sm:$0xf]
        %v5692 = vld [vmem:[%s5676 + $0x3c] sm:$0xf]
        %v5693 = vunpack.c.l.b16 %v5512
        %v5694 = vunpack.c.l.b16 %v5521
        %v5695 = vunpack.c.l.b16 %v5534
        %v5696 = vunpack.c.l.b16 %v5543
        %v5697 = vunpack.c.l.b16 %v5556
        %v5698 = vunpack.c.l.b16 %v5565
        %v5699 = vunpack.c.l.b16 %v5578
        %v5700 = vunpack.c.l.b16 %v5587
        %v5701 = vunpack.c.l.b16 %v5600
        %v5702 = vunpack.c.l.b16 %v5609
        %v5703 = vunpack.c.l.b16 %v5622
        %v5704 = vunpack.c.l.b16 %v5631
        %v5705 = vunpack.c.l.b16 %v5644
        %v5706 = vunpack.c.l.b16 %v5653
        %v5707 = vunpack.c.l.b16 %v5666
        %v5708 = vunpack.c.l.b16 %v5675
        %v5709 = vpack.c.b16 %v5694, %v5693
        %v5710 = vpack.c.b16 %v5696, %v5695
        %v5711 = vpack.c.b16 %v5698, %v5697
        %v5712 = vpack.c.b16 %v5700, %v5699
        %v5713 = vpack.c.b16 %v5702, %v5701
        %v5714 = vpack.c.b16 %v5704, %v5703
        %v5715 = vpack.c.b16 %v5706, %v5705
        %v5716 = vpack.c.b16 %v5708, %v5707
        %v5741 = vunpack.c.l.b16 %v5677
        %v5742 = vunpack.c.l.b16 %v5678
        %v5743 = vunpack.c.l.b16 %v5679
        %v5744 = vunpack.c.l.b16 %v5680
        %v5745 = vunpack.c.l.b16 %v5681
        %v5746 = vunpack.c.l.b16 %v5682
        %v5747 = vunpack.c.l.b16 %v5683
        %v5748 = vunpack.c.l.b16 %v5684
        %v5749 = vunpack.c.l.b16 %v5685
        %v5750 = vunpack.c.l.b16 %v5686
        %v5751 = vunpack.c.l.b16 %v5687
        %v5752 = vunpack.c.l.b16 %v5688
        %v5753 = vunpack.c.l.b16 %v5689
        %v5754 = vunpack.c.l.b16 %v5690
        %v5755 = vunpack.c.l.b16 %v5691
        %v5756 = vunpack.c.l.b16 %v5692
        %v5757 = vpack.c.b16 %v5742, %v5741
        %v5758 = vpack.c.b16 %v5744, %v5743
        %v5759 = vpack.c.b16 %v5746, %v5745
        %v5760 = vpack.c.b16 %v5748, %v5747
        %v5761 = vpack.c.b16 %v5750, %v5749
        %v5762 = vpack.c.b16 %v5752, %v5751
        %v5763 = vpack.c.b16 %v5754, %v5753
        %v5764 = vpack.c.b16 %v5756, %v5755
        %5773 = vmatprep.subr.bf16.mxu0 0
        %5774 = vmatpush1.bf16.msra.mxu0 %v5764
        %5775 = vmatprep.subr.bf16.mxu0 0
        %5776 = vmatpush1.bf16.msra.mxu0 %v5763
        %5777 = vmatprep.subr.bf16.mxu0 0
        %5778 = vmatpush1.bf16.msra.mxu0 %v5762
        %5779 = vmatprep.subr.bf16.mxu0 0
        %5780 = vmatpush1.bf16.msra.mxu0 %v5761
        %5781 = vmatprep.subr.bf16.mxu0 0
        %5782 = vmatpush1.bf16.msra.mxu0 %v5760
        %5783 = vmatprep.subr.bf16.mxu0 0
        %5784 = vmatpush1.bf16.msra.mxu0 %v5759
        %5785 = vmatprep.subr.bf16.mxu0 0
        %5786 = vmatpush1.bf16.msra.mxu0 %v5758
        %5787 = vmatprep.subr.bf16.mxu0 0
        %5788 = vmatpush1.bf16.msra.mxu0 %v5757
        %5789 = vmatprep.subr.bf16.mxu0 0
        %5790 = vmatpush2.bf16.msra.mxu0 0
        %5791 = vmatprep.subr.bf16.mxu0 0
        %5792 = vmatpush2.bf16.msra.mxu0 0
        %5793 = vmatprep.subr.bf16.mxu0 0
        %5794 = vmatpush2.bf16.msra.mxu0 0
        %5795 = vmatprep.subr.bf16.mxu0 0
        %5796 = vmatpush2.bf16.msra.mxu0 0
        %5797 = vmatprep.subr.bf16.mxu0 0
        %5798 = vmatpush2.bf16.msra.mxu0 0
        %5799 = vmatprep.subr.bf16.mxu0 0
        %5800 = vmatpush2.bf16.msra.mxu0 0
        %5801 = vmatprep.subr.bf16.mxu0 0
        %5802 = vmatpush2.bf16.msra.mxu0 0
        %5803 = vmatprep.subr.bf16.mxu0 0
        %5804 = vmatpush2.bf16.msra.mxu0 0
        %5805 = vmatprep.mubr.bf16.mxu0 0
        %5806 = vmatmul.mubr.bf16.gmra.mxu0 %v5709
        %v5807 = vpop.f32.mrf.mxu0
        %v5808 = vadd.f32 0.0, %v5807
        %v5809 = vpop.f32.mrf.mxu0
        %v5810 = vpop.f32.mrf.mxu0
        %v5811 = vadd.f32 0.0, %v5810
        %v5812 = vpop.f32.mrf.mxu0
        %5813 = vmatprep.mubr.bf16.mxu0 0
        %5814 = vmatmul.mubr.bf16.gmra.mxu0 %v5710
        %v5815 = vpop.f32.mrf.mxu0
        %v5816 = vadd.f32 0.0, %v5815
        %v5817 = vpop.f32.mrf.mxu0
        %v5818 = vpop.f32.mrf.mxu0
        %v5819 = vadd.f32 0.0, %v5818
        %v5820 = vpop.f32.mrf.mxu0
        %5821 = vmatprep.mubr.bf16.mxu0 0
        %5822 = vmatmul.mubr.bf16.gmra.mxu0 %v5711
        %v5823 = vpop.f32.mrf.mxu0
        %v5824 = vadd.f32 0.0, %v5823
        %v5825 = vpop.f32.mrf.mxu0
        %v5826 = vpop.f32.mrf.mxu0
        %v5827 = vadd.f32 0.0, %v5826
        %v5828 = vpop.f32.mrf.mxu0
        %5829 = vmatprep.mubr.bf16.mxu0 0
        %5830 = vmatmul.mubr.bf16.gmra.mxu0 %v5712
        %v5831 = vpop.f32.mrf.mxu0
        %v5832 = vadd.f32 0.0, %v5831
        %v5833 = vpop.f32.mrf.mxu0
        %v5834 = vpop.f32.mrf.mxu0
        %v5835 = vadd.f32 0.0, %v5834
        %v5836 = vpop.f32.mrf.mxu0
        %5837 = vmatprep.mubr.bf16.mxu0 0
        %5838 = vmatmul.mubr.bf16.gmra.mxu0 %v5713
        %v5839 = vpop.f32.mrf.mxu0
        %v5840 = vadd.f32 0.0, %v5839
        %v5841 = vpop.f32.mrf.mxu0
        %v5842 = vpop.f32.mrf.mxu0
        %v5843 = vadd.f32 0.0, %v5842
        %v5844 = vpop.f32.mrf.mxu0
        %5845 = vmatprep.mubr.bf16.mxu0 0
        %5846 = vmatmul.mubr.bf16.gmra.mxu0 %v5714
        %v5847 = vpop.f32.mrf.mxu0
        %v5848 = vadd.f32 0.0, %v5847
        %v5849 = vpop.f32.mrf.mxu0
        %v5850 = vpop.f32.mrf.mxu0
        %v5851 = vadd.f32 0.0, %v5850
        %v5852 = vpop.f32.mrf.mxu0
        %5853 = vmatprep.mubr.bf16.mxu0 0
        %5854 = vmatmul.mubr.bf16.gmra.mxu0 %v5715
        %v5855 = vpop.f32.mrf.mxu0
        %v5856 = vadd.f32 0.0, %v5855
        %v5857 = vpop.f32.mrf.mxu0
        %v5858 = vpop.f32.mrf.mxu0
        %v5859 = vadd.f32 0.0, %v5858
        %v5860 = vpop.f32.mrf.mxu0
        %5861 = vmatprep.mubr.bf16.mxu0 0
        %5862 = vmatmul.mubr.bf16.gmra.mxu0 %v5716
        %v5863 = vpop.f32.mrf.mxu0
        %v5864 = vadd.f32 0.0, %v5863
        %v5865 = vpop.f32.mrf.mxu0
        %v5866 = vpop.f32.mrf.mxu0
        %v5867 = vadd.f32 0.0, %v5866
        %v5868 = vpop.f32.mrf.mxu0
        %5869 = vdwg.mxu0
        %v5870 = vadd.f32 %v5459, %v5808
        %v5871 = vadd.f32 %v5460, %v5811
        %v5872 = vadd.f32 %v5461, %v5816
        %v5873 = vadd.f32 %v5462, %v5819
        %v5874 = vadd.f32 %v5463, %v5824
        %v5875 = vadd.f32 %v5464, %v5827
        %v5876 = vadd.f32 %v5465, %v5832
        %v5877 = vadd.f32 %v5466, %v5835
        %v5878 = vadd.f32 %v5467, %v5840
        %v5879 = vadd.f32 %v5468, %v5843
        %v5880 = vadd.f32 %v5469, %v5848
        %v5881 = vadd.f32 %v5470, %v5851
        %v5882 = vadd.f32 %v5471, %v5856
        %v5883 = vadd.f32 %v5472, %v5859
        %v5884 = vadd.f32 %v5473, %v5864
        %v5885 = vadd.f32 %v5474, %v5867
        %s5886 = scalar_lea.vmem [#allocation12], 256
        %v5887 = vld [vmem:[%s5886] sm:$0xf]
        %v5888 = vld [vmem:[%s5886 + $0x4] sm:$0xf]
        %v5889 = vld [vmem:[%s5886 + $0x8] sm:$0xf]
        %v5890 = vld [vmem:[%s5886 + $0xc] sm:$0xf]
        %v5891 = vld [vmem:[%s5886 + $0x10] sm:$0xf]
        %v5892 = vld [vmem:[%s5886 + $0x14] sm:$0xf]
        %v5893 = vld [vmem:[%s5886 + $0x18] sm:$0xf]
        %v5894 = vld [vmem:[%s5886 + $0x1c] sm:$0xf]
        %v5895 = vld [vmem:[%s5886 + $0x20] sm:$0xf]
        %v5896 = vld [vmem:[%s5886 + $0x24] sm:$0xf]
        %v5897 = vld [vmem:[%s5886 + $0x28] sm:$0xf]
        %v5898 = vld [vmem:[%s5886 + $0x2c] sm:$0xf]
        %v5899 = vld [vmem:[%s5886 + $0x30] sm:$0xf]
        %v5900 = vld [vmem:[%s5886 + $0x34] sm:$0xf]
        %v5901 = vld [vmem:[%s5886 + $0x38] sm:$0xf]
        %v5902 = vld [vmem:[%s5886 + $0x3c] sm:$0xf]
        %v5919 = vunpack.c.l.b16 %v5477
        %v5920 = vunpack.c.l.b16 %v5478
        %v5921 = vunpack.c.l.b16 %v5480
        %v5922 = vunpack.c.l.b16 %v5481
        %v5923 = vunpack.c.l.b16 %v5483
        %v5924 = vunpack.c.l.b16 %v5484
        %v5925 = vunpack.c.l.b16 %v5486
        %v5926 = vunpack.c.l.b16 %v5487
        %v5927 = vunpack.c.l.b16 %v5489
        %v5928 = vunpack.c.l.b16 %v5490
        %v5929 = vunpack.c.l.b16 %v5492
        %v5930 = vunpack.c.l.b16 %v5493
        %v5931 = vunpack.c.l.b16 %v5495
        %v5932 = vunpack.c.l.b16 %v5496
        %v5933 = vunpack.c.l.b16 %v5498
        %v5934 = vunpack.c.l.b16 %v5499
        %v5935 = vpack.c.b16 %v5920, %v5919
        %v5936 = vpack.c.b16 %v5922, %v5921
        %v5937 = vpack.c.b16 %v5924, %v5923
        %v5938 = vpack.c.b16 %v5926, %v5925
        %v5939 = vpack.c.b16 %v5928, %v5927
        %v5940 = vpack.c.b16 %v5930, %v5929
        %v5941 = vpack.c.b16 %v5932, %v5931
        %v5942 = vpack.c.b16 %v5934, %v5933
        %v5967 = vunpack.c.l.b16 %v5887
        %v5968 = vunpack.c.l.b16 %v5888
        %v5969 = vunpack.c.l.b16 %v5889
        %v5970 = vunpack.c.l.b16 %v5890
        %v5971 = vunpack.c.l.b16 %v5891
        %v5972 = vunpack.c.l.b16 %v5892
        %v5973 = vunpack.c.l.b16 %v5893
        %v5974 = vunpack.c.l.b16 %v5894
        %v5975 = vunpack.c.l.b16 %v5895
        %v5976 = vunpack.c.l.b16 %v5896
        %v5977 = vunpack.c.l.b16 %v5897
        %v5978 = vunpack.c.l.b16 %v5898
        %v5979 = vunpack.c.l.b16 %v5899
        %v5980 = vunpack.c.l.b16 %v5900
        %v5981 = vunpack.c.l.b16 %v5901
        %v5982 = vunpack.c.l.b16 %v5902
        %v5983 = vpack.c.b16 %v5968, %v5967
        %v5984 = vpack.c.b16 %v5970, %v5969
        %v5985 = vpack.c.b16 %v5972, %v5971
        %v5986 = vpack.c.b16 %v5974, %v5973
        %v5987 = vpack.c.b16 %v5976, %v5975
        %v5988 = vpack.c.b16 %v5978, %v5977
        %v5989 = vpack.c.b16 %v5980, %v5979
        %v5990 = vpack.c.b16 %v5982, %v5981
        %5999 = vmatprep.subr.bf16.mxu0 0
        %6000 = vmatpush1.bf16.msra.mxu0 %v5990
        %6001 = vmatprep.subr.bf16.mxu0 0
        %6002 = vmatpush1.bf16.msra.mxu0 %v5989
        %6003 = vmatprep.subr.bf16.mxu0 0
        %6004 = vmatpush1.bf16.msra.mxu0 %v5988
        %6005 = vmatprep.subr.bf16.mxu0 0
        %6006 = vmatpush1.bf16.msra.mxu0 %v5987
        %6007 = vmatprep.subr.bf16.mxu0 0
        %6008 = vmatpush1.bf16.msra.mxu0 %v5986
        %6009 = vmatprep.subr.bf16.mxu0 0
        %6010 = vmatpush1.bf16.msra.mxu0 %v5985
        %6011 = vmatprep.subr.bf16.mxu0 0
        %6012 = vmatpush1.bf16.msra.mxu0 %v5984
        %6013 = vmatprep.subr.bf16.mxu0 0
        %6014 = vmatpush1.bf16.msra.mxu0 %v5983
        %6015 = vmatprep.subr.bf16.mxu0 0
        %6016 = vmatpush2.bf16.msra.mxu0 0
        %6017 = vmatprep.subr.bf16.mxu0 0
        %6018 = vmatpush2.bf16.msra.mxu0 0
        %6019 = vmatprep.subr.bf16.mxu0 0
        %6020 = vmatpush2.bf16.msra.mxu0 0
        %6021 = vmatprep.subr.bf16.mxu0 0
        %6022 = vmatpush2.bf16.msra.mxu0 0
        %6023 = vmatprep.subr.bf16.mxu0 0
        %6024 = vmatpush2.bf16.msra.mxu0 0
        %6025 = vmatprep.subr.bf16.mxu0 0
        %6026 = vmatpush2.bf16.msra.mxu0 0
        %6027 = vmatprep.subr.bf16.mxu0 0
        %6028 = vmatpush2.bf16.msra.mxu0 0
        %6029 = vmatprep.subr.bf16.mxu0 0
        %6030 = vmatpush2.bf16.msra.mxu0 0
        %6031 = vmatprep.mubr.bf16.mxu0 0
        %6032 = vmatmul.mubr.bf16.gmra.mxu0 %v5935
        %v6033 = vpop.f32.mrf.mxu0
        %v6034 = vadd.f32 0.0, %v6033
        %v6035 = vpop.f32.mrf.mxu0
        %v6036 = vpop.f32.mrf.mxu0
        %v6037 = vadd.f32 0.0, %v6036
        %v6038 = vpop.f32.mrf.mxu0
        %6039 = vmatprep.mubr.bf16.mxu0 0
        %6040 = vmatmul.mubr.bf16.gmra.mxu0 %v5936
        %v6041 = vpop.f32.mrf.mxu0
        %v6042 = vadd.f32 0.0, %v6041
        %v6043 = vpop.f32.mrf.mxu0
        %v6044 = vpop.f32.mrf.mxu0
        %v6045 = vadd.f32 0.0, %v6044
        %v6046 = vpop.f32.mrf.mxu0
        %6047 = vmatprep.mubr.bf16.mxu0 0
        %6048 = vmatmul.mubr.bf16.gmra.mxu0 %v5937
        %v6049 = vpop.f32.mrf.mxu0
        %v6050 = vadd.f32 0.0, %v6049
        %v6051 = vpop.f32.mrf.mxu0
        %v6052 = vpop.f32.mrf.mxu0
        %v6053 = vadd.f32 0.0, %v6052
        %v6054 = vpop.f32.mrf.mxu0
        %6055 = vmatprep.mubr.bf16.mxu0 0
        %6056 = vmatmul.mubr.bf16.gmra.mxu0 %v5938
        %v6057 = vpop.f32.mrf.mxu0
        %v6058 = vadd.f32 0.0, %v6057
        %v6059 = vpop.f32.mrf.mxu0
        %v6060 = vpop.f32.mrf.mxu0
        %v6061 = vadd.f32 0.0, %v6060
        %v6062 = vpop.f32.mrf.mxu0
        %6063 = vmatprep.mubr.bf16.mxu0 0
        %6064 = vmatmul.mubr.bf16.gmra.mxu0 %v5939
        %v6065 = vpop.f32.mrf.mxu0
        %v6066 = vadd.f32 0.0, %v6065
        %v6067 = vpop.f32.mrf.mxu0
        %v6068 = vpop.f32.mrf.mxu0
        %v6069 = vadd.f32 0.0, %v6068
        %v6070 = vpop.f32.mrf.mxu0
        %6071 = vmatprep.mubr.bf16.mxu0 0
        %6072 = vmatmul.mubr.bf16.gmra.mxu0 %v5940
        %v6073 = vpop.f32.mrf.mxu0
        %v6074 = vadd.f32 0.0, %v6073
        %v6075 = vpop.f32.mrf.mxu0
        %v6076 = vpop.f32.mrf.mxu0
        %v6077 = vadd.f32 0.0, %v6076
        %v6078 = vpop.f32.mrf.mxu0
        %6079 = vmatprep.mubr.bf16.mxu0 0
        %6080 = vmatmul.mubr.bf16.gmra.mxu0 %v5941
        %v6081 = vpop.f32.mrf.mxu0
        %v6082 = vadd.f32 0.0, %v6081
        %v6083 = vpop.f32.mrf.mxu0
        %v6084 = vpop.f32.mrf.mxu0
        %v6085 = vadd.f32 0.0, %v6084
        %v6086 = vpop.f32.mrf.mxu0
        %6087 = vmatprep.mubr.bf16.mxu0 0
        %6088 = vmatmul.mubr.bf16.gmra.mxu0 %v5942
        %v6089 = vpop.f32.mrf.mxu0
        %v6090 = vadd.f32 0.0, %v6089
        %v6091 = vpop.f32.mrf.mxu0
        %v6092 = vpop.f32.mrf.mxu0
        %v6093 = vadd.f32 0.0, %v6092
        %v6094 = vpop.f32.mrf.mxu0
        %6095 = vdwg.mxu0
        %v6096 = vadd.f32 %v5870, %v6034
        %v6097 = vadd.f32 %v5871, %v6037
        %v6098 = vadd.f32 %v5872, %v6042
        %v6099 = vadd.f32 %v5873, %v6045
        %v6100 = vadd.f32 %v5874, %v6050
        %v6101 = vadd.f32 %v5875, %v6053
        %v6102 = vadd.f32 %v5876, %v6058
        %v6103 = vadd.f32 %v5877, %v6061
        %v6104 = vadd.f32 %v5878, %v6066
        %v6105 = vadd.f32 %v5879, %v6069
        %v6106 = vadd.f32 %v5880, %v6074
        %v6107 = vadd.f32 %v5881, %v6077
        %v6108 = vadd.f32 %v5882, %v6082
        %v6109 = vadd.f32 %v5883, %v6085
        %v6110 = vadd.f32 %v5884, %v6090
        %v6111 = vadd.f32 %v5885, %v6093
        %v6112 = vld [vmem:[%s5475 + $0x4] sm:$0xf]
        %v6113 = vld [vmem:[%s5475 + $0x8] sm:$0xf]
        %v6114 = vld [vmem:[%s5475 + $0xc] sm:$0x1]
        %v6115 = vld [vmem:[%s5475 + $0x14] sm:$0xf]
        %v6116 = vld [vmem:[%s5475 + $0x18] sm:$0xf]
        %v6117 = vld [vmem:[%s5475 + $0x1c] sm:$0x1]
        %v6118 = vld [vmem:[%s5475 + $0x24] sm:$0xf]
        %v6119 = vld [vmem:[%s5475 + $0x28] sm:$0xf]
        %v6120 = vld [vmem:[%s5475 + $0x2c] sm:$0x1]
        %v6121 = vld [vmem:[%s5475 + $0x34] sm:$0xf]
        %v6122 = vld [vmem:[%s5475 + $0x38] sm:$0xf]
        %v6123 = vld [vmem:[%s5475 + $0x3c] sm:$0x1]
        %v6124 = vld [vmem:[%s5475 + $0x44] sm:$0xf]
        %v6125 = vld [vmem:[%s5475 + $0x48] sm:$0xf]
        %v6126 = vld [vmem:[%s5475 + $0x4c] sm:$0x1]
        %v6127 = vld [vmem:[%s5475 + $0x54] sm:$0xf]
        %v6128 = vld [vmem:[%s5475 + $0x58] sm:$0xf]
        %v6129 = vld [vmem:[%s5475 + $0x5c] sm:$0x1]
        %v6130 = vld [vmem:[%s5475 + $0x64] sm:$0xf]
        %v6131 = vld [vmem:[%s5475 + $0x68] sm:$0xf]
        %v6132 = vld [vmem:[%s5475 + $0x6c] sm:$0x1]
        %v6133 = vld [vmem:[%s5475 + $0x74] sm:$0xf]
        %v6134 = vld [vmem:[%s5475 + $0x78] sm:$0xf]
        %v6135 = vld [vmem:[%s5475 + $0x7c] sm:$0x1]
        %v6137 = vshrl.u32 %v6112, 16
        %v6139 = vrot.slane %v6137, 4
        %v6140 = vshll.u32 %v6112, 16
        %v6142 = vrot.slane %v6140, 5
        %v6143 = vor.u32 %v6139, %v6142
        %v6144 = vrot.slane %v6143, 4
        %v6146 = vshll.u32 %v6113, 16
        %v6148 = vrot.slane %v6146, 5
        %v6149 = vsel %vm1282, %v6144, %v6148
        %v6150 = vshrl.u32 %v6113, 16
        %v6152 = vrot.slane %v6150, 4
        %v6153 = vor.u32 %v6152, %v6148
        %v6154 = vrot.slane %v6153, 4
        %v6156 = vshll.u32 %v6114, 16
        %v6158 = vrot.slane %v6156, 5
        %v6159 = vsel %vm1282, %v6154, %v6158
        %v6161 = vshrl.u32 %v6115, 16
        %v6163 = vrot.slane %v6161, 4
        %v6164 = vshll.u32 %v6115, 16
        %v6166 = vrot.slane %v6164, 5
        %v6167 = vor.u32 %v6163, %v6166
        %v6168 = vrot.slane %v6167, 4
        %v6170 = vshll.u32 %v6116, 16
        %v6172 = vrot.slane %v6170, 5
        %v6173 = vsel %vm1282, %v6168, %v6172
        %v6174 = vshrl.u32 %v6116, 16
        %v6176 = vrot.slane %v6174, 4
        %v6177 = vor.u32 %v6176, %v6172
        %v6178 = vrot.slane %v6177, 4
        %v6180 = vshll.u32 %v6117, 16
        %v6182 = vrot.slane %v6180, 5
        %v6183 = vsel %vm1282, %v6178, %v6182
        %v6185 = vshrl.u32 %v6118, 16
        %v6187 = vrot.slane %v6185, 4
        %v6188 = vshll.u32 %v6118, 16
        %v6190 = vrot.slane %v6188, 5
        %v6191 = vor.u32 %v6187, %v6190
        %v6192 = vrot.slane %v6191, 4
        %v6194 = vshll.u32 %v6119, 16
        %v6196 = vrot.slane %v6194, 5
        %v6197 = vsel %vm1282, %v6192, %v6196
        %v6198 = vshrl.u32 %v6119, 16
        %v6200 = vrot.slane %v6198, 4
        %v6201 = vor.u32 %v6200, %v6196
        %v6202 = vrot.slane %v6201, 4
        %v6204 = vshll.u32 %v6120, 16
        %v6206 = vrot.slane %v6204, 5
        %v6207 = vsel %vm1282, %v6202, %v6206
        %v6209 = vshrl.u32 %v6121, 16
        %v6211 = vrot.slane %v6209, 4
        %v6212 = vshll.u32 %v6121, 16
        %v6214 = vrot.slane %v6212, 5
        %v6215 = vor.u32 %v6211, %v6214
        %v6216 = vrot.slane %v6215, 4
        %v6218 = vshll.u32 %v6122, 16
        %v6220 = vrot.slane %v6218, 5
        %v6221 = vsel %vm1282, %v6216, %v6220
        %v6222 = vshrl.u32 %v6122, 16
        %v6224 = vrot.slane %v6222, 4
        %v6225 = vor.u32 %v6224, %v6220
        %v6226 = vrot.slane %v6225, 4
        %v6228 = vshll.u32 %v6123, 16
        %v6230 = vrot.slane %v6228, 5
        %v6231 = vsel %vm1282, %v6226, %v6230
        %v6233 = vshrl.u32 %v6124, 16
        %v6235 = vrot.slane %v6233, 4
        %v6236 = vshll.u32 %v6124, 16
        %v6238 = vrot.slane %v6236, 5
        %v6239 = vor.u32 %v6235, %v6238
        %v6240 = vrot.slane %v6239, 4
        %v6242 = vshll.u32 %v6125, 16
        %v6244 = vrot.slane %v6242, 5
        %v6245 = vsel %vm1282, %v6240, %v6244
        %v6246 = vshrl.u32 %v6125, 16
        %v6248 = vrot.slane %v6246, 4
        %v6249 = vor.u32 %v6248, %v6244
        %v6250 = vrot.slane %v6249, 4
        %v6252 = vshll.u32 %v6126, 16
        %v6254 = vrot.slane %v6252, 5
        %v6255 = vsel %vm1282, %v6250, %v6254
        %v6257 = vshrl.u32 %v6127, 16
        %v6259 = vrot.slane %v6257, 4
        %v6260 = vshll.u32 %v6127, 16
        %v6262 = vrot.slane %v6260, 5
        %v6263 = vor.u32 %v6259, %v6262
        %v6264 = vrot.slane %v6263, 4
        %v6266 = vshll.u32 %v6128, 16
        %v6268 = vrot.slane %v6266, 5
        %v6269 = vsel %vm1282, %v6264, %v6268
        %v6270 = vshrl.u32 %v6128, 16
        %v6272 = vrot.slane %v6270, 4
        %v6273 = vor.u32 %v6272, %v6268
        %v6274 = vrot.slane %v6273, 4
        %v6276 = vshll.u32 %v6129, 16
        %v6278 = vrot.slane %v6276, 5
        %v6279 = vsel %vm1282, %v6274, %v6278
        %v6281 = vshrl.u32 %v6130, 16
        %v6283 = vrot.slane %v6281, 4
        %v6284 = vshll.u32 %v6130, 16
        %v6286 = vrot.slane %v6284, 5
        %v6287 = vor.u32 %v6283, %v6286
        %v6288 = vrot.slane %v6287, 4
        %v6290 = vshll.u32 %v6131, 16
        %v6292 = vrot.slane %v6290, 5
        %v6293 = vsel %vm1282, %v6288, %v6292
        %v6294 = vshrl.u32 %v6131, 16
        %v6296 = vrot.slane %v6294, 4
        %v6297 = vor.u32 %v6296, %v6292
        %v6298 = vrot.slane %v6297, 4
        %v6300 = vshll.u32 %v6132, 16
        %v6302 = vrot.slane %v6300, 5
        %v6303 = vsel %vm1282, %v6298, %v6302
        %v6305 = vshrl.u32 %v6133, 16
        %v6307 = vrot.slane %v6305, 4
        %v6308 = vshll.u32 %v6133, 16
        %v6310 = vrot.slane %v6308, 5
        %v6311 = vor.u32 %v6307, %v6310
        %v6312 = vrot.slane %v6311, 4
        %v6314 = vshll.u32 %v6134, 16
        %v6316 = vrot.slane %v6314, 5
        %v6317 = vsel %vm1282, %v6312, %v6316
        %v6318 = vshrl.u32 %v6134, 16
        %v6320 = vrot.slane %v6318, 4
        %v6321 = vor.u32 %v6320, %v6316
        %v6322 = vrot.slane %v6321, 4
        %v6324 = vshll.u32 %v6135, 16
        %v6326 = vrot.slane %v6324, 5
        %v6327 = vsel %vm1282, %v6322, %v6326
        %s6328 = scalar_lea.vmem [#allocation12], 320
        %v6329 = vld [vmem:[%s6328] sm:$0xf]
        %v6330 = vld [vmem:[%s6328 + $0x4] sm:$0xf]
        %v6331 = vld [vmem:[%s6328 + $0x8] sm:$0xf]
        %v6332 = vld [vmem:[%s6328 + $0xc] sm:$0xf]
        %v6333 = vld [vmem:[%s6328 + $0x10] sm:$0xf]
        %v6334 = vld [vmem:[%s6328 + $0x14] sm:$0xf]
        %v6335 = vld [vmem:[%s6328 + $0x18] sm:$0xf]
        %v6336 = vld [vmem:[%s6328 + $0x1c] sm:$0xf]
        %v6337 = vld [vmem:[%s6328 + $0x20] sm:$0xf]
        %v6338 = vld [vmem:[%s6328 + $0x24] sm:$0xf]
        %v6339 = vld [vmem:[%s6328 + $0x28] sm:$0xf]
        %v6340 = vld [vmem:[%s6328 + $0x2c] sm:$0xf]
        %v6341 = vld [vmem:[%s6328 + $0x30] sm:$0xf]
        %v6342 = vld [vmem:[%s6328 + $0x34] sm:$0xf]
        %v6343 = vld [vmem:[%s6328 + $0x38] sm:$0xf]
        %v6344 = vld [vmem:[%s6328 + $0x3c] sm:$0xf]
        %v6345 = vunpack.c.l.b16 %v6149
        %v6346 = vunpack.c.l.b16 %v6159
        %v6347 = vunpack.c.l.b16 %v6173
        %v6348 = vunpack.c.l.b16 %v6183
        %v6349 = vunpack.c.l.b16 %v6197
        %v6350 = vunpack.c.l.b16 %v6207
        %v6351 = vunpack.c.l.b16 %v6221
        %v6352 = vunpack.c.l.b16 %v6231
        %v6353 = vunpack.c.l.b16 %v6245
        %v6354 = vunpack.c.l.b16 %v6255
        %v6355 = vunpack.c.l.b16 %v6269
        %v6356 = vunpack.c.l.b16 %v6279
        %v6357 = vunpack.c.l.b16 %v6293
        %v6358 = vunpack.c.l.b16 %v6303
        %v6359 = vunpack.c.l.b16 %v6317
        %v6360 = vunpack.c.l.b16 %v6327
        %v6361 = vpack.c.b16 %v6346, %v6345
        %v6362 = vpack.c.b16 %v6348, %v6347
        %v6363 = vpack.c.b16 %v6350, %v6349
        %v6364 = vpack.c.b16 %v6352, %v6351
        %v6365 = vpack.c.b16 %v6354, %v6353
        %v6366 = vpack.c.b16 %v6356, %v6355
        %v6367 = vpack.c.b16 %v6358, %v6357
        %v6368 = vpack.c.b16 %v6360, %v6359
        %v6393 = vunpack.c.l.b16 %v6329
        %v6394 = vunpack.c.l.b16 %v6330
        %v6395 = vunpack.c.l.b16 %v6331
        %v6396 = vunpack.c.l.b16 %v6332
        %v6397 = vunpack.c.l.b16 %v6333
        %v6398 = vunpack.c.l.b16 %v6334
        %v6399 = vunpack.c.l.b16 %v6335
        %v6400 = vunpack.c.l.b16 %v6336
        %v6401 = vunpack.c.l.b16 %v6337
        %v6402 = vunpack.c.l.b16 %v6338
        %v6403 = vunpack.c.l.b16 %v6339
        %v6404 = vunpack.c.l.b16 %v6340
        %v6405 = vunpack.c.l.b16 %v6341
        %v6406 = vunpack.c.l.b16 %v6342
        %v6407 = vunpack.c.l.b16 %v6343
        %v6408 = vunpack.c.l.b16 %v6344
        %v6409 = vpack.c.b16 %v6394, %v6393
        %v6410 = vpack.c.b16 %v6396, %v6395
        %v6411 = vpack.c.b16 %v6398, %v6397
        %v6412 = vpack.c.b16 %v6400, %v6399
        %v6413 = vpack.c.b16 %v6402, %v6401
        %v6414 = vpack.c.b16 %v6404, %v6403
        %v6415 = vpack.c.b16 %v6406, %v6405
        %v6416 = vpack.c.b16 %v6408, %v6407
        %6425 = vmatprep.subr.bf16.mxu0 0
        %6426 = vmatpush1.bf16.msra.mxu0 %v6416
        %6427 = vmatprep.subr.bf16.mxu0 0
        %6428 = vmatpush1.bf16.msra.mxu0 %v6415
        %6429 = vmatprep.subr.bf16.mxu0 0
        %6430 = vmatpush1.bf16.msra.mxu0 %v6414
        %6431 = vmatprep.subr.bf16.mxu0 0
        %6432 = vmatpush1.bf16.msra.mxu0 %v6413
        %6433 = vmatprep.subr.bf16.mxu0 0
        %6434 = vmatpush1.bf16.msra.mxu0 %v6412
        %6435 = vmatprep.subr.bf16.mxu0 0
        %6436 = vmatpush1.bf16.msra.mxu0 %v6411
        %6437 = vmatprep.subr.bf16.mxu0 0
        %6438 = vmatpush1.bf16.msra.mxu0 %v6410
        %6439 = vmatprep.subr.bf16.mxu0 0
        %6440 = vmatpush1.bf16.msra.mxu0 %v6409
        %6441 = vmatprep.subr.bf16.mxu0 0
        %6442 = vmatpush2.bf16.msra.mxu0 0
        %6443 = vmatprep.subr.bf16.mxu0 0
        %6444 = vmatpush2.bf16.msra.mxu0 0
        %6445 = vmatprep.subr.bf16.mxu0 0
        %6446 = vmatpush2.bf16.msra.mxu0 0
        %6447 = vmatprep.subr.bf16.mxu0 0
        %6448 = vmatpush2.bf16.msra.mxu0 0
        %6449 = vmatprep.subr.bf16.mxu0 0
        %6450 = vmatpush2.bf16.msra.mxu0 0
        %6451 = vmatprep.subr.bf16.mxu0 0
        %6452 = vmatpush2.bf16.msra.mxu0 0
        %6453 = vmatprep.subr.bf16.mxu0 0
        %6454 = vmatpush2.bf16.msra.mxu0 0
        %6455 = vmatprep.subr.bf16.mxu0 0
        %6456 = vmatpush2.bf16.msra.mxu0 0
        %6457 = vmatprep.mubr.bf16.mxu0 0
        %6458 = vmatmul.mubr.bf16.gmra.mxu0 %v6361
        %v6459 = vpop.f32.mrf.mxu0
        %v6460 = vadd.f32 0.0, %v6459
        %v6461 = vpop.f32.mrf.mxu0
        %v6462 = vpop.f32.mrf.mxu0
        %v6463 = vadd.f32 0.0, %v6462
        %v6464 = vpop.f32.mrf.mxu0
        %6465 = vmatprep.mubr.bf16.mxu0 0
        %6466 = vmatmul.mubr.bf16.gmra.mxu0 %v6362
        %v6467 = vpop.f32.mrf.mxu0
        %v6468 = vadd.f32 0.0, %v6467
        %v6469 = vpop.f32.mrf.mxu0
        %v6470 = vpop.f32.mrf.mxu0
        %v6471 = vadd.f32 0.0, %v6470
        %v6472 = vpop.f32.mrf.mxu0
        %6473 = vmatprep.mubr.bf16.mxu0 0
        %6474 = vmatmul.mubr.bf16.gmra.mxu0 %v6363
        %v6475 = vpop.f32.mrf.mxu0
        %v6476 = vadd.f32 0.0, %v6475
        %v6477 = vpop.f32.mrf.mxu0
        %v6478 = vpop.f32.mrf.mxu0
        %v6479 = vadd.f32 0.0, %v6478
        %v6480 = vpop.f32.mrf.mxu0
        %6481 = vmatprep.mubr.bf16.mxu0 0
        %6482 = vmatmul.mubr.bf16.gmra.mxu0 %v6364
        %v6483 = vpop.f32.mrf.mxu0
        %v6484 = vadd.f32 0.0, %v6483
        %v6485 = vpop.f32.mrf.mxu0
        %v6486 = vpop.f32.mrf.mxu0
        %v6487 = vadd.f32 0.0, %v6486
        %v6488 = vpop.f32.mrf.mxu0
        %6489 = vmatprep.mubr.bf16.mxu0 0
        %6490 = vmatmul.mubr.bf16.gmra.mxu0 %v6365
        %v6491 = vpop.f32.mrf.mxu0
        %v6492 = vadd.f32 0.0, %v6491
        %v6493 = vpop.f32.mrf.mxu0
        %v6494 = vpop.f32.mrf.mxu0
        %v6495 = vadd.f32 0.0, %v6494
        %v6496 = vpop.f32.mrf.mxu0
        %6497 = vmatprep.mubr.bf16.mxu0 0
        %6498 = vmatmul.mubr.bf16.gmra.mxu0 %v6366
        %v6499 = vpop.f32.mrf.mxu0
        %v6500 = vadd.f32 0.0, %v6499
        %v6501 = vpop.f32.mrf.mxu0
        %v6502 = vpop.f32.mrf.mxu0
        %v6503 = vadd.f32 0.0, %v6502
        %v6504 = vpop.f32.mrf.mxu0
        %6505 = vmatprep.mubr.bf16.mxu0 0
        %6506 = vmatmul.mubr.bf16.gmra.mxu0 %v6367
        %v6507 = vpop.f32.mrf.mxu0
        %v6508 = vadd.f32 0.0, %v6507
        %v6509 = vpop.f32.mrf.mxu0
        %v6510 = vpop.f32.mrf.mxu0
        %v6511 = vadd.f32 0.0, %v6510
        %v6512 = vpop.f32.mrf.mxu0
        %6513 = vmatprep.mubr.bf16.mxu0 0
        %6514 = vmatmul.mubr.bf16.gmra.mxu0 %v6368
        %v6515 = vpop.f32.mrf.mxu0
        %v6516 = vadd.f32 0.0, %v6515
        %v6517 = vpop.f32.mrf.mxu0
        %v6518 = vpop.f32.mrf.mxu0
        %v6519 = vadd.f32 0.0, %v6518
        %v6520 = vpop.f32.mrf.mxu0
        %6521 = vdwg.mxu0
        %v6522 = vadd.f32 %v6096, %v6460
        %v6523 = vadd.f32 %v6097, %v6463
        %v6524 = vadd.f32 %v6098, %v6468
        %v6525 = vadd.f32 %v6099, %v6471
        %v6526 = vadd.f32 %v6100, %v6476
        %v6527 = vadd.f32 %v6101, %v6479
        %v6528 = vadd.f32 %v6102, %v6484
        %v6529 = vadd.f32 %v6103, %v6487
        %v6530 = vadd.f32 %v6104, %v6492
        %v6531 = vadd.f32 %v6105, %v6495
        %v6532 = vadd.f32 %v6106, %v6500
        %v6533 = vadd.f32 %v6107, %v6503
        %v6534 = vadd.f32 %v6108, %v6508
        %v6535 = vadd.f32 %v6109, %v6511
        %v6536 = vadd.f32 %v6110, %v6516
        %v6537 = vadd.f32 %v6111, %v6519
        %s6538 = scalar_lea.vmem [#allocation3], 32
        %v6539 = vld [vmem:[%s6538] sm:$0x8]
        %v6540 = vld [vmem:[%s6538 + $0x4] sm:$0xf]
        %v6541 = vld [vmem:[%s6538 + $0x8] sm:$0xf]
        %v6542 = vld [vmem:[%s6538 + $0x10] sm:$0x8]
        %v6543 = vld [vmem:[%s6538 + $0x14] sm:$0xf]
        %v6544 = vld [vmem:[%s6538 + $0x18] sm:$0xf]
        %v6545 = vld [vmem:[%s6538 + $0x20] sm:$0x8]
        %v6546 = vld [vmem:[%s6538 + $0x24] sm:$0xf]
        %v6547 = vld [vmem:[%s6538 + $0x28] sm:$0xf]
        %v6548 = vld [vmem:[%s6538 + $0x30] sm:$0x8]
        %v6549 = vld [vmem:[%s6538 + $0x34] sm:$0xf]
        %v6550 = vld [vmem:[%s6538 + $0x38] sm:$0xf]
        %v6551 = vld [vmem:[%s6538 + $0x40] sm:$0x8]
        %v6552 = vld [vmem:[%s6538 + $0x44] sm:$0xf]
        %v6553 = vld [vmem:[%s6538 + $0x48] sm:$0xf]
        %v6554 = vld [vmem:[%s6538 + $0x50] sm:$0x8]
        %v6555 = vld [vmem:[%s6538 + $0x54] sm:$0xf]
        %v6556 = vld [vmem:[%s6538 + $0x58] sm:$0xf]
        %v6557 = vld [vmem:[%s6538 + $0x60] sm:$0x8]
        %v6558 = vld [vmem:[%s6538 + $0x64] sm:$0xf]
        %v6559 = vld [vmem:[%s6538 + $0x68] sm:$0xf]
        %v6560 = vld [vmem:[%s6538 + $0x70] sm:$0x8]
        %v6561 = vld [vmem:[%s6538 + $0x74] sm:$0xf]
        %v6562 = vld [vmem:[%s6538 + $0x78] sm:$0xf]
        %v6564 = vshrl.u32 %v6539, 16
        %v6566 = vrot.slane %v6564, 7
        %v6567 = vrot.slane %v6566, 4
        %v6569 = vshrl.u32 %v6540, 16
        %v6571 = vrot.slane %v6569, 7
        %v6572 = vshll.u32 %v6540, 16
        %v6574 = vor.u32 %v6571, %v6572
        %v6575 = vsel %vm574, %v6567, %v6574
        %v6576 = vrot.slane %v6571, 4
        %v6578 = vshrl.u32 %v6541, 16
        %v6580 = vrot.slane %v6578, 7
        %v6581 = vshll.u32 %v6541, 16
        %v6583 = vor.u32 %v6580, %v6581
        %v6584 = vsel %vm574, %v6576, %v6583
        %v6586 = vshrl.u32 %v6542, 16
        %v6588 = vrot.slane %v6586, 7
        %v6589 = vrot.slane %v6588, 4
        %v6591 = vshrl.u32 %v6543, 16
        %v6593 = vrot.slane %v6591, 7
        %v6594 = vshll.u32 %v6543, 16
        %v6596 = vor.u32 %v6593, %v6594
        %v6597 = vsel %vm574, %v6589, %v6596
        %v6598 = vrot.slane %v6593, 4
        %v6600 = vshrl.u32 %v6544, 16
        %v6602 = vrot.slane %v6600, 7
        %v6603 = vshll.u32 %v6544, 16
        %v6605 = vor.u32 %v6602, %v6603
        %v6606 = vsel %vm574, %v6598, %v6605
        %v6608 = vshrl.u32 %v6545, 16
        %v6610 = vrot.slane %v6608, 7
        %v6611 = vrot.slane %v6610, 4
        %v6613 = vshrl.u32 %v6546, 16
        %v6615 = vrot.slane %v6613, 7
        %v6616 = vshll.u32 %v6546, 16
        %v6618 = vor.u32 %v6615, %v6616
        %v6619 = vsel %vm574, %v6611, %v6618
        %v6620 = vrot.slane %v6615, 4
        %v6622 = vshrl.u32 %v6547, 16
        %v6624 = vrot.slane %v6622, 7
        %v6625 = vshll.u32 %v6547, 16
        %v6627 = vor.u32 %v6624, %v6625
        %v6628 = vsel %vm574, %v6620, %v6627
        %v6630 = vshrl.u32 %v6548, 16
        %v6632 = vrot.slane %v6630, 7
        %v6633 = vrot.slane %v6632, 4
        %v6635 = vshrl.u32 %v6549, 16
        %v6637 = vrot.slane %v6635, 7
        %v6638 = vshll.u32 %v6549, 16
        %v6640 = vor.u32 %v6637, %v6638
        %v6641 = vsel %vm574, %v6633, %v6640
        %v6642 = vrot.slane %v6637, 4
        %v6644 = vshrl.u32 %v6550, 16
        %v6646 = vrot.slane %v6644, 7
        %v6647 = vshll.u32 %v6550, 16
        %v6649 = vor.u32 %v6646, %v6647
        %v6650 = vsel %vm574, %v6642, %v6649
        %v6652 = vshrl.u32 %v6551, 16
        %v6654 = vrot.slane %v6652, 7
        %v6655 = vrot.slane %v6654, 4
        %v6657 = vshrl.u32 %v6552, 16
        %v6659 = vrot.slane %v6657, 7
        %v6660 = vshll.u32 %v6552, 16
        %v6662 = vor.u32 %v6659, %v6660
        %v6663 = vsel %vm574, %v6655, %v6662
        %v6664 = vrot.slane %v6659, 4
        %v6666 = vshrl.u32 %v6553, 16
        %v6668 = vrot.slane %v6666, 7
        %v6669 = vshll.u32 %v6553, 16
        %v6671 = vor.u32 %v6668, %v6669
        %v6672 = vsel %vm574, %v6664, %v6671
        %v6674 = vshrl.u32 %v6554, 16
        %v6676 = vrot.slane %v6674, 7
        %v6677 = vrot.slane %v6676, 4
        %v6679 = vshrl.u32 %v6555, 16
        %v6681 = vrot.slane %v6679, 7
        %v6682 = vshll.u32 %v6555, 16
        %v6684 = vor.u32 %v6681, %v6682
        %v6685 = vsel %vm574, %v6677, %v6684
        %v6686 = vrot.slane %v6681, 4
        %v6688 = vshrl.u32 %v6556, 16
        %v6690 = vrot.slane %v6688, 7
        %v6691 = vshll.u32 %v6556, 16
        %v6693 = vor.u32 %v6690, %v6691
        %v6694 = vsel %vm574, %v6686, %v6693
        %v6696 = vshrl.u32 %v6557, 16
        %v6698 = vrot.slane %v6696, 7
        %v6699 = vrot.slane %v6698, 4
        %v6701 = vshrl.u32 %v6558, 16
        %v6703 = vrot.slane %v6701, 7
        %v6704 = vshll.u32 %v6558, 16
        %v6706 = vor.u32 %v6703, %v6704
        %v6707 = vsel %vm574, %v6699, %v6706
        %v6708 = vrot.slane %v6703, 4
        %v6710 = vshrl.u32 %v6559, 16
        %v6712 = vrot.slane %v6710, 7
        %v6713 = vshll.u32 %v6559, 16
        %v6715 = vor.u32 %v6712, %v6713
        %v6716 = vsel %vm574, %v6708, %v6715
        %v6718 = vshrl.u32 %v6560, 16
        %v6720 = vrot.slane %v6718, 7
        %v6721 = vrot.slane %v6720, 4
        %v6723 = vshrl.u32 %v6561, 16
        %v6725 = vrot.slane %v6723, 7
        %v6726 = vshll.u32 %v6561, 16
        %v6728 = vor.u32 %v6725, %v6726
        %v6729 = vsel %vm574, %v6721, %v6728
        %v6730 = vrot.slane %v6725, 4
        %v6732 = vshrl.u32 %v6562, 16
        %v6734 = vrot.slane %v6732, 7
        %v6735 = vshll.u32 %v6562, 16
        %v6737 = vor.u32 %v6734, %v6735
        %v6738 = vsel %vm574, %v6730, %v6737
        %s6739 = scalar_lea.vmem [#allocation12], 384
        %v6740 = vld [vmem:[%s6739] sm:$0xf]
        %v6741 = vld [vmem:[%s6739 + $0x4] sm:$0xf]
        %v6742 = vld [vmem:[%s6739 + $0x8] sm:$0xf]
        %v6743 = vld [vmem:[%s6739 + $0xc] sm:$0xf]
        %v6744 = vld [vmem:[%s6739 + $0x10] sm:$0xf]
        %v6745 = vld [vmem:[%s6739 + $0x14] sm:$0xf]
        %v6746 = vld [vmem:[%s6739 + $0x18] sm:$0xf]
        %v6747 = vld [vmem:[%s6739 + $0x1c] sm:$0xf]
        %v6748 = vld [vmem:[%s6739 + $0x20] sm:$0xf]
        %v6749 = vld [vmem:[%s6739 + $0x24] sm:$0xf]
        %v6750 = vld [vmem:[%s6739 + $0x28] sm:$0xf]
        %v6751 = vld [vmem:[%s6739 + $0x2c] sm:$0xf]
        %v6752 = vld [vmem:[%s6739 + $0x30] sm:$0xf]
        %v6753 = vld [vmem:[%s6739 + $0x34] sm:$0xf]
        %v6754 = vld [vmem:[%s6739 + $0x38] sm:$0xf]
        %v6755 = vld [vmem:[%s6739 + $0x3c] sm:$0xf]
        %v6756 = vunpack.c.l.b16 %v6575
        %v6757 = vunpack.c.l.b16 %v6584
        %v6758 = vunpack.c.l.b16 %v6597
        %v6759 = vunpack.c.l.b16 %v6606
        %v6760 = vunpack.c.l.b16 %v6619
        %v6761 = vunpack.c.l.b16 %v6628
        %v6762 = vunpack.c.l.b16 %v6641
        %v6763 = vunpack.c.l.b16 %v6650
        %v6764 = vunpack.c.l.b16 %v6663
        %v6765 = vunpack.c.l.b16 %v6672
        %v6766 = vunpack.c.l.b16 %v6685
        %v6767 = vunpack.c.l.b16 %v6694
        %v6768 = vunpack.c.l.b16 %v6707
        %v6769 = vunpack.c.l.b16 %v6716
        %v6770 = vunpack.c.l.b16 %v6729
        %v6771 = vunpack.c.l.b16 %v6738
        %v6772 = vpack.c.b16 %v6757, %v6756
        %v6773 = vpack.c.b16 %v6759, %v6758
        %v6774 = vpack.c.b16 %v6761, %v6760
        %v6775 = vpack.c.b16 %v6763, %v6762
        %v6776 = vpack.c.b16 %v6765, %v6764
        %v6777 = vpack.c.b16 %v6767, %v6766
        %v6778 = vpack.c.b16 %v6769, %v6768
        %v6779 = vpack.c.b16 %v6771, %v6770
        %v6804 = vunpack.c.l.b16 %v6740
        %v6805 = vunpack.c.l.b16 %v6741
        %v6806 = vunpack.c.l.b16 %v6742
        %v6807 = vunpack.c.l.b16 %v6743
        %v6808 = vunpack.c.l.b16 %v6744
        %v6809 = vunpack.c.l.b16 %v6745
        %v6810 = vunpack.c.l.b16 %v6746
        %v6811 = vunpack.c.l.b16 %v6747
        %v6812 = vunpack.c.l.b16 %v6748
        %v6813 = vunpack.c.l.b16 %v6749
        %v6814 = vunpack.c.l.b16 %v6750
        %v6815 = vunpack.c.l.b16 %v6751
        %v6816 = vunpack.c.l.b16 %v6752
        %v6817 = vunpack.c.l.b16 %v6753
        %v6818 = vunpack.c.l.b16 %v6754
        %v6819 = vunpack.c.l.b16 %v6755
        %v6820 = vpack.c.b16 %v6805, %v6804
        %v6821 = vpack.c.b16 %v6807, %v6806
        %v6822 = vpack.c.b16 %v6809, %v6808
        %v6823 = vpack.c.b16 %v6811, %v6810
        %v6824 = vpack.c.b16 %v6813, %v6812
        %v6825 = vpack.c.b16 %v6815, %v6814
        %v6826 = vpack.c.b16 %v6817, %v6816
        %v6827 = vpack.c.b16 %v6819, %v6818
        %6836 = vmatprep.subr.bf16.mxu0 0
        %6837 = vmatpush1.bf16.msra.mxu0 %v6827
        %6838 = vmatprep.subr.bf16.mxu0 0
        %6839 = vmatpush1.bf16.msra.mxu0 %v6826
        %6840 = vmatprep.subr.bf16.mxu0 0
        %6841 = vmatpush1.bf16.msra.mxu0 %v6825
        %6842 = vmatprep.subr.bf16.mxu0 0
        %6843 = vmatpush1.bf16.msra.mxu0 %v6824
        %6844 = vmatprep.subr.bf16.mxu0 0
        %6845 = vmatpush1.bf16.msra.mxu0 %v6823
        %6846 = vmatprep.subr.bf16.mxu0 0
        %6847 = vmatpush1.bf16.msra.mxu0 %v6822
        %6848 = vmatprep.subr.bf16.mxu0 0
        %6849 = vmatpush1.bf16.msra.mxu0 %v6821
        %6850 = vmatprep.subr.bf16.mxu0 0
        %6851 = vmatpush1.bf16.msra.mxu0 %v6820
        %6852 = vmatprep.subr.bf16.mxu0 0
        %6853 = vmatpush2.bf16.msra.mxu0 0
        %6854 = vmatprep.subr.bf16.mxu0 0
        %6855 = vmatpush2.bf16.msra.mxu0 0
        %6856 = vmatprep.subr.bf16.mxu0 0
        %6857 = vmatpush2.bf16.msra.mxu0 0
        %6858 = vmatprep.subr.bf16.mxu0 0
        %6859 = vmatpush2.bf16.msra.mxu0 0
        %6860 = vmatprep.subr.bf16.mxu0 0
        %6861 = vmatpush2.bf16.msra.mxu0 0
        %6862 = vmatprep.subr.bf16.mxu0 0
        %6863 = vmatpush2.bf16.msra.mxu0 0
        %6864 = vmatprep.subr.bf16.mxu0 0
        %6865 = vmatpush2.bf16.msra.mxu0 0
        %6866 = vmatprep.subr.bf16.mxu0 0
        %6867 = vmatpush2.bf16.msra.mxu0 0
        %6868 = vmatprep.mubr.bf16.mxu0 0
        %6869 = vmatmul.mubr.bf16.gmra.mxu0 %v6772
        %v6870 = vpop.f32.mrf.mxu0
        %v6871 = vadd.f32 0.0, %v6870
        %v6872 = vpop.f32.mrf.mxu0
        %v6873 = vpop.f32.mrf.mxu0
        %v6874 = vadd.f32 0.0, %v6873
        %v6875 = vpop.f32.mrf.mxu0
        %6876 = vmatprep.mubr.bf16.mxu0 0
        %6877 = vmatmul.mubr.bf16.gmra.mxu0 %v6773
        %v6878 = vpop.f32.mrf.mxu0
        %v6879 = vadd.f32 0.0, %v6878
        %v6880 = vpop.f32.mrf.mxu0
        %v6881 = vpop.f32.mrf.mxu0
        %v6882 = vadd.f32 0.0, %v6881
        %v6883 = vpop.f32.mrf.mxu0
        %6884 = vmatprep.mubr.bf16.mxu0 0
        %6885 = vmatmul.mubr.bf16.gmra.mxu0 %v6774
        %v6886 = vpop.f32.mrf.mxu0
        %v6887 = vadd.f32 0.0, %v6886
        %v6888 = vpop.f32.mrf.mxu0
        %v6889 = vpop.f32.mrf.mxu0
        %v6890 = vadd.f32 0.0, %v6889
        %v6891 = vpop.f32.mrf.mxu0
        %6892 = vmatprep.mubr.bf16.mxu0 0
        %6893 = vmatmul.mubr.bf16.gmra.mxu0 %v6775
        %v6894 = vpop.f32.mrf.mxu0
        %v6895 = vadd.f32 0.0, %v6894
        %v6896 = vpop.f32.mrf.mxu0
        %v6897 = vpop.f32.mrf.mxu0
        %v6898 = vadd.f32 0.0, %v6897
        %v6899 = vpop.f32.mrf.mxu0
        %6900 = vmatprep.mubr.bf16.mxu0 0
        %6901 = vmatmul.mubr.bf16.gmra.mxu0 %v6776
        %v6902 = vpop.f32.mrf.mxu0
        %v6903 = vadd.f32 0.0, %v6902
        %v6904 = vpop.f32.mrf.mxu0
        %v6905 = vpop.f32.mrf.mxu0
        %v6906 = vadd.f32 0.0, %v6905
        %v6907 = vpop.f32.mrf.mxu0
        %6908 = vmatprep.mubr.bf16.mxu0 0
        %6909 = vmatmul.mubr.bf16.gmra.mxu0 %v6777
        %v6910 = vpop.f32.mrf.mxu0
        %v6911 = vadd.f32 0.0, %v6910
        %v6912 = vpop.f32.mrf.mxu0
        %v6913 = vpop.f32.mrf.mxu0
        %v6914 = vadd.f32 0.0, %v6913
        %v6915 = vpop.f32.mrf.mxu0
        %6916 = vmatprep.mubr.bf16.mxu0 0
        %6917 = vmatmul.mubr.bf16.gmra.mxu0 %v6778
        %v6918 = vpop.f32.mrf.mxu0
        %v6919 = vadd.f32 0.0, %v6918
        %v6920 = vpop.f32.mrf.mxu0
        %v6921 = vpop.f32.mrf.mxu0
        %v6922 = vadd.f32 0.0, %v6921
        %v6923 = vpop.f32.mrf.mxu0
        %6924 = vmatprep.mubr.bf16.mxu0 0
        %6925 = vmatmul.mubr.bf16.gmra.mxu0 %v6779
        %v6926 = vpop.f32.mrf.mxu0
        %v6927 = vadd.f32 0.0, %v6926
        %v6928 = vpop.f32.mrf.mxu0
        %v6929 = vpop.f32.mrf.mxu0
        %v6930 = vadd.f32 0.0, %v6929
        %v6931 = vpop.f32.mrf.mxu0
        %6932 = vdwg.mxu0
        %v6933 = vadd.f32 %v6522, %v6871
        %v6934 = vadd.f32 %v6523, %v6874
        %v6935 = vadd.f32 %v6524, %v6879
        %v6936 = vadd.f32 %v6525, %v6882
        %v6937 = vadd.f32 %v6526, %v6887
        %v6938 = vadd.f32 %v6527, %v6890
        %v6939 = vadd.f32 %v6528, %v6895
        %v6940 = vadd.f32 %v6529, %v6898
        %v6941 = vadd.f32 %v6530, %v6903
        %v6942 = vadd.f32 %v6531, %v6906
        %v6943 = vadd.f32 %v6532, %v6911
        %v6944 = vadd.f32 %v6533, %v6914
        %v6945 = vadd.f32 %v6534, %v6919
        %v6946 = vadd.f32 %v6535, %v6922
        %v6947 = vadd.f32 %v6536, %v6927
        %v6948 = vadd.f32 %v6537, %v6930
        %s6949 = scalar_lea.vmem [#allocation12], 448
        %v6950 = vld [vmem:[%s6949] sm:$0xf]
        %v6951 = vld [vmem:[%s6949 + $0x4] sm:$0xf]
        %v6952 = vld [vmem:[%s6949 + $0x8] sm:$0xf]
        %v6953 = vld [vmem:[%s6949 + $0xc] sm:$0xf]
        %v6954 = vld [vmem:[%s6949 + $0x10] sm:$0xf]
        %v6955 = vld [vmem:[%s6949 + $0x14] sm:$0xf]
        %v6956 = vld [vmem:[%s6949 + $0x18] sm:$0xf]
        %v6957 = vld [vmem:[%s6949 + $0x1c] sm:$0xf]
        %v6958 = vld [vmem:[%s6949 + $0x20] sm:$0xf]
        %v6959 = vld [vmem:[%s6949 + $0x24] sm:$0xf]
        %v6960 = vld [vmem:[%s6949 + $0x28] sm:$0xf]
        %v6961 = vld [vmem:[%s6949 + $0x2c] sm:$0xf]
        %v6962 = vld [vmem:[%s6949 + $0x30] sm:$0xf]
        %v6963 = vld [vmem:[%s6949 + $0x34] sm:$0xf]
        %v6964 = vld [vmem:[%s6949 + $0x38] sm:$0xf]
        %v6965 = vld [vmem:[%s6949 + $0x3c] sm:$0xf]
        %v6982 = vunpack.c.l.b16 %v6540
        %v6983 = vunpack.c.l.b16 %v6541
        %v6984 = vunpack.c.l.b16 %v6543
        %v6985 = vunpack.c.l.b16 %v6544
        %v6986 = vunpack.c.l.b16 %v6546
        %v6987 = vunpack.c.l.b16 %v6547
        %v6988 = vunpack.c.l.b16 %v6549
        %v6989 = vunpack.c.l.b16 %v6550
        %v6990 = vunpack.c.l.b16 %v6552
        %v6991 = vunpack.c.l.b16 %v6553
        %v6992 = vunpack.c.l.b16 %v6555
        %v6993 = vunpack.c.l.b16 %v6556
        %v6994 = vunpack.c.l.b16 %v6558
        %v6995 = vunpack.c.l.b16 %v6559
        %v6996 = vunpack.c.l.b16 %v6561
        %v6997 = vunpack.c.l.b16 %v6562
        %v6998 = vpack.c.b16 %v6983, %v6982
        %v6999 = vpack.c.b16 %v6985, %v6984
        %v7000 = vpack.c.b16 %v6987, %v6986
        %v7001 = vpack.c.b16 %v6989, %v6988
        %v7002 = vpack.c.b16 %v6991, %v6990
        %v7003 = vpack.c.b16 %v6993, %v6992
        %v7004 = vpack.c.b16 %v6995, %v6994
        %v7005 = vpack.c.b16 %v6997, %v6996
        %v7030 = vunpack.c.l.b16 %v6950
        %v7031 = vunpack.c.l.b16 %v6951
        %v7032 = vunpack.c.l.b16 %v6952
        %v7033 = vunpack.c.l.b16 %v6953
        %v7034 = vunpack.c.l.b16 %v6954
        %v7035 = vunpack.c.l.b16 %v6955
        %v7036 = vunpack.c.l.b16 %v6956
        %v7037 = vunpack.c.l.b16 %v6957
        %v7038 = vunpack.c.l.b16 %v6958
        %v7039 = vunpack.c.l.b16 %v6959
        %v7040 = vunpack.c.l.b16 %v6960
        %v7041 = vunpack.c.l.b16 %v6961
        %v7042 = vunpack.c.l.b16 %v6962
        %v7043 = vunpack.c.l.b16 %v6963
        %v7044 = vunpack.c.l.b16 %v6964
        %v7045 = vunpack.c.l.b16 %v6965
        %v7046 = vpack.c.b16 %v7031, %v7030
        %v7047 = vpack.c.b16 %v7033, %v7032
        %v7048 = vpack.c.b16 %v7035, %v7034
        %v7049 = vpack.c.b16 %v7037, %v7036
        %v7050 = vpack.c.b16 %v7039, %v7038
        %v7051 = vpack.c.b16 %v7041, %v7040
        %v7052 = vpack.c.b16 %v7043, %v7042
        %v7053 = vpack.c.b16 %v7045, %v7044
        %7062 = vmatprep.subr.bf16.mxu0 0
        %7063 = vmatpush1.bf16.msra.mxu0 %v7053
        %7064 = vmatprep.subr.bf16.mxu0 0
        %7065 = vmatpush1.bf16.msra.mxu0 %v7052
        %7066 = vmatprep.subr.bf16.mxu0 0
        %7067 = vmatpush1.bf16.msra.mxu0 %v7051
        %7068 = vmatprep.subr.bf16.mxu0 0
        %7069 = vmatpush1.bf16.msra.mxu0 %v7050
        %7070 = vmatprep.subr.bf16.mxu0 0
        %7071 = vmatpush1.bf16.msra.mxu0 %v7049
        %7072 = vmatprep.subr.bf16.mxu0 0
        %7073 = vmatpush1.bf16.msra.mxu0 %v7048
        %7074 = vmatprep.subr.bf16.mxu0 0
        %7075 = vmatpush1.bf16.msra.mxu0 %v7047
        %7076 = vmatprep.subr.bf16.mxu0 0
        %7077 = vmatpush1.bf16.msra.mxu0 %v7046
        %7078 = vmatprep.subr.bf16.mxu0 0
        %7079 = vmatpush2.bf16.msra.mxu0 0
        %7080 = vmatprep.subr.bf16.mxu0 0
        %7081 = vmatpush2.bf16.msra.mxu0 0
        %7082 = vmatprep.subr.bf16.mxu0 0
        %7083 = vmatpush2.bf16.msra.mxu0 0
        %7084 = vmatprep.subr.bf16.mxu0 0
        %7085 = vmatpush2.bf16.msra.mxu0 0
        %7086 = vmatprep.subr.bf16.mxu0 0
        %7087 = vmatpush2.bf16.msra.mxu0 0
        %7088 = vmatprep.subr.bf16.mxu0 0
        %7089 = vmatpush2.bf16.msra.mxu0 0
        %7090 = vmatprep.subr.bf16.mxu0 0
        %7091 = vmatpush2.bf16.msra.mxu0 0
        %7092 = vmatprep.subr.bf16.mxu0 0
        %7093 = vmatpush2.bf16.msra.mxu0 0
        %7094 = vmatprep.mubr.bf16.mxu0 0
        %7095 = vmatmul.mubr.bf16.gmra.mxu0 %v6998
        %v7096 = vpop.f32.mrf.mxu0
        %v7097 = vadd.f32 0.0, %v7096
        %v7098 = vpop.f32.mrf.mxu0
        %v7099 = vpop.f32.mrf.mxu0
        %v7100 = vadd.f32 0.0, %v7099
        %v7101 = vpop.f32.mrf.mxu0
        %7102 = vmatprep.mubr.bf16.mxu0 0
        %7103 = vmatmul.mubr.bf16.gmra.mxu0 %v6999
        %v7104 = vpop.f32.mrf.mxu0
        %v7105 = vadd.f32 0.0, %v7104
        %v7106 = vpop.f32.mrf.mxu0
        %v7107 = vpop.f32.mrf.mxu0
        %v7108 = vadd.f32 0.0, %v7107
        %v7109 = vpop.f32.mrf.mxu0
        %7110 = vmatprep.mubr.bf16.mxu0 0
        %7111 = vmatmul.mubr.bf16.gmra.mxu0 %v7000
        %v7112 = vpop.f32.mrf.mxu0
        %v7113 = vadd.f32 0.0, %v7112
        %v7114 = vpop.f32.mrf.mxu0
        %v7115 = vpop.f32.mrf.mxu0
        %v7116 = vadd.f32 0.0, %v7115
        %v7117 = vpop.f32.mrf.mxu0
        %7118 = vmatprep.mubr.bf16.mxu0 0
        %7119 = vmatmul.mubr.bf16.gmra.mxu0 %v7001
        %v7120 = vpop.f32.mrf.mxu0
        %v7121 = vadd.f32 0.0, %v7120
        %v7122 = vpop.f32.mrf.mxu0
        %v7123 = vpop.f32.mrf.mxu0
        %v7124 = vadd.f32 0.0, %v7123
        %v7125 = vpop.f32.mrf.mxu0
        %7126 = vmatprep.mubr.bf16.mxu0 0
        %7127 = vmatmul.mubr.bf16.gmra.mxu0 %v7002
        %v7128 = vpop.f32.mrf.mxu0
        %v7129 = vadd.f32 0.0, %v7128
        %v7130 = vpop.f32.mrf.mxu0
        %v7131 = vpop.f32.mrf.mxu0
        %v7132 = vadd.f32 0.0, %v7131
        %v7133 = vpop.f32.mrf.mxu0
        %7134 = vmatprep.mubr.bf16.mxu0 0
        %7135 = vmatmul.mubr.bf16.gmra.mxu0 %v7003
        %v7136 = vpop.f32.mrf.mxu0
        %v7137 = vadd.f32 0.0, %v7136
        %v7138 = vpop.f32.mrf.mxu0
        %v7139 = vpop.f32.mrf.mxu0
        %v7140 = vadd.f32 0.0, %v7139
        %v7141 = vpop.f32.mrf.mxu0
        %7142 = vmatprep.mubr.bf16.mxu0 0
        %7143 = vmatmul.mubr.bf16.gmra.mxu0 %v7004
        %v7144 = vpop.f32.mrf.mxu0
        %v7145 = vadd.f32 0.0, %v7144
        %v7146 = vpop.f32.mrf.mxu0
        %v7147 = vpop.f32.mrf.mxu0
        %v7148 = vadd.f32 0.0, %v7147
        %v7149 = vpop.f32.mrf.mxu0
        %7150 = vmatprep.mubr.bf16.mxu0 0
        %7151 = vmatmul.mubr.bf16.gmra.mxu0 %v7005
        %v7152 = vpop.f32.mrf.mxu0
        %v7153 = vadd.f32 0.0, %v7152
        %v7154 = vpop.f32.mrf.mxu0
        %v7155 = vpop.f32.mrf.mxu0
        %v7156 = vadd.f32 0.0, %v7155
        %v7157 = vpop.f32.mrf.mxu0
        %7158 = vdwg.mxu0
        %v7159 = vadd.f32 %v6933, %v7097
        %v7160 = vadd.f32 %v6934, %v7100
        %v7161 = vadd.f32 %v6935, %v7105
        %v7162 = vadd.f32 %v6936, %v7108
        %v7163 = vadd.f32 %v6937, %v7113
        %v7164 = vadd.f32 %v6938, %v7116
        %v7165 = vadd.f32 %v6939, %v7121
        %v7166 = vadd.f32 %v6940, %v7124
        %v7167 = vadd.f32 %v6941, %v7129
        %v7168 = vadd.f32 %v6942, %v7132
        %v7169 = vadd.f32 %v6943, %v7137
        %v7170 = vadd.f32 %v6944, %v7140
        %v7171 = vadd.f32 %v6945, %v7145
        %v7172 = vadd.f32 %v6946, %v7148
        %v7173 = vadd.f32 %v6947, %v7153
        %v7174 = vadd.f32 %v6948, %v7156
        %v7175 = vld [vmem:[%s6538 + $0x4] sm:$0xf]
        %v7176 = vld [vmem:[%s6538 + $0x8] sm:$0xf]
        %v7177 = vld [vmem:[%s6538 + $0xc] sm:$0x1]
        %v7178 = vld [vmem:[%s6538 + $0x14] sm:$0xf]
        %v7179 = vld [vmem:[%s6538 + $0x18] sm:$0xf]
        %v7180 = vld [vmem:[%s6538 + $0x1c] sm:$0x1]
        %v7181 = vld [vmem:[%s6538 + $0x24] sm:$0xf]
        %v7182 = vld [vmem:[%s6538 + $0x28] sm:$0xf]
        %v7183 = vld [vmem:[%s6538 + $0x2c] sm:$0x1]
        %v7184 = vld [vmem:[%s6538 + $0x34] sm:$0xf]
        %v7185 = vld [vmem:[%s6538 + $0x38] sm:$0xf]
        %v7186 = vld [vmem:[%s6538 + $0x3c] sm:$0x1]
        %v7187 = vld [vmem:[%s6538 + $0x44] sm:$0xf]
        %v7188 = vld [vmem:[%s6538 + $0x48] sm:$0xf]
        %v7189 = vld [vmem:[%s6538 + $0x4c] sm:$0x1]
        %v7190 = vld [vmem:[%s6538 + $0x54] sm:$0xf]
        %v7191 = vld [vmem:[%s6538 + $0x58] sm:$0xf]
        %v7192 = vld [vmem:[%s6538 + $0x5c] sm:$0x1]
        %v7193 = vld [vmem:[%s6538 + $0x64] sm:$0xf]
        %v7194 = vld [vmem:[%s6538 + $0x68] sm:$0xf]
        %v7195 = vld [vmem:[%s6538 + $0x6c] sm:$0x1]
        %v7196 = vld [vmem:[%s6538 + $0x74] sm:$0xf]
        %v7197 = vld [vmem:[%s6538 + $0x78] sm:$0xf]
        %v7198 = vld [vmem:[%s6538 + $0x7c] sm:$0x1]
        %v7200 = vshrl.u32 %v7175, 16
        %v7202 = vrot.slane %v7200, 4
        %v7203 = vshll.u32 %v7175, 16
        %v7205 = vrot.slane %v7203, 5
        %v7206 = vor.u32 %v7202, %v7205
        %v7207 = vrot.slane %v7206, 4
        %v7209 = vshll.u32 %v7176, 16
        %v7211 = vrot.slane %v7209, 5
        %v7212 = vsel %vm1282, %v7207, %v7211
        %v7213 = vshrl.u32 %v7176, 16
        %v7215 = vrot.slane %v7213, 4
        %v7216 = vor.u32 %v7215, %v7211
        %v7217 = vrot.slane %v7216, 4
        %v7219 = vshll.u32 %v7177, 16
        %v7221 = vrot.slane %v7219, 5
        %v7222 = vsel %vm1282, %v7217, %v7221
        %v7224 = vshrl.u32 %v7178, 16
        %v7226 = vrot.slane %v7224, 4
        %v7227 = vshll.u32 %v7178, 16
        %v7229 = vrot.slane %v7227, 5
        %v7230 = vor.u32 %v7226, %v7229
        %v7231 = vrot.slane %v7230, 4
        %v7233 = vshll.u32 %v7179, 16
        %v7235 = vrot.slane %v7233, 5
        %v7236 = vsel %vm1282, %v7231, %v7235
        %v7237 = vshrl.u32 %v7179, 16
        %v7239 = vrot.slane %v7237, 4
        %v7240 = vor.u32 %v7239, %v7235
        %v7241 = vrot.slane %v7240, 4
        %v7243 = vshll.u32 %v7180, 16
        %v7245 = vrot.slane %v7243, 5
        %v7246 = vsel %vm1282, %v7241, %v7245
        %v7248 = vshrl.u32 %v7181, 16
        %v7250 = vrot.slane %v7248, 4
        %v7251 = vshll.u32 %v7181, 16
        %v7253 = vrot.slane %v7251, 5
        %v7254 = vor.u32 %v7250, %v7253
        %v7255 = vrot.slane %v7254, 4
        %v7257 = vshll.u32 %v7182, 16
        %v7259 = vrot.slane %v7257, 5
        %v7260 = vsel %vm1282, %v7255, %v7259
        %v7261 = vshrl.u32 %v7182, 16
        %v7263 = vrot.slane %v7261, 4
        %v7264 = vor.u32 %v7263, %v7259
        %v7265 = vrot.slane %v7264, 4
        %v7267 = vshll.u32 %v7183, 16
        %v7269 = vrot.slane %v7267, 5
        %v7270 = vsel %vm1282, %v7265, %v7269
        %v7272 = vshrl.u32 %v7184, 16
        %v7274 = vrot.slane %v7272, 4
        %v7275 = vshll.u32 %v7184, 16
        %v7277 = vrot.slane %v7275, 5
        %v7278 = vor.u32 %v7274, %v7277
        %v7279 = vrot.slane %v7278, 4
        %v7281 = vshll.u32 %v7185, 16
        %v7283 = vrot.slane %v7281, 5
        %v7284 = vsel %vm1282, %v7279, %v7283
        %v7285 = vshrl.u32 %v7185, 16
        %v7287 = vrot.slane %v7285, 4
        %v7288 = vor.u32 %v7287, %v7283
        %v7289 = vrot.slane %v7288, 4
        %v7291 = vshll.u32 %v7186, 16
        %v7293 = vrot.slane %v7291, 5
        %v7294 = vsel %vm1282, %v7289, %v7293
        %v7296 = vshrl.u32 %v7187, 16
        %v7298 = vrot.slane %v7296, 4
        %v7299 = vshll.u32 %v7187, 16
        %v7301 = vrot.slane %v7299, 5
        %v7302 = vor.u32 %v7298, %v7301
        %v7303 = vrot.slane %v7302, 4
        %v7305 = vshll.u32 %v7188, 16
        %v7307 = vrot.slane %v7305, 5
        %v7308 = vsel %vm1282, %v7303, %v7307
        %v7309 = vshrl.u32 %v7188, 16
        %v7311 = vrot.slane %v7309, 4
        %v7312 = vor.u32 %v7311, %v7307
        %v7313 = vrot.slane %v7312, 4
        %v7315 = vshll.u32 %v7189, 16
        %v7317 = vrot.slane %v7315, 5
        %v7318 = vsel %vm1282, %v7313, %v7317
        %v7320 = vshrl.u32 %v7190, 16
        %v7322 = vrot.slane %v7320, 4
        %v7323 = vshll.u32 %v7190, 16
        %v7325 = vrot.slane %v7323, 5
        %v7326 = vor.u32 %v7322, %v7325
        %v7327 = vrot.slane %v7326, 4
        %v7329 = vshll.u32 %v7191, 16
        %v7331 = vrot.slane %v7329, 5
        %v7332 = vsel %vm1282, %v7327, %v7331
        %v7333 = vshrl.u32 %v7191, 16
        %v7335 = vrot.slane %v7333, 4
        %v7336 = vor.u32 %v7335, %v7331
        %v7337 = vrot.slane %v7336, 4
        %v7339 = vshll.u32 %v7192, 16
        %v7341 = vrot.slane %v7339, 5
        %v7342 = vsel %vm1282, %v7337, %v7341
        %v7344 = vshrl.u32 %v7193, 16
        %v7346 = vrot.slane %v7344, 4
        %v7347 = vshll.u32 %v7193, 16
        %v7349 = vrot.slane %v7347, 5
        %v7350 = vor.u32 %v7346, %v7349
        %v7351 = vrot.slane %v7350, 4
        %v7353 = vshll.u32 %v7194, 16
        %v7355 = vrot.slane %v7353, 5
        %v7356 = vsel %vm1282, %v7351, %v7355
        %v7357 = vshrl.u32 %v7194, 16
        %v7359 = vrot.slane %v7357, 4
        %v7360 = vor.u32 %v7359, %v7355
        %v7361 = vrot.slane %v7360, 4
        %v7363 = vshll.u32 %v7195, 16
        %v7365 = vrot.slane %v7363, 5
        %v7366 = vsel %vm1282, %v7361, %v7365
        %v7368 = vshrl.u32 %v7196, 16
        %v7370 = vrot.slane %v7368, 4
        %v7371 = vshll.u32 %v7196, 16
        %v7373 = vrot.slane %v7371, 5
        %v7374 = vor.u32 %v7370, %v7373
        %v7375 = vrot.slane %v7374, 4
        %v7377 = vshll.u32 %v7197, 16
        %v7379 = vrot.slane %v7377, 5
        %v7380 = vsel %vm1282, %v7375, %v7379
        %v7381 = vshrl.u32 %v7197, 16
        %v7383 = vrot.slane %v7381, 4
        %v7384 = vor.u32 %v7383, %v7379
        %v7385 = vrot.slane %v7384, 4
        %v7387 = vshll.u32 %v7198, 16
        %v7389 = vrot.slane %v7387, 5
        %v7390 = vsel %vm1282, %v7385, %v7389
        %s7391 = scalar_lea.vmem [#allocation12], 512
        %v7392 = vld [vmem:[%s7391] sm:$0xf]
        %v7393 = vld [vmem:[%s7391 + $0x4] sm:$0xf]
        %v7394 = vld [vmem:[%s7391 + $0x8] sm:$0xf]
        %v7395 = vld [vmem:[%s7391 + $0xc] sm:$0xf]
        %v7396 = vld [vmem:[%s7391 + $0x10] sm:$0xf]
        %v7397 = vld [vmem:[%s7391 + $0x14] sm:$0xf]
        %v7398 = vld [vmem:[%s7391 + $0x18] sm:$0xf]
        %v7399 = vld [vmem:[%s7391 + $0x1c] sm:$0xf]
        %v7400 = vld [vmem:[%s7391 + $0x20] sm:$0xf]
        %v7401 = vld [vmem:[%s7391 + $0x24] sm:$0xf]
        %v7402 = vld [vmem:[%s7391 + $0x28] sm:$0xf]
        %v7403 = vld [vmem:[%s7391 + $0x2c] sm:$0xf]
        %v7404 = vld [vmem:[%s7391 + $0x30] sm:$0xf]
        %v7405 = vld [vmem:[%s7391 + $0x34] sm:$0xf]
        %v7406 = vld [vmem:[%s7391 + $0x38] sm:$0xf]
        %v7407 = vld [vmem:[%s7391 + $0x3c] sm:$0xf]
        %v7408 = vunpack.c.l.b16 %v7212
        %v7409 = vunpack.c.l.b16 %v7222
        %v7410 = vunpack.c.l.b16 %v7236
        %v7411 = vunpack.c.l.b16 %v7246
        %v7412 = vunpack.c.l.b16 %v7260
        %v7413 = vunpack.c.l.b16 %v7270
        %v7414 = vunpack.c.l.b16 %v7284
        %v7415 = vunpack.c.l.b16 %v7294
        %v7416 = vunpack.c.l.b16 %v7308
        %v7417 = vunpack.c.l.b16 %v7318
        %v7418 = vunpack.c.l.b16 %v7332
        %v7419 = vunpack.c.l.b16 %v7342
        %v7420 = vunpack.c.l.b16 %v7356
        %v7421 = vunpack.c.l.b16 %v7366
        %v7422 = vunpack.c.l.b16 %v7380
        %v7423 = vunpack.c.l.b16 %v7390
        %v7424 = vpack.c.b16 %v7409, %v7408
        %v7425 = vpack.c.b16 %v7411, %v7410
        %v7426 = vpack.c.b16 %v7413, %v7412
        %v7427 = vpack.c.b16 %v7415, %v7414
        %v7428 = vpack.c.b16 %v7417, %v7416
        %v7429 = vpack.c.b16 %v7419, %v7418
        %v7430 = vpack.c.b16 %v7421, %v7420
        %v7431 = vpack.c.b16 %v7423, %v7422
        %v7456 = vunpack.c.l.b16 %v7392
        %v7457 = vunpack.c.l.b16 %v7393
        %v7458 = vunpack.c.l.b16 %v7394
        %v7459 = vunpack.c.l.b16 %v7395
        %v7460 = vunpack.c.l.b16 %v7396
        %v7461 = vunpack.c.l.b16 %v7397
        %v7462 = vunpack.c.l.b16 %v7398
        %v7463 = vunpack.c.l.b16 %v7399
        %v7464 = vunpack.c.l.b16 %v7400
        %v7465 = vunpack.c.l.b16 %v7401
        %v7466 = vunpack.c.l.b16 %v7402
        %v7467 = vunpack.c.l.b16 %v7403
        %v7468 = vunpack.c.l.b16 %v7404
        %v7469 = vunpack.c.l.b16 %v7405
        %v7470 = vunpack.c.l.b16 %v7406
        %v7471 = vunpack.c.l.b16 %v7407
        %v7472 = vpack.c.b16 %v7457, %v7456
        %v7473 = vpack.c.b16 %v7459, %v7458
        %v7474 = vpack.c.b16 %v7461, %v7460
        %v7475 = vpack.c.b16 %v7463, %v7462
        %v7476 = vpack.c.b16 %v7465, %v7464
        %v7477 = vpack.c.b16 %v7467, %v7466
        %v7478 = vpack.c.b16 %v7469, %v7468
        %v7479 = vpack.c.b16 %v7471, %v7470
        %7488 = vmatprep.subr.bf16.mxu0 0
        %7489 = vmatpush1.bf16.msra.mxu0 %v7479
        %7490 = vmatprep.subr.bf16.mxu0 0
        %7491 = vmatpush1.bf16.msra.mxu0 %v7478
        %7492 = vmatprep.subr.bf16.mxu0 0
        %7493 = vmatpush1.bf16.msra.mxu0 %v7477
        %7494 = vmatprep.subr.bf16.mxu0 0
        %7495 = vmatpush1.bf16.msra.mxu0 %v7476
        %7496 = vmatprep.subr.bf16.mxu0 0
        %7497 = vmatpush1.bf16.msra.mxu0 %v7475
        %7498 = vmatprep.subr.bf16.mxu0 0
        %7499 = vmatpush1.bf16.msra.mxu0 %v7474
        %7500 = vmatprep.subr.bf16.mxu0 0
        %7501 = vmatpush1.bf16.msra.mxu0 %v7473
        %7502 = vmatprep.subr.bf16.mxu0 0
        %7503 = vmatpush1.bf16.msra.mxu0 %v7472
        %7504 = vmatprep.subr.bf16.mxu0 0
        %7505 = vmatpush2.bf16.msra.mxu0 0
        %7506 = vmatprep.subr.bf16.mxu0 0
        %7507 = vmatpush2.bf16.msra.mxu0 0
        %7508 = vmatprep.subr.bf16.mxu0 0
        %7509 = vmatpush2.bf16.msra.mxu0 0
        %7510 = vmatprep.subr.bf16.mxu0 0
        %7511 = vmatpush2.bf16.msra.mxu0 0
        %7512 = vmatprep.subr.bf16.mxu0 0
        %7513 = vmatpush2.bf16.msra.mxu0 0
        %7514 = vmatprep.subr.bf16.mxu0 0
        %7515 = vmatpush2.bf16.msra.mxu0 0
        %7516 = vmatprep.subr.bf16.mxu0 0
        %7517 = vmatpush2.bf16.msra.mxu0 0
        %7518 = vmatprep.subr.bf16.mxu0 0
        %7519 = vmatpush2.bf16.msra.mxu0 0
        %7520 = vmatprep.mubr.bf16.mxu0 0
        %7521 = vmatmul.mubr.bf16.gmra.mxu0 %v7424
        %v7522 = vpop.f32.mrf.mxu0
        %v7523 = vadd.f32 0.0, %v7522
        %v7524 = vpop.f32.mrf.mxu0
        %v7525 = vpop.f32.mrf.mxu0
        %v7526 = vadd.f32 0.0, %v7525
        %v7527 = vpop.f32.mrf.mxu0
        %7528 = vmatprep.mubr.bf16.mxu0 0
        %7529 = vmatmul.mubr.bf16.gmra.mxu0 %v7425
        %v7530 = vpop.f32.mrf.mxu0
        %v7531 = vadd.f32 0.0, %v7530
        %v7532 = vpop.f32.mrf.mxu0
        %v7533 = vpop.f32.mrf.mxu0
        %v7534 = vadd.f32 0.0, %v7533
        %v7535 = vpop.f32.mrf.mxu0
        %7536 = vmatprep.mubr.bf16.mxu0 0
        %7537 = vmatmul.mubr.bf16.gmra.mxu0 %v7426
        %v7538 = vpop.f32.mrf.mxu0
        %v7539 = vadd.f32 0.0, %v7538
        %v7540 = vpop.f32.mrf.mxu0
        %v7541 = vpop.f32.mrf.mxu0
        %v7542 = vadd.f32 0.0, %v7541
        %v7543 = vpop.f32.mrf.mxu0
        %7544 = vmatprep.mubr.bf16.mxu0 0
        %7545 = vmatmul.mubr.bf16.gmra.mxu0 %v7427
        %v7546 = vpop.f32.mrf.mxu0
        %v7547 = vadd.f32 0.0, %v7546
        %v7548 = vpop.f32.mrf.mxu0
        %v7549 = vpop.f32.mrf.mxu0
        %v7550 = vadd.f32 0.0, %v7549
        %v7551 = vpop.f32.mrf.mxu0
        %7552 = vmatprep.mubr.bf16.mxu0 0
        %7553 = vmatmul.mubr.bf16.gmra.mxu0 %v7428
        %v7554 = vpop.f32.mrf.mxu0
        %v7555 = vadd.f32 0.0, %v7554
        %v7556 = vpop.f32.mrf.mxu0
        %v7557 = vpop.f32.mrf.mxu0
        %v7558 = vadd.f32 0.0, %v7557
        %v7559 = vpop.f32.mrf.mxu0
        %7560 = vmatprep.mubr.bf16.mxu0 0
        %7561 = vmatmul.mubr.bf16.gmra.mxu0 %v7429
        %v7562 = vpop.f32.mrf.mxu0
        %v7563 = vadd.f32 0.0, %v7562
        %v7564 = vpop.f32.mrf.mxu0
        %v7565 = vpop.f32.mrf.mxu0
        %v7566 = vadd.f32 0.0, %v7565
        %v7567 = vpop.f32.mrf.mxu0
        %7568 = vmatprep.mubr.bf16.mxu0 0
        %7569 = vmatmul.mubr.bf16.gmra.mxu0 %v7430
        %v7570 = vpop.f32.mrf.mxu0
        %v7571 = vadd.f32 0.0, %v7570
        %v7572 = vpop.f32.mrf.mxu0
        %v7573 = vpop.f32.mrf.mxu0
        %v7574 = vadd.f32 0.0, %v7573
        %v7575 = vpop.f32.mrf.mxu0
        %7576 = vmatprep.mubr.bf16.mxu0 0
        %7577 = vmatmul.mubr.bf16.gmra.mxu0 %v7431
        %v7578 = vpop.f32.mrf.mxu0
        %v7579 = vadd.f32 0.0, %v7578
        %v7580 = vpop.f32.mrf.mxu0
        %v7581 = vpop.f32.mrf.mxu0
        %v7582 = vadd.f32 0.0, %v7581
        %v7583 = vpop.f32.mrf.mxu0
        %7584 = vdwg.mxu0
        %v7585 = vadd.f32 %v7159, %v7523
        %v7586 = vadd.f32 %v7160, %v7526
        %v7587 = vadd.f32 %v7161, %v7531
        %v7588 = vadd.f32 %v7162, %v7534
        %v7589 = vadd.f32 %v7163, %v7539
        %v7590 = vadd.f32 %v7164, %v7542
        %v7591 = vadd.f32 %v7165, %v7547
        %v7592 = vadd.f32 %v7166, %v7550
        %v7593 = vadd.f32 %v7167, %v7555
        %v7594 = vadd.f32 %v7168, %v7558
        %v7595 = vadd.f32 %v7169, %v7563
        %v7596 = vadd.f32 %v7170, %v7566
        %v7597 = vadd.f32 %v7171, %v7571
        %v7598 = vadd.f32 %v7172, %v7574
        %v7599 = vadd.f32 %v7173, %v7579
        %v7600 = vadd.f32 %v7174, %v7582
        %v7601 = vlaneseq
        %v7602 = vshrl.u32 %v7601, 7
        %v7603 = vsub.s32 0, %v7602
        %v7604 = vrot.slane %v4445, %v7603
        %v7605 = vadd.f32 %v7585, %v7604
        %v7606 = vadd.f32 %v7586, %v7604
        %v7607 = vadd.f32 %v7587, %v7604
        %v7608 = vadd.f32 %v7588, %v7604
        %v7609 = vadd.f32 %v7589, %v7604
        %v7610 = vadd.f32 %v7590, %v7604
        %v7611 = vadd.f32 %v7591, %v7604
        %v7612 = vadd.f32 %v7592, %v7604
        %v7613 = vadd.f32 %v7593, %v7604
        %v7614 = vadd.f32 %v7594, %v7604
        %v7615 = vadd.f32 %v7595, %v7604
        %v7616 = vadd.f32 %v7596, %v7604
        %v7617 = vadd.f32 %v7597, %v7604
        %v7618 = vadd.f32 %v7598, %v7604
        %v7619 = vadd.f32 %v7599, %v7604
        %v7620 = vadd.f32 %v7600, %v7604
        %v7621 = vmax.f32 %v7605, 0.0
        %v7622 = vmax.f32 %v7606, 0.0
        %v7623 = vmax.f32 %v7607, 0.0
        %v7624 = vmax.f32 %v7608, 0.0
        %v7625 = vmax.f32 %v7609, 0.0
        %v7626 = vmax.f32 %v7610, 0.0
        %v7627 = vmax.f32 %v7611, 0.0
        %v7628 = vmax.f32 %v7612, 0.0
        %v7629 = vmax.f32 %v7613, 0.0
        %v7630 = vmax.f32 %v7614, 0.0
        %v7631 = vmax.f32 %v7615, 0.0
        %v7632 = vmax.f32 %v7616, 0.0
        %v7633 = vmax.f32 %v7617, 0.0
        %v7634 = vmax.f32 %v7618, 0.0
        %v7635 = vmax.f32 %v7619, 0.0
        %v7636 = vmax.f32 %v7620, 0.0
        %v7637 = vpack.c.bf16 %v7622, %v7621
        %v7638 = vpack.c.bf16 %v7624, %v7623
        %v7639 = vpack.c.bf16 %v7626, %v7625
        %v7640 = vpack.c.bf16 %v7628, %v7627
        %v7641 = vpack.c.bf16 %v7630, %v7629
        %v7642 = vpack.c.bf16 %v7632, %v7631
        %v7643 = vpack.c.bf16 %v7634, %v7633
        %v7644 = vpack.c.bf16 %v7636, %v7635
        %v7653 = vunpack.c.l.b16 %v7637
        %v7654 = vunpack.c.h.b16 %v7637
        %v7655 = vunpack.c.l.b16 %v7638
        %v7656 = vunpack.c.h.b16 %v7638
        %v7657 = vunpack.c.l.b16 %v7639
        %v7658 = vunpack.c.h.b16 %v7639
        %v7659 = vunpack.c.l.b16 %v7640
        %v7660 = vunpack.c.h.b16 %v7640
        %v7661 = vunpack.c.l.b16 %v7641
        %v7662 = vunpack.c.h.b16 %v7641
        %v7663 = vunpack.c.l.b16 %v7642
        %v7664 = vunpack.c.h.b16 %v7642
        %v7665 = vunpack.c.l.b16 %v7643
        %v7666 = vunpack.c.h.b16 %v7643
        %v7667 = vunpack.c.l.b16 %v7644
        %v7668 = vunpack.c.h.b16 %v7644
        %v7669 = vpack.c.b16 %v7653, %v7653
        %v7670 = vpack.c.b16 %v7654, %v7654
        %v7671 = vpack.c.b16 %v7655, %v7655
        %v7672 = vpack.c.b16 %v7656, %v7656
        %v7673 = vpack.c.b16 %v7657, %v7657
        %v7674 = vpack.c.b16 %v7658, %v7658
        %v7675 = vpack.c.b16 %v7659, %v7659
        %v7676 = vpack.c.b16 %v7660, %v7660
        %v7677 = vpack.c.b16 %v7661, %v7661
        %v7678 = vpack.c.b16 %v7662, %v7662
        %v7679 = vpack.c.b16 %v7663, %v7663
        %v7680 = vpack.c.b16 %v7664, %v7664
        %v7681 = vpack.c.b16 %v7665, %v7665
        %v7682 = vpack.c.b16 %v7666, %v7666
        %v7683 = vpack.c.b16 %v7667, %v7667
        %v7684 = vpack.c.b16 %v7668, %v7668
        %7701 = vst [vmem:[%s428] sm:$0xf] %v7669
        %7702 = vst [vmem:[%s428 + $0x4] sm:$0xf] %v7670
        %7703 = vst [vmem:[%s428 + $0x8] sm:$0xf] %v7671
        %7704 = vst [vmem:[%s428 + $0xc] sm:$0xf] %v7672
        %7705 = vst [vmem:[%s428 + $0x10] sm:$0xf] %v7673
        %7706 = vst [vmem:[%s428 + $0x14] sm:$0xf] %v7674
        %7707 = vst [vmem:[%s428 + $0x18] sm:$0xf] %v7675
        %7708 = vst [vmem:[%s428 + $0x1c] sm:$0xf] %v7676
        %7709 = vst [vmem:[%s428 + $0x20] sm:$0xf] %v7677
        %7710 = vst [vmem:[%s428 + $0x24] sm:$0xf] %v7678
        %7711 = vst [vmem:[%s428 + $0x28] sm:$0xf] %v7679
        %7712 = vst [vmem:[%s428 + $0x2c] sm:$0xf] %v7680
        %7713 = vst [vmem:[%s428 + $0x30] sm:$0xf] %v7681
        %7714 = vst [vmem:[%s428 + $0x34] sm:$0xf] %v7682
        %7715 = vst [vmem:[%s428 + $0x38] sm:$0xf] %v7683
        %7716 = vst [vmem:[%s428 + $0x3c] sm:$0xf] %v7684
        %s7717 = sand.u32 %s212, 1
        %s7718 = scalar_lea.sflag [#allocation6], %s7717
        %s7719 = sand.u32 %s212, 1
        %s7720 = smul.addr %s7719, 64
        %s7721 = scalar_lea.vmem [#allocation13], %s7720
        // Predicated region
        $region89: #{tpu_custom_call.1} parent=43 // pred_check
          %p7722 = pneg %p222
        $region90: #{tpu_custom_call.1} parent=43 // pred_check_branch
          %7724 = sbr.rel (%p7722) target = $region92
        $region91: #{tpu_custom_call.1} parent=43 // pred_region
          %s7725 = smul.u32 8, %s32
          %s7727 = ssub.s32 1024, 1024
          %7728 = vsyncadd %s7718, %s7727
          %s7729 = smul.addr %s7725, 2
          %s7730 = smul.addr %s31, 32
          %s7731 = sadd.s32 %s7729, %s7730
          %s7732 = smul.addr %s7731, 64
          %s7733 = scalar_lea.hbm %s6, %s7732
          %s7734 = sshll.u32 %s7721, 4
          %s7735 = int_to_ptr.vmem [resolvable:$true] %s7734
          %7740 = dma.vmem_to_hbm [thread:$0]  %s7735, 1024, %s7733, %s7718, 64, 64, 4
        $region92: #{tpu_custom_call.1} parent=43 // pred_fallthru
          _
      $region44: #{tpu_custom_call.1} parent=5 // pred_fallthru
        _
      %p7741 = scmp.le.s32.totalorder 2, %s22
      // Predicated region
      $region93: #{tpu_custom_call.1} parent=5 // pred_check
        %p7742 = pneg %p7741
      $region94: #{tpu_custom_call.1} parent=5 // pred_check_branch
        %7744 = sbr.rel (%p7742) target = $region96
      $region95: #{tpu_custom_call.1} parent=5 // pred_region
        %s7745 = ssub.s32 %s22, 2
        // Predicated region
        $region97: #{tpu_custom_call.1} parent=95 // pred_check
          %p7746 = pneg %p228
        $region98: #{tpu_custom_call.1} parent=95 // pred_check_branch
          %7748 = sbr.rel (%p7746) target = $region100
        $region99: #{tpu_custom_call.1} parent=95 // pred_region
          %s7749 = sand.u32 %s213, 1
          %s7750 = scalar_lea.sflag [#allocation6], %s7749
          %s7751 = sand.u32 %s213, 1
          %s7752 = smul.addr %s7751, 64
          %s7753 = scalar_lea.vmem [#allocation13], %s7752
          %7754 = dma.done %s7750, 1024
        $region100: #{tpu_custom_call.1} parent=95 // pred_fallthru
          _
      $region96: #{tpu_custom_call.1} parent=5 // pred_fallthru
        _
    $region6: #{tpu_custom_call.1} parent=1 // loop_footer
      %s26 = sadd.s32 1, %s22
    $region7: #{tpu_custom_call.1} parent=1 // loop_footer_branch
      %21 = sbr.rel target = $region3
    $region8: #{tpu_custom_call.1} parent=1 // loop_exit
      _
    %7755 = vsyncpa [#allocation5], 1
    %s7756 = scalar_lea.sflag [#allocation5], 1
    %7757 = vsyncpa %s7756, 1
    %7758 = vsyncpa [#allocation8], 1
    %s7759 = scalar_lea.sflag [#allocation8], 1
    %7760 = vsyncpa %s7759, 1
    %7761 = vsyncpa [#allocation11], 1
    %7762 = vsyncpa [#allocation6], 1
    %s7763 = scalar_lea.sflag [#allocation6], 1
    %7764 = vsyncpa %s7763, 1

</llo_original>
